<compile_context>
chip_gen: v7x
topology: tpu7x:2x2x1
jax: 0.10.0
libtpu: 0.0.40
codegen_flags: <defaults>
</compile_context>

<pallas_src>
import math
import functools

import jax
import jax.numpy as jnp
from jax.experimental import pallas as pl
from jax.experimental.pallas import tpu as pltpu

# ---------------- config (small, BERT-like) ----------------
HIDDEN = 32
NUM_HEADS = 4
HEAD_DIM = HIDDEN // NUM_HEADS
LN_EPS = 1e-12


# ---------------------------------------------------------------------------
# In-kernel cross-attention block (BertSelfAttention + BertSelfOutput), shared
# by the single-direction and fused-pair kernels. Operates on plain arrays.
# ---------------------------------------------------------------------------
def _cross_attention(x2, c2, raw_mask, wq, bq, wkv, bkv, wo, bo, gamma, beta,
                     *, bb, sq, sk):
    """x2: (bb*sq, H) query-side input, c2: (bb*sk, H) context,
    raw_mask: (bb, 1, sk) in {0, 1}.  wq/bq already carry 1/sqrt(head_dim)."""
    h = HIDDEN
    hd = HEAD_DIM

    # Fused projections: Q from x, [K|V] from ctx (2 MXU passes).
    q = jnp.dot(x2, wq, preferred_element_type=jnp.float32) + bq       # (bb*sq, H)
    kv = jnp.dot(c2, wkv, preferred_element_type=jnp.float32) + bkv    # (bb*sk, 2H)

    q3 = q.reshape(bb, sq, h)
    k3 = kv[:, :h].reshape(bb, sk, h)
    v3 = kv[:, h:].reshape(bb, sk, h)

    # HuggingFace-style additive mask, built + broadcast ONCE (not per head).
    amask = jnp.broadcast_to((1.0 - raw_mask) * -10000.0, (bb, sq, sk))

    # Per-head attention with the output projection folded into the loop:
    #   o = sum_h softmax(Q_h K_h^T + mask) V_h @ Wo[h*hd:(h+1)*hd, :]
    # -> no VMEM scratch, no lane-offset masked stores, no concat-heads.
    o = None
    for head in range(NUM_HEADS):
        lo = head * hd
        qh = q3[:, :, lo:lo + hd]                                      # (bb, sq, hd)
        kh = k3[:, :, lo:lo + hd]                                      # (bb, sk, hd)
        vh = v3[:, :, lo:lo + hd]                                      # (bb, sk, hd)

        s = jnp.einsum('bqd,bkd->bqk', qh, kh,
                       preferred_element_type=jnp.float32) + amask     # (bb, sq, sk)
        m = jnp.max(s, axis=-1, keepdims=True)
        p = jnp.exp(s - m)
        p = p / jnp.sum(p, axis=-1, keepdims=True)                     # exact divide
        pv = jnp.einsum('bqk,bkd->bqd', p, vh,
                        preferred_element_type=jnp.float32)            # (bb, sq, hd)
        # Wo row-slice (hd=8 rows) is one f32 sublane group -> tile-aligned.
        contrib = jnp.dot(pv.reshape(bb * sq, hd), wo[lo:lo + hd, :],
                          preferred_element_type=jnp.float32)          # (bb*sq, H)
        o = contrib if o is None else o + contrib

    # BertSelfOutput: dense bias + residual + LayerNorm (eps = 1e-12)
    y = o + bo + x2
    mu = jnp.mean(y, axis=-1, keepdims=True)
    var = jnp.mean((y - mu) ** 2, axis=-1, keepdims=True)
    yn = (y - mu) * jax.lax.rsqrt(var + LN_EPS)
    return yn * gamma + beta


# ------------------------- kernels -------------------------
def _crossatt_kernel(x_ref, ctx_ref, mask_ref,
                     wq_ref, bq_ref, wkv_ref, bkv_ref, wo_ref, bo_ref, ln_ref,
                     out_ref, *, bb, sq, sk):
    out_ref[...] = _cross_attention(
        x_ref[...], ctx_ref[...], mask_ref[...],
        wq_ref[...], bq_ref[...], wkv_ref[...], bkv_ref[...],
        wo_ref[...], bo_ref[...], ln_ref[0:1, :], ln_ref[1:2, :],
        bb=bb, sq=sq, sk=sk)


def _crossatt_pair_kernel(lang_ref, visn_ref, lmask_ref, vmask_ref,
                          wq_ref, bq_ref, wkv_ref, bkv_ref, wo_ref, bo_ref,
                          ln_ref, lang_out_ref, visn_out_ref, *, b, sl, sv):
    """LXRTXLayer.cross_att: both directions share one set of weights."""
    lang2 = lang_ref[...]
    visn2 = visn_ref[...]
    wq, bq = wq_ref[...], bq_ref[...]
    wkv, bkv = wkv_ref[...], bkv_ref[...]
    wo, bo = wo_ref[...], bo_ref[...]
    gamma, beta = ln_ref[0:1, :], ln_ref[1:2, :]

    # lang queries attend over visn context ...
    lang_out_ref[...] = _cross_attention(lang2, visn2, vmask_ref[...],
                                         wq, bq, wkv, bkv, wo, bo, gamma, beta,
                                         bb=b, sq=sl, sk=sv)
    # ... and visn queries attend over lang context (same weights).
    visn_out_ref[...] = _cross_attention(visn2, lang2, lmask_ref[...],
                                         wq, bq, wkv, bkv, wo, bo, gamma, beta,
                                         bb=b, sq=sv, sk=sl)


# ------------------------- one-time param prep -------------------------
def pack_params(raw_params):
    """Run ONCE (hoisted out of the per-forward path): pack weights into
    compute-shaped slabs and fold 1/sqrt(head_dim) into Wq/bq."""
    wq, bq, wk, bk, wv, bv, wo, bo, gamma, beta = raw_params
    scale = 1.0 / math.sqrt(HEAD_DIM)
    return {
        'wq': wq * scale,                               # (H, H)   pre-scaled
        'bq': bq * scale,                               # (1, H)   pre-scaled
        'wkv': jnp.concatenate([wk, wv], axis=1),       # (H, 2H)
        'bkv': jnp.concatenate([bk, bv], axis=1),       # (1, 2H)
        'wo': wo,                                       # (H, H)
        'bo': bo,                                       # (1, H)
        'ln': jnp.concatenate([gamma, beta], axis=0),   # (2, H) [gamma; beta]
    }


def _mask3(mask, B, S):
    if mask is None:
        return jnp.ones((B, 1, S), jnp.float32)
    return mask.astype(jnp.float32).reshape(B, 1, S)


# ------------------------- wrappers -------------------------
def bert_crossatt_layer(x, ctx, ctx_att_mask, packed, *, block_b=None):
    """BertCrossattLayer forward. x: (B,Sq,H), ctx: (B,Sk,H), mask: (B,Sk)∈{0,1}."""
    B, Sq, H = x.shape
    _, Sk, _ = ctx.shape
    assert H == HIDDEN
    # Default: ONE grid step. v5e/v6e have a single TensorCore, so extra grid
    # steps are pure per-step overhead (working set <100 KB).  block_b is kept
    # only as an A/B knob for v7x core-sharded grids.
    if block_b is None:
        block_b = B
    assert B % block_b == 0
    n_blocks = B // block_b

    mask3 = _mask3(ctx_att_mask, B, Sk)
    x2 = x.reshape(B * Sq, H)          # free metadata reshapes in HBM
    ctx2 = ctx.reshape(B * Sk, H)

    kernel = functools.partial(_crossatt_kernel, bb=block_b, sq=Sq, sk=Sk)
    p = packed

    grid_spec = pltpu.PrefetchScalarGridSpec(
        num_scalar_prefetch=0,
        grid=(n_blocks,),
        in_specs=[
            pl.BlockSpec((block_b * Sq, H), lambda i: (i, 0)),     # x rows
            pl.BlockSpec((block_b * Sk, H), lambda i: (i, 0)),     # ctx rows
            pl.BlockSpec((block_b, 1, Sk), lambda i: (i, 0, 0)),   # raw 0/1 mask
            pl.BlockSpec((H, H), lambda i: (0, 0)),                # Wq (scaled)
            pl.BlockSpec((1, H), lambda i: (0, 0)),                # bq (scaled)
            pl.BlockSpec((H, 2 * H), lambda i: (0, 0)),            # [Wk|Wv]
            pl.BlockSpec((1, 2 * H), lambda i: (0, 0)),            # [bk|bv]
            pl.BlockSpec((H, H), lambda i: (0, 0)),                # Wo
            pl.BlockSpec((1, H), lambda i: (0, 0)),                # bo
            pl.BlockSpec((2, H), lambda i: (0, 0)),                # [gamma;beta]
        ],
        out_specs=pl.BlockSpec((block_b * Sq, H), lambda i: (i, 0)),
    )

    out2 = pl.pallas_call(
        kernel,
        out_shape=jax.ShapeDtypeStruct((B * Sq, H), jnp.float32),
        grid_spec=grid_spec,
        compiler_params=pltpu.CompilerParams(
            dimension_semantics=("parallel",)),
    )(x2, ctx2, mask3, p['wq'], p['bq'], p['wkv'], p['bkv'],
      p['wo'], p['bo'], p['ln'])

    return out2.reshape(B, Sq, H)


def lxrt_cross_att(lang, lang_mask, visn, visn_mask, packed):
    """LXRTXLayer.cross_att: both cross-attention directions fused into ONE
    pallas_call (shared weights), amortizing launch + parameter DMA 2x."""
    B, Sl, H = lang.shape
    _, Sv, _ = visn.shape
    assert H == HIDDEN and visn.shape[0] == B

    lmask = _mask3(lang_mask, B, Sl)
    vmask = _mask3(visn_mask, B, Sv)
    lang2 = lang.reshape(B * Sl, H)
    visn2 = visn.reshape(B * Sv, H)
    p = packed

    def full(shape):
        return pl.BlockSpec(shape, lambda i: (0,) * len(shape))

    kernel = functools.partial(_crossatt_pair_kernel, b=B, sl=Sl, sv=Sv)

    grid_spec = pltpu.PrefetchScalarGridSpec(
        num_scalar_prefetch=0,
        grid=(1,),
        in_specs=[
            full((B * Sl, H)), full((B * Sv, H)),
            full((B, 1, Sl)), full((B, 1, Sv)),
            full((H, H)), full((1, H)),
            full((H, 2 * H)), full((1, 2 * H)),
            full((H, H)), full((1, H)),
            full((2, H)),
        ],
        out_specs=[full((B * Sl, H)), full((B * Sv, H))],
    )

    lang_out2, visn_out2 = pl.pallas_call(
        kernel,
        out_shape=(jax.ShapeDtypeStruct((B * Sl, H), jnp.float32),
                   jax.ShapeDtypeStruct((B * Sv, H), jnp.float32)),
        grid_spec=grid_spec,
        compiler_params=pltpu.CompilerParams(
            dimension_semantics=("arbitrary",)),
    )(lang2, visn2, lmask, vmask, p['wq'], p['bq'], p['wkv'], p['bkv'],
      p['wo'], p['bo'], p['ln'])

    return lang_out2.reshape(B, Sl, H), visn_out2.reshape(B, Sv, H)


# ------------------------- reference + params -------------------------
def _reference(x, ctx, ctx_att_mask, raw_params):
    """Pure-JAX reference mirroring the PyTorch BertCrossattLayer forward (eval)."""
    wq, bq, wk, bk, wv, bv, wo, bo, gamma, beta = raw_params
    B, Sq, H = x.shape
    Sk = ctx.shape[1]
    q = x @ wq + bq[0]
    k = ctx @ wk + bk[0]
    v = ctx @ wv + bv[0]

    def split(t, S):
        return t.reshape(B, S, NUM_HEADS, HEAD_DIM).transpose(0, 2, 1, 3)

    qh, kh, vh = split(q, Sq), split(k, Sk), split(v, Sk)
    s = jnp.einsum('bhqd,bhkd->bhqk', qh, kh) / math.sqrt(HEAD_DIM)
    amask = (1.0 - ctx_att_mask.astype(jnp.float32)) * -10000.0
    s = s + amask[:, None, None, :]
    p = jax.nn.softmax(s, axis=-1)
    o = jnp.einsum('bhqk,bhkd->bhqd', p, vh)
    o = o.transpose(0, 2, 1, 3).reshape(B, Sq, H)
    y = o @ wo + bo[0] + x
    mu = y.mean(-1, keepdims=True)
    var = ((y - mu) ** 2).mean(-1, keepdims=True)
    return (y - mu) / jnp.sqrt(var + LN_EPS) * gamma[0] + beta[0]


def _init_params(key):
    ks = jax.random.split(key, 8)
    scale = 0.02
    wq = scale * jax.random.normal(ks[0], (HIDDEN, HIDDEN), jnp.float32)
    wk = scale * jax.random.normal(ks[1], (HIDDEN, HIDDEN), jnp.float32)
    wv = scale * jax.random.normal(ks[2], (HIDDEN, HIDDEN), jnp.float32)
    wo = scale * jax.random.normal(ks[3], (HIDDEN, HIDDEN), jnp.float32)
    bq = scale * jax.random.normal(ks[4], (1, HIDDEN), jnp.float32)
    bk = scale * jax.random.normal(ks[5], (1, HIDDEN), jnp.float32)
    bv = scale * jax.random.normal(ks[6], (1, HIDDEN), jnp.float32)
    bo = scale * jax.random.normal(ks[7], (1, HIDDEN), jnp.float32)
    gamma = jnp.ones((1, HIDDEN), jnp.float32)
    beta = jnp.zeros((1, HIDDEN), jnp.float32)
    return (wq, bq, wk, bk, wv, bv, wo, bo, gamma, beta)


if __name__ == "__main__":
    key = jax.random.PRNGKey(0)
    k_l, k_v, k_p = jax.random.split(key, 3)

    B, S_LANG, S_VISN = 8, 8, 16
    lang = jax.random.normal(k_l, (B, S_LANG, HIDDEN), jnp.float32)
    visn = jax.random.normal(k_v, (B, S_VISN, HIDDEN), jnp.float32)
    lang_mask = jnp.ones((B, S_LANG), jnp.float32).at[2, -2:].set(0.0)
    visn_mask = (jnp.ones((B, S_VISN), jnp.float32)
                 .at[1, -3:].set(0.0)
                 .at[5, :4].set(0.0))

    raw = _init_params(k_p)
    packed = pack_params(raw)   # one-time prep, hoisted out of the per-call path

    # --- single cross-attention (BertCrossattLayer), grid=(1,) ---
    out = bert_crossatt_layer(lang, visn, visn_mask, packed)
    out = jax.block_until_ready(out)
    ref = _reference(lang, visn, visn_mask, raw)
    assert out.shape == ref.shape
    assert jnp.allclose(out, ref, atol=5e-5, rtol=5e-5), "single-direction mismatch"

    # --- fused LXRTXLayer.cross_att: both directions in ONE pallas_call ---
    l_out, v_out = lxrt_cross_att(lang, lang_mask, visn, visn_mask, packed)
    l_out, v_out = jax.block_until_ready((l_out, v_out))
    l_ref = _reference(lang, visn, visn_mask, raw)
    v_ref = _reference(visn, lang, lang_mask, raw)
    assert jnp.allclose(l_out, l_ref, atol=5e-5, rtol=5e-5), "lang-dir mismatch"
    assert jnp.allclose(v_out, v_ref, atol=5e-5, rtol=5e-5), "visn-dir mismatch"

    print("KERNEL_OK")
</pallas_src>

<mosaic_0001>
module attributes {stable_mosaic.version = 11 : i64} {
  func.func @_crossatt_kernel(%arg0: i32, %arg1: memref<64x32xf32, #tpu.memory_space<vmem>>, %arg2: memref<128x32xf32, #tpu.memory_space<vmem>>, %arg3: memref<8x1x16xf32, #tpu.memory_space<vmem>>, %arg4: memref<32x32xf32, #tpu.memory_space<vmem>>, %arg5: memref<1x32xf32, #tpu.memory_space<vmem>>, %arg6: memref<32x64xf32, #tpu.memory_space<vmem>>, %arg7: memref<1x64xf32, #tpu.memory_space<vmem>>, %arg8: memref<32x32xf32, #tpu.memory_space<vmem>>, %arg9: memref<1x32xf32, #tpu.memory_space<vmem>>, %arg10: memref<2x32xf32, #tpu.memory_space<vmem>>, %arg11: memref<64x32xf32, #tpu.memory_space<vmem>>) attributes {dimension_semantics = [#tpu.dimension_semantics<parallel>], iteration_bounds = array<i64: 1>, scalar_prefetch = 0 : i64, scratch_operands = 0 : i64, tpu.core_type = #tpu.core_type<tc>, window_params = [{transform_indices = @transform_0, window_bounds = array<i64: 64, 32>}, {transform_indices = @transform_1, window_bounds = array<i64: 128, 32>}, {transform_indices = @transform_2, window_bounds = array<i64: 8, 1, 16>}, {pipeline_mode = #tpu.pipeline_mode<synchronous>, transform_indices = @transform_3, window_bounds = array<i64: 32, 32>}, {pipeline_mode = #tpu.pipeline_mode<synchronous>, transform_indices = @transform_4, window_bounds = array<i64: 1, 32>}, {pipeline_mode = #tpu.pipeline_mode<synchronous>, transform_indices = @transform_5, window_bounds = array<i64: 32, 64>}, {pipeline_mode = #tpu.pipeline_mode<synchronous>, transform_indices = @transform_6, window_bounds = array<i64: 1, 64>}, {pipeline_mode = #tpu.pipeline_mode<synchronous>, transform_indices = @transform_7, window_bounds = array<i64: 32, 32>}, {pipeline_mode = #tpu.pipeline_mode<synchronous>, transform_indices = @transform_8, window_bounds = array<i64: 1, 32>}, {pipeline_mode = #tpu.pipeline_mode<synchronous>, transform_indices = @transform_9, window_bounds = array<i64: 2, 32>}, {transform_indices = @transform_10, window_bounds = array<i64: 64, 32>}]} {
    %c0 = arith.constant 0 : index
    %c0_0 = arith.constant 0 : index
    %0 = vector.load %arg1[%c0, %c0_0] : memref<64x32xf32, #tpu.memory_space<vmem>>, vector<64x32xf32>
    %c0_1 = arith.constant 0 : index
    %c0_2 = arith.constant 0 : index
    %1 = vector.load %arg2[%c0_1, %c0_2] : memref<128x32xf32, #tpu.memory_space<vmem>>, vector<128x32xf32>
    %c0_3 = arith.constant 0 : index
    %c0_4 = arith.constant 0 : index
    %c0_5 = arith.constant 0 : index
    %2 = vector.load %arg3[%c0_3, %c0_4, %c0_5] : memref<8x1x16xf32, #tpu.memory_space<vmem>>, vector<8x1x16xf32>
    %c0_6 = arith.constant 0 : index
    %c0_7 = arith.constant 0 : index
    %3 = vector.load %arg4[%c0_6, %c0_7] : memref<32x32xf32, #tpu.memory_space<vmem>>, vector<32x32xf32>
    %c0_8 = arith.constant 0 : index
    %c0_9 = arith.constant 0 : index
    %4 = vector.load %arg5[%c0_8, %c0_9] : memref<1x32xf32, #tpu.memory_space<vmem>>, vector<1x32xf32>
    %c0_10 = arith.constant 0 : index
    %c0_11 = arith.constant 0 : index
    %5 = vector.load %arg6[%c0_10, %c0_11] : memref<32x64xf32, #tpu.memory_space<vmem>>, vector<32x64xf32>
    %c0_12 = arith.constant 0 : index
    %c0_13 = arith.constant 0 : index
    %6 = vector.load %arg7[%c0_12, %c0_13] : memref<1x64xf32, #tpu.memory_space<vmem>>, vector<1x64xf32>
    %c0_14 = arith.constant 0 : index
    %c0_15 = arith.constant 0 : index
    %7 = vector.load %arg8[%c0_14, %c0_15] : memref<32x32xf32, #tpu.memory_space<vmem>>, vector<32x32xf32>
    %c0_16 = arith.constant 0 : index
    %c0_17 = arith.constant 0 : index
    %8 = vector.load %arg9[%c0_16, %c0_17] : memref<1x32xf32, #tpu.memory_space<vmem>>, vector<1x32xf32>
    %c0_18 = arith.constant 0 : index
    %c0_19 = arith.constant 0 : index
    %9 = vector.load %arg10[%c0_18, %c0_19] : memref<2x32xf32, #tpu.memory_space<vmem>>, vector<1x32xf32>
    %c1 = arith.constant 1 : index
    %c0_20 = arith.constant 0 : index
    %10 = vector.load %arg10[%c1, %c0_20] : memref<2x32xf32, #tpu.memory_space<vmem>>, vector<1x32xf32>
    %cst = arith.constant dense<0.000000e+00> : vector<64x32xf32>
    %11 = tpu.matmul %0, %3, %cst {dimension_numbers = #tpu.dot_dimension_numbers<[1], [0], [0], [1], [0, 0, 1, 1], [], []>} : vector<64x32xf32>, vector<32x32xf32>, vector<64x32xf32> -> vector<64x32xf32>
    %12 = vector.broadcast %4 : vector<1x32xf32> to vector<64x32xf32>
    %13 = arith.addf %11, %12 : vector<64x32xf32>
    %cst_21 = arith.constant dense<0.000000e+00> : vector<128x64xf32>
    %14 = tpu.matmul %1, %5, %cst_21 {dimension_numbers = #tpu.dot_dimension_numbers<[1], [0], [0], [1], [0, 0, 1, 1], [], []>} : vector<128x32xf32>, vector<32x64xf32>, vector<128x64xf32> -> vector<128x64xf32>
    %15 = vector.broadcast %6 : vector<1x64xf32> to vector<128x64xf32>
    %16 = arith.addf %14, %15 : vector<128x64xf32>
    %17 = vector.shape_cast %13 : vector<64x32xf32> to vector<8x8x32xf32>
    %18 = vector.extract_strided_slice %16 {offsets = [0, 0], sizes = [128, 32], strides = [1, 1]} : vector<128x64xf32> to vector<128x32xf32>
    %19 = vector.shape_cast %18 : vector<128x32xf32> to vector<8x16x32xf32>
    %20 = vector.extract_strided_slice %16 {offsets = [0, 32], sizes = [128, 32], strides = [1, 1]} : vector<128x64xf32> to vector<128x32xf32>
    %21 = vector.shape_cast %20 : vector<128x32xf32> to vector<8x16x32xf32>
    %cst_22 = arith.constant 1.000000e+00 : f32
    %22 = vector.broadcast %cst_22 : f32 to vector<8x1x16xf32>
    %23 = arith.subf %22, %2 : vector<8x1x16xf32>
    %cst_23 = arith.constant -1.000000e+04 : f32
    %24 = vector.broadcast %cst_23 : f32 to vector<8x1x16xf32>
    %25 = arith.mulf %23, %24 : vector<8x1x16xf32>
    %26 = vector.shape_cast %25 : vector<8x1x16xf32> to vector<8x1x16xf32>
    %27 = vector.broadcast %26 : vector<8x1x16xf32> to vector<8x8x16xf32>
    %28 = vector.extract_strided_slice %17 {offsets = [0, 0, 0], sizes = [8, 8, 8], strides = [1, 1, 1]} : vector<8x8x32xf32> to vector<8x8x8xf32>
    %29 = vector.extract_strided_slice %19 {offsets = [0, 0, 0], sizes = [8, 16, 8], strides = [1, 1, 1]} : vector<8x16x32xf32> to vector<8x16x8xf32>
    %30 = vector.extract_strided_slice %21 {offsets = [0, 0, 0], sizes = [8, 16, 8], strides = [1, 1, 1]} : vector<8x16x32xf32> to vector<8x16x8xf32>
    "tpu.trace_start"() <{level = 10 : i32, message = "bqd,bkd->bqk"}> : () -> ()
    %cst_24 = arith.constant dense<0.000000e+00> : vector<8x8x16xf32>
    %31 = tpu.matmul %28, %29, %cst_24 {dimension_numbers = #tpu.dot_dimension_numbers<[2], [2], [1], [1], [0, 0, 0, 1, 1, 1], [0], [0]>} : vector<8x8x8xf32>, vector<8x16x8xf32>, vector<8x8x16xf32> -> vector<8x8x16xf32>
    "tpu.trace_stop"() : () -> ()
    %32 = arith.addf %31, %27 : vector<8x8x16xf32>
    %cst_25 = arith.constant dense<0xFF800000> : vector<8x8xf32>
    %33 = vector.multi_reduction <maximumf>, %32, %cst_25 [2] : vector<8x8x16xf32> to vector<8x8xf32>
    %34 = vector.shape_cast %33 : vector<8x8xf32> to vector<8x8x1xf32>
    %35 = vector.broadcast %34 : vector<8x8x1xf32> to vector<8x8x16xf32>
    %36 = arith.subf %32, %35 : vector<8x8x16xf32>
    %37 = math.exp %36 : vector<8x8x16xf32>
    %cst_26 = arith.constant dense<0.000000e+00> : vector<8x8xf32>
    %38 = vector.multi_reduction <add>, %37, %cst_26 [2] : vector<8x8x16xf32> to vector<8x8xf32>
    %39 = vector.shape_cast %38 : vector<8x8xf32> to vector<8x8x1xf32>
    %40 = vector.broadcast %39 : vector<8x8x1xf32> to vector<8x8x16xf32>
    %41 = arith.divf %37, %40 : vector<8x8x16xf32>
    "tpu.trace_start"() <{level = 10 : i32, message = "bqk,bkd->bqd"}> : () -> ()
    %cst_27 = arith.constant dense<0.000000e+00> : vector<8x8x8xf32>
    %42 = tpu.matmul %41, %30, %cst_27 {dimension_numbers = #tpu.dot_dimension_numbers<[2], [1], [1], [2], [0, 0, 0, 1, 1, 2], [0], [0]>} : vector<8x8x16xf32>, vector<8x16x8xf32>, vector<8x8x8xf32> -> vector<8x8x8xf32>
    "tpu.trace_stop"() : () -> ()
    %43 = vector.shape_cast %42 : vector<8x8x8xf32> to vector<64x8xf32>
    %44 = vector.extract_strided_slice %7 {offsets = [0, 0], sizes = [8, 32], strides = [1, 1]} : vector<32x32xf32> to vector<8x32xf32>
    %cst_28 = arith.constant dense<0.000000e+00> : vector<64x32xf32>
    %45 = tpu.matmul %43, %44, %cst_28 {dimension_numbers = #tpu.dot_dimension_numbers<[1], [0], [0], [1], [0, 0, 1, 1], [], []>} : vector<64x8xf32>, vector<8x32xf32>, vector<64x32xf32> -> vector<64x32xf32>
    %46 = vector.extract_strided_slice %17 {offsets = [0, 0, 8], sizes = [8, 8, 8], strides = [1, 1, 1]} : vector<8x8x32xf32> to vector<8x8x8xf32>
    %47 = vector.extract_strided_slice %19 {offsets = [0, 0, 8], sizes = [8, 16, 8], strides = [1, 1, 1]} : vector<8x16x32xf32> to vector<8x16x8xf32>
    %48 = vector.extract_strided_slice %21 {offsets = [0, 0, 8], sizes = [8, 16, 8], strides = [1, 1, 1]} : vector<8x16x32xf32> to vector<8x16x8xf32>
    "tpu.trace_start"() <{level = 10 : i32, message = "bqd,bkd->bqk"}> : () -> ()
    %cst_29 = arith.constant dense<0.000000e+00> : vector<8x8x16xf32>
    %49 = tpu.matmul %46, %47, %cst_29 {dimension_numbers = #tpu.dot_dimension_numbers<[2], [2], [1], [1], [0, 0, 0, 1, 1, 1], [0], [0]>} : vector<8x8x8xf32>, vector<8x16x8xf32>, vector<8x8x16xf32> -> vector<8x8x16xf32>
    "tpu.trace_stop"() : () -> ()
    %50 = arith.addf %49, %27 : vector<8x8x16xf32>
    %cst_30 = arith.constant dense<0xFF800000> : vector<8x8xf32>
    %51 = vector.multi_reduction <maximumf>, %50, %cst_30 [2] : vector<8x8x16xf32> to vector<8x8xf32>
    %52 = vector.shape_cast %51 : vector<8x8xf32> to vector<8x8x1xf32>
    %53 = vector.broadcast %52 : vector<8x8x1xf32> to vector<8x8x16xf32>
    %54 = arith.subf %50, %53 : vector<8x8x16xf32>
    %55 = math.exp %54 : vector<8x8x16xf32>
    %cst_31 = arith.constant dense<0.000000e+00> : vector<8x8xf32>
    %56 = vector.multi_reduction <add>, %55, %cst_31 [2] : vector<8x8x16xf32> to vector<8x8xf32>
    %57 = vector.shape_cast %56 : vector<8x8xf32> to vector<8x8x1xf32>
    %58 = vector.broadcast %57 : vector<8x8x1xf32> to vector<8x8x16xf32>
    %59 = arith.divf %55, %58 : vector<8x8x16xf32>
    "tpu.trace_start"() <{level = 10 : i32, message = "bqk,bkd->bqd"}> : () -> ()
    %cst_32 = arith.constant dense<0.000000e+00> : vector<8x8x8xf32>
    %60 = tpu.matmul %59, %48, %cst_32 {dimension_numbers = #tpu.dot_dimension_numbers<[2], [1], [1], [2], [0, 0, 0, 1, 1, 2], [0], [0]>} : vector<8x8x16xf32>, vector<8x16x8xf32>, vector<8x8x8xf32> -> vector<8x8x8xf32>
    "tpu.trace_stop"() : () -> ()
    %61 = vector.shape_cast %60 : vector<8x8x8xf32> to vector<64x8xf32>
    %62 = vector.extract_strided_slice %7 {offsets = [8, 0], sizes = [8, 32], strides = [1, 1]} : vector<32x32xf32> to vector<8x32xf32>
    %cst_33 = arith.constant dense<0.000000e+00> : vector<64x32xf32>
    %63 = tpu.matmul %61, %62, %cst_33 {dimension_numbers = #tpu.dot_dimension_numbers<[1], [0], [0], [1], [0, 0, 1, 1], [], []>} : vector<64x8xf32>, vector<8x32xf32>, vector<64x32xf32> -> vector<64x32xf32>
    %64 = arith.addf %45, %63 : vector<64x32xf32>
    %65 = vector.extract_strided_slice %17 {offsets = [0, 0, 16], sizes = [8, 8, 8], strides = [1, 1, 1]} : vector<8x8x32xf32> to vector<8x8x8xf32>
    %66 = vector.extract_strided_slice %19 {offsets = [0, 0, 16], sizes = [8, 16, 8], strides = [1, 1, 1]} : vector<8x16x32xf32> to vector<8x16x8xf32>
    %67 = vector.extract_strided_slice %21 {offsets = [0, 0, 16], sizes = [8, 16, 8], strides = [1, 1, 1]} : vector<8x16x32xf32> to vector<8x16x8xf32>
    "tpu.trace_start"() <{level = 10 : i32, message = "bqd,bkd->bqk"}> : () -> ()
    %cst_34 = arith.constant dense<0.000000e+00> : vector<8x8x16xf32>
    %68 = tpu.matmul %65, %66, %cst_34 {dimension_numbers = #tpu.dot_dimension_numbers<[2], [2], [1], [1], [0, 0, 0, 1, 1, 1], [0], [0]>} : vector<8x8x8xf32>, vector<8x16x8xf32>, vector<8x8x16xf32> -> vector<8x8x16xf32>
    "tpu.trace_stop"() : () -> ()
    %69 = arith.addf %68, %27 : vector<8x8x16xf32>
    %cst_35 = arith.constant dense<0xFF800000> : vector<8x8xf32>
    %70 = vector.multi_reduction <maximumf>, %69, %cst_35 [2] : vector<8x8x16xf32> to vector<8x8xf32>
    %71 = vector.shape_cast %70 : vector<8x8xf32> to vector<8x8x1xf32>
    %72 = vector.broadcast %71 : vector<8x8x1xf32> to vector<8x8x16xf32>
    %73 = arith.subf %69, %72 : vector<8x8x16xf32>
    %74 = math.exp %73 : vector<8x8x16xf32>
    %cst_36 = arith.constant dense<0.000000e+00> : vector<8x8xf32>
    %75 = vector.multi_reduction <add>, %74, %cst_36 [2] : vector<8x8x16xf32> to vector<8x8xf32>
    %76 = vector.shape_cast %75 : vector<8x8xf32> to vector<8x8x1xf32>
    %77 = vector.broadcast %76 : vector<8x8x1xf32> to vector<8x8x16xf32>
    %78 = arith.divf %74, %77 : vector<8x8x16xf32>
    "tpu.trace_start"() <{level = 10 : i32, message = "bqk,bkd->bqd"}> : () -> ()
    %cst_37 = arith.constant dense<0.000000e+00> : vector<8x8x8xf32>
    %79 = tpu.matmul %78, %67, %cst_37 {dimension_numbers = #tpu.dot_dimension_numbers<[2], [1], [1], [2], [0, 0, 0, 1, 1, 2], [0], [0]>} : vector<8x8x16xf32>, vector<8x16x8xf32>, vector<8x8x8xf32> -> vector<8x8x8xf32>
    "tpu.trace_stop"() : () -> ()
    %80 = vector.shape_cast %79 : vector<8x8x8xf32> to vector<64x8xf32>
    %81 = vector.extract_strided_slice %7 {offsets = [16, 0], sizes = [8, 32], strides = [1, 1]} : vector<32x32xf32> to vector<8x32xf32>
    %cst_38 = arith.constant dense<0.000000e+00> : vector<64x32xf32>
    %82 = tpu.matmul %80, %81, %cst_38 {dimension_numbers = #tpu.dot_dimension_numbers<[1], [0], [0], [1], [0, 0, 1, 1], [], []>} : vector<64x8xf32>, vector<8x32xf32>, vector<64x32xf32> -> vector<64x32xf32>
    %83 = arith.addf %64, %82 : vector<64x32xf32>
    %84 = vector.extract_strided_slice %17 {offsets = [0, 0, 24], sizes = [8, 8, 8], strides = [1, 1, 1]} : vector<8x8x32xf32> to vector<8x8x8xf32>
    %85 = vector.extract_strided_slice %19 {offsets = [0, 0, 24], sizes = [8, 16, 8], strides = [1, 1, 1]} : vector<8x16x32xf32> to vector<8x16x8xf32>
    %86 = vector.extract_strided_slice %21 {offsets = [0, 0, 24], sizes = [8, 16, 8], strides = [1, 1, 1]} : vector<8x16x32xf32> to vector<8x16x8xf32>
    "tpu.trace_start"() <{level = 10 : i32, message = "bqd,bkd->bqk"}> : () -> ()
    %cst_39 = arith.constant dense<0.000000e+00> : vector<8x8x16xf32>
    %87 = tpu.matmul %84, %85, %cst_39 {dimension_numbers = #tpu.dot_dimension_numbers<[2], [2], [1], [1], [0, 0, 0, 1, 1, 1], [0], [0]>} : vector<8x8x8xf32>, vector<8x16x8xf32>, vector<8x8x16xf32> -> vector<8x8x16xf32>
    "tpu.trace_stop"() : () -> ()
    %88 = arith.addf %87, %27 : vector<8x8x16xf32>
    %cst_40 = arith.constant dense<0xFF800000> : vector<8x8xf32>
    %89 = vector.multi_reduction <maximumf>, %88, %cst_40 [2] : vector<8x8x16xf32> to vector<8x8xf32>
    %90 = vector.shape_cast %89 : vector<8x8xf32> to vector<8x8x1xf32>
    %91 = vector.broadcast %90 : vector<8x8x1xf32> to vector<8x8x16xf32>
    %92 = arith.subf %88, %91 : vector<8x8x16xf32>
    %93 = math.exp %92 : vector<8x8x16xf32>
    %cst_41 = arith.constant dense<0.000000e+00> : vector<8x8xf32>
    %94 = vector.multi_reduction <add>, %93, %cst_41 [2] : vector<8x8x16xf32> to vector<8x8xf32>
    %95 = vector.shape_cast %94 : vector<8x8xf32> to vector<8x8x1xf32>
    %96 = vector.broadcast %95 : vector<8x8x1xf32> to vector<8x8x16xf32>
    %97 = arith.divf %93, %96 : vector<8x8x16xf32>
    "tpu.trace_start"() <{level = 10 : i32, message = "bqk,bkd->bqd"}> : () -> ()
    %cst_42 = arith.constant dense<0.000000e+00> : vector<8x8x8xf32>
    %98 = tpu.matmul %97, %86, %cst_42 {dimension_numbers = #tpu.dot_dimension_numbers<[2], [1], [1], [2], [0, 0, 0, 1, 1, 2], [0], [0]>} : vector<8x8x16xf32>, vector<8x16x8xf32>, vector<8x8x8xf32> -> vector<8x8x8xf32>
    "tpu.trace_stop"() : () -> ()
    %99 = vector.shape_cast %98 : vector<8x8x8xf32> to vector<64x8xf32>
    %100 = vector.extract_strided_slice %7 {offsets = [24, 0], sizes = [8, 32], strides = [1, 1]} : vector<32x32xf32> to vector<8x32xf32>
    %cst_43 = arith.constant dense<0.000000e+00> : vector<64x32xf32>
    %101 = tpu.matmul %99, %100, %cst_43 {dimension_numbers = #tpu.dot_dimension_numbers<[1], [0], [0], [1], [0, 0, 1, 1], [], []>} : vector<64x8xf32>, vector<8x32xf32>, vector<64x32xf32> -> vector<64x32xf32>
    %102 = arith.addf %83, %101 : vector<64x32xf32>
    %103 = vector.broadcast %8 : vector<1x32xf32> to vector<64x32xf32>
    %104 = arith.addf %102, %103 : vector<64x32xf32>
    %105 = arith.addf %104, %0 : vector<64x32xf32>
    %cst_44 = arith.constant dense<0.000000e+00> : vector<64xf32>
    %106 = vector.multi_reduction <add>, %105, %cst_44 [1] : vector<64x32xf32> to vector<64xf32>
    %107 = vector.shape_cast %106 : vector<64xf32> to vector<64x1xf32>
    %cst_45 = arith.constant 3.200000e+01 : f32
    %108 = vector.broadcast %cst_45 : f32 to vector<64x1xf32>
    %109 = arith.divf %107, %108 : vector<64x1xf32>
    %110 = vector.broadcast %109 : vector<64x1xf32> to vector<64x32xf32>
    %111 = arith.subf %105, %110 : vector<64x32xf32>
    %112 = arith.mulf %111, %111 : vector<64x32xf32>
    %cst_46 = arith.constant dense<0.000000e+00> : vector<64xf32>
    %113 = vector.multi_reduction <add>, %112, %cst_46 [1] : vector<64x32xf32> to vector<64xf32>
    %114 = vector.shape_cast %113 : vector<64xf32> to vector<64x1xf32>
    %cst_47 = arith.constant 3.200000e+01 : f32
    %115 = vector.broadcast %cst_47 : f32 to vector<64x1xf32>
    %116 = arith.divf %114, %115 : vector<64x1xf32>
    %117 = vector.broadcast %109 : vector<64x1xf32> to vector<64x32xf32>
    %118 = arith.subf %105, %117 : vector<64x32xf32>
    %cst_48 = arith.constant 9.99999996E-13 : f32
    %119 = vector.broadcast %cst_48 : f32 to vector<64x1xf32>
    %120 = arith.addf %116, %119 : vector<64x1xf32>
    %121 = math.rsqrt %120 : vector<64x1xf32>
    %122 = vector.broadcast %121 : vector<64x1xf32> to vector<64x32xf32>
    %123 = arith.mulf %118, %122 : vector<64x32xf32>
    %124 = vector.broadcast %9 : vector<1x32xf32> to vector<64x32xf32>
    %125 = arith.mulf %123, %124 : vector<64x32xf32>
    %126 = vector.broadcast %10 : vector<1x32xf32> to vector<64x32xf32>
    %127 = arith.addf %125, %126 : vector<64x32xf32>
    %c0_49 = arith.constant 0 : index
    %c0_50 = arith.constant 0 : index
    %128 = vector.load %arg11[%c0_49, %c0_50] : memref<64x32xf32, #tpu.memory_space<vmem>>, vector<64x32xf32>
    tpu.vector_store %arg11[%c0_49, %c0_50], %127 {strides = array<i32>} : memref<64x32xf32, #tpu.memory_space<vmem>>, vector<64x32xf32>,
    return
  }
  func.func @transform_0(%arg0: i32) -> (i32, i32) {
    %c0_i32 = arith.constant 0 : i32
    %c0_i32_0 = arith.constant 0 : i32
    return %arg0, %c0_i32 : i32, i32
  }
  func.func @transform_1(%arg0: i32) -> (i32, i32) {
    %c0_i32 = arith.constant 0 : i32
    %c0_i32_0 = arith.constant 0 : i32
    return %arg0, %c0_i32 : i32, i32
  }
  func.func @transform_2(%arg0: i32) -> (i32, i32, i32) {
    %c0_i32 = arith.constant 0 : i32
    %c0_i32_0 = arith.constant 0 : i32
    %c0_i32_1 = arith.constant 0 : i32
    return %arg0, %c0_i32, %c0_i32_0 : i32, i32, i32
  }
  func.func @transform_3(%arg0: i32) -> (i32, i32) {
    %c0_i32 = arith.constant 0 : i32
    %c0_i32_0 = arith.constant 0 : i32
    %c0_i32_1 = arith.constant 0 : i32
    return %c0_i32, %c0_i32_0 : i32, i32
  }
  func.func @transform_4(%arg0: i32) -> (i32, i32) {
    %c0_i32 = arith.constant 0 : i32
    %c0_i32_0 = arith.constant 0 : i32
    %c0_i32_1 = arith.constant 0 : i32
    return %c0_i32, %c0_i32_0 : i32, i32
  }
  func.func @transform_5(%arg0: i32) -> (i32, i32) {
    %c0_i32 = arith.constant 0 : i32
    %c0_i32_0 = arith.constant 0 : i32
    %c0_i32_1 = arith.constant 0 : i32
    return %c0_i32, %c0_i32_0 : i32, i32
  }
  func.func @transform_6(%arg0: i32) -> (i32, i32) {
    %c0_i32 = arith.constant 0 : i32
    %c0_i32_0 = arith.constant 0 : i32
    %c0_i32_1 = arith.constant 0 : i32
    return %c0_i32, %c0_i32_0 : i32, i32
  }
  func.func @transform_7(%arg0: i32) -> (i32, i32) {
    %c0_i32 = arith.constant 0 : i32
    %c0_i32_0 = arith.constant 0 : i32
    %c0_i32_1 = arith.constant 0 : i32
    return %c0_i32, %c0_i32_0 : i32, i32
  }
  func.func @transform_8(%arg0: i32) -> (i32, i32) {
    %c0_i32 = arith.constant 0 : i32
    %c0_i32_0 = arith.constant 0 : i32
    %c0_i32_1 = arith.constant 0 : i32
    return %c0_i32, %c0_i32_0 : i32, i32
  }
  func.func @transform_9(%arg0: i32) -> (i32, i32) {
    %c0_i32 = arith.constant 0 : i32
    %c0_i32_0 = arith.constant 0 : i32
    %c0_i32_1 = arith.constant 0 : i32
    return %c0_i32, %c0_i32_0 : i32, i32
  }
  func.func @transform_10(%arg0: i32) -> (i32, i32) {
    %c0_i32 = arith.constant 0 : i32
    %c0_i32_0 = arith.constant 0 : i32
    return %arg0, %c0_i32 : i32, i32
  }
}

</mosaic_0001>

<llo_original>
// kernel: tpu_custom_call.1
$region0: #{tpu_custom_call.1}
  #allocation0 [shape = 'u32[]', space=smem, size = 0x4, offset = 0x4, fixed_abs, tag = 'smem constant byte address 0x4 - core index']
  #allocation1 [shape = 'u32[144,128]{1,0:T(1,128)}', space=vmem, size = 0x12000, scoped, tag = 'internal scratch']
  %s0 = inlined_call_operand.vmem [shape: f32[64,32], index: 0, kind: input, shape index: {}]
  %s1 = inlined_call_operand.vmem [shape: f32[128,32], index: 1, kind: input, shape index: {}]
  %s2 = inlined_call_operand.vmem [shape: f32[8,1,16], index: 2, kind: input, shape index: {}]
  %s3 = inlined_call_operand.vmem [shape: f32[32,32], index: 3, kind: input, shape index: {}]
  %s4 = inlined_call_operand.vmem [shape: f32[1,32], index: 4, kind: input, shape index: {}]
  %s5 = inlined_call_operand.vmem [shape: f32[32,64], index: 5, kind: input, shape index: {}]
  %s6 = inlined_call_operand.vmem [shape: f32[1,64], index: 6, kind: input, shape index: {}]
  %s7 = inlined_call_operand.vmem [shape: f32[32,32], index: 7, kind: input, shape index: {}]
  %s8 = inlined_call_operand.vmem [shape: f32[1,32], index: 8, kind: input, shape index: {}]
  %s9 = inlined_call_operand.vmem [shape: f32[2,32], index: 9, kind: input, shape index: {}]
  %s10 = inlined_call_operand.vmem [shape: f32[64,32], index: 10, kind: output, shape index: {}]
  %s11 = sld [smem:[#allocation0]]
  $region50: #{tpu_custom_call.1} parent=0
    _
  %s13 = ssub.s32 1, %s11
  %s14 = scalar_select 0, %s13, %s11
  // Predicated region
  $region2: #{tpu_custom_call.1} parent=0 // pred_check
    _
  $region3: #{tpu_custom_call.1} parent=0 // pred_check_branch
    %16 = sbr.rel (0) target = $region5
  $region4: #{tpu_custom_call.1} parent=0 // pred_region
    _
  $region5: #{tpu_custom_call.1} parent=0 // pred_fallthru
    _
  // Predicated region
  $region6: #{tpu_custom_call.1} parent=0 // pred_check
    _
  $region7: #{tpu_custom_call.1} parent=0 // pred_check_branch
    %18 = sbr.rel (0) target = $region9
  $region8: #{tpu_custom_call.1} parent=0 // pred_region
    _
  $region9: #{tpu_custom_call.1} parent=0 // pred_fallthru
    _
  // Predicated region
  $region10: #{tpu_custom_call.1} parent=0 // pred_check
    _
  $region11: #{tpu_custom_call.1} parent=0 // pred_check_branch
    %20 = sbr.rel (0) target = $region13
  $region12: #{tpu_custom_call.1} parent=0 // pred_region
    _
  $region13: #{tpu_custom_call.1} parent=0 // pred_fallthru
    _
  // Predicated region
  $region14: #{tpu_custom_call.1} parent=0 // pred_check
    _
  $region15: #{tpu_custom_call.1} parent=0 // pred_check_branch
    %22 = sbr.rel (0) target = $region17
  $region16: #{tpu_custom_call.1} parent=0 // pred_region
    _
  $region17: #{tpu_custom_call.1} parent=0 // pred_fallthru
    _
  // Predicated region
  $region18: #{tpu_custom_call.1} parent=0 // pred_check
    _
  $region19: #{tpu_custom_call.1} parent=0 // pred_check_branch
    %24 = sbr.rel (0) target = $region21
  $region20: #{tpu_custom_call.1} parent=0 // pred_region
    _
  $region21: #{tpu_custom_call.1} parent=0 // pred_fallthru
    _
  // Predicated region
  $region22: #{tpu_custom_call.1} parent=0 // pred_check
    _
  $region23: #{tpu_custom_call.1} parent=0 // pred_check_branch
    %26 = sbr.rel (0) target = $region25
  $region24: #{tpu_custom_call.1} parent=0 // pred_region
    _
  $region25: #{tpu_custom_call.1} parent=0 // pred_fallthru
    _
  // Predicated region
  $region26: #{tpu_custom_call.1} parent=0 // pred_check
    _
  $region27: #{tpu_custom_call.1} parent=0 // pred_check_branch
    %28 = sbr.rel (0) target = $region29
  $region28: #{tpu_custom_call.1} parent=0 // pred_region
    _
  $region29: #{tpu_custom_call.1} parent=0 // pred_fallthru
    _
  // Predicated region
  $region30: #{tpu_custom_call.1} parent=0 // pred_check
    _
  $region31: #{tpu_custom_call.1} parent=0 // pred_check_branch
    %30 = sbr.rel (0) target = $region33
  $region32: #{tpu_custom_call.1} parent=0 // pred_region
    _
  $region33: #{tpu_custom_call.1} parent=0 // pred_fallthru
    _
  // Predicated region
  $region34: #{tpu_custom_call.1} parent=0 // pred_check
    _
  $region35: #{tpu_custom_call.1} parent=0 // pred_check_branch
    %32 = sbr.rel (0) target = $region37
  $region36: #{tpu_custom_call.1} parent=0 // pred_region
    _
  $region37: #{tpu_custom_call.1} parent=0 // pred_fallthru
    _
  // Predicated region
  $region38: #{tpu_custom_call.1} parent=0 // pred_check
    _
  $region39: #{tpu_custom_call.1} parent=0 // pred_check_branch
    %34 = sbr.rel (0) target = $region41
  $region40: #{tpu_custom_call.1} parent=0 // pred_region
    _
  $region41: #{tpu_custom_call.1} parent=0 // pred_fallthru
    _
  %v35 = vld [vmem:[%s0] sm:$0xff]
  %v36 = vld [vmem:[%s0 + $0x8] sm:$0xff]
  %v37 = vld [vmem:[%s0 + $0x10] sm:$0xff]
  %v38 = vld [vmem:[%s0 + $0x18] sm:$0xff]
  %v39 = vld [vmem:[%s0 + $0x20] sm:$0xff]
  %v40 = vld [vmem:[%s0 + $0x28] sm:$0xff]
  %v41 = vld [vmem:[%s0 + $0x30] sm:$0xff]
  %v42 = vld [vmem:[%s0 + $0x38] sm:$0xff]
  %v43 = vld [vmem:[%s1] sm:$0xff]
  %v44 = vld [vmem:[%s1 + $0x8] sm:$0xff]
  %v45 = vld [vmem:[%s1 + $0x10] sm:$0xff]
  %v46 = vld [vmem:[%s1 + $0x18] sm:$0xff]
  %v47 = vld [vmem:[%s1 + $0x20] sm:$0xff]
  %v48 = vld [vmem:[%s1 + $0x28] sm:$0xff]
  %v49 = vld [vmem:[%s1 + $0x30] sm:$0xff]
  %v50 = vld [vmem:[%s1 + $0x38] sm:$0xff]
  %v51 = vld [vmem:[%s1 + $0x40] sm:$0xff]
  %v52 = vld [vmem:[%s1 + $0x48] sm:$0xff]
  %v53 = vld [vmem:[%s1 + $0x50] sm:$0xff]
  %v54 = vld [vmem:[%s1 + $0x58] sm:$0xff]
  %v55 = vld [vmem:[%s1 + $0x60] sm:$0xff]
  %v56 = vld [vmem:[%s1 + $0x68] sm:$0xff]
  %v57 = vld [vmem:[%s1 + $0x70] sm:$0xff]
  %v58 = vld [vmem:[%s1 + $0x78] sm:$0xff]
  %v59 = vld [vmem:[%s2] sm:$0x1]
  %v60 = vld [vmem:[%s2 + $0x1] sm:$0x1]
  %v61 = vld [vmem:[%s2 + $0x2] sm:$0x1]
  %v62 = vld [vmem:[%s2 + $0x3] sm:$0x1]
  %v63 = vld [vmem:[%s2 + $0x4] sm:$0x1]
  %v64 = vld [vmem:[%s2 + $0x5] sm:$0x1]
  %v65 = vld [vmem:[%s2 + $0x6] sm:$0x1]
  %v66 = vld [vmem:[%s2 + $0x7] sm:$0x1]
  %v67 = vld [vmem:[%s3] sm:$0xff]
  %v68 = vld [vmem:[%s3 + $0x8] sm:$0xff]
  %v69 = vld [vmem:[%s3 + $0x10] sm:$0xff]
  %v70 = vld [vmem:[%s3 + $0x18] sm:$0xff]
  %v71 = vld [vmem:[%s4] sm:$0x1]
  %v72 = vld [vmem:[%s5] sm:$0xff]
  %v73 = vld [vmem:[%s5 + $0x8] sm:$0xff]
  %v74 = vld [vmem:[%s5 + $0x10] sm:$0xff]
  %v75 = vld [vmem:[%s5 + $0x18] sm:$0xff]
  %v76 = vld [vmem:[%s6] sm:$0x1]
  %v77 = vld [vmem:[%s7] sm:$0xff]
  %v78 = vld [vmem:[%s7 + $0x8] sm:$0xff]
  %v79 = vld [vmem:[%s7 + $0x10] sm:$0xff]
  %v80 = vld [vmem:[%s7 + $0x18] sm:$0xff]
  %v81 = vld [vmem:[%s8] sm:$0x1]
  %v82 = vld [vmem:[%s9] sm:$0x1]
  %v83 = vld [vmem:[%s9 + $0x1] sm:$0x1]
  %v85 = vlaneseq
  %v86 = vshrl.u32 %v85, 7
  %v87 = vsub.s32 0, %v86
  %v88 = vrot.slane %v71, %v87
  %vm90 = vcmask 261120
  %v92 = vsel %vm90, %v35, 0
  %v95 = vsel %vm90, %v36, 0
  %v98 = vsel %vm90, %v37, 0
  %v101 = vsel %vm90, %v38, 0
  %v104 = vsel %vm90, %v39, 0
  %v107 = vsel %vm90, %v40, 0
  %v110 = vsel %vm90, %v41, 0
  %v113 = vsel %vm90, %v42, 0
  %115 = vmatprep.subr.mxu0 0.0
  %116 = vmatpush1.msra.mxu0 %v67
  %117 = vmatprep.subr.mxu0 0.0
  %118 = vmatpush1.msra.mxu0 %v68
  %119 = vmatprep.subr.mxu0 0.0
  %120 = vmatpush1.msra.mxu0 %v69
  %121 = vmatprep.subr.mxu0 0.0
  %122 = vmatpush1.msra.mxu0 %v70
  %123 = vmatprep.subr.mxu0 0.0
  %124 = vmatpush1.msra.mxu0 0.0
  %125 = vmatprep.subr.mxu0 0.0
  %126 = vmatpush1.msra.mxu0 0.0
  %127 = vmatprep.subr.mxu0 0.0
  %128 = vmatpush1.msra.mxu0 0.0
  %129 = vmatprep.subr.mxu0 0.0
  %130 = vmatpush1.msra.mxu0 0.0
  %131 = vmatprep.subr.mxu0 0.0
  %132 = vmatpush1.msra.mxu0 0.0
  %133 = vmatprep.subr.mxu0 0.0
  %134 = vmatpush1.msra.mxu0 0.0
  %135 = vmatprep.subr.mxu0 0.0
  %136 = vmatpush1.msra.mxu0 0.0
  %137 = vmatprep.subr.mxu0 0.0
  %138 = vmatpush1.msra.mxu0 0.0
  %139 = vmatprep.subr.mxu0 0.0
  %140 = vmatpush1.msra.mxu0 0.0
  %141 = vmatprep.subr.mxu0 0.0
  %142 = vmatpush1.msra.mxu0 0.0
  %143 = vmatprep.subr.mxu0 0.0
  %144 = vmatpush1.msra.mxu0 0.0
  %145 = vmatprep.subr.mxu0 0.0
  %146 = vmatpush1.msra.mxu0 0.0
  %147 = vmatprep.subr.mxu0 0.0
  %148 = vmatpush1.msra.mxu0 0.0
  %149 = vmatprep.subr.mxu0 0.0
  %150 = vmatpush1.msra.mxu0 0.0
  %151 = vmatprep.subr.mxu0 0.0
  %152 = vmatpush1.msra.mxu0 0.0
  %153 = vmatprep.subr.mxu0 0.0
  %154 = vmatpush1.msra.mxu0 0.0
  %155 = vmatprep.subr.mxu0 0.0
  %156 = vmatpush1.msra.mxu0 0.0
  %157 = vmatprep.subr.mxu0 0.0
  %158 = vmatpush1.msra.mxu0 0.0
  %159 = vmatprep.subr.mxu0 0.0
  %160 = vmatpush1.msra.mxu0 0.0
  %161 = vmatprep.subr.mxu0 0.0
  %162 = vmatpush1.msra.mxu0 0.0
  %163 = vmatprep.subr.mxu0 0.0
  %164 = vmatpush1.msra.mxu0 0.0
  %165 = vmatprep.subr.mxu0 0.0
  %166 = vmatpush1.msra.mxu0 0.0
  %167 = vmatprep.subr.mxu0 0.0
  %168 = vmatpush1.msra.mxu0 0.0
  %169 = vmatprep.subr.mxu0 0.0
  %170 = vmatpush1.msra.mxu0 0.0
  %171 = vmatprep.subr.mxu0 0.0
  %172 = vmatpush1.msra.mxu0 0.0
  %173 = vmatprep.subr.mxu0 0.0
  %174 = vmatpush1.msra.mxu0 0.0
  %175 = vmatprep.subr.mxu0 0.0
  %176 = vmatpush1.msra.mxu0 0.0
  %177 = vmatprep.subr.mxu0 0.0
  %178 = vmatpush1.msra.mxu0 0.0
  %179 = vmatprep.mubr.f32.mxu0 0.0
  %180 = vmatmul.mubr.f32.gmra.mrb[0].mxu0 %v92
  %v181 = vpop.f32.mrb[0].mxu0
  %v182 = vadd.f32 %v88, %v181
  %v183 = vpop.f32.mrb[0].mxu0
  %184 = vmatprep.mubr.f32.mxu0 0.0
  %185 = vmatmul.mubr.f32.gmra.mrb[0].mxu0 %v95
  %v186 = vpop.f32.mrb[0].mxu0
  %v187 = vadd.f32 %v88, %v186
  %v188 = vpop.f32.mrb[0].mxu0
  %189 = vmatprep.mubr.f32.mxu0 0.0
  %190 = vmatmul.mubr.f32.gmra.mrb[0].mxu0 %v98
  %v191 = vpop.f32.mrb[0].mxu0
  %v192 = vadd.f32 %v88, %v191
  %v193 = vpop.f32.mrb[0].mxu0
  %194 = vmatprep.mubr.f32.mxu0 0.0
  %195 = vmatmul.mubr.f32.gmra.mrb[0].mxu0 %v101
  %v196 = vpop.f32.mrb[0].mxu0
  %v197 = vadd.f32 %v88, %v196
  %v198 = vpop.f32.mrb[0].mxu0
  %199 = vmatprep.mubr.f32.mxu0 0.0
  %200 = vmatmul.mubr.f32.gmra.mrb[0].mxu0 %v104
  %v201 = vpop.f32.mrb[0].mxu0
  %v202 = vadd.f32 %v88, %v201
  %v203 = vpop.f32.mrb[0].mxu0
  %204 = vmatprep.mubr.f32.mxu0 0.0
  %205 = vmatmul.mubr.f32.gmra.mrb[0].mxu0 %v107
  %v206 = vpop.f32.mrb[0].mxu0
  %v207 = vadd.f32 %v88, %v206
  %v208 = vpop.f32.mrb[0].mxu0
  %209 = vmatprep.mubr.f32.mxu0 0.0
  %210 = vmatmul.mubr.f32.gmra.mrb[0].mxu0 %v110
  %v211 = vpop.f32.mrb[0].mxu0
  %v212 = vadd.f32 %v88, %v211
  %v213 = vpop.f32.mrb[0].mxu0
  %214 = vmatprep.mubr.f32.mxu0 0.0
  %215 = vmatmul.mubr.f32.gmra.mrb[0].mxu0 %v113
  %v216 = vpop.f32.mrb[0].mxu0
  %v217 = vadd.f32 %v88, %v216
  %v218 = vpop.f32.mrb[0].mxu0
  %219 = vdwg.mxu0
  %v221 = vlaneseq
  %v222 = vshrl.u32 %v221, 7
  %v223 = vsub.s32 0, %v222
  %v224 = vrot.slane %v76, %v223
  %v227 = vsel %vm90, %v43, 0
  %v230 = vsel %vm90, %v44, 0
  %v233 = vsel %vm90, %v45, 0
  %v236 = vsel %vm90, %v46, 0
  %v239 = vsel %vm90, %v47, 0
  %v242 = vsel %vm90, %v48, 0
  %v245 = vsel %vm90, %v49, 0
  %v248 = vsel %vm90, %v50, 0
  %v251 = vsel %vm90, %v51, 0
  %v254 = vsel %vm90, %v52, 0
  %v257 = vsel %vm90, %v53, 0
  %v260 = vsel %vm90, %v54, 0
  %v263 = vsel %vm90, %v55, 0
  %v266 = vsel %vm90, %v56, 0
  %v269 = vsel %vm90, %v57, 0
  %v272 = vsel %vm90, %v58, 0
  %274 = vmatprep.subr.mxu0 0.0
  %275 = vmatpush1.msra.mxu0 %v72
  %276 = vmatprep.subr.mxu0 0.0
  %277 = vmatpush1.msra.mxu0 %v73
  %278 = vmatprep.subr.mxu0 0.0
  %279 = vmatpush1.msra.mxu0 %v74
  %280 = vmatprep.subr.mxu0 0.0
  %281 = vmatpush1.msra.mxu0 %v75
  %282 = vmatprep.subr.mxu0 0.0
  %283 = vmatpush1.msra.mxu0 0.0
  %284 = vmatprep.subr.mxu0 0.0
  %285 = vmatpush1.msra.mxu0 0.0
  %286 = vmatprep.subr.mxu0 0.0
  %287 = vmatpush1.msra.mxu0 0.0
  %288 = vmatprep.subr.mxu0 0.0
  %289 = vmatpush1.msra.mxu0 0.0
  %290 = vmatprep.subr.mxu0 0.0
  %291 = vmatpush1.msra.mxu0 0.0
  %292 = vmatprep.subr.mxu0 0.0
  %293 = vmatpush1.msra.mxu0 0.0
  %294 = vmatprep.subr.mxu0 0.0
  %295 = vmatpush1.msra.mxu0 0.0
  %296 = vmatprep.subr.mxu0 0.0
  %297 = vmatpush1.msra.mxu0 0.0
  %298 = vmatprep.subr.mxu0 0.0
  %299 = vmatpush1.msra.mxu0 0.0
  %300 = vmatprep.subr.mxu0 0.0
  %301 = vmatpush1.msra.mxu0 0.0
  %302 = vmatprep.subr.mxu0 0.0
  %303 = vmatpush1.msra.mxu0 0.0
  %304 = vmatprep.subr.mxu0 0.0
  %305 = vmatpush1.msra.mxu0 0.0
  %306 = vmatprep.subr.mxu0 0.0
  %307 = vmatpush1.msra.mxu0 0.0
  %308 = vmatprep.subr.mxu0 0.0
  %309 = vmatpush1.msra.mxu0 0.0
  %310 = vmatprep.subr.mxu0 0.0
  %311 = vmatpush1.msra.mxu0 0.0
  %312 = vmatprep.subr.mxu0 0.0
  %313 = vmatpush1.msra.mxu0 0.0
  %314 = vmatprep.subr.mxu0 0.0
  %315 = vmatpush1.msra.mxu0 0.0
  %316 = vmatprep.subr.mxu0 0.0
  %317 = vmatpush1.msra.mxu0 0.0
  %318 = vmatprep.subr.mxu0 0.0
  %319 = vmatpush1.msra.mxu0 0.0
  %320 = vmatprep.subr.mxu0 0.0
  %321 = vmatpush1.msra.mxu0 0.0
  %322 = vmatprep.subr.mxu0 0.0
  %323 = vmatpush1.msra.mxu0 0.0
  %324 = vmatprep.subr.mxu0 0.0
  %325 = vmatpush1.msra.mxu0 0.0
  %326 = vmatprep.subr.mxu0 0.0
  %327 = vmatpush1.msra.mxu0 0.0
  %328 = vmatprep.subr.mxu0 0.0
  %329 = vmatpush1.msra.mxu0 0.0
  %330 = vmatprep.subr.mxu0 0.0
  %331 = vmatpush1.msra.mxu0 0.0
  %332 = vmatprep.subr.mxu0 0.0
  %333 = vmatpush1.msra.mxu0 0.0
  %334 = vmatprep.subr.mxu0 0.0
  %335 = vmatpush1.msra.mxu0 0.0
  %336 = vmatprep.subr.mxu0 0.0
  %337 = vmatpush1.msra.mxu0 0.0
  %338 = vmatprep.mubr.f32.mxu0 0.0
  %339 = vmatmul.mubr.f32.gmra.mrb[0].mxu0 %v227
  %v340 = vpop.f32.mrb[0].mxu0
  %v341 = vadd.f32 %v224, %v340
  %v342 = vpop.f32.mrb[0].mxu0
  %343 = vmatprep.mubr.f32.mxu0 0.0
  %344 = vmatmul.mubr.f32.gmra.mrb[0].mxu0 %v230
  %v345 = vpop.f32.mrb[0].mxu0
  %v346 = vadd.f32 %v224, %v345
  %v347 = vpop.f32.mrb[0].mxu0
  %348 = vmatprep.mubr.f32.mxu0 0.0
  %349 = vmatmul.mubr.f32.gmra.mrb[0].mxu0 %v233
  %v350 = vpop.f32.mrb[0].mxu0
  %v351 = vadd.f32 %v224, %v350
  %v352 = vpop.f32.mrb[0].mxu0
  %353 = vmatprep.mubr.f32.mxu0 0.0
  %354 = vmatmul.mubr.f32.gmra.mrb[0].mxu0 %v236
  %v355 = vpop.f32.mrb[0].mxu0
  %v356 = vadd.f32 %v224, %v355
  %v357 = vpop.f32.mrb[0].mxu0
  %358 = vmatprep.mubr.f32.mxu0 0.0
  %359 = vmatmul.mubr.f32.gmra.mrb[0].mxu0 %v239
  %v360 = vpop.f32.mrb[0].mxu0
  %v361 = vadd.f32 %v224, %v360
  %v362 = vpop.f32.mrb[0].mxu0
  %363 = vmatprep.mubr.f32.mxu0 0.0
  %364 = vmatmul.mubr.f32.gmra.mrb[0].mxu0 %v242
  %v365 = vpop.f32.mrb[0].mxu0
  %v366 = vadd.f32 %v224, %v365
  %v367 = vpop.f32.mrb[0].mxu0
  %368 = vmatprep.mubr.f32.mxu0 0.0
  %369 = vmatmul.mubr.f32.gmra.mrb[0].mxu0 %v245
  %v370 = vpop.f32.mrb[0].mxu0
  %v371 = vadd.f32 %v224, %v370
  %v372 = vpop.f32.mrb[0].mxu0
  %373 = vmatprep.mubr.f32.mxu0 0.0
  %374 = vmatmul.mubr.f32.gmra.mrb[0].mxu0 %v248
  %v375 = vpop.f32.mrb[0].mxu0
  %v376 = vadd.f32 %v224, %v375
  %v377 = vpop.f32.mrb[0].mxu0
  %378 = vmatprep.mubr.f32.mxu0 0.0
  %379 = vmatmul.mubr.f32.gmra.mrb[0].mxu0 %v251
  %v380 = vpop.f32.mrb[0].mxu0
  %v381 = vadd.f32 %v224, %v380
  %v382 = vpop.f32.mrb[0].mxu0
  %383 = vmatprep.mubr.f32.mxu0 0.0
  %384 = vmatmul.mubr.f32.gmra.mrb[0].mxu0 %v254
  %v385 = vpop.f32.mrb[0].mxu0
  %v386 = vadd.f32 %v224, %v385
  %v387 = vpop.f32.mrb[0].mxu0
  %388 = vmatprep.mubr.f32.mxu0 0.0
  %389 = vmatmul.mubr.f32.gmra.mrb[0].mxu0 %v257
  %v390 = vpop.f32.mrb[0].mxu0
  %v391 = vadd.f32 %v224, %v390
  %v392 = vpop.f32.mrb[0].mxu0
  %393 = vmatprep.mubr.f32.mxu0 0.0
  %394 = vmatmul.mubr.f32.gmra.mrb[0].mxu0 %v260
  %v395 = vpop.f32.mrb[0].mxu0
  %v396 = vadd.f32 %v224, %v395
  %v397 = vpop.f32.mrb[0].mxu0
  %398 = vmatprep.mubr.f32.mxu0 0.0
  %399 = vmatmul.mubr.f32.gmra.mrb[0].mxu0 %v263
  %v400 = vpop.f32.mrb[0].mxu0
  %v401 = vadd.f32 %v224, %v400
  %v402 = vpop.f32.mrb[0].mxu0
  %403 = vmatprep.mubr.f32.mxu0 0.0
  %404 = vmatmul.mubr.f32.gmra.mrb[0].mxu0 %v266
  %v405 = vpop.f32.mrb[0].mxu0
  %v406 = vadd.f32 %v224, %v405
  %v407 = vpop.f32.mrb[0].mxu0
  %408 = vmatprep.mubr.f32.mxu0 0.0
  %409 = vmatmul.mubr.f32.gmra.mrb[0].mxu0 %v269
  %v410 = vpop.f32.mrb[0].mxu0
  %v411 = vadd.f32 %v224, %v410
  %v412 = vpop.f32.mrb[0].mxu0
  %413 = vmatprep.mubr.f32.mxu0 0.0
  %414 = vmatmul.mubr.f32.gmra.mrb[0].mxu0 %v272
  %v415 = vpop.f32.mrb[0].mxu0
  %v416 = vadd.f32 %v224, %v415
  %v417 = vpop.f32.mrb[0].mxu0
  %418 = vdwg.mxu0
  %v419 = vsub.f32 1.0, %v59
  %v420 = vsub.f32 1.0, %v60
  %v421 = vsub.f32 1.0, %v61
  %v422 = vsub.f32 1.0, %v62
  %v423 = vsub.f32 1.0, %v63
  %v424 = vsub.f32 1.0, %v64
  %v425 = vsub.f32 1.0, %v65
  %v426 = vsub.f32 1.0, %v66
  %v427 = vmul.f32 %v419, -10000.0
  %v428 = vmul.f32 %v420, -10000.0
  %v429 = vmul.f32 %v421, -10000.0
  %v430 = vmul.f32 %v422, -10000.0
  %v431 = vmul.f32 %v423, -10000.0
  %v432 = vmul.f32 %v424, -10000.0
  %v433 = vmul.f32 %v425, -10000.0
  %v434 = vmul.f32 %v426, -10000.0
  %v443 = vlaneseq
  %v444 = vshrl.u32 %v443, 7
  %v445 = vsub.s32 0, %v444
  %v446 = vrot.slane %v427, %v445
  %v447 = vlaneseq
  %v448 = vshrl.u32 %v447, 7
  %v449 = vsub.s32 0, %v448
  %v450 = vrot.slane %v428, %v449
  %v451 = vlaneseq
  %v452 = vshrl.u32 %v451, 7
  %v453 = vsub.s32 0, %v452
  %v454 = vrot.slane %v429, %v453
  %v455 = vlaneseq
  %v456 = vshrl.u32 %v455, 7
  %v457 = vsub.s32 0, %v456
  %v458 = vrot.slane %v430, %v457
  %v459 = vlaneseq
  %v460 = vshrl.u32 %v459, 7
  %v461 = vsub.s32 0, %v460
  %v462 = vrot.slane %v431, %v461
  %v463 = vlaneseq
  %v464 = vshrl.u32 %v463, 7
  %v465 = vsub.s32 0, %v464
  %v466 = vrot.slane %v432, %v465
  %v467 = vlaneseq
  %v468 = vshrl.u32 %v467, 7
  %v469 = vsub.s32 0, %v468
  %v470 = vrot.slane %v433, %v469
  %v471 = vlaneseq
  %v472 = vshrl.u32 %v471, 7
  %v473 = vsub.s32 0, %v472
  %v474 = vrot.slane %v434, %v473
  %vm483 = vcmask 64512
  %v485 = vsel %vm483, %v182, 0
  %v488 = vsel %vm483, %v341, 0
  %v491 = vsel %vm483, %v346, 0
  %493 = vmatprep.subr.mxu0 0.0
  %494 = vmatpush1.xpose.msra.mxu0 %v488
  %495 = vmatprep.subr.mxu0 0.0
  %496 = vmatpush1.xpose.msra.mxu0 %v491
  %497 = vmatprep.subr.mxu0 0.0
  %498 = vmatpush1.xpose.msra.mxu0 0.0
  %499 = vmatprep.subr.mxu0 0.0
  %500 = vmatpush1.xpose.msra.mxu0 0.0
  %501 = vmatprep.subr.mxu0 0.0
  %502 = vmatpush1.xpose.msra.mxu0 0.0
  %503 = vmatprep.subr.mxu0 0.0
  %504 = vmatpush1.xpose.msra.mxu0 0.0
  %505 = vmatprep.subr.mxu0 0.0
  %506 = vmatpush1.xpose.msra.mxu0 0.0
  %507 = vmatprep.subr.mxu0 0.0
  %508 = vmatpush1.xpose.msra.mxu0 0.0
  %509 = vmatprep.subr.mxu0 0.0
  %510 = vmatpush1.xpose.msra.mxu0 0.0
  %511 = vmatprep.subr.mxu0 0.0
  %512 = vmatpush1.xpose.msra.mxu0 0.0
  %513 = vmatprep.subr.mxu0 0.0
  %514 = vmatpush1.xpose.msra.mxu0 0.0
  %515 = vmatprep.subr.mxu0 0.0
  %516 = vmatpush1.xpose.msra.mxu0 0.0
  %517 = vmatprep.subr.mxu0 0.0
  %518 = vmatpush1.xpose.msra.mxu0 0.0
  %519 = vmatprep.subr.mxu0 0.0
  %520 = vmatpush1.xpose.msra.mxu0 0.0
  %521 = vmatprep.subr.mxu0 0.0
  %522 = vmatpush1.xpose.msra.mxu0 0.0
  %523 = vmatprep.subr.mxu0 0.0
  %524 = vmatpush1.xpose.msra.mxu0 0.0
  %525 = vmatprep.subr.mxu0 0.0
  %526 = vmatpush1.xpose.msra.mxu0 0.0
  %527 = vmatprep.subr.mxu0 0.0
  %528 = vmatpush1.xpose.msra.mxu0 0.0
  %529 = vmatprep.subr.mxu0 0.0
  %530 = vmatpush1.xpose.msra.mxu0 0.0
  %531 = vmatprep.subr.mxu0 0.0
  %532 = vmatpush1.xpose.msra.mxu0 0.0
  %533 = vmatprep.subr.mxu0 0.0
  %534 = vmatpush1.xpose.msra.mxu0 0.0
  %535 = vmatprep.subr.mxu0 0.0
  %536 = vmatpush1.xpose.msra.mxu0 0.0
  %537 = vmatprep.subr.mxu0 0.0
  %538 = vmatpush1.xpose.msra.mxu0 0.0
  %539 = vmatprep.subr.mxu0 0.0
  %540 = vmatpush1.xpose.msra.mxu0 0.0
  %541 = vmatprep.subr.mxu0 0.0
  %542 = vmatpush1.xpose.msra.mxu0 0.0
  %543 = vmatprep.subr.mxu0 0.0
  %544 = vmatpush1.xpose.msra.mxu0 0.0
  %545 = vmatprep.subr.mxu0 0.0
  %546 = vmatpush1.xpose.msra.mxu0 0.0
  %547 = vmatprep.subr.mxu0 0.0
  %548 = vmatpush1.xpose.msra.mxu0 0.0
  %549 = vmatprep.subr.mxu0 0.0
  %550 = vmatpush1.xpose.msra.mxu0 0.0
  %551 = vmatprep.subr.mxu0 0.0
  %552 = vmatpush1.xpose.msra.mxu0 0.0
  %553 = vmatprep.subr.mxu0 0.0
  %554 = vmatpush1.xpose.msra.mxu0 0.0
  %555 = vmatprep.subr.mxu0 0.0
  %556 = vmatpush1.xpose.msra.mxu0 0.0
  %557 = vmatprep.mubr.f32.mxu0 0.0
  %558 = vmatmul.mubr.f32.gmra.mrb[0].mxu0 %v485
  %v559 = vpop.f32.mrb[0].mxu0
  %v560 = vadd.f32 %v446, %v559
  %v561 = vpop.f32.mrb[0].mxu0
  %562 = vdwg.mxu0
  %v564 = vsel %vm483, %v187, 0
  %v567 = vsel %vm483, %v351, 0
  %v570 = vsel %vm483, %v356, 0
  %572 = vmatprep.subr.mxu0 0.0
  %573 = vmatpush1.xpose.msra.mxu0 %v567
  %574 = vmatprep.subr.mxu0 0.0
  %575 = vmatpush1.xpose.msra.mxu0 %v570
  %576 = vmatprep.subr.mxu0 0.0
  %577 = vmatpush1.xpose.msra.mxu0 0.0
  %578 = vmatprep.subr.mxu0 0.0
  %579 = vmatpush1.xpose.msra.mxu0 0.0
  %580 = vmatprep.subr.mxu0 0.0
  %581 = vmatpush1.xpose.msra.mxu0 0.0
  %582 = vmatprep.subr.mxu0 0.0
  %583 = vmatpush1.xpose.msra.mxu0 0.0
  %584 = vmatprep.subr.mxu0 0.0
  %585 = vmatpush1.xpose.msra.mxu0 0.0
  %586 = vmatprep.subr.mxu0 0.0
  %587 = vmatpush1.xpose.msra.mxu0 0.0
  %588 = vmatprep.subr.mxu0 0.0
  %589 = vmatpush1.xpose.msra.mxu0 0.0
  %590 = vmatprep.subr.mxu0 0.0
  %591 = vmatpush1.xpose.msra.mxu0 0.0
  %592 = vmatprep.subr.mxu0 0.0
  %593 = vmatpush1.xpose.msra.mxu0 0.0
  %594 = vmatprep.subr.mxu0 0.0
  %595 = vmatpush1.xpose.msra.mxu0 0.0
  %596 = vmatprep.subr.mxu0 0.0
  %597 = vmatpush1.xpose.msra.mxu0 0.0
  %598 = vmatprep.subr.mxu0 0.0
  %599 = vmatpush1.xpose.msra.mxu0 0.0
  %600 = vmatprep.subr.mxu0 0.0
  %601 = vmatpush1.xpose.msra.mxu0 0.0
  %602 = vmatprep.subr.mxu0 0.0
  %603 = vmatpush1.xpose.msra.mxu0 0.0
  %604 = vmatprep.subr.mxu0 0.0
  %605 = vmatpush1.xpose.msra.mxu0 0.0
  %606 = vmatprep.subr.mxu0 0.0
  %607 = vmatpush1.xpose.msra.mxu0 0.0
  %608 = vmatprep.subr.mxu0 0.0
  %609 = vmatpush1.xpose.msra.mxu0 0.0
  %610 = vmatprep.subr.mxu0 0.0
  %611 = vmatpush1.xpose.msra.mxu0 0.0
  %612 = vmatprep.subr.mxu0 0.0
  %613 = vmatpush1.xpose.msra.mxu0 0.0
  %614 = vmatprep.subr.mxu0 0.0
  %615 = vmatpush1.xpose.msra.mxu0 0.0
  %616 = vmatprep.subr.mxu0 0.0
  %617 = vmatpush1.xpose.msra.mxu0 0.0
  %618 = vmatprep.subr.mxu0 0.0
  %619 = vmatpush1.xpose.msra.mxu0 0.0
  %620 = vmatprep.subr.mxu0 0.0
  %621 = vmatpush1.xpose.msra.mxu0 0.0
  %622 = vmatprep.subr.mxu0 0.0
  %623 = vmatpush1.xpose.msra.mxu0 0.0
  %624 = vmatprep.subr.mxu0 0.0
  %625 = vmatpush1.xpose.msra.mxu0 0.0
  %626 = vmatprep.subr.mxu0 0.0
  %627 = vmatpush1.xpose.msra.mxu0 0.0
  %628 = vmatprep.subr.mxu0 0.0
  %629 = vmatpush1.xpose.msra.mxu0 0.0
  %630 = vmatprep.subr.mxu0 0.0
  %631 = vmatpush1.xpose.msra.mxu0 0.0
  %632 = vmatprep.subr.mxu0 0.0
  %633 = vmatpush1.xpose.msra.mxu0 0.0
  %634 = vmatprep.subr.mxu0 0.0
  %635 = vmatpush1.xpose.msra.mxu0 0.0
  %636 = vmatprep.mubr.f32.mxu0 0.0
  %637 = vmatmul.mubr.f32.gmra.mrb[0].mxu0 %v564
  %v638 = vpop.f32.mrb[0].mxu0
  %v639 = vadd.f32 %v450, %v638
  %v640 = vpop.f32.mrb[0].mxu0
  %641 = vdwg.mxu0
  %v643 = vsel %vm483, %v192, 0
  %v646 = vsel %vm483, %v361, 0
  %v649 = vsel %vm483, %v366, 0
  %651 = vmatprep.subr.mxu0 0.0
  %652 = vmatpush1.xpose.msra.mxu0 %v646
  %653 = vmatprep.subr.mxu0 0.0
  %654 = vmatpush1.xpose.msra.mxu0 %v649
  %655 = vmatprep.subr.mxu0 0.0
  %656 = vmatpush1.xpose.msra.mxu0 0.0
  %657 = vmatprep.subr.mxu0 0.0
  %658 = vmatpush1.xpose.msra.mxu0 0.0
  %659 = vmatprep.subr.mxu0 0.0
  %660 = vmatpush1.xpose.msra.mxu0 0.0
  %661 = vmatprep.subr.mxu0 0.0
  %662 = vmatpush1.xpose.msra.mxu0 0.0
  %663 = vmatprep.subr.mxu0 0.0
  %664 = vmatpush1.xpose.msra.mxu0 0.0
  %665 = vmatprep.subr.mxu0 0.0
  %666 = vmatpush1.xpose.msra.mxu0 0.0
  %667 = vmatprep.subr.mxu0 0.0
  %668 = vmatpush1.xpose.msra.mxu0 0.0
  %669 = vmatprep.subr.mxu0 0.0
  %670 = vmatpush1.xpose.msra.mxu0 0.0
  %671 = vmatprep.subr.mxu0 0.0
  %672 = vmatpush1.xpose.msra.mxu0 0.0
  %673 = vmatprep.subr.mxu0 0.0
  %674 = vmatpush1.xpose.msra.mxu0 0.0
  %675 = vmatprep.subr.mxu0 0.0
  %676 = vmatpush1.xpose.msra.mxu0 0.0
  %677 = vmatprep.subr.mxu0 0.0
  %678 = vmatpush1.xpose.msra.mxu0 0.0
  %679 = vmatprep.subr.mxu0 0.0
  %680 = vmatpush1.xpose.msra.mxu0 0.0
  %681 = vmatprep.subr.mxu0 0.0
  %682 = vmatpush1.xpose.msra.mxu0 0.0
  %683 = vmatprep.subr.mxu0 0.0
  %684 = vmatpush1.xpose.msra.mxu0 0.0
  %685 = vmatprep.subr.mxu0 0.0
  %686 = vmatpush1.xpose.msra.mxu0 0.0
  %687 = vmatprep.subr.mxu0 0.0
  %688 = vmatpush1.xpose.msra.mxu0 0.0
  %689 = vmatprep.subr.mxu0 0.0
  %690 = vmatpush1.xpose.msra.mxu0 0.0
  %691 = vmatprep.subr.mxu0 0.0
  %692 = vmatpush1.xpose.msra.mxu0 0.0
  %693 = vmatprep.subr.mxu0 0.0
  %694 = vmatpush1.xpose.msra.mxu0 0.0
  %695 = vmatprep.subr.mxu0 0.0
  %696 = vmatpush1.xpose.msra.mxu0 0.0
  %697 = vmatprep.subr.mxu0 0.0
  %698 = vmatpush1.xpose.msra.mxu0 0.0
  %699 = vmatprep.subr.mxu0 0.0
  %700 = vmatpush1.xpose.msra.mxu0 0.0
  %701 = vmatprep.subr.mxu0 0.0
  %702 = vmatpush1.xpose.msra.mxu0 0.0
  %703 = vmatprep.subr.mxu0 0.0
  %704 = vmatpush1.xpose.msra.mxu0 0.0
  %705 = vmatprep.subr.mxu0 0.0
  %706 = vmatpush1.xpose.msra.mxu0 0.0
  %707 = vmatprep.subr.mxu0 0.0
  %708 = vmatpush1.xpose.msra.mxu0 0.0
  %709 = vmatprep.subr.mxu0 0.0
  %710 = vmatpush1.xpose.msra.mxu0 0.0
  %711 = vmatprep.subr.mxu0 0.0
  %712 = vmatpush1.xpose.msra.mxu0 0.0
  %713 = vmatprep.subr.mxu0 0.0
  %714 = vmatpush1.xpose.msra.mxu0 0.0
  %715 = vmatprep.mubr.f32.mxu0 0.0
  %716 = vmatmul.mubr.f32.gmra.mrb[0].mxu0 %v643
  %v717 = vpop.f32.mrb[0].mxu0
  %v718 = vadd.f32 %v454, %v717
  %v719 = vpop.f32.mrb[0].mxu0
  %720 = vdwg.mxu0
  %v722 = vsel %vm483, %v197, 0
  %v725 = vsel %vm483, %v371, 0
  %v728 = vsel %vm483, %v376, 0
  %730 = vmatprep.subr.mxu0 0.0
  %731 = vmatpush1.xpose.msra.mxu0 %v725
  %732 = vmatprep.subr.mxu0 0.0
  %733 = vmatpush1.xpose.msra.mxu0 %v728
  %734 = vmatprep.subr.mxu0 0.0
  %735 = vmatpush1.xpose.msra.mxu0 0.0
  %736 = vmatprep.subr.mxu0 0.0
  %737 = vmatpush1.xpose.msra.mxu0 0.0
  %738 = vmatprep.subr.mxu0 0.0
  %739 = vmatpush1.xpose.msra.mxu0 0.0
  %740 = vmatprep.subr.mxu0 0.0
  %741 = vmatpush1.xpose.msra.mxu0 0.0
  %742 = vmatprep.subr.mxu0 0.0
  %743 = vmatpush1.xpose.msra.mxu0 0.0
  %744 = vmatprep.subr.mxu0 0.0
  %745 = vmatpush1.xpose.msra.mxu0 0.0
  %746 = vmatprep.subr.mxu0 0.0
  %747 = vmatpush1.xpose.msra.mxu0 0.0
  %748 = vmatprep.subr.mxu0 0.0
  %749 = vmatpush1.xpose.msra.mxu0 0.0
  %750 = vmatprep.subr.mxu0 0.0
  %751 = vmatpush1.xpose.msra.mxu0 0.0
  %752 = vmatprep.subr.mxu0 0.0
  %753 = vmatpush1.xpose.msra.mxu0 0.0
  %754 = vmatprep.subr.mxu0 0.0
  %755 = vmatpush1.xpose.msra.mxu0 0.0
  %756 = vmatprep.subr.mxu0 0.0
  %757 = vmatpush1.xpose.msra.mxu0 0.0
  %758 = vmatprep.subr.mxu0 0.0
  %759 = vmatpush1.xpose.msra.mxu0 0.0
  %760 = vmatprep.subr.mxu0 0.0
  %761 = vmatpush1.xpose.msra.mxu0 0.0
  %762 = vmatprep.subr.mxu0 0.0
  %763 = vmatpush1.xpose.msra.mxu0 0.0
  %764 = vmatprep.subr.mxu0 0.0
  %765 = vmatpush1.xpose.msra.mxu0 0.0
  %766 = vmatprep.subr.mxu0 0.0
  %767 = vmatpush1.xpose.msra.mxu0 0.0
  %768 = vmatprep.subr.mxu0 0.0
  %769 = vmatpush1.xpose.msra.mxu0 0.0
  %770 = vmatprep.subr.mxu0 0.0
  %771 = vmatpush1.xpose.msra.mxu0 0.0
  %772 = vmatprep.subr.mxu0 0.0
  %773 = vmatpush1.xpose.msra.mxu0 0.0
  %774 = vmatprep.subr.mxu0 0.0
  %775 = vmatpush1.xpose.msra.mxu0 0.0
  %776 = vmatprep.subr.mxu0 0.0
  %777 = vmatpush1.xpose.msra.mxu0 0.0
  %778 = vmatprep.subr.mxu0 0.0
  %779 = vmatpush1.xpose.msra.mxu0 0.0
  %780 = vmatprep.subr.mxu0 0.0
  %781 = vmatpush1.xpose.msra.mxu0 0.0
  %782 = vmatprep.subr.mxu0 0.0
  %783 = vmatpush1.xpose.msra.mxu0 0.0
  %784 = vmatprep.subr.mxu0 0.0
  %785 = vmatpush1.xpose.msra.mxu0 0.0
  %786 = vmatprep.subr.mxu0 0.0
  %787 = vmatpush1.xpose.msra.mxu0 0.0
  %788 = vmatprep.subr.mxu0 0.0
  %789 = vmatpush1.xpose.msra.mxu0 0.0
  %790 = vmatprep.subr.mxu0 0.0
  %791 = vmatpush1.xpose.msra.mxu0 0.0
  %792 = vmatprep.subr.mxu0 0.0
  %793 = vmatpush1.xpose.msra.mxu0 0.0
  %794 = vmatprep.mubr.f32.mxu0 0.0
  %795 = vmatmul.mubr.f32.gmra.mrb[0].mxu0 %v722
  %v796 = vpop.f32.mrb[0].mxu0
  %v797 = vadd.f32 %v458, %v796
  %v798 = vpop.f32.mrb[0].mxu0
  %799 = vdwg.mxu0
  %v801 = vsel %vm483, %v202, 0
  %v804 = vsel %vm483, %v381, 0
  %v807 = vsel %vm483, %v386, 0
  %809 = vmatprep.subr.mxu0 0.0
  %810 = vmatpush1.xpose.msra.mxu0 %v804
  %811 = vmatprep.subr.mxu0 0.0
  %812 = vmatpush1.xpose.msra.mxu0 %v807
  %813 = vmatprep.subr.mxu0 0.0
  %814 = vmatpush1.xpose.msra.mxu0 0.0
  %815 = vmatprep.subr.mxu0 0.0
  %816 = vmatpush1.xpose.msra.mxu0 0.0
  %817 = vmatprep.subr.mxu0 0.0
  %818 = vmatpush1.xpose.msra.mxu0 0.0
  %819 = vmatprep.subr.mxu0 0.0
  %820 = vmatpush1.xpose.msra.mxu0 0.0
  %821 = vmatprep.subr.mxu0 0.0
  %822 = vmatpush1.xpose.msra.mxu0 0.0
  %823 = vmatprep.subr.mxu0 0.0
  %824 = vmatpush1.xpose.msra.mxu0 0.0
  %825 = vmatprep.subr.mxu0 0.0
  %826 = vmatpush1.xpose.msra.mxu0 0.0
  %827 = vmatprep.subr.mxu0 0.0
  %828 = vmatpush1.xpose.msra.mxu0 0.0
  %829 = vmatprep.subr.mxu0 0.0
  %830 = vmatpush1.xpose.msra.mxu0 0.0
  %831 = vmatprep.subr.mxu0 0.0
  %832 = vmatpush1.xpose.msra.mxu0 0.0
  %833 = vmatprep.subr.mxu0 0.0
  %834 = vmatpush1.xpose.msra.mxu0 0.0
  %835 = vmatprep.subr.mxu0 0.0
  %836 = vmatpush1.xpose.msra.mxu0 0.0
  %837 = vmatprep.subr.mxu0 0.0
  %838 = vmatpush1.xpose.msra.mxu0 0.0
  %839 = vmatprep.subr.mxu0 0.0
  %840 = vmatpush1.xpose.msra.mxu0 0.0
  %841 = vmatprep.subr.mxu0 0.0
  %842 = vmatpush1.xpose.msra.mxu0 0.0
  %843 = vmatprep.subr.mxu0 0.0
  %844 = vmatpush1.xpose.msra.mxu0 0.0
  %845 = vmatprep.subr.mxu0 0.0
  %846 = vmatpush1.xpose.msra.mxu0 0.0
  %847 = vmatprep.subr.mxu0 0.0
  %848 = vmatpush1.xpose.msra.mxu0 0.0
  %849 = vmatprep.subr.mxu0 0.0
  %850 = vmatpush1.xpose.msra.mxu0 0.0
  %851 = vmatprep.subr.mxu0 0.0
  %852 = vmatpush1.xpose.msra.mxu0 0.0
  %853 = vmatprep.subr.mxu0 0.0
  %854 = vmatpush1.xpose.msra.mxu0 0.0
  %855 = vmatprep.subr.mxu0 0.0
  %856 = vmatpush1.xpose.msra.mxu0 0.0
  %857 = vmatprep.subr.mxu0 0.0
  %858 = vmatpush1.xpose.msra.mxu0 0.0
  %859 = vmatprep.subr.mxu0 0.0
  %860 = vmatpush1.xpose.msra.mxu0 0.0
  %861 = vmatprep.subr.mxu0 0.0
  %862 = vmatpush1.xpose.msra.mxu0 0.0
  %863 = vmatprep.subr.mxu0 0.0
  %864 = vmatpush1.xpose.msra.mxu0 0.0
  %865 = vmatprep.subr.mxu0 0.0
  %866 = vmatpush1.xpose.msra.mxu0 0.0
  %867 = vmatprep.subr.mxu0 0.0
  %868 = vmatpush1.xpose.msra.mxu0 0.0
  %869 = vmatprep.subr.mxu0 0.0
  %870 = vmatpush1.xpose.msra.mxu0 0.0
  %871 = vmatprep.subr.mxu0 0.0
  %872 = vmatpush1.xpose.msra.mxu0 0.0
  %873 = vmatprep.mubr.f32.mxu0 0.0
  %874 = vmatmul.mubr.f32.gmra.mrb[0].mxu0 %v801
  %v875 = vpop.f32.mrb[0].mxu0
  %v876 = vadd.f32 %v462, %v875
  %v877 = vpop.f32.mrb[0].mxu0
  %878 = vdwg.mxu0
  %v880 = vsel %vm483, %v207, 0
  %v883 = vsel %vm483, %v391, 0
  %v886 = vsel %vm483, %v396, 0
  %888 = vmatprep.subr.mxu0 0.0
  %889 = vmatpush1.xpose.msra.mxu0 %v883
  %890 = vmatprep.subr.mxu0 0.0
  %891 = vmatpush1.xpose.msra.mxu0 %v886
  %892 = vmatprep.subr.mxu0 0.0
  %893 = vmatpush1.xpose.msra.mxu0 0.0
  %894 = vmatprep.subr.mxu0 0.0
  %895 = vmatpush1.xpose.msra.mxu0 0.0
  %896 = vmatprep.subr.mxu0 0.0
  %897 = vmatpush1.xpose.msra.mxu0 0.0
  %898 = vmatprep.subr.mxu0 0.0
  %899 = vmatpush1.xpose.msra.mxu0 0.0
  %900 = vmatprep.subr.mxu0 0.0
  %901 = vmatpush1.xpose.msra.mxu0 0.0
  %902 = vmatprep.subr.mxu0 0.0
  %903 = vmatpush1.xpose.msra.mxu0 0.0
  %904 = vmatprep.subr.mxu0 0.0
  %905 = vmatpush1.xpose.msra.mxu0 0.0
  %906 = vmatprep.subr.mxu0 0.0
  %907 = vmatpush1.xpose.msra.mxu0 0.0
  %908 = vmatprep.subr.mxu0 0.0
  %909 = vmatpush1.xpose.msra.mxu0 0.0
  %910 = vmatprep.subr.mxu0 0.0
  %911 = vmatpush1.xpose.msra.mxu0 0.0
  %912 = vmatprep.subr.mxu0 0.0
  %913 = vmatpush1.xpose.msra.mxu0 0.0
  %914 = vmatprep.subr.mxu0 0.0
  %915 = vmatpush1.xpose.msra.mxu0 0.0
  %916 = vmatprep.subr.mxu0 0.0
  %917 = vmatpush1.xpose.msra.mxu0 0.0
  %918 = vmatprep.subr.mxu0 0.0
  %919 = vmatpush1.xpose.msra.mxu0 0.0
  %920 = vmatprep.subr.mxu0 0.0
  %921 = vmatpush1.xpose.msra.mxu0 0.0
  %922 = vmatprep.subr.mxu0 0.0
  %923 = vmatpush1.xpose.msra.mxu0 0.0
  %924 = vmatprep.subr.mxu0 0.0
  %925 = vmatpush1.xpose.msra.mxu0 0.0
  %926 = vmatprep.subr.mxu0 0.0
  %927 = vmatpush1.xpose.msra.mxu0 0.0
  %928 = vmatprep.subr.mxu0 0.0
  %929 = vmatpush1.xpose.msra.mxu0 0.0
  %930 = vmatprep.subr.mxu0 0.0
  %931 = vmatpush1.xpose.msra.mxu0 0.0
  %932 = vmatprep.subr.mxu0 0.0
  %933 = vmatpush1.xpose.msra.mxu0 0.0
  %934 = vmatprep.subr.mxu0 0.0
  %935 = vmatpush1.xpose.msra.mxu0 0.0
  %936 = vmatprep.subr.mxu0 0.0
  %937 = vmatpush1.xpose.msra.mxu0 0.0
  %938 = vmatprep.subr.mxu0 0.0
  %939 = vmatpush1.xpose.msra.mxu0 0.0
  %940 = vmatprep.subr.mxu0 0.0
  %941 = vmatpush1.xpose.msra.mxu0 0.0
  %942 = vmatprep.subr.mxu0 0.0
  %943 = vmatpush1.xpose.msra.mxu0 0.0
  %944 = vmatprep.subr.mxu0 0.0
  %945 = vmatpush1.xpose.msra.mxu0 0.0
  %946 = vmatprep.subr.mxu0 0.0
  %947 = vmatpush1.xpose.msra.mxu0 0.0
  %948 = vmatprep.subr.mxu0 0.0
  %949 = vmatpush1.xpose.msra.mxu0 0.0
  %950 = vmatprep.subr.mxu0 0.0
  %951 = vmatpush1.xpose.msra.mxu0 0.0
  %952 = vmatprep.mubr.f32.mxu0 0.0
  %953 = vmatmul.mubr.f32.gmra.mrb[0].mxu0 %v880
  %v954 = vpop.f32.mrb[0].mxu0
  %v955 = vadd.f32 %v466, %v954
  %v956 = vpop.f32.mrb[0].mxu0
  %957 = vdwg.mxu0
  %v959 = vsel %vm483, %v212, 0
  %v962 = vsel %vm483, %v401, 0
  %v965 = vsel %vm483, %v406, 0
  %967 = vmatprep.subr.mxu0 0.0
  %968 = vmatpush1.xpose.msra.mxu0 %v962
  %969 = vmatprep.subr.mxu0 0.0
  %970 = vmatpush1.xpose.msra.mxu0 %v965
  %971 = vmatprep.subr.mxu0 0.0
  %972 = vmatpush1.xpose.msra.mxu0 0.0
  %973 = vmatprep.subr.mxu0 0.0
  %974 = vmatpush1.xpose.msra.mxu0 0.0
  %975 = vmatprep.subr.mxu0 0.0
  %976 = vmatpush1.xpose.msra.mxu0 0.0
  %977 = vmatprep.subr.mxu0 0.0
  %978 = vmatpush1.xpose.msra.mxu0 0.0
  %979 = vmatprep.subr.mxu0 0.0
  %980 = vmatpush1.xpose.msra.mxu0 0.0
  %981 = vmatprep.subr.mxu0 0.0
  %982 = vmatpush1.xpose.msra.mxu0 0.0
  %983 = vmatprep.subr.mxu0 0.0
  %984 = vmatpush1.xpose.msra.mxu0 0.0
  %985 = vmatprep.subr.mxu0 0.0
  %986 = vmatpush1.xpose.msra.mxu0 0.0
  %987 = vmatprep.subr.mxu0 0.0
  %988 = vmatpush1.xpose.msra.mxu0 0.0
  %989 = vmatprep.subr.mxu0 0.0
  %990 = vmatpush1.xpose.msra.mxu0 0.0
  %991 = vmatprep.subr.mxu0 0.0
  %992 = vmatpush1.xpose.msra.mxu0 0.0
  %993 = vmatprep.subr.mxu0 0.0
  %994 = vmatpush1.xpose.msra.mxu0 0.0
  %995 = vmatprep.subr.mxu0 0.0
  %996 = vmatpush1.xpose.msra.mxu0 0.0
  %997 = vmatprep.subr.mxu0 0.0
  %998 = vmatpush1.xpose.msra.mxu0 0.0
  %999 = vmatprep.subr.mxu0 0.0
  %1000 = vmatpush1.xpose.msra.mxu0 0.0
  %1001 = vmatprep.subr.mxu0 0.0
  %1002 = vmatpush1.xpose.msra.mxu0 0.0
  %1003 = vmatprep.subr.mxu0 0.0
  %1004 = vmatpush1.xpose.msra.mxu0 0.0
  %1005 = vmatprep.subr.mxu0 0.0
  %1006 = vmatpush1.xpose.msra.mxu0 0.0
  %1007 = vmatprep.subr.mxu0 0.0
  %1008 = vmatpush1.xpose.msra.mxu0 0.0
  %1009 = vmatprep.subr.mxu0 0.0
  %1010 = vmatpush1.xpose.msra.mxu0 0.0
  %1011 = vmatprep.subr.mxu0 0.0
  %1012 = vmatpush1.xpose.msra.mxu0 0.0
  %1013 = vmatprep.subr.mxu0 0.0
  %1014 = vmatpush1.xpose.msra.mxu0 0.0
  %1015 = vmatprep.subr.mxu0 0.0
  %1016 = vmatpush1.xpose.msra.mxu0 0.0
  %1017 = vmatprep.subr.mxu0 0.0
  %1018 = vmatpush1.xpose.msra.mxu0 0.0
  %1019 = vmatprep.subr.mxu0 0.0
  %1020 = vmatpush1.xpose.msra.mxu0 0.0
  %1021 = vmatprep.subr.mxu0 0.0
  %1022 = vmatpush1.xpose.msra.mxu0 0.0
  %1023 = vmatprep.subr.mxu0 0.0
  %1024 = vmatpush1.xpose.msra.mxu0 0.0
  %1025 = vmatprep.subr.mxu0 0.0
  %1026 = vmatpush1.xpose.msra.mxu0 0.0
  %1027 = vmatprep.subr.mxu0 0.0
  %1028 = vmatpush1.xpose.msra.mxu0 0.0
  %1029 = vmatprep.subr.mxu0 0.0
  %1030 = vmatpush1.xpose.msra.mxu0 0.0
  %1031 = vmatprep.mubr.f32.mxu0 0.0
  %1032 = vmatmul.mubr.f32.gmra.mrb[0].mxu0 %v959
  %v1033 = vpop.f32.mrb[0].mxu0
  %v1034 = vadd.f32 %v470, %v1033
  %v1035 = vpop.f32.mrb[0].mxu0
  %1036 = vdwg.mxu0
  %v1038 = vsel %vm483, %v217, 0
  %v1041 = vsel %vm483, %v411, 0
  %v1044 = vsel %vm483, %v416, 0
  %1046 = vmatprep.subr.mxu0 0.0
  %1047 = vmatpush1.xpose.msra.mxu0 %v1041
  %1048 = vmatprep.subr.mxu0 0.0
  %1049 = vmatpush1.xpose.msra.mxu0 %v1044
  %1050 = vmatprep.subr.mxu0 0.0
  %1051 = vmatpush1.xpose.msra.mxu0 0.0
  %1052 = vmatprep.subr.mxu0 0.0
  %1053 = vmatpush1.xpose.msra.mxu0 0.0
  %1054 = vmatprep.subr.mxu0 0.0
  %1055 = vmatpush1.xpose.msra.mxu0 0.0
  %1056 = vmatprep.subr.mxu0 0.0
  %1057 = vmatpush1.xpose.msra.mxu0 0.0
  %1058 = vmatprep.subr.mxu0 0.0
  %1059 = vmatpush1.xpose.msra.mxu0 0.0
  %1060 = vmatprep.subr.mxu0 0.0
  %1061 = vmatpush1.xpose.msra.mxu0 0.0
  %1062 = vmatprep.subr.mxu0 0.0
  %1063 = vmatpush1.xpose.msra.mxu0 0.0
  %1064 = vmatprep.subr.mxu0 0.0
  %1065 = vmatpush1.xpose.msra.mxu0 0.0
  %1066 = vmatprep.subr.mxu0 0.0
  %1067 = vmatpush1.xpose.msra.mxu0 0.0
  %1068 = vmatprep.subr.mxu0 0.0
  %1069 = vmatpush1.xpose.msra.mxu0 0.0
  %1070 = vmatprep.subr.mxu0 0.0
  %1071 = vmatpush1.xpose.msra.mxu0 0.0
  %1072 = vmatprep.subr.mxu0 0.0
  %1073 = vmatpush1.xpose.msra.mxu0 0.0
  %1074 = vmatprep.subr.mxu0 0.0
  %1075 = vmatpush1.xpose.msra.mxu0 0.0
  %1076 = vmatprep.subr.mxu0 0.0
  %1077 = vmatpush1.xpose.msra.mxu0 0.0
  %1078 = vmatprep.subr.mxu0 0.0
  %1079 = vmatpush1.xpose.msra.mxu0 0.0
  %1080 = vmatprep.subr.mxu0 0.0
  %1081 = vmatpush1.xpose.msra.mxu0 0.0
  %1082 = vmatprep.subr.mxu0 0.0
  %1083 = vmatpush1.xpose.msra.mxu0 0.0
  %1084 = vmatprep.subr.mxu0 0.0
  %1085 = vmatpush1.xpose.msra.mxu0 0.0
  %1086 = vmatprep.subr.mxu0 0.0
  %1087 = vmatpush1.xpose.msra.mxu0 0.0
  %1088 = vmatprep.subr.mxu0 0.0
  %1089 = vmatpush1.xpose.msra.mxu0 0.0
  %1090 = vmatprep.subr.mxu0 0.0
  %1091 = vmatpush1.xpose.msra.mxu0 0.0
  %1092 = vmatprep.subr.mxu0 0.0
  %1093 = vmatpush1.xpose.msra.mxu0 0.0
  %1094 = vmatprep.subr.mxu0 0.0
  %1095 = vmatpush1.xpose.msra.mxu0 0.0
  %1096 = vmatprep.subr.mxu0 0.0
  %1097 = vmatpush1.xpose.msra.mxu0 0.0
  %1098 = vmatprep.subr.mxu0 0.0
  %1099 = vmatpush1.xpose.msra.mxu0 0.0
  %1100 = vmatprep.subr.mxu0 0.0
  %1101 = vmatpush1.xpose.msra.mxu0 0.0
  %1102 = vmatprep.subr.mxu0 0.0
  %1103 = vmatpush1.xpose.msra.mxu0 0.0
  %1104 = vmatprep.subr.mxu0 0.0
  %1105 = vmatpush1.xpose.msra.mxu0 0.0
  %1106 = vmatprep.subr.mxu0 0.0
  %1107 = vmatpush1.xpose.msra.mxu0 0.0
  %1108 = vmatprep.subr.mxu0 0.0
  %1109 = vmatpush1.xpose.msra.mxu0 0.0
  %1110 = vmatprep.mubr.f32.mxu0 0.0
  %1111 = vmatmul.mubr.f32.gmra.mrb[0].mxu0 %v1038
  %v1112 = vpop.f32.mrb[0].mxu0
  %v1113 = vadd.f32 %v474, %v1112
  %v1114 = vpop.f32.mrb[0].mxu0
  %1115 = vdwg.mxu0
  %vm1116 = vcmask 130048
  %v1117 = vsel %vm1116, %v560, -inf
  %1118 = vmax.xlane.f32.xlu0 %v1117
  %v1119 = vpop.xlane.xlu0 %1118
  %v1120 = vsel %vm1116, %v639, -inf
  %1121 = vmax.xlane.f32.xlu0 %v1120
  %v1122 = vpop.xlane.xlu0 %1121
  %v1123 = vsel %vm1116, %v718, -inf
  %1124 = vmax.xlane.f32.xlu0 %v1123
  %v1125 = vpop.xlane.xlu0 %1124
  %v1126 = vsel %vm1116, %v797, -inf
  %1127 = vmax.xlane.f32.xlu0 %v1126
  %v1128 = vpop.xlane.xlu0 %1127
  %v1129 = vsel %vm1116, %v876, -inf
  %1130 = vmax.xlane.f32.xlu0 %v1129
  %v1131 = vpop.xlane.xlu0 %1130
  %v1132 = vsel %vm1116, %v955, -inf
  %1133 = vmax.xlane.f32.xlu0 %v1132
  %v1134 = vpop.xlane.xlu0 %1133
  %v1135 = vsel %vm1116, %v1034, -inf
  %1136 = vmax.xlane.f32.xlu0 %v1135
  %v1137 = vpop.xlane.xlu0 %1136
  %v1138 = vsel %vm1116, %v1113, -inf
  %1139 = vmax.xlane.f32.xlu0 %v1138
  %v1140 = vpop.xlane.xlu0 %1139
  %v1141 = vsub.f32 %v560, %v1119
  %v1142 = vsub.f32 %v639, %v1122
  %v1143 = vsub.f32 %v718, %v1125
  %v1144 = vsub.f32 %v797, %v1128
  %v1145 = vsub.f32 %v876, %v1131
  %v1146 = vsub.f32 %v955, %v1134
  %v1147 = vsub.f32 %v1034, %v1137
  %v1148 = vsub.f32 %v1113, %v1140
  %v1149 = vmul.f32 %v1141, 1.442695
  %v1150 = vpow.pop %v1149
  %v1151 = vmul.f32 %v1142, 1.442695
  %v1152 = vpow.pop %v1151
  %v1153 = vmul.f32 %v1143, 1.442695
  %v1154 = vpow.pop %v1153
  %v1155 = vmul.f32 %v1144, 1.442695
  %v1156 = vpow.pop %v1155
  %v1157 = vmul.f32 %v1145, 1.442695
  %v1158 = vpow.pop %v1157
  %v1159 = vmul.f32 %v1146, 1.442695
  %v1160 = vpow.pop %v1159
  %v1161 = vmul.f32 %v1147, 1.442695
  %v1162 = vpow.pop %v1161
  %v1163 = vmul.f32 %v1148, 1.442695
  %v1164 = vpow.pop %v1163
  %v1165 = vsel %vm1116, %v1150, 0.0
  %1166 = vadd.xlane.f32.xlu0 %v1165
  %v1167 = vpop.xlane.xlu0 %1166
  %v1168 = vsel %vm1116, %v1152, 0.0
  %1169 = vadd.xlane.f32.xlu0 %v1168
  %v1170 = vpop.xlane.xlu0 %1169
  %v1171 = vsel %vm1116, %v1154, 0.0
  %1172 = vadd.xlane.f32.xlu0 %v1171
  %v1173 = vpop.xlane.xlu0 %1172
  %v1174 = vsel %vm1116, %v1156, 0.0
  %1175 = vadd.xlane.f32.xlu0 %v1174
  %v1176 = vpop.xlane.xlu0 %1175
  %v1177 = vsel %vm1116, %v1158, 0.0
  %1178 = vadd.xlane.f32.xlu0 %v1177
  %v1179 = vpop.xlane.xlu0 %1178
  %v1180 = vsel %vm1116, %v1160, 0.0
  %1181 = vadd.xlane.f32.xlu0 %v1180
  %v1182 = vpop.xlane.xlu0 %1181
  %v1183 = vsel %vm1116, %v1162, 0.0
  %1184 = vadd.xlane.f32.xlu0 %v1183
  %v1185 = vpop.xlane.xlu0 %1184
  %v1186 = vsel %vm1116, %v1164, 0.0
  %1187 = vadd.xlane.f32.xlu0 %v1186
  %v1188 = vpop.xlane.xlu0 %1187
  %v1189 = vrcp.pop %v1167
  %v1190 = vmul.f32 %v1150, %v1189
  %v1191 = vrcp.pop %v1170
  %v1192 = vmul.f32 %v1152, %v1191
  %v1193 = vrcp.pop %v1173
  %v1194 = vmul.f32 %v1154, %v1193
  %v1195 = vrcp.pop %v1176
  %v1196 = vmul.f32 %v1156, %v1195
  %v1197 = vrcp.pop %v1179
  %v1198 = vmul.f32 %v1158, %v1197
  %v1199 = vrcp.pop %v1182
  %v1200 = vmul.f32 %v1160, %v1199
  %v1201 = vrcp.pop %v1185
  %v1202 = vmul.f32 %v1162, %v1201
  %v1203 = vrcp.pop %v1188
  %v1204 = vmul.f32 %v1164, %v1203
  %1205 = vrot.lane.b32.xlu0 %v341, 96
  %v1206 = vpop.permute.xlu0 %1205
  %1207 = vrot.lane.b32.xlu0 %v346, 96
  %v1208 = vpop.permute.xlu0 %1207
  %v1212 = vsel %vm1116, %v1190, 0
  %1214 = vmatprep.subr.mxu0 0.0
  %1215 = vmatpush1.msra.mxu0 %v1206
  %1216 = vmatprep.subr.mxu0 0.0
  %1217 = vmatpush1.msra.mxu0 %v1208
  %1218 = vmatprep.subr.mxu0 0.0
  %1219 = vmatpush1.msra.mxu0 0.0
  %1220 = vmatprep.subr.mxu0 0.0
  %1221 = vmatpush1.msra.mxu0 0.0
  %1222 = vmatprep.subr.mxu0 0.0
  %1223 = vmatpush1.msra.mxu0 0.0
  %1224 = vmatprep.subr.mxu0 0.0
  %1225 = vmatpush1.msra.mxu0 0.0
  %1226 = vmatprep.subr.mxu0 0.0
  %1227 = vmatpush1.msra.mxu0 0.0
  %1228 = vmatprep.subr.mxu0 0.0
  %1229 = vmatpush1.msra.mxu0 0.0
  %1230 = vmatprep.subr.mxu0 0.0
  %1231 = vmatpush1.msra.mxu0 0.0
  %1232 = vmatprep.subr.mxu0 0.0
  %1233 = vmatpush1.msra.mxu0 0.0
  %1234 = vmatprep.subr.mxu0 0.0
  %1235 = vmatpush1.msra.mxu0 0.0
  %1236 = vmatprep.subr.mxu0 0.0
  %1237 = vmatpush1.msra.mxu0 0.0
  %1238 = vmatprep.subr.mxu0 0.0
  %1239 = vmatpush1.msra.mxu0 0.0
  %1240 = vmatprep.subr.mxu0 0.0
  %1241 = vmatpush1.msra.mxu0 0.0
  %1242 = vmatprep.subr.mxu0 0.0
  %1243 = vmatpush1.msra.mxu0 0.0
  %1244 = vmatprep.subr.mxu0 0.0
  %1245 = vmatpush1.msra.mxu0 0.0
  %1246 = vmatprep.subr.mxu0 0.0
  %1247 = vmatpush1.msra.mxu0 0.0
  %1248 = vmatprep.subr.mxu0 0.0
  %1249 = vmatpush1.msra.mxu0 0.0
  %1250 = vmatprep.subr.mxu0 0.0
  %1251 = vmatpush1.msra.mxu0 0.0
  %1252 = vmatprep.subr.mxu0 0.0
  %1253 = vmatpush1.msra.mxu0 0.0
  %1254 = vmatprep.subr.mxu0 0.0
  %1255 = vmatpush1.msra.mxu0 0.0
  %1256 = vmatprep.subr.mxu0 0.0
  %1257 = vmatpush1.msra.mxu0 0.0
  %1258 = vmatprep.subr.mxu0 0.0
  %1259 = vmatpush1.msra.mxu0 0.0
  %1260 = vmatprep.subr.mxu0 0.0
  %1261 = vmatpush1.msra.mxu0 0.0
  %1262 = vmatprep.subr.mxu0 0.0
  %1263 = vmatpush1.msra.mxu0 0.0
  %1264 = vmatprep.subr.mxu0 0.0
  %1265 = vmatpush1.msra.mxu0 0.0
  %1266 = vmatprep.subr.mxu0 0.0
  %1267 = vmatpush1.msra.mxu0 0.0
  %1268 = vmatprep.subr.mxu0 0.0
  %1269 = vmatpush1.msra.mxu0 0.0
  %1270 = vmatprep.subr.mxu0 0.0
  %1271 = vmatpush1.msra.mxu0 0.0
  %1272 = vmatprep.subr.mxu0 0.0
  %1273 = vmatpush1.msra.mxu0 0.0
  %1274 = vmatprep.subr.mxu0 0.0
  %1275 = vmatpush1.msra.mxu0 0.0
  %1276 = vmatprep.subr.mxu0 0.0
  %1277 = vmatpush1.msra.mxu0 0.0
  %1278 = vmatprep.mubr.f32.mxu0 0.0
  %1279 = vmatmul.mubr.f32.gmra.mrb[0].mxu0 %v1212
  %v1280 = vpop.f32.mrb[0].mxu0
  %v1281 = vadd.f32 0.0, %v1280
  %v1282 = vpop.f32.mrb[0].mxu0
  %1283 = vdwg.mxu0
  %1284 = vrot.lane.b32.xlu0 %v351, 96
  %v1285 = vpop.permute.xlu0 %1284
  %1286 = vrot.lane.b32.xlu0 %v356, 96
  %v1287 = vpop.permute.xlu0 %1286
  %v1291 = vsel %vm1116, %v1192, 0
  %1293 = vmatprep.subr.mxu0 0.0
  %1294 = vmatpush1.msra.mxu0 %v1285
  %1295 = vmatprep.subr.mxu0 0.0
  %1296 = vmatpush1.msra.mxu0 %v1287
  %1297 = vmatprep.subr.mxu0 0.0
  %1298 = vmatpush1.msra.mxu0 0.0
  %1299 = vmatprep.subr.mxu0 0.0
  %1300 = vmatpush1.msra.mxu0 0.0
  %1301 = vmatprep.subr.mxu0 0.0
  %1302 = vmatpush1.msra.mxu0 0.0
  %1303 = vmatprep.subr.mxu0 0.0
  %1304 = vmatpush1.msra.mxu0 0.0
  %1305 = vmatprep.subr.mxu0 0.0
  %1306 = vmatpush1.msra.mxu0 0.0
  %1307 = vmatprep.subr.mxu0 0.0
  %1308 = vmatpush1.msra.mxu0 0.0
  %1309 = vmatprep.subr.mxu0 0.0
  %1310 = vmatpush1.msra.mxu0 0.0
  %1311 = vmatprep.subr.mxu0 0.0
  %1312 = vmatpush1.msra.mxu0 0.0
  %1313 = vmatprep.subr.mxu0 0.0
  %1314 = vmatpush1.msra.mxu0 0.0
  %1315 = vmatprep.subr.mxu0 0.0
  %1316 = vmatpush1.msra.mxu0 0.0
  %1317 = vmatprep.subr.mxu0 0.0
  %1318 = vmatpush1.msra.mxu0 0.0
  %1319 = vmatprep.subr.mxu0 0.0
  %1320 = vmatpush1.msra.mxu0 0.0
  %1321 = vmatprep.subr.mxu0 0.0
  %1322 = vmatpush1.msra.mxu0 0.0
  %1323 = vmatprep.subr.mxu0 0.0
  %1324 = vmatpush1.msra.mxu0 0.0
  %1325 = vmatprep.subr.mxu0 0.0
  %1326 = vmatpush1.msra.mxu0 0.0
  %1327 = vmatprep.subr.mxu0 0.0
  %1328 = vmatpush1.msra.mxu0 0.0
  %1329 = vmatprep.subr.mxu0 0.0
  %1330 = vmatpush1.msra.mxu0 0.0
  %1331 = vmatprep.subr.mxu0 0.0
  %1332 = vmatpush1.msra.mxu0 0.0
  %1333 = vmatprep.subr.mxu0 0.0
  %1334 = vmatpush1.msra.mxu0 0.0
  %1335 = vmatprep.subr.mxu0 0.0
  %1336 = vmatpush1.msra.mxu0 0.0
  %1337 = vmatprep.subr.mxu0 0.0
  %1338 = vmatpush1.msra.mxu0 0.0
  %1339 = vmatprep.subr.mxu0 0.0
  %1340 = vmatpush1.msra.mxu0 0.0
  %1341 = vmatprep.subr.mxu0 0.0
  %1342 = vmatpush1.msra.mxu0 0.0
  %1343 = vmatprep.subr.mxu0 0.0
  %1344 = vmatpush1.msra.mxu0 0.0
  %1345 = vmatprep.subr.mxu0 0.0
  %1346 = vmatpush1.msra.mxu0 0.0
  %1347 = vmatprep.subr.mxu0 0.0
  %1348 = vmatpush1.msra.mxu0 0.0
  %1349 = vmatprep.subr.mxu0 0.0
  %1350 = vmatpush1.msra.mxu0 0.0
  %1351 = vmatprep.subr.mxu0 0.0
  %1352 = vmatpush1.msra.mxu0 0.0
  %1353 = vmatprep.subr.mxu0 0.0
  %1354 = vmatpush1.msra.mxu0 0.0
  %1355 = vmatprep.subr.mxu0 0.0
  %1356 = vmatpush1.msra.mxu0 0.0
  %1357 = vmatprep.mubr.f32.mxu0 0.0
  %1358 = vmatmul.mubr.f32.gmra.mrb[0].mxu0 %v1291
  %v1359 = vpop.f32.mrb[0].mxu0
  %v1360 = vadd.f32 0.0, %v1359
  %v1361 = vpop.f32.mrb[0].mxu0
  %1362 = vdwg.mxu0
  %1363 = vrot.lane.b32.xlu0 %v361, 96
  %v1364 = vpop.permute.xlu0 %1363
  %1365 = vrot.lane.b32.xlu0 %v366, 96
  %v1366 = vpop.permute.xlu0 %1365
  %v1370 = vsel %vm1116, %v1194, 0
  %1372 = vmatprep.subr.mxu0 0.0
  %1373 = vmatpush1.msra.mxu0 %v1364
  %1374 = vmatprep.subr.mxu0 0.0
  %1375 = vmatpush1.msra.mxu0 %v1366
  %1376 = vmatprep.subr.mxu0 0.0
  %1377 = vmatpush1.msra.mxu0 0.0
  %1378 = vmatprep.subr.mxu0 0.0
  %1379 = vmatpush1.msra.mxu0 0.0
  %1380 = vmatprep.subr.mxu0 0.0
  %1381 = vmatpush1.msra.mxu0 0.0
  %1382 = vmatprep.subr.mxu0 0.0
  %1383 = vmatpush1.msra.mxu0 0.0
  %1384 = vmatprep.subr.mxu0 0.0
  %1385 = vmatpush1.msra.mxu0 0.0
  %1386 = vmatprep.subr.mxu0 0.0
  %1387 = vmatpush1.msra.mxu0 0.0
  %1388 = vmatprep.subr.mxu0 0.0
  %1389 = vmatpush1.msra.mxu0 0.0
  %1390 = vmatprep.subr.mxu0 0.0
  %1391 = vmatpush1.msra.mxu0 0.0
  %1392 = vmatprep.subr.mxu0 0.0
  %1393 = vmatpush1.msra.mxu0 0.0
  %1394 = vmatprep.subr.mxu0 0.0
  %1395 = vmatpush1.msra.mxu0 0.0
  %1396 = vmatprep.subr.mxu0 0.0
  %1397 = vmatpush1.msra.mxu0 0.0
  %1398 = vmatprep.subr.mxu0 0.0
  %1399 = vmatpush1.msra.mxu0 0.0
  %1400 = vmatprep.subr.mxu0 0.0
  %1401 = vmatpush1.msra.mxu0 0.0
  %1402 = vmatprep.subr.mxu0 0.0
  %1403 = vmatpush1.msra.mxu0 0.0
  %1404 = vmatprep.subr.mxu0 0.0
  %1405 = vmatpush1.msra.mxu0 0.0
  %1406 = vmatprep.subr.mxu0 0.0
  %1407 = vmatpush1.msra.mxu0 0.0
  %1408 = vmatprep.subr.mxu0 0.0
  %1409 = vmatpush1.msra.mxu0 0.0
  %1410 = vmatprep.subr.mxu0 0.0
  %1411 = vmatpush1.msra.mxu0 0.0
  %1412 = vmatprep.subr.mxu0 0.0
  %1413 = vmatpush1.msra.mxu0 0.0
  %1414 = vmatprep.subr.mxu0 0.0
  %1415 = vmatpush1.msra.mxu0 0.0
  %1416 = vmatprep.subr.mxu0 0.0
  %1417 = vmatpush1.msra.mxu0 0.0
  %1418 = vmatprep.subr.mxu0 0.0
  %1419 = vmatpush1.msra.mxu0 0.0
  %1420 = vmatprep.subr.mxu0 0.0
  %1421 = vmatpush1.msra.mxu0 0.0
  %1422 = vmatprep.subr.mxu0 0.0
  %1423 = vmatpush1.msra.mxu0 0.0
  %1424 = vmatprep.subr.mxu0 0.0
  %1425 = vmatpush1.msra.mxu0 0.0
  %1426 = vmatprep.subr.mxu0 0.0
  %1427 = vmatpush1.msra.mxu0 0.0
  %1428 = vmatprep.subr.mxu0 0.0
  %1429 = vmatpush1.msra.mxu0 0.0
  %1430 = vmatprep.subr.mxu0 0.0
  %1431 = vmatpush1.msra.mxu0 0.0
  %1432 = vmatprep.subr.mxu0 0.0
  %1433 = vmatpush1.msra.mxu0 0.0
  %1434 = vmatprep.subr.mxu0 0.0
  %1435 = vmatpush1.msra.mxu0 0.0
  %1436 = vmatprep.mubr.f32.mxu0 0.0
  %1437 = vmatmul.mubr.f32.gmra.mrb[0].mxu0 %v1370
  %v1438 = vpop.f32.mrb[0].mxu0
  %v1439 = vadd.f32 0.0, %v1438
  %v1440 = vpop.f32.mrb[0].mxu0
  %1441 = vdwg.mxu0
  %1442 = vrot.lane.b32.xlu0 %v371, 96
  %v1443 = vpop.permute.xlu0 %1442
  %1444 = vrot.lane.b32.xlu0 %v376, 96
  %v1445 = vpop.permute.xlu0 %1444
  %v1449 = vsel %vm1116, %v1196, 0
  %1451 = vmatprep.subr.mxu0 0.0
  %1452 = vmatpush1.msra.mxu0 %v1443
  %1453 = vmatprep.subr.mxu0 0.0
  %1454 = vmatpush1.msra.mxu0 %v1445
  %1455 = vmatprep.subr.mxu0 0.0
  %1456 = vmatpush1.msra.mxu0 0.0
  %1457 = vmatprep.subr.mxu0 0.0
  %1458 = vmatpush1.msra.mxu0 0.0
  %1459 = vmatprep.subr.mxu0 0.0
  %1460 = vmatpush1.msra.mxu0 0.0
  %1461 = vmatprep.subr.mxu0 0.0
  %1462 = vmatpush1.msra.mxu0 0.0
  %1463 = vmatprep.subr.mxu0 0.0
  %1464 = vmatpush1.msra.mxu0 0.0
  %1465 = vmatprep.subr.mxu0 0.0
  %1466 = vmatpush1.msra.mxu0 0.0
  %1467 = vmatprep.subr.mxu0 0.0
  %1468 = vmatpush1.msra.mxu0 0.0
  %1469 = vmatprep.subr.mxu0 0.0
  %1470 = vmatpush1.msra.mxu0 0.0
  %1471 = vmatprep.subr.mxu0 0.0
  %1472 = vmatpush1.msra.mxu0 0.0
  %1473 = vmatprep.subr.mxu0 0.0
  %1474 = vmatpush1.msra.mxu0 0.0
  %1475 = vmatprep.subr.mxu0 0.0
  %1476 = vmatpush1.msra.mxu0 0.0
  %1477 = vmatprep.subr.mxu0 0.0
  %1478 = vmatpush1.msra.mxu0 0.0
  %1479 = vmatprep.subr.mxu0 0.0
  %1480 = vmatpush1.msra.mxu0 0.0
  %1481 = vmatprep.subr.mxu0 0.0
  %1482 = vmatpush1.msra.mxu0 0.0
  %1483 = vmatprep.subr.mxu0 0.0
  %1484 = vmatpush1.msra.mxu0 0.0
  %1485 = vmatprep.subr.mxu0 0.0
  %1486 = vmatpush1.msra.mxu0 0.0
  %1487 = vmatprep.subr.mxu0 0.0
  %1488 = vmatpush1.msra.mxu0 0.0
  %1489 = vmatprep.subr.mxu0 0.0
  %1490 = vmatpush1.msra.mxu0 0.0
  %1491 = vmatprep.subr.mxu0 0.0
  %1492 = vmatpush1.msra.mxu0 0.0
  %1493 = vmatprep.subr.mxu0 0.0
  %1494 = vmatpush1.msra.mxu0 0.0
  %1495 = vmatprep.subr.mxu0 0.0
  %1496 = vmatpush1.msra.mxu0 0.0
  %1497 = vmatprep.subr.mxu0 0.0
  %1498 = vmatpush1.msra.mxu0 0.0
  %1499 = vmatprep.subr.mxu0 0.0
  %1500 = vmatpush1.msra.mxu0 0.0
  %1501 = vmatprep.subr.mxu0 0.0
  %1502 = vmatpush1.msra.mxu0 0.0
  %1503 = vmatprep.subr.mxu0 0.0
  %1504 = vmatpush1.msra.mxu0 0.0
  %1505 = vmatprep.subr.mxu0 0.0
  %1506 = vmatpush1.msra.mxu0 0.0
  %1507 = vmatprep.subr.mxu0 0.0
  %1508 = vmatpush1.msra.mxu0 0.0
  %1509 = vmatprep.subr.mxu0 0.0
  %1510 = vmatpush1.msra.mxu0 0.0
  %1511 = vmatprep.subr.mxu0 0.0
  %1512 = vmatpush1.msra.mxu0 0.0
  %1513 = vmatprep.subr.mxu0 0.0
  %1514 = vmatpush1.msra.mxu0 0.0
  %1515 = vmatprep.mubr.f32.mxu0 0.0
  %1516 = vmatmul.mubr.f32.gmra.mrb[0].mxu0 %v1449
  %v1517 = vpop.f32.mrb[0].mxu0
  %v1518 = vadd.f32 0.0, %v1517
  %v1519 = vpop.f32.mrb[0].mxu0
  %1520 = vdwg.mxu0
  %1521 = vrot.lane.b32.xlu0 %v381, 96
  %v1522 = vpop.permute.xlu0 %1521
  %1523 = vrot.lane.b32.xlu0 %v386, 96
  %v1524 = vpop.permute.xlu0 %1523
  %v1528 = vsel %vm1116, %v1198, 0
  %1530 = vmatprep.subr.mxu0 0.0
  %1531 = vmatpush1.msra.mxu0 %v1522
  %1532 = vmatprep.subr.mxu0 0.0
  %1533 = vmatpush1.msra.mxu0 %v1524
  %1534 = vmatprep.subr.mxu0 0.0
  %1535 = vmatpush1.msra.mxu0 0.0
  %1536 = vmatprep.subr.mxu0 0.0
  %1537 = vmatpush1.msra.mxu0 0.0
  %1538 = vmatprep.subr.mxu0 0.0
  %1539 = vmatpush1.msra.mxu0 0.0
  %1540 = vmatprep.subr.mxu0 0.0
  %1541 = vmatpush1.msra.mxu0 0.0
  %1542 = vmatprep.subr.mxu0 0.0
  %1543 = vmatpush1.msra.mxu0 0.0
  %1544 = vmatprep.subr.mxu0 0.0
  %1545 = vmatpush1.msra.mxu0 0.0
  %1546 = vmatprep.subr.mxu0 0.0
  %1547 = vmatpush1.msra.mxu0 0.0
  %1548 = vmatprep.subr.mxu0 0.0
  %1549 = vmatpush1.msra.mxu0 0.0
  %1550 = vmatprep.subr.mxu0 0.0
  %1551 = vmatpush1.msra.mxu0 0.0
  %1552 = vmatprep.subr.mxu0 0.0
  %1553 = vmatpush1.msra.mxu0 0.0
  %1554 = vmatprep.subr.mxu0 0.0
  %1555 = vmatpush1.msra.mxu0 0.0
  %1556 = vmatprep.subr.mxu0 0.0
  %1557 = vmatpush1.msra.mxu0 0.0
  %1558 = vmatprep.subr.mxu0 0.0
  %1559 = vmatpush1.msra.mxu0 0.0
  %1560 = vmatprep.subr.mxu0 0.0
  %1561 = vmatpush1.msra.mxu0 0.0
  %1562 = vmatprep.subr.mxu0 0.0
  %1563 = vmatpush1.msra.mxu0 0.0
  %1564 = vmatprep.subr.mxu0 0.0
  %1565 = vmatpush1.msra.mxu0 0.0
  %1566 = vmatprep.subr.mxu0 0.0
  %1567 = vmatpush1.msra.mxu0 0.0
  %1568 = vmatprep.subr.mxu0 0.0
  %1569 = vmatpush1.msra.mxu0 0.0
  %1570 = vmatprep.subr.mxu0 0.0
  %1571 = vmatpush1.msra.mxu0 0.0
  %1572 = vmatprep.subr.mxu0 0.0
  %1573 = vmatpush1.msra.mxu0 0.0
  %1574 = vmatprep.subr.mxu0 0.0
  %1575 = vmatpush1.msra.mxu0 0.0
  %1576 = vmatprep.subr.mxu0 0.0
  %1577 = vmatpush1.msra.mxu0 0.0
  %1578 = vmatprep.subr.mxu0 0.0
  %1579 = vmatpush1.msra.mxu0 0.0
  %1580 = vmatprep.subr.mxu0 0.0
  %1581 = vmatpush1.msra.mxu0 0.0
  %1582 = vmatprep.subr.mxu0 0.0
  %1583 = vmatpush1.msra.mxu0 0.0
  %1584 = vmatprep.subr.mxu0 0.0
  %1585 = vmatpush1.msra.mxu0 0.0
  %1586 = vmatprep.subr.mxu0 0.0
  %1587 = vmatpush1.msra.mxu0 0.0
  %1588 = vmatprep.subr.mxu0 0.0
  %1589 = vmatpush1.msra.mxu0 0.0
  %1590 = vmatprep.subr.mxu0 0.0
  %1591 = vmatpush1.msra.mxu0 0.0
  %1592 = vmatprep.subr.mxu0 0.0
  %1593 = vmatpush1.msra.mxu0 0.0
  %1594 = vmatprep.mubr.f32.mxu0 0.0
  %1595 = vmatmul.mubr.f32.gmra.mrb[0].mxu0 %v1528
  %v1596 = vpop.f32.mrb[0].mxu0
  %v1597 = vadd.f32 0.0, %v1596
  %v1598 = vpop.f32.mrb[0].mxu0
  %1599 = vdwg.mxu0
  %1600 = vrot.lane.b32.xlu0 %v391, 96
  %v1601 = vpop.permute.xlu0 %1600
  %1602 = vrot.lane.b32.xlu0 %v396, 96
  %v1603 = vpop.permute.xlu0 %1602
  %v1607 = vsel %vm1116, %v1200, 0
  %1609 = vmatprep.subr.mxu0 0.0
  %1610 = vmatpush1.msra.mxu0 %v1601
  %1611 = vmatprep.subr.mxu0 0.0
  %1612 = vmatpush1.msra.mxu0 %v1603
  %1613 = vmatprep.subr.mxu0 0.0
  %1614 = vmatpush1.msra.mxu0 0.0
  %1615 = vmatprep.subr.mxu0 0.0
  %1616 = vmatpush1.msra.mxu0 0.0
  %1617 = vmatprep.subr.mxu0 0.0
  %1618 = vmatpush1.msra.mxu0 0.0
  %1619 = vmatprep.subr.mxu0 0.0
  %1620 = vmatpush1.msra.mxu0 0.0
  %1621 = vmatprep.subr.mxu0 0.0
  %1622 = vmatpush1.msra.mxu0 0.0
  %1623 = vmatprep.subr.mxu0 0.0
  %1624 = vmatpush1.msra.mxu0 0.0
  %1625 = vmatprep.subr.mxu0 0.0
  %1626 = vmatpush1.msra.mxu0 0.0
  %1627 = vmatprep.subr.mxu0 0.0
  %1628 = vmatpush1.msra.mxu0 0.0
  %1629 = vmatprep.subr.mxu0 0.0
  %1630 = vmatpush1.msra.mxu0 0.0
  %1631 = vmatprep.subr.mxu0 0.0
  %1632 = vmatpush1.msra.mxu0 0.0
  %1633 = vmatprep.subr.mxu0 0.0
  %1634 = vmatpush1.msra.mxu0 0.0
  %1635 = vmatprep.subr.mxu0 0.0
  %1636 = vmatpush1.msra.mxu0 0.0
  %1637 = vmatprep.subr.mxu0 0.0
  %1638 = vmatpush1.msra.mxu0 0.0
  %1639 = vmatprep.subr.mxu0 0.0
  %1640 = vmatpush1.msra.mxu0 0.0
  %1641 = vmatprep.subr.mxu0 0.0
  %1642 = vmatpush1.msra.mxu0 0.0
  %1643 = vmatprep.subr.mxu0 0.0
  %1644 = vmatpush1.msra.mxu0 0.0
  %1645 = vmatprep.subr.mxu0 0.0
  %1646 = vmatpush1.msra.mxu0 0.0
  %1647 = vmatprep.subr.mxu0 0.0
  %1648 = vmatpush1.msra.mxu0 0.0
  %1649 = vmatprep.subr.mxu0 0.0
  %1650 = vmatpush1.msra.mxu0 0.0
  %1651 = vmatprep.subr.mxu0 0.0
  %1652 = vmatpush1.msra.mxu0 0.0
  %1653 = vmatprep.subr.mxu0 0.0
  %1654 = vmatpush1.msra.mxu0 0.0
  %1655 = vmatprep.subr.mxu0 0.0
  %1656 = vmatpush1.msra.mxu0 0.0
  %1657 = vmatprep.subr.mxu0 0.0
  %1658 = vmatpush1.msra.mxu0 0.0
  %1659 = vmatprep.subr.mxu0 0.0
  %1660 = vmatpush1.msra.mxu0 0.0
  %1661 = vmatprep.subr.mxu0 0.0
  %1662 = vmatpush1.msra.mxu0 0.0
  %1663 = vmatprep.subr.mxu0 0.0
  %1664 = vmatpush1.msra.mxu0 0.0
  %1665 = vmatprep.subr.mxu0 0.0
  %1666 = vmatpush1.msra.mxu0 0.0
  %1667 = vmatprep.subr.mxu0 0.0
  %1668 = vmatpush1.msra.mxu0 0.0
  %1669 = vmatprep.subr.mxu0 0.0
  %1670 = vmatpush1.msra.mxu0 0.0
  %1671 = vmatprep.subr.mxu0 0.0
  %1672 = vmatpush1.msra.mxu0 0.0
  %1673 = vmatprep.mubr.f32.mxu0 0.0
  %1674 = vmatmul.mubr.f32.gmra.mrb[0].mxu0 %v1607
  %v1675 = vpop.f32.mrb[0].mxu0
  %v1676 = vadd.f32 0.0, %v1675
  %v1677 = vpop.f32.mrb[0].mxu0
  %1678 = vdwg.mxu0
  %1679 = vrot.lane.b32.xlu0 %v401, 96
  %v1680 = vpop.permute.xlu0 %1679
  %1681 = vrot.lane.b32.xlu0 %v406, 96
  %v1682 = vpop.permute.xlu0 %1681
  %v1686 = vsel %vm1116, %v1202, 0
  %1688 = vmatprep.subr.mxu0 0.0
  %1689 = vmatpush1.msra.mxu0 %v1680
  %1690 = vmatprep.subr.mxu0 0.0
  %1691 = vmatpush1.msra.mxu0 %v1682
  %1692 = vmatprep.subr.mxu0 0.0
  %1693 = vmatpush1.msra.mxu0 0.0
  %1694 = vmatprep.subr.mxu0 0.0
  %1695 = vmatpush1.msra.mxu0 0.0
  %1696 = vmatprep.subr.mxu0 0.0
  %1697 = vmatpush1.msra.mxu0 0.0
  %1698 = vmatprep.subr.mxu0 0.0
  %1699 = vmatpush1.msra.mxu0 0.0
  %1700 = vmatprep.subr.mxu0 0.0
  %1701 = vmatpush1.msra.mxu0 0.0
  %1702 = vmatprep.subr.mxu0 0.0
  %1703 = vmatpush1.msra.mxu0 0.0
  %1704 = vmatprep.subr.mxu0 0.0
  %1705 = vmatpush1.msra.mxu0 0.0
  %1706 = vmatprep.subr.mxu0 0.0
  %1707 = vmatpush1.msra.mxu0 0.0
  %1708 = vmatprep.subr.mxu0 0.0
  %1709 = vmatpush1.msra.mxu0 0.0
  %1710 = vmatprep.subr.mxu0 0.0
  %1711 = vmatpush1.msra.mxu0 0.0
  %1712 = vmatprep.subr.mxu0 0.0
  %1713 = vmatpush1.msra.mxu0 0.0
  %1714 = vmatprep.subr.mxu0 0.0
  %1715 = vmatpush1.msra.mxu0 0.0
  %1716 = vmatprep.subr.mxu0 0.0
  %1717 = vmatpush1.msra.mxu0 0.0
  %1718 = vmatprep.subr.mxu0 0.0
  %1719 = vmatpush1.msra.mxu0 0.0
  %1720 = vmatprep.subr.mxu0 0.0
  %1721 = vmatpush1.msra.mxu0 0.0
  %1722 = vmatprep.subr.mxu0 0.0
  %1723 = vmatpush1.msra.mxu0 0.0
  %1724 = vmatprep.subr.mxu0 0.0
  %1725 = vmatpush1.msra.mxu0 0.0
  %1726 = vmatprep.subr.mxu0 0.0
  %1727 = vmatpush1.msra.mxu0 0.0
  %1728 = vmatprep.subr.mxu0 0.0
  %1729 = vmatpush1.msra.mxu0 0.0
  %1730 = vmatprep.subr.mxu0 0.0
  %1731 = vmatpush1.msra.mxu0 0.0
  %1732 = vmatprep.subr.mxu0 0.0
  %1733 = vmatpush1.msra.mxu0 0.0
  %1734 = vmatprep.subr.mxu0 0.0
  %1735 = vmatpush1.msra.mxu0 0.0
  %1736 = vmatprep.subr.mxu0 0.0
  %1737 = vmatpush1.msra.mxu0 0.0
  %1738 = vmatprep.subr.mxu0 0.0
  %1739 = vmatpush1.msra.mxu0 0.0
  %1740 = vmatprep.subr.mxu0 0.0
  %1741 = vmatpush1.msra.mxu0 0.0
  %1742 = vmatprep.subr.mxu0 0.0
  %1743 = vmatpush1.msra.mxu0 0.0
  %1744 = vmatprep.subr.mxu0 0.0
  %1745 = vmatpush1.msra.mxu0 0.0
  %1746 = vmatprep.subr.mxu0 0.0
  %1747 = vmatpush1.msra.mxu0 0.0
  %1748 = vmatprep.subr.mxu0 0.0
  %1749 = vmatpush1.msra.mxu0 0.0
  %1750 = vmatprep.subr.mxu0 0.0
  %1751 = vmatpush1.msra.mxu0 0.0
  %1752 = vmatprep.mubr.f32.mxu0 0.0
  %1753 = vmatmul.mubr.f32.gmra.mrb[0].mxu0 %v1686
  %v1754 = vpop.f32.mrb[0].mxu0
  %v1755 = vadd.f32 0.0, %v1754
  %v1756 = vpop.f32.mrb[0].mxu0
  %1757 = vdwg.mxu0
  %1758 = vrot.lane.b32.xlu0 %v411, 96
  %v1759 = vpop.permute.xlu0 %1758
  %1760 = vrot.lane.b32.xlu0 %v416, 96
  %v1761 = vpop.permute.xlu0 %1760
  %v1765 = vsel %vm1116, %v1204, 0
  %1767 = vmatprep.subr.mxu0 0.0
  %1768 = vmatpush1.msra.mxu0 %v1759
  %1769 = vmatprep.subr.mxu0 0.0
  %1770 = vmatpush1.msra.mxu0 %v1761
  %1771 = vmatprep.subr.mxu0 0.0
  %1772 = vmatpush1.msra.mxu0 0.0
  %1773 = vmatprep.subr.mxu0 0.0
  %1774 = vmatpush1.msra.mxu0 0.0
  %1775 = vmatprep.subr.mxu0 0.0
  %1776 = vmatpush1.msra.mxu0 0.0
  %1777 = vmatprep.subr.mxu0 0.0
  %1778 = vmatpush1.msra.mxu0 0.0
  %1779 = vmatprep.subr.mxu0 0.0
  %1780 = vmatpush1.msra.mxu0 0.0
  %1781 = vmatprep.subr.mxu0 0.0
  %1782 = vmatpush1.msra.mxu0 0.0
  %1783 = vmatprep.subr.mxu0 0.0
  %1784 = vmatpush1.msra.mxu0 0.0
  %1785 = vmatprep.subr.mxu0 0.0
  %1786 = vmatpush1.msra.mxu0 0.0
  %1787 = vmatprep.subr.mxu0 0.0
  %1788 = vmatpush1.msra.mxu0 0.0
  %1789 = vmatprep.subr.mxu0 0.0
  %1790 = vmatpush1.msra.mxu0 0.0
  %1791 = vmatprep.subr.mxu0 0.0
  %1792 = vmatpush1.msra.mxu0 0.0
  %1793 = vmatprep.subr.mxu0 0.0
  %1794 = vmatpush1.msra.mxu0 0.0
  %1795 = vmatprep.subr.mxu0 0.0
  %1796 = vmatpush1.msra.mxu0 0.0
  %1797 = vmatprep.subr.mxu0 0.0
  %1798 = vmatpush1.msra.mxu0 0.0
  %1799 = vmatprep.subr.mxu0 0.0
  %1800 = vmatpush1.msra.mxu0 0.0
  %1801 = vmatprep.subr.mxu0 0.0
  %1802 = vmatpush1.msra.mxu0 0.0
  %1803 = vmatprep.subr.mxu0 0.0
  %1804 = vmatpush1.msra.mxu0 0.0
  %1805 = vmatprep.subr.mxu0 0.0
  %1806 = vmatpush1.msra.mxu0 0.0
  %1807 = vmatprep.subr.mxu0 0.0
  %1808 = vmatpush1.msra.mxu0 0.0
  %1809 = vmatprep.subr.mxu0 0.0
  %1810 = vmatpush1.msra.mxu0 0.0
  %1811 = vmatprep.subr.mxu0 0.0
  %1812 = vmatpush1.msra.mxu0 0.0
  %1813 = vmatprep.subr.mxu0 0.0
  %1814 = vmatpush1.msra.mxu0 0.0
  %1815 = vmatprep.subr.mxu0 0.0
  %1816 = vmatpush1.msra.mxu0 0.0
  %1817 = vmatprep.subr.mxu0 0.0
  %1818 = vmatpush1.msra.mxu0 0.0
  %1819 = vmatprep.subr.mxu0 0.0
  %1820 = vmatpush1.msra.mxu0 0.0
  %1821 = vmatprep.subr.mxu0 0.0
  %1822 = vmatpush1.msra.mxu0 0.0
  %1823 = vmatprep.subr.mxu0 0.0
  %1824 = vmatpush1.msra.mxu0 0.0
  %1825 = vmatprep.subr.mxu0 0.0
  %1826 = vmatpush1.msra.mxu0 0.0
  %1827 = vmatprep.subr.mxu0 0.0
  %1828 = vmatpush1.msra.mxu0 0.0
  %1829 = vmatprep.subr.mxu0 0.0
  %1830 = vmatpush1.msra.mxu0 0.0
  %1831 = vmatprep.mubr.f32.mxu0 0.0
  %1832 = vmatmul.mubr.f32.gmra.mrb[0].mxu0 %v1765
  %v1833 = vpop.f32.mrb[0].mxu0
  %v1834 = vadd.f32 0.0, %v1833
  %v1835 = vpop.f32.mrb[0].mxu0
  %1836 = vdwg.mxu0
  %1837 = vrot.lane.b32.xlu0 %v182, 120
  %v1838 = vpop.permute.xlu0 %1837
  %1839 = vrot.lane.b32.xlu0 %v341, 120
  %v1840 = vpop.permute.xlu0 %1839
  %1841 = vrot.lane.b32.xlu0 %v346, 120
  %v1842 = vpop.permute.xlu0 %1841
  %v1843 = vsel %vm483, %v1838, 0
  %v1845 = vsel %vm483, %v1840, 0
  %v1847 = vsel %vm483, %v1842, 0
  %1849 = vmatprep.subr.mxu0 0.0
  %1850 = vmatpush1.xpose.msra.mxu0 %v1845
  %1851 = vmatprep.subr.mxu0 0.0
  %1852 = vmatpush1.xpose.msra.mxu0 %v1847
  %1853 = vmatprep.subr.mxu0 0.0
  %1854 = vmatpush1.xpose.msra.mxu0 0.0
  %1855 = vmatprep.subr.mxu0 0.0
  %1856 = vmatpush1.xpose.msra.mxu0 0.0
  %1857 = vmatprep.subr.mxu0 0.0
  %1858 = vmatpush1.xpose.msra.mxu0 0.0
  %1859 = vmatprep.subr.mxu0 0.0
  %1860 = vmatpush1.xpose.msra.mxu0 0.0
  %1861 = vmatprep.subr.mxu0 0.0
  %1862 = vmatpush1.xpose.msra.mxu0 0.0
  %1863 = vmatprep.subr.mxu0 0.0
  %1864 = vmatpush1.xpose.msra.mxu0 0.0
  %1865 = vmatprep.subr.mxu0 0.0
  %1866 = vmatpush1.xpose.msra.mxu0 0.0
  %1867 = vmatprep.subr.mxu0 0.0
  %1868 = vmatpush1.xpose.msra.mxu0 0.0
  %1869 = vmatprep.subr.mxu0 0.0
  %1870 = vmatpush1.xpose.msra.mxu0 0.0
  %1871 = vmatprep.subr.mxu0 0.0
  %1872 = vmatpush1.xpose.msra.mxu0 0.0
  %1873 = vmatprep.subr.mxu0 0.0
  %1874 = vmatpush1.xpose.msra.mxu0 0.0
  %1875 = vmatprep.subr.mxu0 0.0
  %1876 = vmatpush1.xpose.msra.mxu0 0.0
  %1877 = vmatprep.subr.mxu0 0.0
  %1878 = vmatpush1.xpose.msra.mxu0 0.0
  %1879 = vmatprep.subr.mxu0 0.0
  %1880 = vmatpush1.xpose.msra.mxu0 0.0
  %1881 = vmatprep.subr.mxu0 0.0
  %1882 = vmatpush1.xpose.msra.mxu0 0.0
  %1883 = vmatprep.subr.mxu0 0.0
  %1884 = vmatpush1.xpose.msra.mxu0 0.0
  %1885 = vmatprep.subr.mxu0 0.0
  %1886 = vmatpush1.xpose.msra.mxu0 0.0
  %1887 = vmatprep.subr.mxu0 0.0
  %1888 = vmatpush1.xpose.msra.mxu0 0.0
  %1889 = vmatprep.subr.mxu0 0.0
  %1890 = vmatpush1.xpose.msra.mxu0 0.0
  %1891 = vmatprep.subr.mxu0 0.0
  %1892 = vmatpush1.xpose.msra.mxu0 0.0
  %1893 = vmatprep.subr.mxu0 0.0
  %1894 = vmatpush1.xpose.msra.mxu0 0.0
  %1895 = vmatprep.subr.mxu0 0.0
  %1896 = vmatpush1.xpose.msra.mxu0 0.0
  %1897 = vmatprep.subr.mxu0 0.0
  %1898 = vmatpush1.xpose.msra.mxu0 0.0
  %1899 = vmatprep.subr.mxu0 0.0
  %1900 = vmatpush1.xpose.msra.mxu0 0.0
  %1901 = vmatprep.subr.mxu0 0.0
  %1902 = vmatpush1.xpose.msra.mxu0 0.0
  %1903 = vmatprep.subr.mxu0 0.0
  %1904 = vmatpush1.xpose.msra.mxu0 0.0
  %1905 = vmatprep.subr.mxu0 0.0
  %1906 = vmatpush1.xpose.msra.mxu0 0.0
  %1907 = vmatprep.subr.mxu0 0.0
  %1908 = vmatpush1.xpose.msra.mxu0 0.0
  %1909 = vmatprep.subr.mxu0 0.0
  %1910 = vmatpush1.xpose.msra.mxu0 0.0
  %1911 = vmatprep.subr.mxu0 0.0
  %1912 = vmatpush1.xpose.msra.mxu0 0.0
  %1913 = vmatprep.mubr.f32.mxu0 0.0
  %1914 = vmatmul.mubr.f32.gmra.mrb[0].mxu0 %v1843
  %v1915 = vpop.f32.mrb[0].mxu0
  %v1916 = vadd.f32 %v446, %v1915
  %v1917 = vpop.f32.mrb[0].mxu0
  %1918 = vdwg.mxu0
  %1919 = vrot.lane.b32.xlu0 %v187, 120
  %v1920 = vpop.permute.xlu0 %1919
  %1921 = vrot.lane.b32.xlu0 %v351, 120
  %v1922 = vpop.permute.xlu0 %1921
  %1923 = vrot.lane.b32.xlu0 %v356, 120
  %v1924 = vpop.permute.xlu0 %1923
  %v1925 = vsel %vm483, %v1920, 0
  %v1927 = vsel %vm483, %v1922, 0
  %v1929 = vsel %vm483, %v1924, 0
  %1931 = vmatprep.subr.mxu0 0.0
  %1932 = vmatpush1.xpose.msra.mxu0 %v1927
  %1933 = vmatprep.subr.mxu0 0.0
  %1934 = vmatpush1.xpose.msra.mxu0 %v1929
  %1935 = vmatprep.subr.mxu0 0.0
  %1936 = vmatpush1.xpose.msra.mxu0 0.0
  %1937 = vmatprep.subr.mxu0 0.0
  %1938 = vmatpush1.xpose.msra.mxu0 0.0
  %1939 = vmatprep.subr.mxu0 0.0
  %1940 = vmatpush1.xpose.msra.mxu0 0.0
  %1941 = vmatprep.subr.mxu0 0.0
  %1942 = vmatpush1.xpose.msra.mxu0 0.0
  %1943 = vmatprep.subr.mxu0 0.0
  %1944 = vmatpush1.xpose.msra.mxu0 0.0
  %1945 = vmatprep.subr.mxu0 0.0
  %1946 = vmatpush1.xpose.msra.mxu0 0.0
  %1947 = vmatprep.subr.mxu0 0.0
  %1948 = vmatpush1.xpose.msra.mxu0 0.0
  %1949 = vmatprep.subr.mxu0 0.0
  %1950 = vmatpush1.xpose.msra.mxu0 0.0
  %1951 = vmatprep.subr.mxu0 0.0
  %1952 = vmatpush1.xpose.msra.mxu0 0.0
  %1953 = vmatprep.subr.mxu0 0.0
  %1954 = vmatpush1.xpose.msra.mxu0 0.0
  %1955 = vmatprep.subr.mxu0 0.0
  %1956 = vmatpush1.xpose.msra.mxu0 0.0
  %1957 = vmatprep.subr.mxu0 0.0
  %1958 = vmatpush1.xpose.msra.mxu0 0.0
  %1959 = vmatprep.subr.mxu0 0.0
  %1960 = vmatpush1.xpose.msra.mxu0 0.0
  %1961 = vmatprep.subr.mxu0 0.0
  %1962 = vmatpush1.xpose.msra.mxu0 0.0
  %1963 = vmatprep.subr.mxu0 0.0
  %1964 = vmatpush1.xpose.msra.mxu0 0.0
  %1965 = vmatprep.subr.mxu0 0.0
  %1966 = vmatpush1.xpose.msra.mxu0 0.0
  %1967 = vmatprep.subr.mxu0 0.0
  %1968 = vmatpush1.xpose.msra.mxu0 0.0
  %1969 = vmatprep.subr.mxu0 0.0
  %1970 = vmatpush1.xpose.msra.mxu0 0.0
  %1971 = vmatprep.subr.mxu0 0.0
  %1972 = vmatpush1.xpose.msra.mxu0 0.0
  %1973 = vmatprep.subr.mxu0 0.0
  %1974 = vmatpush1.xpose.msra.mxu0 0.0
  %1975 = vmatprep.subr.mxu0 0.0
  %1976 = vmatpush1.xpose.msra.mxu0 0.0
  %1977 = vmatprep.subr.mxu0 0.0
  %1978 = vmatpush1.xpose.msra.mxu0 0.0
  %1979 = vmatprep.subr.mxu0 0.0
  %1980 = vmatpush1.xpose.msra.mxu0 0.0
  %1981 = vmatprep.subr.mxu0 0.0
  %1982 = vmatpush1.xpose.msra.mxu0 0.0
  %1983 = vmatprep.subr.mxu0 0.0
  %1984 = vmatpush1.xpose.msra.mxu0 0.0
  %1985 = vmatprep.subr.mxu0 0.0
  %1986 = vmatpush1.xpose.msra.mxu0 0.0
  %1987 = vmatprep.subr.mxu0 0.0
  %1988 = vmatpush1.xpose.msra.mxu0 0.0
  %1989 = vmatprep.subr.mxu0 0.0
  %1990 = vmatpush1.xpose.msra.mxu0 0.0
  %1991 = vmatprep.subr.mxu0 0.0
  %1992 = vmatpush1.xpose.msra.mxu0 0.0
  %1993 = vmatprep.subr.mxu0 0.0
  %1994 = vmatpush1.xpose.msra.mxu0 0.0
  %1995 = vmatprep.mubr.f32.mxu0 0.0
  %1996 = vmatmul.mubr.f32.gmra.mrb[0].mxu0 %v1925
  %v1997 = vpop.f32.mrb[0].mxu0
  %v1998 = vadd.f32 %v450, %v1997
  %v1999 = vpop.f32.mrb[0].mxu0
  %2000 = vdwg.mxu0
  %2001 = vrot.lane.b32.xlu0 %v192, 120
  %v2002 = vpop.permute.xlu0 %2001
  %2003 = vrot.lane.b32.xlu0 %v361, 120
  %v2004 = vpop.permute.xlu0 %2003
  %2005 = vrot.lane.b32.xlu0 %v366, 120
  %v2006 = vpop.permute.xlu0 %2005
  %v2007 = vsel %vm483, %v2002, 0
  %v2009 = vsel %vm483, %v2004, 0
  %v2011 = vsel %vm483, %v2006, 0
  %2013 = vmatprep.subr.mxu0 0.0
  %2014 = vmatpush1.xpose.msra.mxu0 %v2009
  %2015 = vmatprep.subr.mxu0 0.0
  %2016 = vmatpush1.xpose.msra.mxu0 %v2011
  %2017 = vmatprep.subr.mxu0 0.0
  %2018 = vmatpush1.xpose.msra.mxu0 0.0
  %2019 = vmatprep.subr.mxu0 0.0
  %2020 = vmatpush1.xpose.msra.mxu0 0.0
  %2021 = vmatprep.subr.mxu0 0.0
  %2022 = vmatpush1.xpose.msra.mxu0 0.0
  %2023 = vmatprep.subr.mxu0 0.0
  %2024 = vmatpush1.xpose.msra.mxu0 0.0
  %2025 = vmatprep.subr.mxu0 0.0
  %2026 = vmatpush1.xpose.msra.mxu0 0.0
  %2027 = vmatprep.subr.mxu0 0.0
  %2028 = vmatpush1.xpose.msra.mxu0 0.0
  %2029 = vmatprep.subr.mxu0 0.0
  %2030 = vmatpush1.xpose.msra.mxu0 0.0
  %2031 = vmatprep.subr.mxu0 0.0
  %2032 = vmatpush1.xpose.msra.mxu0 0.0
  %2033 = vmatprep.subr.mxu0 0.0
  %2034 = vmatpush1.xpose.msra.mxu0 0.0
  %2035 = vmatprep.subr.mxu0 0.0
  %2036 = vmatpush1.xpose.msra.mxu0 0.0
  %2037 = vmatprep.subr.mxu0 0.0
  %2038 = vmatpush1.xpose.msra.mxu0 0.0
  %2039 = vmatprep.subr.mxu0 0.0
  %2040 = vmatpush1.xpose.msra.mxu0 0.0
  %2041 = vmatprep.subr.mxu0 0.0
  %2042 = vmatpush1.xpose.msra.mxu0 0.0
  %2043 = vmatprep.subr.mxu0 0.0
  %2044 = vmatpush1.xpose.msra.mxu0 0.0
  %2045 = vmatprep.subr.mxu0 0.0
  %2046 = vmatpush1.xpose.msra.mxu0 0.0
  %2047 = vmatprep.subr.mxu0 0.0
  %2048 = vmatpush1.xpose.msra.mxu0 0.0
  %2049 = vmatprep.subr.mxu0 0.0
  %2050 = vmatpush1.xpose.msra.mxu0 0.0
  %2051 = vmatprep.subr.mxu0 0.0
  %2052 = vmatpush1.xpose.msra.mxu0 0.0
  %2053 = vmatprep.subr.mxu0 0.0
  %2054 = vmatpush1.xpose.msra.mxu0 0.0
  %2055 = vmatprep.subr.mxu0 0.0
  %2056 = vmatpush1.xpose.msra.mxu0 0.0
  %2057 = vmatprep.subr.mxu0 0.0
  %2058 = vmatpush1.xpose.msra.mxu0 0.0
  %2059 = vmatprep.subr.mxu0 0.0
  %2060 = vmatpush1.xpose.msra.mxu0 0.0
  %2061 = vmatprep.subr.mxu0 0.0
  %2062 = vmatpush1.xpose.msra.mxu0 0.0
  %2063 = vmatprep.subr.mxu0 0.0
  %2064 = vmatpush1.xpose.msra.mxu0 0.0
  %2065 = vmatprep.subr.mxu0 0.0
  %2066 = vmatpush1.xpose.msra.mxu0 0.0
  %2067 = vmatprep.subr.mxu0 0.0
  %2068 = vmatpush1.xpose.msra.mxu0 0.0
  %2069 = vmatprep.subr.mxu0 0.0
  %2070 = vmatpush1.xpose.msra.mxu0 0.0
  %2071 = vmatprep.subr.mxu0 0.0
  %2072 = vmatpush1.xpose.msra.mxu0 0.0
  %2073 = vmatprep.subr.mxu0 0.0
  %2074 = vmatpush1.xpose.msra.mxu0 0.0
  %2075 = vmatprep.subr.mxu0 0.0
  %2076 = vmatpush1.xpose.msra.mxu0 0.0
  %2077 = vmatprep.mubr.f32.mxu0 0.0
  %2078 = vmatmul.mubr.f32.gmra.mrb[0].mxu0 %v2007
  %v2079 = vpop.f32.mrb[0].mxu0
  %v2080 = vadd.f32 %v454, %v2079
  %v2081 = vpop.f32.mrb[0].mxu0
  %2082 = vdwg.mxu0
  %2083 = vrot.lane.b32.xlu0 %v197, 120
  %v2084 = vpop.permute.xlu0 %2083
  %2085 = vrot.lane.b32.xlu0 %v371, 120
  %v2086 = vpop.permute.xlu0 %2085
  %2087 = vrot.lane.b32.xlu0 %v376, 120
  %v2088 = vpop.permute.xlu0 %2087
  %v2089 = vsel %vm483, %v2084, 0
  %v2091 = vsel %vm483, %v2086, 0
  %v2093 = vsel %vm483, %v2088, 0
  %2095 = vmatprep.subr.mxu0 0.0
  %2096 = vmatpush1.xpose.msra.mxu0 %v2091
  %2097 = vmatprep.subr.mxu0 0.0
  %2098 = vmatpush1.xpose.msra.mxu0 %v2093
  %2099 = vmatprep.subr.mxu0 0.0
  %2100 = vmatpush1.xpose.msra.mxu0 0.0
  %2101 = vmatprep.subr.mxu0 0.0
  %2102 = vmatpush1.xpose.msra.mxu0 0.0
  %2103 = vmatprep.subr.mxu0 0.0
  %2104 = vmatpush1.xpose.msra.mxu0 0.0
  %2105 = vmatprep.subr.mxu0 0.0
  %2106 = vmatpush1.xpose.msra.mxu0 0.0
  %2107 = vmatprep.subr.mxu0 0.0
  %2108 = vmatpush1.xpose.msra.mxu0 0.0
  %2109 = vmatprep.subr.mxu0 0.0
  %2110 = vmatpush1.xpose.msra.mxu0 0.0
  %2111 = vmatprep.subr.mxu0 0.0
  %2112 = vmatpush1.xpose.msra.mxu0 0.0
  %2113 = vmatprep.subr.mxu0 0.0
  %2114 = vmatpush1.xpose.msra.mxu0 0.0
  %2115 = vmatprep.subr.mxu0 0.0
  %2116 = vmatpush1.xpose.msra.mxu0 0.0
  %2117 = vmatprep.subr.mxu0 0.0
  %2118 = vmatpush1.xpose.msra.mxu0 0.0
  %2119 = vmatprep.subr.mxu0 0.0
  %2120 = vmatpush1.xpose.msra.mxu0 0.0
  %2121 = vmatprep.subr.mxu0 0.0
  %2122 = vmatpush1.xpose.msra.mxu0 0.0
  %2123 = vmatprep.subr.mxu0 0.0
  %2124 = vmatpush1.xpose.msra.mxu0 0.0
  %2125 = vmatprep.subr.mxu0 0.0
  %2126 = vmatpush1.xpose.msra.mxu0 0.0
  %2127 = vmatprep.subr.mxu0 0.0
  %2128 = vmatpush1.xpose.msra.mxu0 0.0
  %2129 = vmatprep.subr.mxu0 0.0
  %2130 = vmatpush1.xpose.msra.mxu0 0.0
  %2131 = vmatprep.subr.mxu0 0.0
  %2132 = vmatpush1.xpose.msra.mxu0 0.0
  %2133 = vmatprep.subr.mxu0 0.0
  %2134 = vmatpush1.xpose.msra.mxu0 0.0
  %2135 = vmatprep.subr.mxu0 0.0
  %2136 = vmatpush1.xpose.msra.mxu0 0.0
  %2137 = vmatprep.subr.mxu0 0.0
  %2138 = vmatpush1.xpose.msra.mxu0 0.0
  %2139 = vmatprep.subr.mxu0 0.0
  %2140 = vmatpush1.xpose.msra.mxu0 0.0
  %2141 = vmatprep.subr.mxu0 0.0
  %2142 = vmatpush1.xpose.msra.mxu0 0.0
  %2143 = vmatprep.subr.mxu0 0.0
  %2144 = vmatpush1.xpose.msra.mxu0 0.0
  %2145 = vmatprep.subr.mxu0 0.0
  %2146 = vmatpush1.xpose.msra.mxu0 0.0
  %2147 = vmatprep.subr.mxu0 0.0
  %2148 = vmatpush1.xpose.msra.mxu0 0.0
  %2149 = vmatprep.subr.mxu0 0.0
  %2150 = vmatpush1.xpose.msra.mxu0 0.0
  %2151 = vmatprep.subr.mxu0 0.0
  %2152 = vmatpush1.xpose.msra.mxu0 0.0
  %2153 = vmatprep.subr.mxu0 0.0
  %2154 = vmatpush1.xpose.msra.mxu0 0.0
  %2155 = vmatprep.subr.mxu0 0.0
  %2156 = vmatpush1.xpose.msra.mxu0 0.0
  %2157 = vmatprep.subr.mxu0 0.0
  %2158 = vmatpush1.xpose.msra.mxu0 0.0
  %2159 = vmatprep.mubr.f32.mxu0 0.0
  %2160 = vmatmul.mubr.f32.gmra.mrb[0].mxu0 %v2089
  %v2161 = vpop.f32.mrb[0].mxu0
  %v2162 = vadd.f32 %v458, %v2161
  %v2163 = vpop.f32.mrb[0].mxu0
  %2164 = vdwg.mxu0
  %2165 = vrot.lane.b32.xlu0 %v202, 120
  %v2166 = vpop.permute.xlu0 %2165
  %2167 = vrot.lane.b32.xlu0 %v381, 120
  %v2168 = vpop.permute.xlu0 %2167
  %2169 = vrot.lane.b32.xlu0 %v386, 120
  %v2170 = vpop.permute.xlu0 %2169
  %v2171 = vsel %vm483, %v2166, 0
  %v2173 = vsel %vm483, %v2168, 0
  %v2175 = vsel %vm483, %v2170, 0
  %2177 = vmatprep.subr.mxu0 0.0
  %2178 = vmatpush1.xpose.msra.mxu0 %v2173
  %2179 = vmatprep.subr.mxu0 0.0
  %2180 = vmatpush1.xpose.msra.mxu0 %v2175
  %2181 = vmatprep.subr.mxu0 0.0
  %2182 = vmatpush1.xpose.msra.mxu0 0.0
  %2183 = vmatprep.subr.mxu0 0.0
  %2184 = vmatpush1.xpose.msra.mxu0 0.0
  %2185 = vmatprep.subr.mxu0 0.0
  %2186 = vmatpush1.xpose.msra.mxu0 0.0
  %2187 = vmatprep.subr.mxu0 0.0
  %2188 = vmatpush1.xpose.msra.mxu0 0.0
  %2189 = vmatprep.subr.mxu0 0.0
  %2190 = vmatpush1.xpose.msra.mxu0 0.0
  %2191 = vmatprep.subr.mxu0 0.0
  %2192 = vmatpush1.xpose.msra.mxu0 0.0
  %2193 = vmatprep.subr.mxu0 0.0
  %2194 = vmatpush1.xpose.msra.mxu0 0.0
  %2195 = vmatprep.subr.mxu0 0.0
  %2196 = vmatpush1.xpose.msra.mxu0 0.0
  %2197 = vmatprep.subr.mxu0 0.0
  %2198 = vmatpush1.xpose.msra.mxu0 0.0
  %2199 = vmatprep.subr.mxu0 0.0
  %2200 = vmatpush1.xpose.msra.mxu0 0.0
  %2201 = vmatprep.subr.mxu0 0.0
  %2202 = vmatpush1.xpose.msra.mxu0 0.0
  %2203 = vmatprep.subr.mxu0 0.0
  %2204 = vmatpush1.xpose.msra.mxu0 0.0
  %2205 = vmatprep.subr.mxu0 0.0
  %2206 = vmatpush1.xpose.msra.mxu0 0.0
  %2207 = vmatprep.subr.mxu0 0.0
  %2208 = vmatpush1.xpose.msra.mxu0 0.0
  %2209 = vmatprep.subr.mxu0 0.0
  %2210 = vmatpush1.xpose.msra.mxu0 0.0
  %2211 = vmatprep.subr.mxu0 0.0
  %2212 = vmatpush1.xpose.msra.mxu0 0.0
  %2213 = vmatprep.subr.mxu0 0.0
  %2214 = vmatpush1.xpose.msra.mxu0 0.0
  %2215 = vmatprep.subr.mxu0 0.0
  %2216 = vmatpush1.xpose.msra.mxu0 0.0
  %2217 = vmatprep.subr.mxu0 0.0
  %2218 = vmatpush1.xpose.msra.mxu0 0.0
  %2219 = vmatprep.subr.mxu0 0.0
  %2220 = vmatpush1.xpose.msra.mxu0 0.0
  %2221 = vmatprep.subr.mxu0 0.0
  %2222 = vmatpush1.xpose.msra.mxu0 0.0
  %2223 = vmatprep.subr.mxu0 0.0
  %2224 = vmatpush1.xpose.msra.mxu0 0.0
  %2225 = vmatprep.subr.mxu0 0.0
  %2226 = vmatpush1.xpose.msra.mxu0 0.0
  %2227 = vmatprep.subr.mxu0 0.0
  %2228 = vmatpush1.xpose.msra.mxu0 0.0
  %2229 = vmatprep.subr.mxu0 0.0
  %2230 = vmatpush1.xpose.msra.mxu0 0.0
  %2231 = vmatprep.subr.mxu0 0.0
  %2232 = vmatpush1.xpose.msra.mxu0 0.0
  %2233 = vmatprep.subr.mxu0 0.0
  %2234 = vmatpush1.xpose.msra.mxu0 0.0
  %2235 = vmatprep.subr.mxu0 0.0
  %2236 = vmatpush1.xpose.msra.mxu0 0.0
  %2237 = vmatprep.subr.mxu0 0.0
  %2238 = vmatpush1.xpose.msra.mxu0 0.0
  %2239 = vmatprep.subr.mxu0 0.0
  %2240 = vmatpush1.xpose.msra.mxu0 0.0
  %2241 = vmatprep.mubr.f32.mxu0 0.0
  %2242 = vmatmul.mubr.f32.gmra.mrb[0].mxu0 %v2171
  %v2243 = vpop.f32.mrb[0].mxu0
  %v2244 = vadd.f32 %v462, %v2243
  %v2245 = vpop.f32.mrb[0].mxu0
  %2246 = vdwg.mxu0
  %2247 = vrot.lane.b32.xlu0 %v207, 120
  %v2248 = vpop.permute.xlu0 %2247
  %2249 = vrot.lane.b32.xlu0 %v391, 120
  %v2250 = vpop.permute.xlu0 %2249
  %2251 = vrot.lane.b32.xlu0 %v396, 120
  %v2252 = vpop.permute.xlu0 %2251
  %v2253 = vsel %vm483, %v2248, 0
  %v2255 = vsel %vm483, %v2250, 0
  %v2257 = vsel %vm483, %v2252, 0
  %2259 = vmatprep.subr.mxu0 0.0
  %2260 = vmatpush1.xpose.msra.mxu0 %v2255
  %2261 = vmatprep.subr.mxu0 0.0
  %2262 = vmatpush1.xpose.msra.mxu0 %v2257
  %2263 = vmatprep.subr.mxu0 0.0
  %2264 = vmatpush1.xpose.msra.mxu0 0.0
  %2265 = vmatprep.subr.mxu0 0.0
  %2266 = vmatpush1.xpose.msra.mxu0 0.0
  %2267 = vmatprep.subr.mxu0 0.0
  %2268 = vmatpush1.xpose.msra.mxu0 0.0
  %2269 = vmatprep.subr.mxu0 0.0
  %2270 = vmatpush1.xpose.msra.mxu0 0.0
  %2271 = vmatprep.subr.mxu0 0.0
  %2272 = vmatpush1.xpose.msra.mxu0 0.0
  %2273 = vmatprep.subr.mxu0 0.0
  %2274 = vmatpush1.xpose.msra.mxu0 0.0
  %2275 = vmatprep.subr.mxu0 0.0
  %2276 = vmatpush1.xpose.msra.mxu0 0.0
  %2277 = vmatprep.subr.mxu0 0.0
  %2278 = vmatpush1.xpose.msra.mxu0 0.0
  %2279 = vmatprep.subr.mxu0 0.0
  %2280 = vmatpush1.xpose.msra.mxu0 0.0
  %2281 = vmatprep.subr.mxu0 0.0
  %2282 = vmatpush1.xpose.msra.mxu0 0.0
  %2283 = vmatprep.subr.mxu0 0.0
  %2284 = vmatpush1.xpose.msra.mxu0 0.0
  %2285 = vmatprep.subr.mxu0 0.0
  %2286 = vmatpush1.xpose.msra.mxu0 0.0
  %2287 = vmatprep.subr.mxu0 0.0
  %2288 = vmatpush1.xpose.msra.mxu0 0.0
  %2289 = vmatprep.subr.mxu0 0.0
  %2290 = vmatpush1.xpose.msra.mxu0 0.0
  %2291 = vmatprep.subr.mxu0 0.0
  %2292 = vmatpush1.xpose.msra.mxu0 0.0
  %2293 = vmatprep.subr.mxu0 0.0
  %2294 = vmatpush1.xpose.msra.mxu0 0.0
  %2295 = vmatprep.subr.mxu0 0.0
  %2296 = vmatpush1.xpose.msra.mxu0 0.0
  %2297 = vmatprep.subr.mxu0 0.0
  %2298 = vmatpush1.xpose.msra.mxu0 0.0
  %2299 = vmatprep.subr.mxu0 0.0
  %2300 = vmatpush1.xpose.msra.mxu0 0.0
  %2301 = vmatprep.subr.mxu0 0.0
  %2302 = vmatpush1.xpose.msra.mxu0 0.0
  %2303 = vmatprep.subr.mxu0 0.0
  %2304 = vmatpush1.xpose.msra.mxu0 0.0
  %2305 = vmatprep.subr.mxu0 0.0
  %2306 = vmatpush1.xpose.msra.mxu0 0.0
  %2307 = vmatprep.subr.mxu0 0.0
  %2308 = vmatpush1.xpose.msra.mxu0 0.0
  %2309 = vmatprep.subr.mxu0 0.0
  %2310 = vmatpush1.xpose.msra.mxu0 0.0
  %2311 = vmatprep.subr.mxu0 0.0
  %2312 = vmatpush1.xpose.msra.mxu0 0.0
  %2313 = vmatprep.subr.mxu0 0.0
  %2314 = vmatpush1.xpose.msra.mxu0 0.0
  %2315 = vmatprep.subr.mxu0 0.0
  %2316 = vmatpush1.xpose.msra.mxu0 0.0
  %2317 = vmatprep.subr.mxu0 0.0
  %2318 = vmatpush1.xpose.msra.mxu0 0.0
  %2319 = vmatprep.subr.mxu0 0.0
  %2320 = vmatpush1.xpose.msra.mxu0 0.0
  %2321 = vmatprep.subr.mxu0 0.0
  %2322 = vmatpush1.xpose.msra.mxu0 0.0
  %2323 = vmatprep.mubr.f32.mxu0 0.0
  %2324 = vmatmul.mubr.f32.gmra.mrb[0].mxu0 %v2253
  %v2325 = vpop.f32.mrb[0].mxu0
  %v2326 = vadd.f32 %v466, %v2325
  %v2327 = vpop.f32.mrb[0].mxu0
  %2328 = vdwg.mxu0
  %2329 = vrot.lane.b32.xlu0 %v212, 120
  %v2330 = vpop.permute.xlu0 %2329
  %2331 = vrot.lane.b32.xlu0 %v401, 120
  %v2332 = vpop.permute.xlu0 %2331
  %2333 = vrot.lane.b32.xlu0 %v406, 120
  %v2334 = vpop.permute.xlu0 %2333
  %v2335 = vsel %vm483, %v2330, 0
  %v2337 = vsel %vm483, %v2332, 0
  %v2339 = vsel %vm483, %v2334, 0
  %2341 = vmatprep.subr.mxu0 0.0
  %2342 = vmatpush1.xpose.msra.mxu0 %v2337
  %2343 = vmatprep.subr.mxu0 0.0
  %2344 = vmatpush1.xpose.msra.mxu0 %v2339
  %2345 = vmatprep.subr.mxu0 0.0
  %2346 = vmatpush1.xpose.msra.mxu0 0.0
  %2347 = vmatprep.subr.mxu0 0.0
  %2348 = vmatpush1.xpose.msra.mxu0 0.0
  %2349 = vmatprep.subr.mxu0 0.0
  %2350 = vmatpush1.xpose.msra.mxu0 0.0
  %2351 = vmatprep.subr.mxu0 0.0
  %2352 = vmatpush1.xpose.msra.mxu0 0.0
  %2353 = vmatprep.subr.mxu0 0.0
  %2354 = vmatpush1.xpose.msra.mxu0 0.0
  %2355 = vmatprep.subr.mxu0 0.0
  %2356 = vmatpush1.xpose.msra.mxu0 0.0
  %2357 = vmatprep.subr.mxu0 0.0
  %2358 = vmatpush1.xpose.msra.mxu0 0.0
  %2359 = vmatprep.subr.mxu0 0.0
  %2360 = vmatpush1.xpose.msra.mxu0 0.0
  %2361 = vmatprep.subr.mxu0 0.0
  %2362 = vmatpush1.xpose.msra.mxu0 0.0
  %2363 = vmatprep.subr.mxu0 0.0
  %2364 = vmatpush1.xpose.msra.mxu0 0.0
  %2365 = vmatprep.subr.mxu0 0.0
  %2366 = vmatpush1.xpose.msra.mxu0 0.0
  %2367 = vmatprep.subr.mxu0 0.0
  %2368 = vmatpush1.xpose.msra.mxu0 0.0
  %2369 = vmatprep.subr.mxu0 0.0
  %2370 = vmatpush1.xpose.msra.mxu0 0.0
  %2371 = vmatprep.subr.mxu0 0.0
  %2372 = vmatpush1.xpose.msra.mxu0 0.0
  %2373 = vmatprep.subr.mxu0 0.0
  %2374 = vmatpush1.xpose.msra.mxu0 0.0
  %2375 = vmatprep.subr.mxu0 0.0
  %2376 = vmatpush1.xpose.msra.mxu0 0.0
  %2377 = vmatprep.subr.mxu0 0.0
  %2378 = vmatpush1.xpose.msra.mxu0 0.0
  %2379 = vmatprep.subr.mxu0 0.0
  %2380 = vmatpush1.xpose.msra.mxu0 0.0
  %2381 = vmatprep.subr.mxu0 0.0
  %2382 = vmatpush1.xpose.msra.mxu0 0.0
  %2383 = vmatprep.subr.mxu0 0.0
  %2384 = vmatpush1.xpose.msra.mxu0 0.0
  %2385 = vmatprep.subr.mxu0 0.0
  %2386 = vmatpush1.xpose.msra.mxu0 0.0
  %2387 = vmatprep.subr.mxu0 0.0
  %2388 = vmatpush1.xpose.msra.mxu0 0.0
  %2389 = vmatprep.subr.mxu0 0.0
  %2390 = vmatpush1.xpose.msra.mxu0 0.0
  %2391 = vmatprep.subr.mxu0 0.0
  %2392 = vmatpush1.xpose.msra.mxu0 0.0
  %2393 = vmatprep.subr.mxu0 0.0
  %2394 = vmatpush1.xpose.msra.mxu0 0.0
  %2395 = vmatprep.subr.mxu0 0.0
  %2396 = vmatpush1.xpose.msra.mxu0 0.0
  %2397 = vmatprep.subr.mxu0 0.0
  %2398 = vmatpush1.xpose.msra.mxu0 0.0
  %2399 = vmatprep.subr.mxu0 0.0
  %2400 = vmatpush1.xpose.msra.mxu0 0.0
  %2401 = vmatprep.subr.mxu0 0.0
  %2402 = vmatpush1.xpose.msra.mxu0 0.0
  %2403 = vmatprep.subr.mxu0 0.0
  %2404 = vmatpush1.xpose.msra.mxu0 0.0
  %2405 = vmatprep.mubr.f32.mxu0 0.0
  %2406 = vmatmul.mubr.f32.gmra.mrb[0].mxu0 %v2335
  %v2407 = vpop.f32.mrb[0].mxu0
  %v2408 = vadd.f32 %v470, %v2407
  %v2409 = vpop.f32.mrb[0].mxu0
  %2410 = vdwg.mxu0
  %2411 = vrot.lane.b32.xlu0 %v217, 120
  %v2412 = vpop.permute.xlu0 %2411
  %2413 = vrot.lane.b32.xlu0 %v411, 120
  %v2414 = vpop.permute.xlu0 %2413
  %2415 = vrot.lane.b32.xlu0 %v416, 120
  %v2416 = vpop.permute.xlu0 %2415
  %v2417 = vsel %vm483, %v2412, 0
  %v2419 = vsel %vm483, %v2414, 0
  %v2421 = vsel %vm483, %v2416, 0
  %2423 = vmatprep.subr.mxu0 0.0
  %2424 = vmatpush1.xpose.msra.mxu0 %v2419
  %2425 = vmatprep.subr.mxu0 0.0
  %2426 = vmatpush1.xpose.msra.mxu0 %v2421
  %2427 = vmatprep.subr.mxu0 0.0
  %2428 = vmatpush1.xpose.msra.mxu0 0.0
  %2429 = vmatprep.subr.mxu0 0.0
  %2430 = vmatpush1.xpose.msra.mxu0 0.0
  %2431 = vmatprep.subr.mxu0 0.0
  %2432 = vmatpush1.xpose.msra.mxu0 0.0
  %2433 = vmatprep.subr.mxu0 0.0
  %2434 = vmatpush1.xpose.msra.mxu0 0.0
  %2435 = vmatprep.subr.mxu0 0.0
  %2436 = vmatpush1.xpose.msra.mxu0 0.0
  %2437 = vmatprep.subr.mxu0 0.0
  %2438 = vmatpush1.xpose.msra.mxu0 0.0
  %2439 = vmatprep.subr.mxu0 0.0
  %2440 = vmatpush1.xpose.msra.mxu0 0.0
  %2441 = vmatprep.subr.mxu0 0.0
  %2442 = vmatpush1.xpose.msra.mxu0 0.0
  %2443 = vmatprep.subr.mxu0 0.0
  %2444 = vmatpush1.xpose.msra.mxu0 0.0
  %2445 = vmatprep.subr.mxu0 0.0
  %2446 = vmatpush1.xpose.msra.mxu0 0.0
  %2447 = vmatprep.subr.mxu0 0.0
  %2448 = vmatpush1.xpose.msra.mxu0 0.0
  %2449 = vmatprep.subr.mxu0 0.0
  %2450 = vmatpush1.xpose.msra.mxu0 0.0
  %2451 = vmatprep.subr.mxu0 0.0
  %2452 = vmatpush1.xpose.msra.mxu0 0.0
  %2453 = vmatprep.subr.mxu0 0.0
  %2454 = vmatpush1.xpose.msra.mxu0 0.0
  %2455 = vmatprep.subr.mxu0 0.0
  %2456 = vmatpush1.xpose.msra.mxu0 0.0
  %2457 = vmatprep.subr.mxu0 0.0
  %2458 = vmatpush1.xpose.msra.mxu0 0.0
  %2459 = vmatprep.subr.mxu0 0.0
  %2460 = vmatpush1.xpose.msra.mxu0 0.0
  %2461 = vmatprep.subr.mxu0 0.0
  %2462 = vmatpush1.xpose.msra.mxu0 0.0
  %2463 = vmatprep.subr.mxu0 0.0
  %2464 = vmatpush1.xpose.msra.mxu0 0.0
  %2465 = vmatprep.subr.mxu0 0.0
  %2466 = vmatpush1.xpose.msra.mxu0 0.0
  %2467 = vmatprep.subr.mxu0 0.0
  %2468 = vmatpush1.xpose.msra.mxu0 0.0
  %2469 = vmatprep.subr.mxu0 0.0
  %2470 = vmatpush1.xpose.msra.mxu0 0.0
  %2471 = vmatprep.subr.mxu0 0.0
  %2472 = vmatpush1.xpose.msra.mxu0 0.0
  %2473 = vmatprep.subr.mxu0 0.0
  %2474 = vmatpush1.xpose.msra.mxu0 0.0
  %2475 = vmatprep.subr.mxu0 0.0
  %2476 = vmatpush1.xpose.msra.mxu0 0.0
  %2477 = vmatprep.subr.mxu0 0.0
  %2478 = vmatpush1.xpose.msra.mxu0 0.0
  %2479 = vmatprep.subr.mxu0 0.0
  %2480 = vmatpush1.xpose.msra.mxu0 0.0
  %2481 = vmatprep.subr.mxu0 0.0
  %2482 = vmatpush1.xpose.msra.mxu0 0.0
  %2483 = vmatprep.subr.mxu0 0.0
  %2484 = vmatpush1.xpose.msra.mxu0 0.0
  %2485 = vmatprep.subr.mxu0 0.0
  %2486 = vmatpush1.xpose.msra.mxu0 0.0
  %2487 = vmatprep.mubr.f32.mxu0 0.0
  %2488 = vmatmul.mubr.f32.gmra.mrb[0].mxu0 %v2417
  %v2489 = vpop.f32.mrb[0].mxu0
  %v2490 = vadd.f32 %v474, %v2489
  %v2491 = vpop.f32.mrb[0].mxu0
  %2492 = vdwg.mxu0
  %v2493 = vsel %vm1116, %v1916, -inf
  %2494 = vmax.xlane.f32.xlu0 %v2493
  %v2495 = vpop.xlane.xlu0 %2494
  %v2496 = vsel %vm1116, %v1998, -inf
  %2497 = vmax.xlane.f32.xlu0 %v2496
  %v2498 = vpop.xlane.xlu0 %2497
  %v2499 = vsel %vm1116, %v2080, -inf
  %2500 = vmax.xlane.f32.xlu0 %v2499
  %v2501 = vpop.xlane.xlu0 %2500
  %v2502 = vsel %vm1116, %v2162, -inf
  %2503 = vmax.xlane.f32.xlu0 %v2502
  %v2504 = vpop.xlane.xlu0 %2503
  %v2505 = vsel %vm1116, %v2244, -inf
  %2506 = vmax.xlane.f32.xlu0 %v2505
  %v2507 = vpop.xlane.xlu0 %2506
  %v2508 = vsel %vm1116, %v2326, -inf
  %2509 = vmax.xlane.f32.xlu0 %v2508
  %v2510 = vpop.xlane.xlu0 %2509
  %v2511 = vsel %vm1116, %v2408, -inf
  %2512 = vmax.xlane.f32.xlu0 %v2511
  %v2513 = vpop.xlane.xlu0 %2512
  %v2514 = vsel %vm1116, %v2490, -inf
  %2515 = vmax.xlane.f32.xlu0 %v2514
  %v2516 = vpop.xlane.xlu0 %2515
  %v2517 = vsub.f32 %v1916, %v2495
  %v2518 = vsub.f32 %v1998, %v2498
  %v2519 = vsub.f32 %v2080, %v2501
  %v2520 = vsub.f32 %v2162, %v2504
  %v2521 = vsub.f32 %v2244, %v2507
  %v2522 = vsub.f32 %v2326, %v2510
  %v2523 = vsub.f32 %v2408, %v2513
  %v2524 = vsub.f32 %v2490, %v2516
  %v2525 = vmul.f32 %v2517, 1.442695
  %v2526 = vpow.pop %v2525
  %v2527 = vmul.f32 %v2518, 1.442695
  %v2528 = vpow.pop %v2527
  %v2529 = vmul.f32 %v2519, 1.442695
  %v2530 = vpow.pop %v2529
  %v2531 = vmul.f32 %v2520, 1.442695
  %v2532 = vpow.pop %v2531
  %v2533 = vmul.f32 %v2521, 1.442695
  %v2534 = vpow.pop %v2533
  %v2535 = vmul.f32 %v2522, 1.442695
  %v2536 = vpow.pop %v2535
  %v2537 = vmul.f32 %v2523, 1.442695
  %v2538 = vpow.pop %v2537
  %v2539 = vmul.f32 %v2524, 1.442695
  %v2540 = vpow.pop %v2539
  %v2541 = vsel %vm1116, %v2526, 0.0
  %2542 = vadd.xlane.f32.xlu0 %v2541
  %v2543 = vpop.xlane.xlu0 %2542
  %v2544 = vsel %vm1116, %v2528, 0.0
  %2545 = vadd.xlane.f32.xlu0 %v2544
  %v2546 = vpop.xlane.xlu0 %2545
  %v2547 = vsel %vm1116, %v2530, 0.0
  %2548 = vadd.xlane.f32.xlu0 %v2547
  %v2549 = vpop.xlane.xlu0 %2548
  %v2550 = vsel %vm1116, %v2532, 0.0
  %2551 = vadd.xlane.f32.xlu0 %v2550
  %v2552 = vpop.xlane.xlu0 %2551
  %v2553 = vsel %vm1116, %v2534, 0.0
  %2554 = vadd.xlane.f32.xlu0 %v2553
  %v2555 = vpop.xlane.xlu0 %2554
  %v2556 = vsel %vm1116, %v2536, 0.0
  %2557 = vadd.xlane.f32.xlu0 %v2556
  %v2558 = vpop.xlane.xlu0 %2557
  %v2559 = vsel %vm1116, %v2538, 0.0
  %2560 = vadd.xlane.f32.xlu0 %v2559
  %v2561 = vpop.xlane.xlu0 %2560
  %v2562 = vsel %vm1116, %v2540, 0.0
  %2563 = vadd.xlane.f32.xlu0 %v2562
  %v2564 = vpop.xlane.xlu0 %2563
  %v2565 = vrcp.pop %v2543
  %v2566 = vmul.f32 %v2526, %v2565
  %v2567 = vrcp.pop %v2546
  %v2568 = vmul.f32 %v2528, %v2567
  %v2569 = vrcp.pop %v2549
  %v2570 = vmul.f32 %v2530, %v2569
  %v2571 = vrcp.pop %v2552
  %v2572 = vmul.f32 %v2532, %v2571
  %v2573 = vrcp.pop %v2555
  %v2574 = vmul.f32 %v2534, %v2573
  %v2575 = vrcp.pop %v2558
  %v2576 = vmul.f32 %v2536, %v2575
  %v2577 = vrcp.pop %v2561
  %v2578 = vmul.f32 %v2538, %v2577
  %v2579 = vrcp.pop %v2564
  %v2580 = vmul.f32 %v2540, %v2579
  %2581 = vrot.lane.b32.xlu0 %v341, 88
  %v2582 = vpop.permute.xlu0 %2581
  %2583 = vrot.lane.b32.xlu0 %v346, 88
  %v2584 = vpop.permute.xlu0 %2583
  %v2588 = vsel %vm1116, %v2566, 0
  %2590 = vmatprep.subr.mxu0 0.0
  %2591 = vmatpush1.msra.mxu0 %v2582
  %2592 = vmatprep.subr.mxu0 0.0
  %2593 = vmatpush1.msra.mxu0 %v2584
  %2594 = vmatprep.subr.mxu0 0.0
  %2595 = vmatpush1.msra.mxu0 0.0
  %2596 = vmatprep.subr.mxu0 0.0
  %2597 = vmatpush1.msra.mxu0 0.0
  %2598 = vmatprep.subr.mxu0 0.0
  %2599 = vmatpush1.msra.mxu0 0.0
  %2600 = vmatprep.subr.mxu0 0.0
  %2601 = vmatpush1.msra.mxu0 0.0
  %2602 = vmatprep.subr.mxu0 0.0
  %2603 = vmatpush1.msra.mxu0 0.0
  %2604 = vmatprep.subr.mxu0 0.0
  %2605 = vmatpush1.msra.mxu0 0.0
  %2606 = vmatprep.subr.mxu0 0.0
  %2607 = vmatpush1.msra.mxu0 0.0
  %2608 = vmatprep.subr.mxu0 0.0
  %2609 = vmatpush1.msra.mxu0 0.0
  %2610 = vmatprep.subr.mxu0 0.0
  %2611 = vmatpush1.msra.mxu0 0.0
  %2612 = vmatprep.subr.mxu0 0.0
  %2613 = vmatpush1.msra.mxu0 0.0
  %2614 = vmatprep.subr.mxu0 0.0
  %2615 = vmatpush1.msra.mxu0 0.0
  %2616 = vmatprep.subr.mxu0 0.0
  %2617 = vmatpush1.msra.mxu0 0.0
  %2618 = vmatprep.subr.mxu0 0.0
  %2619 = vmatpush1.msra.mxu0 0.0
  %2620 = vmatprep.subr.mxu0 0.0
  %2621 = vmatpush1.msra.mxu0 0.0
  %2622 = vmatprep.subr.mxu0 0.0
  %2623 = vmatpush1.msra.mxu0 0.0
  %2624 = vmatprep.subr.mxu0 0.0
  %2625 = vmatpush1.msra.mxu0 0.0
  %2626 = vmatprep.subr.mxu0 0.0
  %2627 = vmatpush1.msra.mxu0 0.0
  %2628 = vmatprep.subr.mxu0 0.0
  %2629 = vmatpush1.msra.mxu0 0.0
  %2630 = vmatprep.subr.mxu0 0.0
  %2631 = vmatpush1.msra.mxu0 0.0
  %2632 = vmatprep.subr.mxu0 0.0
  %2633 = vmatpush1.msra.mxu0 0.0
  %2634 = vmatprep.subr.mxu0 0.0
  %2635 = vmatpush1.msra.mxu0 0.0
  %2636 = vmatprep.subr.mxu0 0.0
  %2637 = vmatpush1.msra.mxu0 0.0
  %2638 = vmatprep.subr.mxu0 0.0
  %2639 = vmatpush1.msra.mxu0 0.0
  %2640 = vmatprep.subr.mxu0 0.0
  %2641 = vmatpush1.msra.mxu0 0.0
  %2642 = vmatprep.subr.mxu0 0.0
  %2643 = vmatpush1.msra.mxu0 0.0
  %2644 = vmatprep.subr.mxu0 0.0
  %2645 = vmatpush1.msra.mxu0 0.0
  %2646 = vmatprep.subr.mxu0 0.0
  %2647 = vmatpush1.msra.mxu0 0.0
  %2648 = vmatprep.subr.mxu0 0.0
  %2649 = vmatpush1.msra.mxu0 0.0
  %2650 = vmatprep.subr.mxu0 0.0
  %2651 = vmatpush1.msra.mxu0 0.0
  %2652 = vmatprep.subr.mxu0 0.0
  %2653 = vmatpush1.msra.mxu0 0.0
  %2654 = vmatprep.mubr.f32.mxu0 0.0
  %2655 = vmatmul.mubr.f32.gmra.mrb[0].mxu0 %v2588
  %v2656 = vpop.f32.mrb[0].mxu0
  %v2657 = vadd.f32 0.0, %v2656
  %v2658 = vpop.f32.mrb[0].mxu0
  %2659 = vdwg.mxu0
  %2660 = vrot.lane.b32.xlu0 %v351, 88
  %v2661 = vpop.permute.xlu0 %2660
  %2662 = vrot.lane.b32.xlu0 %v356, 88
  %v2663 = vpop.permute.xlu0 %2662
  %v2667 = vsel %vm1116, %v2568, 0
  %2669 = vmatprep.subr.mxu0 0.0
  %2670 = vmatpush1.msra.mxu0 %v2661
  %2671 = vmatprep.subr.mxu0 0.0
  %2672 = vmatpush1.msra.mxu0 %v2663
  %2673 = vmatprep.subr.mxu0 0.0
  %2674 = vmatpush1.msra.mxu0 0.0
  %2675 = vmatprep.subr.mxu0 0.0
  %2676 = vmatpush1.msra.mxu0 0.0
  %2677 = vmatprep.subr.mxu0 0.0
  %2678 = vmatpush1.msra.mxu0 0.0
  %2679 = vmatprep.subr.mxu0 0.0
  %2680 = vmatpush1.msra.mxu0 0.0
  %2681 = vmatprep.subr.mxu0 0.0
  %2682 = vmatpush1.msra.mxu0 0.0
  %2683 = vmatprep.subr.mxu0 0.0
  %2684 = vmatpush1.msra.mxu0 0.0
  %2685 = vmatprep.subr.mxu0 0.0
  %2686 = vmatpush1.msra.mxu0 0.0
  %2687 = vmatprep.subr.mxu0 0.0
  %2688 = vmatpush1.msra.mxu0 0.0
  %2689 = vmatprep.subr.mxu0 0.0
  %2690 = vmatpush1.msra.mxu0 0.0
  %2691 = vmatprep.subr.mxu0 0.0
  %2692 = vmatpush1.msra.mxu0 0.0
  %2693 = vmatprep.subr.mxu0 0.0
  %2694 = vmatpush1.msra.mxu0 0.0
  %2695 = vmatprep.subr.mxu0 0.0
  %2696 = vmatpush1.msra.mxu0 0.0
  %2697 = vmatprep.subr.mxu0 0.0
  %2698 = vmatpush1.msra.mxu0 0.0
  %2699 = vmatprep.subr.mxu0 0.0
  %2700 = vmatpush1.msra.mxu0 0.0
  %2701 = vmatprep.subr.mxu0 0.0
  %2702 = vmatpush1.msra.mxu0 0.0
  %2703 = vmatprep.subr.mxu0 0.0
  %2704 = vmatpush1.msra.mxu0 0.0
  %2705 = vmatprep.subr.mxu0 0.0
  %2706 = vmatpush1.msra.mxu0 0.0
  %2707 = vmatprep.subr.mxu0 0.0
  %2708 = vmatpush1.msra.mxu0 0.0
  %2709 = vmatprep.subr.mxu0 0.0
  %2710 = vmatpush1.msra.mxu0 0.0
  %2711 = vmatprep.subr.mxu0 0.0
  %2712 = vmatpush1.msra.mxu0 0.0
  %2713 = vmatprep.subr.mxu0 0.0
  %2714 = vmatpush1.msra.mxu0 0.0
  %2715 = vmatprep.subr.mxu0 0.0
  %2716 = vmatpush1.msra.mxu0 0.0
  %2717 = vmatprep.subr.mxu0 0.0
  %2718 = vmatpush1.msra.mxu0 0.0
  %2719 = vmatprep.subr.mxu0 0.0
  %2720 = vmatpush1.msra.mxu0 0.0
  %2721 = vmatprep.subr.mxu0 0.0
  %2722 = vmatpush1.msra.mxu0 0.0
  %2723 = vmatprep.subr.mxu0 0.0
  %2724 = vmatpush1.msra.mxu0 0.0
  %2725 = vmatprep.subr.mxu0 0.0
  %2726 = vmatpush1.msra.mxu0 0.0
  %2727 = vmatprep.subr.mxu0 0.0
  %2728 = vmatpush1.msra.mxu0 0.0
  %2729 = vmatprep.subr.mxu0 0.0
  %2730 = vmatpush1.msra.mxu0 0.0
  %2731 = vmatprep.subr.mxu0 0.0
  %2732 = vmatpush1.msra.mxu0 0.0
  %2733 = vmatprep.mubr.f32.mxu0 0.0
  %2734 = vmatmul.mubr.f32.gmra.mrb[0].mxu0 %v2667
  %v2735 = vpop.f32.mrb[0].mxu0
  %v2736 = vadd.f32 0.0, %v2735
  %v2737 = vpop.f32.mrb[0].mxu0
  %2738 = vdwg.mxu0
  %2739 = vrot.lane.b32.xlu0 %v361, 88
  %v2740 = vpop.permute.xlu0 %2739
  %2741 = vrot.lane.b32.xlu0 %v366, 88
  %v2742 = vpop.permute.xlu0 %2741
  %v2746 = vsel %vm1116, %v2570, 0
  %2748 = vmatprep.subr.mxu0 0.0
  %2749 = vmatpush1.msra.mxu0 %v2740
  %2750 = vmatprep.subr.mxu0 0.0
  %2751 = vmatpush1.msra.mxu0 %v2742
  %2752 = vmatprep.subr.mxu0 0.0
  %2753 = vmatpush1.msra.mxu0 0.0
  %2754 = vmatprep.subr.mxu0 0.0
  %2755 = vmatpush1.msra.mxu0 0.0
  %2756 = vmatprep.subr.mxu0 0.0
  %2757 = vmatpush1.msra.mxu0 0.0
  %2758 = vmatprep.subr.mxu0 0.0
  %2759 = vmatpush1.msra.mxu0 0.0
  %2760 = vmatprep.subr.mxu0 0.0
  %2761 = vmatpush1.msra.mxu0 0.0
  %2762 = vmatprep.subr.mxu0 0.0
  %2763 = vmatpush1.msra.mxu0 0.0
  %2764 = vmatprep.subr.mxu0 0.0
  %2765 = vmatpush1.msra.mxu0 0.0
  %2766 = vmatprep.subr.mxu0 0.0
  %2767 = vmatpush1.msra.mxu0 0.0
  %2768 = vmatprep.subr.mxu0 0.0
  %2769 = vmatpush1.msra.mxu0 0.0
  %2770 = vmatprep.subr.mxu0 0.0
  %2771 = vmatpush1.msra.mxu0 0.0
  %2772 = vmatprep.subr.mxu0 0.0
  %2773 = vmatpush1.msra.mxu0 0.0
  %2774 = vmatprep.subr.mxu0 0.0
  %2775 = vmatpush1.msra.mxu0 0.0
  %2776 = vmatprep.subr.mxu0 0.0
  %2777 = vmatpush1.msra.mxu0 0.0
  %2778 = vmatprep.subr.mxu0 0.0
  %2779 = vmatpush1.msra.mxu0 0.0
  %2780 = vmatprep.subr.mxu0 0.0
  %2781 = vmatpush1.msra.mxu0 0.0
  %2782 = vmatprep.subr.mxu0 0.0
  %2783 = vmatpush1.msra.mxu0 0.0
  %2784 = vmatprep.subr.mxu0 0.0
  %2785 = vmatpush1.msra.mxu0 0.0
  %2786 = vmatprep.subr.mxu0 0.0
  %2787 = vmatpush1.msra.mxu0 0.0
  %2788 = vmatprep.subr.mxu0 0.0
  %2789 = vmatpush1.msra.mxu0 0.0
  %2790 = vmatprep.subr.mxu0 0.0
  %2791 = vmatpush1.msra.mxu0 0.0
  %2792 = vmatprep.subr.mxu0 0.0
  %2793 = vmatpush1.msra.mxu0 0.0
  %2794 = vmatprep.subr.mxu0 0.0
  %2795 = vmatpush1.msra.mxu0 0.0
  %2796 = vmatprep.subr.mxu0 0.0
  %2797 = vmatpush1.msra.mxu0 0.0
  %2798 = vmatprep.subr.mxu0 0.0
  %2799 = vmatpush1.msra.mxu0 0.0
  %2800 = vmatprep.subr.mxu0 0.0
  %2801 = vmatpush1.msra.mxu0 0.0
  %2802 = vmatprep.subr.mxu0 0.0
  %2803 = vmatpush1.msra.mxu0 0.0
  %2804 = vmatprep.subr.mxu0 0.0
  %2805 = vmatpush1.msra.mxu0 0.0
  %2806 = vmatprep.subr.mxu0 0.0
  %2807 = vmatpush1.msra.mxu0 0.0
  %2808 = vmatprep.subr.mxu0 0.0
  %2809 = vmatpush1.msra.mxu0 0.0
  %2810 = vmatprep.subr.mxu0 0.0
  %2811 = vmatpush1.msra.mxu0 0.0
  %2812 = vmatprep.mubr.f32.mxu0 0.0
  %2813 = vmatmul.mubr.f32.gmra.mrb[0].mxu0 %v2746
  %v2814 = vpop.f32.mrb[0].mxu0
  %v2815 = vadd.f32 0.0, %v2814
  %v2816 = vpop.f32.mrb[0].mxu0
  %2817 = vdwg.mxu0
  %2818 = vrot.lane.b32.xlu0 %v371, 88
  %v2819 = vpop.permute.xlu0 %2818
  %2820 = vrot.lane.b32.xlu0 %v376, 88
  %v2821 = vpop.permute.xlu0 %2820
  %v2825 = vsel %vm1116, %v2572, 0
  %2827 = vmatprep.subr.mxu0 0.0
  %2828 = vmatpush1.msra.mxu0 %v2819
  %2829 = vmatprep.subr.mxu0 0.0
  %2830 = vmatpush1.msra.mxu0 %v2821
  %2831 = vmatprep.subr.mxu0 0.0
  %2832 = vmatpush1.msra.mxu0 0.0
  %2833 = vmatprep.subr.mxu0 0.0
  %2834 = vmatpush1.msra.mxu0 0.0
  %2835 = vmatprep.subr.mxu0 0.0
  %2836 = vmatpush1.msra.mxu0 0.0
  %2837 = vmatprep.subr.mxu0 0.0
  %2838 = vmatpush1.msra.mxu0 0.0
  %2839 = vmatprep.subr.mxu0 0.0
  %2840 = vmatpush1.msra.mxu0 0.0
  %2841 = vmatprep.subr.mxu0 0.0
  %2842 = vmatpush1.msra.mxu0 0.0
  %2843 = vmatprep.subr.mxu0 0.0
  %2844 = vmatpush1.msra.mxu0 0.0
  %2845 = vmatprep.subr.mxu0 0.0
  %2846 = vmatpush1.msra.mxu0 0.0
  %2847 = vmatprep.subr.mxu0 0.0
  %2848 = vmatpush1.msra.mxu0 0.0
  %2849 = vmatprep.subr.mxu0 0.0
  %2850 = vmatpush1.msra.mxu0 0.0
  %2851 = vmatprep.subr.mxu0 0.0
  %2852 = vmatpush1.msra.mxu0 0.0
  %2853 = vmatprep.subr.mxu0 0.0
  %2854 = vmatpush1.msra.mxu0 0.0
  %2855 = vmatprep.subr.mxu0 0.0
  %2856 = vmatpush1.msra.mxu0 0.0
  %2857 = vmatprep.subr.mxu0 0.0
  %2858 = vmatpush1.msra.mxu0 0.0
  %2859 = vmatprep.subr.mxu0 0.0
  %2860 = vmatpush1.msra.mxu0 0.0
  %2861 = vmatprep.subr.mxu0 0.0
  %2862 = vmatpush1.msra.mxu0 0.0
  %2863 = vmatprep.subr.mxu0 0.0
  %2864 = vmatpush1.msra.mxu0 0.0
  %2865 = vmatprep.subr.mxu0 0.0
  %2866 = vmatpush1.msra.mxu0 0.0
  %2867 = vmatprep.subr.mxu0 0.0
  %2868 = vmatpush1.msra.mxu0 0.0
  %2869 = vmatprep.subr.mxu0 0.0
  %2870 = vmatpush1.msra.mxu0 0.0
  %2871 = vmatprep.subr.mxu0 0.0
  %2872 = vmatpush1.msra.mxu0 0.0
  %2873 = vmatprep.subr.mxu0 0.0
  %2874 = vmatpush1.msra.mxu0 0.0
  %2875 = vmatprep.subr.mxu0 0.0
  %2876 = vmatpush1.msra.mxu0 0.0
  %2877 = vmatprep.subr.mxu0 0.0
  %2878 = vmatpush1.msra.mxu0 0.0
  %2879 = vmatprep.subr.mxu0 0.0
  %2880 = vmatpush1.msra.mxu0 0.0
  %2881 = vmatprep.subr.mxu0 0.0
  %2882 = vmatpush1.msra.mxu0 0.0
  %2883 = vmatprep.subr.mxu0 0.0
  %2884 = vmatpush1.msra.mxu0 0.0
  %2885 = vmatprep.subr.mxu0 0.0
  %2886 = vmatpush1.msra.mxu0 0.0
  %2887 = vmatprep.subr.mxu0 0.0
  %2888 = vmatpush1.msra.mxu0 0.0
  %2889 = vmatprep.subr.mxu0 0.0
  %2890 = vmatpush1.msra.mxu0 0.0
  %2891 = vmatprep.mubr.f32.mxu0 0.0
  %2892 = vmatmul.mubr.f32.gmra.mrb[0].mxu0 %v2825
  %v2893 = vpop.f32.mrb[0].mxu0
  %v2894 = vadd.f32 0.0, %v2893
  %v2895 = vpop.f32.mrb[0].mxu0
  %2896 = vdwg.mxu0
  %2897 = vrot.lane.b32.xlu0 %v381, 88
  %v2898 = vpop.permute.xlu0 %2897
  %2899 = vrot.lane.b32.xlu0 %v386, 88
  %v2900 = vpop.permute.xlu0 %2899
  %v2904 = vsel %vm1116, %v2574, 0
  %2906 = vmatprep.subr.mxu0 0.0
  %2907 = vmatpush1.msra.mxu0 %v2898
  %2908 = vmatprep.subr.mxu0 0.0
  %2909 = vmatpush1.msra.mxu0 %v2900
  %2910 = vmatprep.subr.mxu0 0.0
  %2911 = vmatpush1.msra.mxu0 0.0
  %2912 = vmatprep.subr.mxu0 0.0
  %2913 = vmatpush1.msra.mxu0 0.0
  %2914 = vmatprep.subr.mxu0 0.0
  %2915 = vmatpush1.msra.mxu0 0.0
  %2916 = vmatprep.subr.mxu0 0.0
  %2917 = vmatpush1.msra.mxu0 0.0
  %2918 = vmatprep.subr.mxu0 0.0
  %2919 = vmatpush1.msra.mxu0 0.0
  %2920 = vmatprep.subr.mxu0 0.0
  %2921 = vmatpush1.msra.mxu0 0.0
  %2922 = vmatprep.subr.mxu0 0.0
  %2923 = vmatpush1.msra.mxu0 0.0
  %2924 = vmatprep.subr.mxu0 0.0
  %2925 = vmatpush1.msra.mxu0 0.0
  %2926 = vmatprep.subr.mxu0 0.0
  %2927 = vmatpush1.msra.mxu0 0.0
  %2928 = vmatprep.subr.mxu0 0.0
  %2929 = vmatpush1.msra.mxu0 0.0
  %2930 = vmatprep.subr.mxu0 0.0
  %2931 = vmatpush1.msra.mxu0 0.0
  %2932 = vmatprep.subr.mxu0 0.0
  %2933 = vmatpush1.msra.mxu0 0.0
  %2934 = vmatprep.subr.mxu0 0.0
  %2935 = vmatpush1.msra.mxu0 0.0
  %2936 = vmatprep.subr.mxu0 0.0
  %2937 = vmatpush1.msra.mxu0 0.0
  %2938 = vmatprep.subr.mxu0 0.0
  %2939 = vmatpush1.msra.mxu0 0.0
  %2940 = vmatprep.subr.mxu0 0.0
  %2941 = vmatpush1.msra.mxu0 0.0
  %2942 = vmatprep.subr.mxu0 0.0
  %2943 = vmatpush1.msra.mxu0 0.0
  %2944 = vmatprep.subr.mxu0 0.0
  %2945 = vmatpush1.msra.mxu0 0.0
  %2946 = vmatprep.subr.mxu0 0.0
  %2947 = vmatpush1.msra.mxu0 0.0
  %2948 = vmatprep.subr.mxu0 0.0
  %2949 = vmatpush1.msra.mxu0 0.0
  %2950 = vmatprep.subr.mxu0 0.0
  %2951 = vmatpush1.msra.mxu0 0.0
  %2952 = vmatprep.subr.mxu0 0.0
  %2953 = vmatpush1.msra.mxu0 0.0
  %2954 = vmatprep.subr.mxu0 0.0
  %2955 = vmatpush1.msra.mxu0 0.0
  %2956 = vmatprep.subr.mxu0 0.0
  %2957 = vmatpush1.msra.mxu0 0.0
  %2958 = vmatprep.subr.mxu0 0.0
  %2959 = vmatpush1.msra.mxu0 0.0
  %2960 = vmatprep.subr.mxu0 0.0
  %2961 = vmatpush1.msra.mxu0 0.0
  %2962 = vmatprep.subr.mxu0 0.0
  %2963 = vmatpush1.msra.mxu0 0.0
  %2964 = vmatprep.subr.mxu0 0.0
  %2965 = vmatpush1.msra.mxu0 0.0
  %2966 = vmatprep.subr.mxu0 0.0
  %2967 = vmatpush1.msra.mxu0 0.0
  %2968 = vmatprep.subr.mxu0 0.0
  %2969 = vmatpush1.msra.mxu0 0.0
  %2970 = vmatprep.mubr.f32.mxu0 0.0
  %2971 = vmatmul.mubr.f32.gmra.mrb[0].mxu0 %v2904
  %v2972 = vpop.f32.mrb[0].mxu0
  %v2973 = vadd.f32 0.0, %v2972
  %v2974 = vpop.f32.mrb[0].mxu0
  %2975 = vdwg.mxu0
  %2976 = vrot.lane.b32.xlu0 %v391, 88
  %v2977 = vpop.permute.xlu0 %2976
  %2978 = vrot.lane.b32.xlu0 %v396, 88
  %v2979 = vpop.permute.xlu0 %2978
  %v2983 = vsel %vm1116, %v2576, 0
  %2985 = vmatprep.subr.mxu0 0.0
  %2986 = vmatpush1.msra.mxu0 %v2977
  %2987 = vmatprep.subr.mxu0 0.0
  %2988 = vmatpush1.msra.mxu0 %v2979
  %2989 = vmatprep.subr.mxu0 0.0
  %2990 = vmatpush1.msra.mxu0 0.0
  %2991 = vmatprep.subr.mxu0 0.0
  %2992 = vmatpush1.msra.mxu0 0.0
  %2993 = vmatprep.subr.mxu0 0.0
  %2994 = vmatpush1.msra.mxu0 0.0
  %2995 = vmatprep.subr.mxu0 0.0
  %2996 = vmatpush1.msra.mxu0 0.0
  %2997 = vmatprep.subr.mxu0 0.0
  %2998 = vmatpush1.msra.mxu0 0.0
  %2999 = vmatprep.subr.mxu0 0.0
  %3000 = vmatpush1.msra.mxu0 0.0
  %3001 = vmatprep.subr.mxu0 0.0
  %3002 = vmatpush1.msra.mxu0 0.0
  %3003 = vmatprep.subr.mxu0 0.0
  %3004 = vmatpush1.msra.mxu0 0.0
  %3005 = vmatprep.subr.mxu0 0.0
  %3006 = vmatpush1.msra.mxu0 0.0
  %3007 = vmatprep.subr.mxu0 0.0
  %3008 = vmatpush1.msra.mxu0 0.0
  %3009 = vmatprep.subr.mxu0 0.0
  %3010 = vmatpush1.msra.mxu0 0.0
  %3011 = vmatprep.subr.mxu0 0.0
  %3012 = vmatpush1.msra.mxu0 0.0
  %3013 = vmatprep.subr.mxu0 0.0
  %3014 = vmatpush1.msra.mxu0 0.0
  %3015 = vmatprep.subr.mxu0 0.0
  %3016 = vmatpush1.msra.mxu0 0.0
  %3017 = vmatprep.subr.mxu0 0.0
  %3018 = vmatpush1.msra.mxu0 0.0
  %3019 = vmatprep.subr.mxu0 0.0
  %3020 = vmatpush1.msra.mxu0 0.0
  %3021 = vmatprep.subr.mxu0 0.0
  %3022 = vmatpush1.msra.mxu0 0.0
  %3023 = vmatprep.subr.mxu0 0.0
  %3024 = vmatpush1.msra.mxu0 0.0
  %3025 = vmatprep.subr.mxu0 0.0
  %3026 = vmatpush1.msra.mxu0 0.0
  %3027 = vmatprep.subr.mxu0 0.0
  %3028 = vmatpush1.msra.mxu0 0.0
  %3029 = vmatprep.subr.mxu0 0.0
  %3030 = vmatpush1.msra.mxu0 0.0
  %3031 = vmatprep.subr.mxu0 0.0
  %3032 = vmatpush1.msra.mxu0 0.0
  %3033 = vmatprep.subr.mxu0 0.0
  %3034 = vmatpush1.msra.mxu0 0.0
  %3035 = vmatprep.subr.mxu0 0.0
  %3036 = vmatpush1.msra.mxu0 0.0
  %3037 = vmatprep.subr.mxu0 0.0
  %3038 = vmatpush1.msra.mxu0 0.0
  %3039 = vmatprep.subr.mxu0 0.0
  %3040 = vmatpush1.msra.mxu0 0.0
  %3041 = vmatprep.subr.mxu0 0.0
  %3042 = vmatpush1.msra.mxu0 0.0
  %3043 = vmatprep.subr.mxu0 0.0
  %3044 = vmatpush1.msra.mxu0 0.0
  %3045 = vmatprep.subr.mxu0 0.0
  %3046 = vmatpush1.msra.mxu0 0.0
  %3047 = vmatprep.subr.mxu0 0.0
  %3048 = vmatpush1.msra.mxu0 0.0
  %3049 = vmatprep.mubr.f32.mxu0 0.0
  %3050 = vmatmul.mubr.f32.gmra.mrb[0].mxu0 %v2983
  %v3051 = vpop.f32.mrb[0].mxu0
  %v3052 = vadd.f32 0.0, %v3051
  %v3053 = vpop.f32.mrb[0].mxu0
  %3054 = vdwg.mxu0
  %3055 = vrot.lane.b32.xlu0 %v401, 88
  %v3056 = vpop.permute.xlu0 %3055
  %3057 = vrot.lane.b32.xlu0 %v406, 88
  %v3058 = vpop.permute.xlu0 %3057
  %v3062 = vsel %vm1116, %v2578, 0
  %3064 = vmatprep.subr.mxu0 0.0
  %3065 = vmatpush1.msra.mxu0 %v3056
  %3066 = vmatprep.subr.mxu0 0.0
  %3067 = vmatpush1.msra.mxu0 %v3058
  %3068 = vmatprep.subr.mxu0 0.0
  %3069 = vmatpush1.msra.mxu0 0.0
  %3070 = vmatprep.subr.mxu0 0.0
  %3071 = vmatpush1.msra.mxu0 0.0
  %3072 = vmatprep.subr.mxu0 0.0
  %3073 = vmatpush1.msra.mxu0 0.0
  %3074 = vmatprep.subr.mxu0 0.0
  %3075 = vmatpush1.msra.mxu0 0.0
  %3076 = vmatprep.subr.mxu0 0.0
  %3077 = vmatpush1.msra.mxu0 0.0
  %3078 = vmatprep.subr.mxu0 0.0
  %3079 = vmatpush1.msra.mxu0 0.0
  %3080 = vmatprep.subr.mxu0 0.0
  %3081 = vmatpush1.msra.mxu0 0.0
  %3082 = vmatprep.subr.mxu0 0.0
  %3083 = vmatpush1.msra.mxu0 0.0
  %3084 = vmatprep.subr.mxu0 0.0
  %3085 = vmatpush1.msra.mxu0 0.0
  %3086 = vmatprep.subr.mxu0 0.0
  %3087 = vmatpush1.msra.mxu0 0.0
  %3088 = vmatprep.subr.mxu0 0.0
  %3089 = vmatpush1.msra.mxu0 0.0
  %3090 = vmatprep.subr.mxu0 0.0
  %3091 = vmatpush1.msra.mxu0 0.0
  %3092 = vmatprep.subr.mxu0 0.0
  %3093 = vmatpush1.msra.mxu0 0.0
  %3094 = vmatprep.subr.mxu0 0.0
  %3095 = vmatpush1.msra.mxu0 0.0
  %3096 = vmatprep.subr.mxu0 0.0
  %3097 = vmatpush1.msra.mxu0 0.0
  %3098 = vmatprep.subr.mxu0 0.0
  %3099 = vmatpush1.msra.mxu0 0.0
  %3100 = vmatprep.subr.mxu0 0.0
  %3101 = vmatpush1.msra.mxu0 0.0
  %3102 = vmatprep.subr.mxu0 0.0
  %3103 = vmatpush1.msra.mxu0 0.0
  %3104 = vmatprep.subr.mxu0 0.0
  %3105 = vmatpush1.msra.mxu0 0.0
  %3106 = vmatprep.subr.mxu0 0.0
  %3107 = vmatpush1.msra.mxu0 0.0
  %3108 = vmatprep.subr.mxu0 0.0
  %3109 = vmatpush1.msra.mxu0 0.0
  %3110 = vmatprep.subr.mxu0 0.0
  %3111 = vmatpush1.msra.mxu0 0.0
  %3112 = vmatprep.subr.mxu0 0.0
  %3113 = vmatpush1.msra.mxu0 0.0
  %3114 = vmatprep.subr.mxu0 0.0
  %3115 = vmatpush1.msra.mxu0 0.0
  %3116 = vmatprep.subr.mxu0 0.0
  %3117 = vmatpush1.msra.mxu0 0.0
  %3118 = vmatprep.subr.mxu0 0.0
  %3119 = vmatpush1.msra.mxu0 0.0
  %3120 = vmatprep.subr.mxu0 0.0
  %3121 = vmatpush1.msra.mxu0 0.0
  %3122 = vmatprep.subr.mxu0 0.0
  %3123 = vmatpush1.msra.mxu0 0.0
  %3124 = vmatprep.subr.mxu0 0.0
  %3125 = vmatpush1.msra.mxu0 0.0
  %3126 = vmatprep.subr.mxu0 0.0
  %3127 = vmatpush1.msra.mxu0 0.0
  %3128 = vmatprep.mubr.f32.mxu0 0.0
  %3129 = vmatmul.mubr.f32.gmra.mrb[0].mxu0 %v3062
  %v3130 = vpop.f32.mrb[0].mxu0
  %v3131 = vadd.f32 0.0, %v3130
  %v3132 = vpop.f32.mrb[0].mxu0
  %3133 = vdwg.mxu0
  %3134 = vrot.lane.b32.xlu0 %v411, 88
  %v3135 = vpop.permute.xlu0 %3134
  %3136 = vrot.lane.b32.xlu0 %v416, 88
  %v3137 = vpop.permute.xlu0 %3136
  %v3141 = vsel %vm1116, %v2580, 0
  %3143 = vmatprep.subr.mxu0 0.0
  %3144 = vmatpush1.msra.mxu0 %v3135
  %3145 = vmatprep.subr.mxu0 0.0
  %3146 = vmatpush1.msra.mxu0 %v3137
  %3147 = vmatprep.subr.mxu0 0.0
  %3148 = vmatpush1.msra.mxu0 0.0
  %3149 = vmatprep.subr.mxu0 0.0
  %3150 = vmatpush1.msra.mxu0 0.0
  %3151 = vmatprep.subr.mxu0 0.0
  %3152 = vmatpush1.msra.mxu0 0.0
  %3153 = vmatprep.subr.mxu0 0.0
  %3154 = vmatpush1.msra.mxu0 0.0
  %3155 = vmatprep.subr.mxu0 0.0
  %3156 = vmatpush1.msra.mxu0 0.0
  %3157 = vmatprep.subr.mxu0 0.0
  %3158 = vmatpush1.msra.mxu0 0.0
  %3159 = vmatprep.subr.mxu0 0.0
  %3160 = vmatpush1.msra.mxu0 0.0
  %3161 = vmatprep.subr.mxu0 0.0
  %3162 = vmatpush1.msra.mxu0 0.0
  %3163 = vmatprep.subr.mxu0 0.0
  %3164 = vmatpush1.msra.mxu0 0.0
  %3165 = vmatprep.subr.mxu0 0.0
  %3166 = vmatpush1.msra.mxu0 0.0
  %3167 = vmatprep.subr.mxu0 0.0
  %3168 = vmatpush1.msra.mxu0 0.0
  %3169 = vmatprep.subr.mxu0 0.0
  %3170 = vmatpush1.msra.mxu0 0.0
  %3171 = vmatprep.subr.mxu0 0.0
  %3172 = vmatpush1.msra.mxu0 0.0
  %3173 = vmatprep.subr.mxu0 0.0
  %3174 = vmatpush1.msra.mxu0 0.0
  %3175 = vmatprep.subr.mxu0 0.0
  %3176 = vmatpush1.msra.mxu0 0.0
  %3177 = vmatprep.subr.mxu0 0.0
  %3178 = vmatpush1.msra.mxu0 0.0
  %3179 = vmatprep.subr.mxu0 0.0
  %3180 = vmatpush1.msra.mxu0 0.0
  %3181 = vmatprep.subr.mxu0 0.0
  %3182 = vmatpush1.msra.mxu0 0.0
  %3183 = vmatprep.subr.mxu0 0.0
  %3184 = vmatpush1.msra.mxu0 0.0
  %3185 = vmatprep.subr.mxu0 0.0
  %3186 = vmatpush1.msra.mxu0 0.0
  %3187 = vmatprep.subr.mxu0 0.0
  %3188 = vmatpush1.msra.mxu0 0.0
  %3189 = vmatprep.subr.mxu0 0.0
  %3190 = vmatpush1.msra.mxu0 0.0
  %3191 = vmatprep.subr.mxu0 0.0
  %3192 = vmatpush1.msra.mxu0 0.0
  %3193 = vmatprep.subr.mxu0 0.0
  %3194 = vmatpush1.msra.mxu0 0.0
  %3195 = vmatprep.subr.mxu0 0.0
  %3196 = vmatpush1.msra.mxu0 0.0
  %3197 = vmatprep.subr.mxu0 0.0
  %3198 = vmatpush1.msra.mxu0 0.0
  %3199 = vmatprep.subr.mxu0 0.0
  %3200 = vmatpush1.msra.mxu0 0.0
  %3201 = vmatprep.subr.mxu0 0.0
  %3202 = vmatpush1.msra.mxu0 0.0
  %3203 = vmatprep.subr.mxu0 0.0
  %3204 = vmatpush1.msra.mxu0 0.0
  %3205 = vmatprep.subr.mxu0 0.0
  %3206 = vmatpush1.msra.mxu0 0.0
  %3207 = vmatprep.mubr.f32.mxu0 0.0
  %3208 = vmatmul.mubr.f32.gmra.mrb[0].mxu0 %v3141
  %v3209 = vpop.f32.mrb[0].mxu0
  %v3210 = vadd.f32 0.0, %v3209
  %v3211 = vpop.f32.mrb[0].mxu0
  %3212 = vdwg.mxu0
  %v3214 = vsel %vm483, %v2657, 0
  %v3217 = vsel %vm483, %v2736, 0
  %v3220 = vsel %vm483, %v2815, 0
  %v3223 = vsel %vm483, %v2894, 0
  %v3226 = vsel %vm483, %v2973, 0
  %v3229 = vsel %vm483, %v3052, 0
  %v3232 = vsel %vm483, %v3131, 0
  %v3235 = vsel %vm483, %v3210, 0
  %3237 = vmatprep.subr.mxu0 0.0
  %3238 = vmatpush1.msra.mxu0 %v78
  %3239 = vmatprep.subr.mxu0 0.0
  %3240 = vmatpush1.msra.mxu0 0.0
  %3241 = vmatprep.subr.mxu0 0.0
  %3242 = vmatpush1.msra.mxu0 0.0
  %3243 = vmatprep.subr.mxu0 0.0
  %3244 = vmatpush1.msra.mxu0 0.0
  %3245 = vmatprep.subr.mxu0 0.0
  %3246 = vmatpush1.msra.mxu0 0.0
  %3247 = vmatprep.subr.mxu0 0.0
  %3248 = vmatpush1.msra.mxu0 0.0
  %3249 = vmatprep.subr.mxu0 0.0
  %3250 = vmatpush1.msra.mxu0 0.0
  %3251 = vmatprep.subr.mxu0 0.0
  %3252 = vmatpush1.msra.mxu0 0.0
  %3253 = vmatprep.subr.mxu0 0.0
  %3254 = vmatpush1.msra.mxu0 0.0
  %3255 = vmatprep.subr.mxu0 0.0
  %3256 = vmatpush1.msra.mxu0 0.0
  %3257 = vmatprep.subr.mxu0 0.0
  %3258 = vmatpush1.msra.mxu0 0.0
  %3259 = vmatprep.subr.mxu0 0.0
  %3260 = vmatpush1.msra.mxu0 0.0
  %3261 = vmatprep.subr.mxu0 0.0
  %3262 = vmatpush1.msra.mxu0 0.0
  %3263 = vmatprep.subr.mxu0 0.0
  %3264 = vmatpush1.msra.mxu0 0.0
  %3265 = vmatprep.subr.mxu0 0.0
  %3266 = vmatpush1.msra.mxu0 0.0
  %3267 = vmatprep.subr.mxu0 0.0
  %3268 = vmatpush1.msra.mxu0 0.0
  %3269 = vmatprep.subr.mxu0 0.0
  %3270 = vmatpush1.msra.mxu0 0.0
  %3271 = vmatprep.subr.mxu0 0.0
  %3272 = vmatpush1.msra.mxu0 0.0
  %3273 = vmatprep.subr.mxu0 0.0
  %3274 = vmatpush1.msra.mxu0 0.0
  %3275 = vmatprep.subr.mxu0 0.0
  %3276 = vmatpush1.msra.mxu0 0.0
  %3277 = vmatprep.subr.mxu0 0.0
  %3278 = vmatpush1.msra.mxu0 0.0
  %3279 = vmatprep.subr.mxu0 0.0
  %3280 = vmatpush1.msra.mxu0 0.0
  %3281 = vmatprep.subr.mxu0 0.0
  %3282 = vmatpush1.msra.mxu0 0.0
  %3283 = vmatprep.subr.mxu0 0.0
  %3284 = vmatpush1.msra.mxu0 0.0
  %3285 = vmatprep.subr.mxu0 0.0
  %3286 = vmatpush1.msra.mxu0 0.0
  %3287 = vmatprep.subr.mxu0 0.0
  %3288 = vmatpush1.msra.mxu0 0.0
  %3289 = vmatprep.subr.mxu0 0.0
  %3290 = vmatpush1.msra.mxu0 0.0
  %3291 = vmatprep.subr.mxu0 0.0
  %3292 = vmatpush1.msra.mxu0 0.0
  %3293 = vmatprep.subr.mxu0 0.0
  %3294 = vmatpush1.msra.mxu0 0.0
  %3295 = vmatprep.subr.mxu0 0.0
  %3296 = vmatpush1.msra.mxu0 0.0
  %3297 = vmatprep.subr.mxu0 0.0
  %3298 = vmatpush1.msra.mxu0 0.0
  %3299 = vmatprep.subr.mxu0 0.0
  %3300 = vmatpush1.msra.mxu0 0.0
  %3301 = vmatprep.mubr.f32.mxu0 0.0
  %3302 = vmatmul.mubr.f32.gmra.mrb[0].mxu0 %v3214
  %v3303 = vpop.f32.mrb[0].mxu0
  %v3304 = vadd.f32 0.0, %v3303
  %v3305 = vpop.f32.mrb[0].mxu0
  %3306 = vmatprep.mubr.f32.mxu0 0.0
  %3307 = vmatmul.mubr.f32.gmra.mrb[0].mxu0 %v3217
  %v3308 = vpop.f32.mrb[0].mxu0
  %v3309 = vadd.f32 0.0, %v3308
  %v3310 = vpop.f32.mrb[0].mxu0
  %3311 = vmatprep.mubr.f32.mxu0 0.0
  %3312 = vmatmul.mubr.f32.gmra.mrb[0].mxu0 %v3220
  %v3313 = vpop.f32.mrb[0].mxu0
  %v3314 = vadd.f32 0.0, %v3313
  %v3315 = vpop.f32.mrb[0].mxu0
  %3316 = vmatprep.mubr.f32.mxu0 0.0
  %3317 = vmatmul.mubr.f32.gmra.mrb[0].mxu0 %v3223
  %v3318 = vpop.f32.mrb[0].mxu0
  %v3319 = vadd.f32 0.0, %v3318
  %v3320 = vpop.f32.mrb[0].mxu0
  %3321 = vmatprep.mubr.f32.mxu0 0.0
  %3322 = vmatmul.mubr.f32.gmra.mrb[0].mxu0 %v3226
  %v3323 = vpop.f32.mrb[0].mxu0
  %v3324 = vadd.f32 0.0, %v3323
  %v3325 = vpop.f32.mrb[0].mxu0
  %3326 = vmatprep.mubr.f32.mxu0 0.0
  %3327 = vmatmul.mubr.f32.gmra.mrb[0].mxu0 %v3229
  %v3328 = vpop.f32.mrb[0].mxu0
  %v3329 = vadd.f32 0.0, %v3328
  %v3330 = vpop.f32.mrb[0].mxu0
  %3331 = vmatprep.mubr.f32.mxu0 0.0
  %3332 = vmatmul.mubr.f32.gmra.mrb[0].mxu0 %v3232
  %v3333 = vpop.f32.mrb[0].mxu0
  %v3334 = vadd.f32 0.0, %v3333
  %v3335 = vpop.f32.mrb[0].mxu0
  %3336 = vmatprep.mubr.f32.mxu0 0.0
  %3337 = vmatmul.mubr.f32.gmra.mrb[0].mxu0 %v3235
  %v3338 = vpop.f32.mrb[0].mxu0
  %v3339 = vadd.f32 0.0, %v3338
  %v3340 = vpop.f32.mrb[0].mxu0
  %3341 = vdwg.mxu0
  %v3343 = vsel %vm483, %v1281, 0
  %v3346 = vsel %vm483, %v1360, 0
  %v3349 = vsel %vm483, %v1439, 0
  %v3352 = vsel %vm483, %v1518, 0
  %v3355 = vsel %vm483, %v1597, 0
  %v3358 = vsel %vm483, %v1676, 0
  %v3361 = vsel %vm483, %v1755, 0
  %v3364 = vsel %vm483, %v1834, 0
  %3366 = vmatprep.subr.mxu0 0.0
  %3367 = vmatpush1.msra.mxu0 %v77
  %3368 = vmatprep.subr.mxu0 0.0
  %3369 = vmatpush1.msra.mxu0 0.0
  %3370 = vmatprep.subr.mxu0 0.0
  %3371 = vmatpush1.msra.mxu0 0.0
  %3372 = vmatprep.subr.mxu0 0.0
  %3373 = vmatpush1.msra.mxu0 0.0
  %3374 = vmatprep.subr.mxu0 0.0
  %3375 = vmatpush1.msra.mxu0 0.0
  %3376 = vmatprep.subr.mxu0 0.0
  %3377 = vmatpush1.msra.mxu0 0.0
  %3378 = vmatprep.subr.mxu0 0.0
  %3379 = vmatpush1.msra.mxu0 0.0
  %3380 = vmatprep.subr.mxu0 0.0
  %3381 = vmatpush1.msra.mxu0 0.0
  %3382 = vmatprep.subr.mxu0 0.0
  %3383 = vmatpush1.msra.mxu0 0.0
  %3384 = vmatprep.subr.mxu0 0.0
  %3385 = vmatpush1.msra.mxu0 0.0
  %3386 = vmatprep.subr.mxu0 0.0
  %3387 = vmatpush1.msra.mxu0 0.0
  %3388 = vmatprep.subr.mxu0 0.0
  %3389 = vmatpush1.msra.mxu0 0.0
  %3390 = vmatprep.subr.mxu0 0.0
  %3391 = vmatpush1.msra.mxu0 0.0
  %3392 = vmatprep.subr.mxu0 0.0
  %3393 = vmatpush1.msra.mxu0 0.0
  %3394 = vmatprep.subr.mxu0 0.0
  %3395 = vmatpush1.msra.mxu0 0.0
  %3396 = vmatprep.subr.mxu0 0.0
  %3397 = vmatpush1.msra.mxu0 0.0
  %3398 = vmatprep.subr.mxu0 0.0
  %3399 = vmatpush1.msra.mxu0 0.0
  %3400 = vmatprep.subr.mxu0 0.0
  %3401 = vmatpush1.msra.mxu0 0.0
  %3402 = vmatprep.subr.mxu0 0.0
  %3403 = vmatpush1.msra.mxu0 0.0
  %3404 = vmatprep.subr.mxu0 0.0
  %3405 = vmatpush1.msra.mxu0 0.0
  %3406 = vmatprep.subr.mxu0 0.0
  %3407 = vmatpush1.msra.mxu0 0.0
  %3408 = vmatprep.subr.mxu0 0.0
  %3409 = vmatpush1.msra.mxu0 0.0
  %3410 = vmatprep.subr.mxu0 0.0
  %3411 = vmatpush1.msra.mxu0 0.0
  %3412 = vmatprep.subr.mxu0 0.0
  %3413 = vmatpush1.msra.mxu0 0.0
  %3414 = vmatprep.subr.mxu0 0.0
  %3415 = vmatpush1.msra.mxu0 0.0
  %3416 = vmatprep.subr.mxu0 0.0
  %3417 = vmatpush1.msra.mxu0 0.0
  %3418 = vmatprep.subr.mxu0 0.0
  %3419 = vmatpush1.msra.mxu0 0.0
  %3420 = vmatprep.subr.mxu0 0.0
  %3421 = vmatpush1.msra.mxu0 0.0
  %3422 = vmatprep.subr.mxu0 0.0
  %3423 = vmatpush1.msra.mxu0 0.0
  %3424 = vmatprep.subr.mxu0 0.0
  %3425 = vmatpush1.msra.mxu0 0.0
  %3426 = vmatprep.subr.mxu0 0.0
  %3427 = vmatpush1.msra.mxu0 0.0
  %3428 = vmatprep.subr.mxu0 0.0
  %3429 = vmatpush1.msra.mxu0 0.0
  %3430 = vmatprep.mubr.f32.mxu0 0.0
  %3431 = vmatmul.mubr.f32.gmra.mrb[0].mxu0 %v3343
  %v3432 = vpop.f32.mrb[0].mxu0
  %v3433 = vadd.f32 %v3304, %v3432
  %v3434 = vpop.f32.mrb[0].mxu0
  %3435 = vmatprep.mubr.f32.mxu0 0.0
  %3436 = vmatmul.mubr.f32.gmra.mrb[0].mxu0 %v3346
  %v3437 = vpop.f32.mrb[0].mxu0
  %v3438 = vadd.f32 %v3309, %v3437
  %v3439 = vpop.f32.mrb[0].mxu0
  %3440 = vmatprep.mubr.f32.mxu0 0.0
  %3441 = vmatmul.mubr.f32.gmra.mrb[0].mxu0 %v3349
  %v3442 = vpop.f32.mrb[0].mxu0
  %v3443 = vadd.f32 %v3314, %v3442
  %v3444 = vpop.f32.mrb[0].mxu0
  %3445 = vmatprep.mubr.f32.mxu0 0.0
  %3446 = vmatmul.mubr.f32.gmra.mrb[0].mxu0 %v3352
  %v3447 = vpop.f32.mrb[0].mxu0
  %v3448 = vadd.f32 %v3319, %v3447
  %v3449 = vpop.f32.mrb[0].mxu0
  %3450 = vmatprep.mubr.f32.mxu0 0.0
  %3451 = vmatmul.mubr.f32.gmra.mrb[0].mxu0 %v3355
  %v3452 = vpop.f32.mrb[0].mxu0
  %v3453 = vadd.f32 %v3324, %v3452
  %v3454 = vpop.f32.mrb[0].mxu0
  %3455 = vmatprep.mubr.f32.mxu0 0.0
  %3456 = vmatmul.mubr.f32.gmra.mrb[0].mxu0 %v3358
  %v3457 = vpop.f32.mrb[0].mxu0
  %v3458 = vadd.f32 %v3329, %v3457
  %v3459 = vpop.f32.mrb[0].mxu0
  %3460 = vmatprep.mubr.f32.mxu0 0.0
  %3461 = vmatmul.mubr.f32.gmra.mrb[0].mxu0 %v3361
  %v3462 = vpop.f32.mrb[0].mxu0
  %v3463 = vadd.f32 %v3334, %v3462
  %v3464 = vpop.f32.mrb[0].mxu0
  %3465 = vmatprep.mubr.f32.mxu0 0.0
  %3466 = vmatmul.mubr.f32.gmra.mrb[0].mxu0 %v3364
  %v3467 = vpop.f32.mrb[0].mxu0
  %v3468 = vadd.f32 %v3339, %v3467
  %v3469 = vpop.f32.mrb[0].mxu0
  %3470 = vdwg.mxu0
  %3471 = vrot.lane.b32.xlu0 %v182, 112
  %v3472 = vpop.permute.xlu0 %3471
  %3473 = vrot.lane.b32.xlu0 %v341, 112
  %v3474 = vpop.permute.xlu0 %3473
  %3475 = vrot.lane.b32.xlu0 %v346, 112
  %v3476 = vpop.permute.xlu0 %3475
  %v3477 = vsel %vm483, %v3472, 0
  %v3479 = vsel %vm483, %v3474, 0
  %v3481 = vsel %vm483, %v3476, 0
  %3483 = vmatprep.subr.mxu0 0.0
  %3484 = vmatpush1.xpose.msra.mxu0 %v3479
  %3485 = vmatprep.subr.mxu0 0.0
  %3486 = vmatpush1.xpose.msra.mxu0 %v3481
  %3487 = vmatprep.subr.mxu0 0.0
  %3488 = vmatpush1.xpose.msra.mxu0 0.0
  %3489 = vmatprep.subr.mxu0 0.0
  %3490 = vmatpush1.xpose.msra.mxu0 0.0
  %3491 = vmatprep.subr.mxu0 0.0
  %3492 = vmatpush1.xpose.msra.mxu0 0.0
  %3493 = vmatprep.subr.mxu0 0.0
  %3494 = vmatpush1.xpose.msra.mxu0 0.0
  %3495 = vmatprep.subr.mxu0 0.0
  %3496 = vmatpush1.xpose.msra.mxu0 0.0
  %3497 = vmatprep.subr.mxu0 0.0
  %3498 = vmatpush1.xpose.msra.mxu0 0.0
  %3499 = vmatprep.subr.mxu0 0.0
  %3500 = vmatpush1.xpose.msra.mxu0 0.0
  %3501 = vmatprep.subr.mxu0 0.0
  %3502 = vmatpush1.xpose.msra.mxu0 0.0
  %3503 = vmatprep.subr.mxu0 0.0
  %3504 = vmatpush1.xpose.msra.mxu0 0.0
  %3505 = vmatprep.subr.mxu0 0.0
  %3506 = vmatpush1.xpose.msra.mxu0 0.0
  %3507 = vmatprep.subr.mxu0 0.0
  %3508 = vmatpush1.xpose.msra.mxu0 0.0
  %3509 = vmatprep.subr.mxu0 0.0
  %3510 = vmatpush1.xpose.msra.mxu0 0.0
  %3511 = vmatprep.subr.mxu0 0.0
  %3512 = vmatpush1.xpose.msra.mxu0 0.0
  %3513 = vmatprep.subr.mxu0 0.0
  %3514 = vmatpush1.xpose.msra.mxu0 0.0
  %3515 = vmatprep.subr.mxu0 0.0
  %3516 = vmatpush1.xpose.msra.mxu0 0.0
  %3517 = vmatprep.subr.mxu0 0.0
  %3518 = vmatpush1.xpose.msra.mxu0 0.0
  %3519 = vmatprep.subr.mxu0 0.0
  %3520 = vmatpush1.xpose.msra.mxu0 0.0
  %3521 = vmatprep.subr.mxu0 0.0
  %3522 = vmatpush1.xpose.msra.mxu0 0.0
  %3523 = vmatprep.subr.mxu0 0.0
  %3524 = vmatpush1.xpose.msra.mxu0 0.0
  %3525 = vmatprep.subr.mxu0 0.0
  %3526 = vmatpush1.xpose.msra.mxu0 0.0
  %3527 = vmatprep.subr.mxu0 0.0
  %3528 = vmatpush1.xpose.msra.mxu0 0.0
  %3529 = vmatprep.subr.mxu0 0.0
  %3530 = vmatpush1.xpose.msra.mxu0 0.0
  %3531 = vmatprep.subr.mxu0 0.0
  %3532 = vmatpush1.xpose.msra.mxu0 0.0
  %3533 = vmatprep.subr.mxu0 0.0
  %3534 = vmatpush1.xpose.msra.mxu0 0.0
  %3535 = vmatprep.subr.mxu0 0.0
  %3536 = vmatpush1.xpose.msra.mxu0 0.0
  %3537 = vmatprep.subr.mxu0 0.0
  %3538 = vmatpush1.xpose.msra.mxu0 0.0
  %3539 = vmatprep.subr.mxu0 0.0
  %3540 = vmatpush1.xpose.msra.mxu0 0.0
  %3541 = vmatprep.subr.mxu0 0.0
  %3542 = vmatpush1.xpose.msra.mxu0 0.0
  %3543 = vmatprep.subr.mxu0 0.0
  %3544 = vmatpush1.xpose.msra.mxu0 0.0
  %3545 = vmatprep.subr.mxu0 0.0
  %3546 = vmatpush1.xpose.msra.mxu0 0.0
  %3547 = vmatprep.mubr.f32.mxu0 0.0
  %3548 = vmatmul.mubr.f32.gmra.mrb[0].mxu0 %v3477
  %v3549 = vpop.f32.mrb[0].mxu0
  %v3550 = vadd.f32 %v446, %v3549
  %v3551 = vpop.f32.mrb[0].mxu0
  %3552 = vdwg.mxu0
  %3553 = vrot.lane.b32.xlu0 %v187, 112
  %v3554 = vpop.permute.xlu0 %3553
  %3555 = vrot.lane.b32.xlu0 %v351, 112
  %v3556 = vpop.permute.xlu0 %3555
  %3557 = vrot.lane.b32.xlu0 %v356, 112
  %v3558 = vpop.permute.xlu0 %3557
  %v3559 = vsel %vm483, %v3554, 0
  %v3561 = vsel %vm483, %v3556, 0
  %v3563 = vsel %vm483, %v3558, 0
  %3565 = vmatprep.subr.mxu0 0.0
  %3566 = vmatpush1.xpose.msra.mxu0 %v3561
  %3567 = vmatprep.subr.mxu0 0.0
  %3568 = vmatpush1.xpose.msra.mxu0 %v3563
  %3569 = vmatprep.subr.mxu0 0.0
  %3570 = vmatpush1.xpose.msra.mxu0 0.0
  %3571 = vmatprep.subr.mxu0 0.0
  %3572 = vmatpush1.xpose.msra.mxu0 0.0
  %3573 = vmatprep.subr.mxu0 0.0
  %3574 = vmatpush1.xpose.msra.mxu0 0.0
  %3575 = vmatprep.subr.mxu0 0.0
  %3576 = vmatpush1.xpose.msra.mxu0 0.0
  %3577 = vmatprep.subr.mxu0 0.0
  %3578 = vmatpush1.xpose.msra.mxu0 0.0
  %3579 = vmatprep.subr.mxu0 0.0
  %3580 = vmatpush1.xpose.msra.mxu0 0.0
  %3581 = vmatprep.subr.mxu0 0.0
  %3582 = vmatpush1.xpose.msra.mxu0 0.0
  %3583 = vmatprep.subr.mxu0 0.0
  %3584 = vmatpush1.xpose.msra.mxu0 0.0
  %3585 = vmatprep.subr.mxu0 0.0
  %3586 = vmatpush1.xpose.msra.mxu0 0.0
  %3587 = vmatprep.subr.mxu0 0.0
  %3588 = vmatpush1.xpose.msra.mxu0 0.0
  %3589 = vmatprep.subr.mxu0 0.0
  %3590 = vmatpush1.xpose.msra.mxu0 0.0
  %3591 = vmatprep.subr.mxu0 0.0
  %3592 = vmatpush1.xpose.msra.mxu0 0.0
  %3593 = vmatprep.subr.mxu0 0.0
  %3594 = vmatpush1.xpose.msra.mxu0 0.0
  %3595 = vmatprep.subr.mxu0 0.0
  %3596 = vmatpush1.xpose.msra.mxu0 0.0
  %3597 = vmatprep.subr.mxu0 0.0
  %3598 = vmatpush1.xpose.msra.mxu0 0.0
  %3599 = vmatprep.subr.mxu0 0.0
  %3600 = vmatpush1.xpose.msra.mxu0 0.0
  %3601 = vmatprep.subr.mxu0 0.0
  %3602 = vmatpush1.xpose.msra.mxu0 0.0
  %3603 = vmatprep.subr.mxu0 0.0
  %3604 = vmatpush1.xpose.msra.mxu0 0.0
  %3605 = vmatprep.subr.mxu0 0.0
  %3606 = vmatpush1.xpose.msra.mxu0 0.0
  %3607 = vmatprep.subr.mxu0 0.0
  %3608 = vmatpush1.xpose.msra.mxu0 0.0
  %3609 = vmatprep.subr.mxu0 0.0
  %3610 = vmatpush1.xpose.msra.mxu0 0.0
  %3611 = vmatprep.subr.mxu0 0.0
  %3612 = vmatpush1.xpose.msra.mxu0 0.0
  %3613 = vmatprep.subr.mxu0 0.0
  %3614 = vmatpush1.xpose.msra.mxu0 0.0
  %3615 = vmatprep.subr.mxu0 0.0
  %3616 = vmatpush1.xpose.msra.mxu0 0.0
  %3617 = vmatprep.subr.mxu0 0.0
  %3618 = vmatpush1.xpose.msra.mxu0 0.0
  %3619 = vmatprep.subr.mxu0 0.0
  %3620 = vmatpush1.xpose.msra.mxu0 0.0
  %3621 = vmatprep.subr.mxu0 0.0
  %3622 = vmatpush1.xpose.msra.mxu0 0.0
  %3623 = vmatprep.subr.mxu0 0.0
  %3624 = vmatpush1.xpose.msra.mxu0 0.0
  %3625 = vmatprep.subr.mxu0 0.0
  %3626 = vmatpush1.xpose.msra.mxu0 0.0
  %3627 = vmatprep.subr.mxu0 0.0
  %3628 = vmatpush1.xpose.msra.mxu0 0.0
  %3629 = vmatprep.mubr.f32.mxu0 0.0
  %3630 = vmatmul.mubr.f32.gmra.mrb[0].mxu0 %v3559
  %v3631 = vpop.f32.mrb[0].mxu0
  %v3632 = vadd.f32 %v450, %v3631
  %v3633 = vpop.f32.mrb[0].mxu0
  %3634 = vdwg.mxu0
  %3635 = vrot.lane.b32.xlu0 %v192, 112
  %v3636 = vpop.permute.xlu0 %3635
  %3637 = vrot.lane.b32.xlu0 %v361, 112
  %v3638 = vpop.permute.xlu0 %3637
  %3639 = vrot.lane.b32.xlu0 %v366, 112
  %v3640 = vpop.permute.xlu0 %3639
  %v3641 = vsel %vm483, %v3636, 0
  %v3643 = vsel %vm483, %v3638, 0
  %v3645 = vsel %vm483, %v3640, 0
  %3647 = vmatprep.subr.mxu0 0.0
  %3648 = vmatpush1.xpose.msra.mxu0 %v3643
  %3649 = vmatprep.subr.mxu0 0.0
  %3650 = vmatpush1.xpose.msra.mxu0 %v3645
  %3651 = vmatprep.subr.mxu0 0.0
  %3652 = vmatpush1.xpose.msra.mxu0 0.0
  %3653 = vmatprep.subr.mxu0 0.0
  %3654 = vmatpush1.xpose.msra.mxu0 0.0
  %3655 = vmatprep.subr.mxu0 0.0
  %3656 = vmatpush1.xpose.msra.mxu0 0.0
  %3657 = vmatprep.subr.mxu0 0.0
  %3658 = vmatpush1.xpose.msra.mxu0 0.0
  %3659 = vmatprep.subr.mxu0 0.0
  %3660 = vmatpush1.xpose.msra.mxu0 0.0
  %3661 = vmatprep.subr.mxu0 0.0
  %3662 = vmatpush1.xpose.msra.mxu0 0.0
  %3663 = vmatprep.subr.mxu0 0.0
  %3664 = vmatpush1.xpose.msra.mxu0 0.0
  %3665 = vmatprep.subr.mxu0 0.0
  %3666 = vmatpush1.xpose.msra.mxu0 0.0
  %3667 = vmatprep.subr.mxu0 0.0
  %3668 = vmatpush1.xpose.msra.mxu0 0.0
  %3669 = vmatprep.subr.mxu0 0.0
  %3670 = vmatpush1.xpose.msra.mxu0 0.0
  %3671 = vmatprep.subr.mxu0 0.0
  %3672 = vmatpush1.xpose.msra.mxu0 0.0
  %3673 = vmatprep.subr.mxu0 0.0
  %3674 = vmatpush1.xpose.msra.mxu0 0.0
  %3675 = vmatprep.subr.mxu0 0.0
  %3676 = vmatpush1.xpose.msra.mxu0 0.0
  %3677 = vmatprep.subr.mxu0 0.0
  %3678 = vmatpush1.xpose.msra.mxu0 0.0
  %3679 = vmatprep.subr.mxu0 0.0
  %3680 = vmatpush1.xpose.msra.mxu0 0.0
  %3681 = vmatprep.subr.mxu0 0.0
  %3682 = vmatpush1.xpose.msra.mxu0 0.0
  %3683 = vmatprep.subr.mxu0 0.0
  %3684 = vmatpush1.xpose.msra.mxu0 0.0
  %3685 = vmatprep.subr.mxu0 0.0
  %3686 = vmatpush1.xpose.msra.mxu0 0.0
  %3687 = vmatprep.subr.mxu0 0.0
  %3688 = vmatpush1.xpose.msra.mxu0 0.0
  %3689 = vmatprep.subr.mxu0 0.0
  %3690 = vmatpush1.xpose.msra.mxu0 0.0
  %3691 = vmatprep.subr.mxu0 0.0
  %3692 = vmatpush1.xpose.msra.mxu0 0.0
  %3693 = vmatprep.subr.mxu0 0.0
  %3694 = vmatpush1.xpose.msra.mxu0 0.0
  %3695 = vmatprep.subr.mxu0 0.0
  %3696 = vmatpush1.xpose.msra.mxu0 0.0
  %3697 = vmatprep.subr.mxu0 0.0
  %3698 = vmatpush1.xpose.msra.mxu0 0.0
  %3699 = vmatprep.subr.mxu0 0.0
  %3700 = vmatpush1.xpose.msra.mxu0 0.0
  %3701 = vmatprep.subr.mxu0 0.0
  %3702 = vmatpush1.xpose.msra.mxu0 0.0
  %3703 = vmatprep.subr.mxu0 0.0
  %3704 = vmatpush1.xpose.msra.mxu0 0.0
  %3705 = vmatprep.subr.mxu0 0.0
  %3706 = vmatpush1.xpose.msra.mxu0 0.0
  %3707 = vmatprep.subr.mxu0 0.0
  %3708 = vmatpush1.xpose.msra.mxu0 0.0
  %3709 = vmatprep.subr.mxu0 0.0
  %3710 = vmatpush1.xpose.msra.mxu0 0.0
  %3711 = vmatprep.mubr.f32.mxu0 0.0
  %3712 = vmatmul.mubr.f32.gmra.mrb[0].mxu0 %v3641
  %v3713 = vpop.f32.mrb[0].mxu0
  %v3714 = vadd.f32 %v454, %v3713
  %v3715 = vpop.f32.mrb[0].mxu0
  %3716 = vdwg.mxu0
  %3717 = vrot.lane.b32.xlu0 %v197, 112
  %v3718 = vpop.permute.xlu0 %3717
  %3719 = vrot.lane.b32.xlu0 %v371, 112
  %v3720 = vpop.permute.xlu0 %3719
  %3721 = vrot.lane.b32.xlu0 %v376, 112
  %v3722 = vpop.permute.xlu0 %3721
  %v3723 = vsel %vm483, %v3718, 0
  %v3725 = vsel %vm483, %v3720, 0
  %v3727 = vsel %vm483, %v3722, 0
  %3729 = vmatprep.subr.mxu0 0.0
  %3730 = vmatpush1.xpose.msra.mxu0 %v3725
  %3731 = vmatprep.subr.mxu0 0.0
  %3732 = vmatpush1.xpose.msra.mxu0 %v3727
  %3733 = vmatprep.subr.mxu0 0.0
  %3734 = vmatpush1.xpose.msra.mxu0 0.0
  %3735 = vmatprep.subr.mxu0 0.0
  %3736 = vmatpush1.xpose.msra.mxu0 0.0
  %3737 = vmatprep.subr.mxu0 0.0
  %3738 = vmatpush1.xpose.msra.mxu0 0.0
  %3739 = vmatprep.subr.mxu0 0.0
  %3740 = vmatpush1.xpose.msra.mxu0 0.0
  %3741 = vmatprep.subr.mxu0 0.0
  %3742 = vmatpush1.xpose.msra.mxu0 0.0
  %3743 = vmatprep.subr.mxu0 0.0
  %3744 = vmatpush1.xpose.msra.mxu0 0.0
  %3745 = vmatprep.subr.mxu0 0.0
  %3746 = vmatpush1.xpose.msra.mxu0 0.0
  %3747 = vmatprep.subr.mxu0 0.0
  %3748 = vmatpush1.xpose.msra.mxu0 0.0
  %3749 = vmatprep.subr.mxu0 0.0
  %3750 = vmatpush1.xpose.msra.mxu0 0.0
  %3751 = vmatprep.subr.mxu0 0.0
  %3752 = vmatpush1.xpose.msra.mxu0 0.0
  %3753 = vmatprep.subr.mxu0 0.0
  %3754 = vmatpush1.xpose.msra.mxu0 0.0
  %3755 = vmatprep.subr.mxu0 0.0
  %3756 = vmatpush1.xpose.msra.mxu0 0.0
  %3757 = vmatprep.subr.mxu0 0.0
  %3758 = vmatpush1.xpose.msra.mxu0 0.0
  %3759 = vmatprep.subr.mxu0 0.0
  %3760 = vmatpush1.xpose.msra.mxu0 0.0
  %3761 = vmatprep.subr.mxu0 0.0
  %3762 = vmatpush1.xpose.msra.mxu0 0.0
  %3763 = vmatprep.subr.mxu0 0.0
  %3764 = vmatpush1.xpose.msra.mxu0 0.0
  %3765 = vmatprep.subr.mxu0 0.0
  %3766 = vmatpush1.xpose.msra.mxu0 0.0
  %3767 = vmatprep.subr.mxu0 0.0
  %3768 = vmatpush1.xpose.msra.mxu0 0.0
  %3769 = vmatprep.subr.mxu0 0.0
  %3770 = vmatpush1.xpose.msra.mxu0 0.0
  %3771 = vmatprep.subr.mxu0 0.0
  %3772 = vmatpush1.xpose.msra.mxu0 0.0
  %3773 = vmatprep.subr.mxu0 0.0
  %3774 = vmatpush1.xpose.msra.mxu0 0.0
  %3775 = vmatprep.subr.mxu0 0.0
  %3776 = vmatpush1.xpose.msra.mxu0 0.0
  %3777 = vmatprep.subr.mxu0 0.0
  %3778 = vmatpush1.xpose.msra.mxu0 0.0
  %3779 = vmatprep.subr.mxu0 0.0
  %3780 = vmatpush1.xpose.msra.mxu0 0.0
  %3781 = vmatprep.subr.mxu0 0.0
  %3782 = vmatpush1.xpose.msra.mxu0 0.0
  %3783 = vmatprep.subr.mxu0 0.0
  %3784 = vmatpush1.xpose.msra.mxu0 0.0
  %3785 = vmatprep.subr.mxu0 0.0
  %3786 = vmatpush1.xpose.msra.mxu0 0.0
  %3787 = vmatprep.subr.mxu0 0.0
  %3788 = vmatpush1.xpose.msra.mxu0 0.0
  %3789 = vmatprep.subr.mxu0 0.0
  %3790 = vmatpush1.xpose.msra.mxu0 0.0
  %3791 = vmatprep.subr.mxu0 0.0
  %3792 = vmatpush1.xpose.msra.mxu0 0.0
  %3793 = vmatprep.mubr.f32.mxu0 0.0
  %3794 = vmatmul.mubr.f32.gmra.mrb[0].mxu0 %v3723
  %v3795 = vpop.f32.mrb[0].mxu0
  %v3796 = vadd.f32 %v458, %v3795
  %v3797 = vpop.f32.mrb[0].mxu0
  %3798 = vdwg.mxu0
  %3799 = vrot.lane.b32.xlu0 %v202, 112
  %v3800 = vpop.permute.xlu0 %3799
  %3801 = vrot.lane.b32.xlu0 %v381, 112
  %v3802 = vpop.permute.xlu0 %3801
  %3803 = vrot.lane.b32.xlu0 %v386, 112
  %v3804 = vpop.permute.xlu0 %3803
  %v3805 = vsel %vm483, %v3800, 0
  %v3807 = vsel %vm483, %v3802, 0
  %v3809 = vsel %vm483, %v3804, 0
  %3811 = vmatprep.subr.mxu0 0.0
  %3812 = vmatpush1.xpose.msra.mxu0 %v3807
  %3813 = vmatprep.subr.mxu0 0.0
  %3814 = vmatpush1.xpose.msra.mxu0 %v3809
  %3815 = vmatprep.subr.mxu0 0.0
  %3816 = vmatpush1.xpose.msra.mxu0 0.0
  %3817 = vmatprep.subr.mxu0 0.0
  %3818 = vmatpush1.xpose.msra.mxu0 0.0
  %3819 = vmatprep.subr.mxu0 0.0
  %3820 = vmatpush1.xpose.msra.mxu0 0.0
  %3821 = vmatprep.subr.mxu0 0.0
  %3822 = vmatpush1.xpose.msra.mxu0 0.0
  %3823 = vmatprep.subr.mxu0 0.0
  %3824 = vmatpush1.xpose.msra.mxu0 0.0
  %3825 = vmatprep.subr.mxu0 0.0
  %3826 = vmatpush1.xpose.msra.mxu0 0.0
  %3827 = vmatprep.subr.mxu0 0.0
  %3828 = vmatpush1.xpose.msra.mxu0 0.0
  %3829 = vmatprep.subr.mxu0 0.0
  %3830 = vmatpush1.xpose.msra.mxu0 0.0
  %3831 = vmatprep.subr.mxu0 0.0
  %3832 = vmatpush1.xpose.msra.mxu0 0.0
  %3833 = vmatprep.subr.mxu0 0.0
  %3834 = vmatpush1.xpose.msra.mxu0 0.0
  %3835 = vmatprep.subr.mxu0 0.0
  %3836 = vmatpush1.xpose.msra.mxu0 0.0
  %3837 = vmatprep.subr.mxu0 0.0
  %3838 = vmatpush1.xpose.msra.mxu0 0.0
  %3839 = vmatprep.subr.mxu0 0.0
  %3840 = vmatpush1.xpose.msra.mxu0 0.0
  %3841 = vmatprep.subr.mxu0 0.0
  %3842 = vmatpush1.xpose.msra.mxu0 0.0
  %3843 = vmatprep.subr.mxu0 0.0
  %3844 = vmatpush1.xpose.msra.mxu0 0.0
  %3845 = vmatprep.subr.mxu0 0.0
  %3846 = vmatpush1.xpose.msra.mxu0 0.0
  %3847 = vmatprep.subr.mxu0 0.0
  %3848 = vmatpush1.xpose.msra.mxu0 0.0
  %3849 = vmatprep.subr.mxu0 0.0
  %3850 = vmatpush1.xpose.msra.mxu0 0.0
  %3851 = vmatprep.subr.mxu0 0.0
  %3852 = vmatpush1.xpose.msra.mxu0 0.0
  %3853 = vmatprep.subr.mxu0 0.0
  %3854 = vmatpush1.xpose.msra.mxu0 0.0
  %3855 = vmatprep.subr.mxu0 0.0
  %3856 = vmatpush1.xpose.msra.mxu0 0.0
  %3857 = vmatprep.subr.mxu0 0.0
  %3858 = vmatpush1.xpose.msra.mxu0 0.0
  %3859 = vmatprep.subr.mxu0 0.0
  %3860 = vmatpush1.xpose.msra.mxu0 0.0
  %3861 = vmatprep.subr.mxu0 0.0
  %3862 = vmatpush1.xpose.msra.mxu0 0.0
  %3863 = vmatprep.subr.mxu0 0.0
  %3864 = vmatpush1.xpose.msra.mxu0 0.0
  %3865 = vmatprep.subr.mxu0 0.0
  %3866 = vmatpush1.xpose.msra.mxu0 0.0
  %3867 = vmatprep.subr.mxu0 0.0
  %3868 = vmatpush1.xpose.msra.mxu0 0.0
  %3869 = vmatprep.subr.mxu0 0.0
  %3870 = vmatpush1.xpose.msra.mxu0 0.0
  %3871 = vmatprep.subr.mxu0 0.0
  %3872 = vmatpush1.xpose.msra.mxu0 0.0
  %3873 = vmatprep.subr.mxu0 0.0
  %3874 = vmatpush1.xpose.msra.mxu0 0.0
  %3875 = vmatprep.mubr.f32.mxu0 0.0
  %3876 = vmatmul.mubr.f32.gmra.mrb[0].mxu0 %v3805
  %v3877 = vpop.f32.mrb[0].mxu0
  %v3878 = vadd.f32 %v462, %v3877
  %v3879 = vpop.f32.mrb[0].mxu0
  %3880 = vdwg.mxu0
  %3881 = vrot.lane.b32.xlu0 %v207, 112
  %v3882 = vpop.permute.xlu0 %3881
  %3883 = vrot.lane.b32.xlu0 %v391, 112
  %v3884 = vpop.permute.xlu0 %3883
  %3885 = vrot.lane.b32.xlu0 %v396, 112
  %v3886 = vpop.permute.xlu0 %3885
  %v3887 = vsel %vm483, %v3882, 0
  %v3889 = vsel %vm483, %v3884, 0
  %v3891 = vsel %vm483, %v3886, 0
  %3893 = vmatprep.subr.mxu0 0.0
  %3894 = vmatpush1.xpose.msra.mxu0 %v3889
  %3895 = vmatprep.subr.mxu0 0.0
  %3896 = vmatpush1.xpose.msra.mxu0 %v3891
  %3897 = vmatprep.subr.mxu0 0.0
  %3898 = vmatpush1.xpose.msra.mxu0 0.0
  %3899 = vmatprep.subr.mxu0 0.0
  %3900 = vmatpush1.xpose.msra.mxu0 0.0
  %3901 = vmatprep.subr.mxu0 0.0
  %3902 = vmatpush1.xpose.msra.mxu0 0.0
  %3903 = vmatprep.subr.mxu0 0.0
  %3904 = vmatpush1.xpose.msra.mxu0 0.0
  %3905 = vmatprep.subr.mxu0 0.0
  %3906 = vmatpush1.xpose.msra.mxu0 0.0
  %3907 = vmatprep.subr.mxu0 0.0
  %3908 = vmatpush1.xpose.msra.mxu0 0.0
  %3909 = vmatprep.subr.mxu0 0.0
  %3910 = vmatpush1.xpose.msra.mxu0 0.0
  %3911 = vmatprep.subr.mxu0 0.0
  %3912 = vmatpush1.xpose.msra.mxu0 0.0
  %3913 = vmatprep.subr.mxu0 0.0
  %3914 = vmatpush1.xpose.msra.mxu0 0.0
  %3915 = vmatprep.subr.mxu0 0.0
  %3916 = vmatpush1.xpose.msra.mxu0 0.0
  %3917 = vmatprep.subr.mxu0 0.0
  %3918 = vmatpush1.xpose.msra.mxu0 0.0
  %3919 = vmatprep.subr.mxu0 0.0
  %3920 = vmatpush1.xpose.msra.mxu0 0.0
  %3921 = vmatprep.subr.mxu0 0.0
  %3922 = vmatpush1.xpose.msra.mxu0 0.0
  %3923 = vmatprep.subr.mxu0 0.0
  %3924 = vmatpush1.xpose.msra.mxu0 0.0
  %3925 = vmatprep.subr.mxu0 0.0
  %3926 = vmatpush1.xpose.msra.mxu0 0.0
  %3927 = vmatprep.subr.mxu0 0.0
  %3928 = vmatpush1.xpose.msra.mxu0 0.0
  %3929 = vmatprep.subr.mxu0 0.0
  %3930 = vmatpush1.xpose.msra.mxu0 0.0
  %3931 = vmatprep.subr.mxu0 0.0
  %3932 = vmatpush1.xpose.msra.mxu0 0.0
  %3933 = vmatprep.subr.mxu0 0.0
  %3934 = vmatpush1.xpose.msra.mxu0 0.0
  %3935 = vmatprep.subr.mxu0 0.0
  %3936 = vmatpush1.xpose.msra.mxu0 0.0
  %3937 = vmatprep.subr.mxu0 0.0
  %3938 = vmatpush1.xpose.msra.mxu0 0.0
  %3939 = vmatprep.subr.mxu0 0.0
  %3940 = vmatpush1.xpose.msra.mxu0 0.0
  %3941 = vmatprep.subr.mxu0 0.0
  %3942 = vmatpush1.xpose.msra.mxu0 0.0
  %3943 = vmatprep.subr.mxu0 0.0
  %3944 = vmatpush1.xpose.msra.mxu0 0.0
  %3945 = vmatprep.subr.mxu0 0.0
  %3946 = vmatpush1.xpose.msra.mxu0 0.0
  %3947 = vmatprep.subr.mxu0 0.0
  %3948 = vmatpush1.xpose.msra.mxu0 0.0
  %3949 = vmatprep.subr.mxu0 0.0
  %3950 = vmatpush1.xpose.msra.mxu0 0.0
  %3951 = vmatprep.subr.mxu0 0.0
  %3952 = vmatpush1.xpose.msra.mxu0 0.0
  %3953 = vmatprep.subr.mxu0 0.0
  %3954 = vmatpush1.xpose.msra.mxu0 0.0
  %3955 = vmatprep.subr.mxu0 0.0
  %3956 = vmatpush1.xpose.msra.mxu0 0.0
  %3957 = vmatprep.mubr.f32.mxu0 0.0
  %3958 = vmatmul.mubr.f32.gmra.mrb[0].mxu0 %v3887
  %v3959 = vpop.f32.mrb[0].mxu0
  %v3960 = vadd.f32 %v466, %v3959
  %v3961 = vpop.f32.mrb[0].mxu0
  %3962 = vdwg.mxu0
  %3963 = vrot.lane.b32.xlu0 %v212, 112
  %v3964 = vpop.permute.xlu0 %3963
  %3965 = vrot.lane.b32.xlu0 %v401, 112
  %v3966 = vpop.permute.xlu0 %3965
  %3967 = vrot.lane.b32.xlu0 %v406, 112
  %v3968 = vpop.permute.xlu0 %3967
  %v3969 = vsel %vm483, %v3964, 0
  %v3971 = vsel %vm483, %v3966, 0
  %v3973 = vsel %vm483, %v3968, 0
  %3975 = vmatprep.subr.mxu0 0.0
  %3976 = vmatpush1.xpose.msra.mxu0 %v3971
  %3977 = vmatprep.subr.mxu0 0.0
  %3978 = vmatpush1.xpose.msra.mxu0 %v3973
  %3979 = vmatprep.subr.mxu0 0.0
  %3980 = vmatpush1.xpose.msra.mxu0 0.0
  %3981 = vmatprep.subr.mxu0 0.0
  %3982 = vmatpush1.xpose.msra.mxu0 0.0
  %3983 = vmatprep.subr.mxu0 0.0
  %3984 = vmatpush1.xpose.msra.mxu0 0.0
  %3985 = vmatprep.subr.mxu0 0.0
  %3986 = vmatpush1.xpose.msra.mxu0 0.0
  %3987 = vmatprep.subr.mxu0 0.0
  %3988 = vmatpush1.xpose.msra.mxu0 0.0
  %3989 = vmatprep.subr.mxu0 0.0
  %3990 = vmatpush1.xpose.msra.mxu0 0.0
  %3991 = vmatprep.subr.mxu0 0.0
  %3992 = vmatpush1.xpose.msra.mxu0 0.0
  %3993 = vmatprep.subr.mxu0 0.0
  %3994 = vmatpush1.xpose.msra.mxu0 0.0
  %3995 = vmatprep.subr.mxu0 0.0
  %3996 = vmatpush1.xpose.msra.mxu0 0.0
  %3997 = vmatprep.subr.mxu0 0.0
  %3998 = vmatpush1.xpose.msra.mxu0 0.0
  %3999 = vmatprep.subr.mxu0 0.0
  %4000 = vmatpush1.xpose.msra.mxu0 0.0
  %4001 = vmatprep.subr.mxu0 0.0
  %4002 = vmatpush1.xpose.msra.mxu0 0.0
  %4003 = vmatprep.subr.mxu0 0.0
  %4004 = vmatpush1.xpose.msra.mxu0 0.0
  %4005 = vmatprep.subr.mxu0 0.0
  %4006 = vmatpush1.xpose.msra.mxu0 0.0
  %4007 = vmatprep.subr.mxu0 0.0
  %4008 = vmatpush1.xpose.msra.mxu0 0.0
  %4009 = vmatprep.subr.mxu0 0.0
  %4010 = vmatpush1.xpose.msra.mxu0 0.0
  %4011 = vmatprep.subr.mxu0 0.0
  %4012 = vmatpush1.xpose.msra.mxu0 0.0
  %4013 = vmatprep.subr.mxu0 0.0
  %4014 = vmatpush1.xpose.msra.mxu0 0.0
  %4015 = vmatprep.subr.mxu0 0.0
  %4016 = vmatpush1.xpose.msra.mxu0 0.0
  %4017 = vmatprep.subr.mxu0 0.0
  %4018 = vmatpush1.xpose.msra.mxu0 0.0
  %4019 = vmatprep.subr.mxu0 0.0
  %4020 = vmatpush1.xpose.msra.mxu0 0.0
  %4021 = vmatprep.subr.mxu0 0.0
  %4022 = vmatpush1.xpose.msra.mxu0 0.0
  %4023 = vmatprep.subr.mxu0 0.0
  %4024 = vmatpush1.xpose.msra.mxu0 0.0
  %4025 = vmatprep.subr.mxu0 0.0
  %4026 = vmatpush1.xpose.msra.mxu0 0.0
  %4027 = vmatprep.subr.mxu0 0.0
  %4028 = vmatpush1.xpose.msra.mxu0 0.0
  %4029 = vmatprep.subr.mxu0 0.0
  %4030 = vmatpush1.xpose.msra.mxu0 0.0
  %4031 = vmatprep.subr.mxu0 0.0
  %4032 = vmatpush1.xpose.msra.mxu0 0.0
  %4033 = vmatprep.subr.mxu0 0.0
  %4034 = vmatpush1.xpose.msra.mxu0 0.0
  %4035 = vmatprep.subr.mxu0 0.0
  %4036 = vmatpush1.xpose.msra.mxu0 0.0
  %4037 = vmatprep.subr.mxu0 0.0
  %4038 = vmatpush1.xpose.msra.mxu0 0.0
  %4039 = vmatprep.mubr.f32.mxu0 0.0
  %4040 = vmatmul.mubr.f32.gmra.mrb[0].mxu0 %v3969
  %v4041 = vpop.f32.mrb[0].mxu0
  %v4042 = vadd.f32 %v470, %v4041
  %v4043 = vpop.f32.mrb[0].mxu0
  %4044 = vdwg.mxu0
  %4045 = vrot.lane.b32.xlu0 %v217, 112
  %v4046 = vpop.permute.xlu0 %4045
  %4047 = vrot.lane.b32.xlu0 %v411, 112
  %v4048 = vpop.permute.xlu0 %4047
  %4049 = vrot.lane.b32.xlu0 %v416, 112
  %v4050 = vpop.permute.xlu0 %4049
  %v4051 = vsel %vm483, %v4046, 0
  %v4053 = vsel %vm483, %v4048, 0
  %v4055 = vsel %vm483, %v4050, 0
  %4057 = vmatprep.subr.mxu0 0.0
  %4058 = vmatpush1.xpose.msra.mxu0 %v4053
  %4059 = vmatprep.subr.mxu0 0.0
  %4060 = vmatpush1.xpose.msra.mxu0 %v4055
  %4061 = vmatprep.subr.mxu0 0.0
  %4062 = vmatpush1.xpose.msra.mxu0 0.0
  %4063 = vmatprep.subr.mxu0 0.0
  %4064 = vmatpush1.xpose.msra.mxu0 0.0
  %4065 = vmatprep.subr.mxu0 0.0
  %4066 = vmatpush1.xpose.msra.mxu0 0.0
  %4067 = vmatprep.subr.mxu0 0.0
  %4068 = vmatpush1.xpose.msra.mxu0 0.0
  %4069 = vmatprep.subr.mxu0 0.0
  %4070 = vmatpush1.xpose.msra.mxu0 0.0
  %4071 = vmatprep.subr.mxu0 0.0
  %4072 = vmatpush1.xpose.msra.mxu0 0.0
  %4073 = vmatprep.subr.mxu0 0.0
  %4074 = vmatpush1.xpose.msra.mxu0 0.0
  %4075 = vmatprep.subr.mxu0 0.0
  %4076 = vmatpush1.xpose.msra.mxu0 0.0
  %4077 = vmatprep.subr.mxu0 0.0
  %4078 = vmatpush1.xpose.msra.mxu0 0.0
  %4079 = vmatprep.subr.mxu0 0.0
  %4080 = vmatpush1.xpose.msra.mxu0 0.0
  %4081 = vmatprep.subr.mxu0 0.0
  %4082 = vmatpush1.xpose.msra.mxu0 0.0
  %4083 = vmatprep.subr.mxu0 0.0
  %4084 = vmatpush1.xpose.msra.mxu0 0.0
  %4085 = vmatprep.subr.mxu0 0.0
  %4086 = vmatpush1.xpose.msra.mxu0 0.0
  %4087 = vmatprep.subr.mxu0 0.0
  %4088 = vmatpush1.xpose.msra.mxu0 0.0
  %4089 = vmatprep.subr.mxu0 0.0
  %4090 = vmatpush1.xpose.msra.mxu0 0.0
  %4091 = vmatprep.subr.mxu0 0.0
  %4092 = vmatpush1.xpose.msra.mxu0 0.0
  %4093 = vmatprep.subr.mxu0 0.0
  %4094 = vmatpush1.xpose.msra.mxu0 0.0
  %4095 = vmatprep.subr.mxu0 0.0
  %4096 = vmatpush1.xpose.msra.mxu0 0.0
  %4097 = vmatprep.subr.mxu0 0.0
  %4098 = vmatpush1.xpose.msra.mxu0 0.0
  %4099 = vmatprep.subr.mxu0 0.0
  %4100 = vmatpush1.xpose.msra.mxu0 0.0
  %4101 = vmatprep.subr.mxu0 0.0
  %4102 = vmatpush1.xpose.msra.mxu0 0.0
  %4103 = vmatprep.subr.mxu0 0.0
  %4104 = vmatpush1.xpose.msra.mxu0 0.0
  %4105 = vmatprep.subr.mxu0 0.0
  %4106 = vmatpush1.xpose.msra.mxu0 0.0
  %4107 = vmatprep.subr.mxu0 0.0
  %4108 = vmatpush1.xpose.msra.mxu0 0.0
  %4109 = vmatprep.subr.mxu0 0.0
  %4110 = vmatpush1.xpose.msra.mxu0 0.0
  %4111 = vmatprep.subr.mxu0 0.0
  %4112 = vmatpush1.xpose.msra.mxu0 0.0
  %4113 = vmatprep.subr.mxu0 0.0
  %4114 = vmatpush1.xpose.msra.mxu0 0.0
  %4115 = vmatprep.subr.mxu0 0.0
  %4116 = vmatpush1.xpose.msra.mxu0 0.0
  %4117 = vmatprep.subr.mxu0 0.0
  %4118 = vmatpush1.xpose.msra.mxu0 0.0
  %4119 = vmatprep.subr.mxu0 0.0
  %4120 = vmatpush1.xpose.msra.mxu0 0.0
  %4121 = vmatprep.mubr.f32.mxu0 0.0
  %4122 = vmatmul.mubr.f32.gmra.mrb[0].mxu0 %v4051
  %v4123 = vpop.f32.mrb[0].mxu0
  %v4124 = vadd.f32 %v474, %v4123
  %v4125 = vpop.f32.mrb[0].mxu0
  %4126 = vdwg.mxu0
  %v4127 = vsel %vm1116, %v3550, -inf
  %4128 = vmax.xlane.f32.xlu0 %v4127
  %v4129 = vpop.xlane.xlu0 %4128
  %v4130 = vsel %vm1116, %v3632, -inf
  %4131 = vmax.xlane.f32.xlu0 %v4130
  %v4132 = vpop.xlane.xlu0 %4131
  %v4133 = vsel %vm1116, %v3714, -inf
  %4134 = vmax.xlane.f32.xlu0 %v4133
  %v4135 = vpop.xlane.xlu0 %4134
  %v4136 = vsel %vm1116, %v3796, -inf
  %4137 = vmax.xlane.f32.xlu0 %v4136
  %v4138 = vpop.xlane.xlu0 %4137
  %v4139 = vsel %vm1116, %v3878, -inf
  %4140 = vmax.xlane.f32.xlu0 %v4139
  %v4141 = vpop.xlane.xlu0 %4140
  %v4142 = vsel %vm1116, %v3960, -inf
  %4143 = vmax.xlane.f32.xlu0 %v4142
  %v4144 = vpop.xlane.xlu0 %4143
  %v4145 = vsel %vm1116, %v4042, -inf
  %4146 = vmax.xlane.f32.xlu0 %v4145
  %v4147 = vpop.xlane.xlu0 %4146
  %v4148 = vsel %vm1116, %v4124, -inf
  %4149 = vmax.xlane.f32.xlu0 %v4148
  %v4150 = vpop.xlane.xlu0 %4149
  %v4151 = vsub.f32 %v3550, %v4129
  %v4152 = vsub.f32 %v3632, %v4132
  %v4153 = vsub.f32 %v3714, %v4135
  %v4154 = vsub.f32 %v3796, %v4138
  %v4155 = vsub.f32 %v3878, %v4141
  %v4156 = vsub.f32 %v3960, %v4144
  %v4157 = vsub.f32 %v4042, %v4147
  %v4158 = vsub.f32 %v4124, %v4150
  %v4159 = vmul.f32 %v4151, 1.442695
  %v4160 = vpow.pop %v4159
  %v4161 = vmul.f32 %v4152, 1.442695
  %v4162 = vpow.pop %v4161
  %v4163 = vmul.f32 %v4153, 1.442695
  %v4164 = vpow.pop %v4163
  %v4165 = vmul.f32 %v4154, 1.442695
  %v4166 = vpow.pop %v4165
  %v4167 = vmul.f32 %v4155, 1.442695
  %v4168 = vpow.pop %v4167
  %v4169 = vmul.f32 %v4156, 1.442695
  %v4170 = vpow.pop %v4169
  %v4171 = vmul.f32 %v4157, 1.442695
  %v4172 = vpow.pop %v4171
  %v4173 = vmul.f32 %v4158, 1.442695
  %v4174 = vpow.pop %v4173
  %v4175 = vsel %vm1116, %v4160, 0.0
  %4176 = vadd.xlane.f32.xlu0 %v4175
  %v4177 = vpop.xlane.xlu0 %4176
  %v4178 = vsel %vm1116, %v4162, 0.0
  %4179 = vadd.xlane.f32.xlu0 %v4178
  %v4180 = vpop.xlane.xlu0 %4179
  %v4181 = vsel %vm1116, %v4164, 0.0
  %4182 = vadd.xlane.f32.xlu0 %v4181
  %v4183 = vpop.xlane.xlu0 %4182
  %v4184 = vsel %vm1116, %v4166, 0.0
  %4185 = vadd.xlane.f32.xlu0 %v4184
  %v4186 = vpop.xlane.xlu0 %4185
  %v4187 = vsel %vm1116, %v4168, 0.0
  %4188 = vadd.xlane.f32.xlu0 %v4187
  %v4189 = vpop.xlane.xlu0 %4188
  %v4190 = vsel %vm1116, %v4170, 0.0
  %4191 = vadd.xlane.f32.xlu0 %v4190
  %v4192 = vpop.xlane.xlu0 %4191
  %v4193 = vsel %vm1116, %v4172, 0.0
  %4194 = vadd.xlane.f32.xlu0 %v4193
  %v4195 = vpop.xlane.xlu0 %4194
  %v4196 = vsel %vm1116, %v4174, 0.0
  %4197 = vadd.xlane.f32.xlu0 %v4196
  %v4198 = vpop.xlane.xlu0 %4197
  %v4199 = vrcp.pop %v4177
  %v4200 = vmul.f32 %v4160, %v4199
  %v4201 = vrcp.pop %v4180
  %v4202 = vmul.f32 %v4162, %v4201
  %v4203 = vrcp.pop %v4183
  %v4204 = vmul.f32 %v4164, %v4203
  %v4205 = vrcp.pop %v4186
  %v4206 = vmul.f32 %v4166, %v4205
  %v4207 = vrcp.pop %v4189
  %v4208 = vmul.f32 %v4168, %v4207
  %v4209 = vrcp.pop %v4192
  %v4210 = vmul.f32 %v4170, %v4209
  %v4211 = vrcp.pop %v4195
  %v4212 = vmul.f32 %v4172, %v4211
  %v4213 = vrcp.pop %v4198
  %v4214 = vmul.f32 %v4174, %v4213
  %4215 = vrot.lane.b32.xlu0 %v341, 80
  %v4216 = vpop.permute.xlu0 %4215
  %4217 = vrot.lane.b32.xlu0 %v346, 80
  %v4218 = vpop.permute.xlu0 %4217
  %v4222 = vsel %vm1116, %v4200, 0
  %4224 = vmatprep.subr.mxu0 0.0
  %4225 = vmatpush1.msra.mxu0 %v4216
  %4226 = vmatprep.subr.mxu0 0.0
  %4227 = vmatpush1.msra.mxu0 %v4218
  %4228 = vmatprep.subr.mxu0 0.0
  %4229 = vmatpush1.msra.mxu0 0.0
  %4230 = vmatprep.subr.mxu0 0.0
  %4231 = vmatpush1.msra.mxu0 0.0
  %4232 = vmatprep.subr.mxu0 0.0
  %4233 = vmatpush1.msra.mxu0 0.0
  %4234 = vmatprep.subr.mxu0 0.0
  %4235 = vmatpush1.msra.mxu0 0.0
  %4236 = vmatprep.subr.mxu0 0.0
  %4237 = vmatpush1.msra.mxu0 0.0
  %4238 = vmatprep.subr.mxu0 0.0
  %4239 = vmatpush1.msra.mxu0 0.0
  %4240 = vmatprep.subr.mxu0 0.0
  %4241 = vmatpush1.msra.mxu0 0.0
  %4242 = vmatprep.subr.mxu0 0.0
  %4243 = vmatpush1.msra.mxu0 0.0
  %4244 = vmatprep.subr.mxu0 0.0
  %4245 = vmatpush1.msra.mxu0 0.0
  %4246 = vmatprep.subr.mxu0 0.0
  %4247 = vmatpush1.msra.mxu0 0.0
  %4248 = vmatprep.subr.mxu0 0.0
  %4249 = vmatpush1.msra.mxu0 0.0
  %4250 = vmatprep.subr.mxu0 0.0
  %4251 = vmatpush1.msra.mxu0 0.0
  %4252 = vmatprep.subr.mxu0 0.0
  %4253 = vmatpush1.msra.mxu0 0.0
  %4254 = vmatprep.subr.mxu0 0.0
  %4255 = vmatpush1.msra.mxu0 0.0
  %4256 = vmatprep.subr.mxu0 0.0
  %4257 = vmatpush1.msra.mxu0 0.0
  %4258 = vmatprep.subr.mxu0 0.0
  %4259 = vmatpush1.msra.mxu0 0.0
  %4260 = vmatprep.subr.mxu0 0.0
  %4261 = vmatpush1.msra.mxu0 0.0
  %4262 = vmatprep.subr.mxu0 0.0
  %4263 = vmatpush1.msra.mxu0 0.0
  %4264 = vmatprep.subr.mxu0 0.0
  %4265 = vmatpush1.msra.mxu0 0.0
  %4266 = vmatprep.subr.mxu0 0.0
  %4267 = vmatpush1.msra.mxu0 0.0
  %4268 = vmatprep.subr.mxu0 0.0
  %4269 = vmatpush1.msra.mxu0 0.0
  %4270 = vmatprep.subr.mxu0 0.0
  %4271 = vmatpush1.msra.mxu0 0.0
  %4272 = vmatprep.subr.mxu0 0.0
  %4273 = vmatpush1.msra.mxu0 0.0
  %4274 = vmatprep.subr.mxu0 0.0
  %4275 = vmatpush1.msra.mxu0 0.0
  %4276 = vmatprep.subr.mxu0 0.0
  %4277 = vmatpush1.msra.mxu0 0.0
  %4278 = vmatprep.subr.mxu0 0.0
  %4279 = vmatpush1.msra.mxu0 0.0
  %4280 = vmatprep.subr.mxu0 0.0
  %4281 = vmatpush1.msra.mxu0 0.0
  %4282 = vmatprep.subr.mxu0 0.0
  %4283 = vmatpush1.msra.mxu0 0.0
  %4284 = vmatprep.subr.mxu0 0.0
  %4285 = vmatpush1.msra.mxu0 0.0
  %4286 = vmatprep.subr.mxu0 0.0
  %4287 = vmatpush1.msra.mxu0 0.0
  %4288 = vmatprep.mubr.f32.mxu0 0.0
  %4289 = vmatmul.mubr.f32.gmra.mrb[0].mxu0 %v4222
  %v4290 = vpop.f32.mrb[0].mxu0
  %v4291 = vadd.f32 0.0, %v4290
  %v4292 = vpop.f32.mrb[0].mxu0
  %4293 = vdwg.mxu0
  %4294 = vrot.lane.b32.xlu0 %v351, 80
  %v4295 = vpop.permute.xlu0 %4294
  %4296 = vrot.lane.b32.xlu0 %v356, 80
  %v4297 = vpop.permute.xlu0 %4296
  %v4301 = vsel %vm1116, %v4202, 0
  %4303 = vmatprep.subr.mxu0 0.0
  %4304 = vmatpush1.msra.mxu0 %v4295
  %4305 = vmatprep.subr.mxu0 0.0
  %4306 = vmatpush1.msra.mxu0 %v4297
  %4307 = vmatprep.subr.mxu0 0.0
  %4308 = vmatpush1.msra.mxu0 0.0
  %4309 = vmatprep.subr.mxu0 0.0
  %4310 = vmatpush1.msra.mxu0 0.0
  %4311 = vmatprep.subr.mxu0 0.0
  %4312 = vmatpush1.msra.mxu0 0.0
  %4313 = vmatprep.subr.mxu0 0.0
  %4314 = vmatpush1.msra.mxu0 0.0
  %4315 = vmatprep.subr.mxu0 0.0
  %4316 = vmatpush1.msra.mxu0 0.0
  %4317 = vmatprep.subr.mxu0 0.0
  %4318 = vmatpush1.msra.mxu0 0.0
  %4319 = vmatprep.subr.mxu0 0.0
  %4320 = vmatpush1.msra.mxu0 0.0
  %4321 = vmatprep.subr.mxu0 0.0
  %4322 = vmatpush1.msra.mxu0 0.0
  %4323 = vmatprep.subr.mxu0 0.0
  %4324 = vmatpush1.msra.mxu0 0.0
  %4325 = vmatprep.subr.mxu0 0.0
  %4326 = vmatpush1.msra.mxu0 0.0
  %4327 = vmatprep.subr.mxu0 0.0
  %4328 = vmatpush1.msra.mxu0 0.0
  %4329 = vmatprep.subr.mxu0 0.0
  %4330 = vmatpush1.msra.mxu0 0.0
  %4331 = vmatprep.subr.mxu0 0.0
  %4332 = vmatpush1.msra.mxu0 0.0
  %4333 = vmatprep.subr.mxu0 0.0
  %4334 = vmatpush1.msra.mxu0 0.0
  %4335 = vmatprep.subr.mxu0 0.0
  %4336 = vmatpush1.msra.mxu0 0.0
  %4337 = vmatprep.subr.mxu0 0.0
  %4338 = vmatpush1.msra.mxu0 0.0
  %4339 = vmatprep.subr.mxu0 0.0
  %4340 = vmatpush1.msra.mxu0 0.0
  %4341 = vmatprep.subr.mxu0 0.0
  %4342 = vmatpush1.msra.mxu0 0.0
  %4343 = vmatprep.subr.mxu0 0.0
  %4344 = vmatpush1.msra.mxu0 0.0
  %4345 = vmatprep.subr.mxu0 0.0
  %4346 = vmatpush1.msra.mxu0 0.0
  %4347 = vmatprep.subr.mxu0 0.0
  %4348 = vmatpush1.msra.mxu0 0.0
  %4349 = vmatprep.subr.mxu0 0.0
  %4350 = vmatpush1.msra.mxu0 0.0
  %4351 = vmatprep.subr.mxu0 0.0
  %4352 = vmatpush1.msra.mxu0 0.0
  %4353 = vmatprep.subr.mxu0 0.0
  %4354 = vmatpush1.msra.mxu0 0.0
  %4355 = vmatprep.subr.mxu0 0.0
  %4356 = vmatpush1.msra.mxu0 0.0
  %4357 = vmatprep.subr.mxu0 0.0
  %4358 = vmatpush1.msra.mxu0 0.0
  %4359 = vmatprep.subr.mxu0 0.0
  %4360 = vmatpush1.msra.mxu0 0.0
  %4361 = vmatprep.subr.mxu0 0.0
  %4362 = vmatpush1.msra.mxu0 0.0
  %4363 = vmatprep.subr.mxu0 0.0
  %4364 = vmatpush1.msra.mxu0 0.0
  %4365 = vmatprep.subr.mxu0 0.0
  %4366 = vmatpush1.msra.mxu0 0.0
  %4367 = vmatprep.mubr.f32.mxu0 0.0
  %4368 = vmatmul.mubr.f32.gmra.mrb[0].mxu0 %v4301
  %v4369 = vpop.f32.mrb[0].mxu0
  %v4370 = vadd.f32 0.0, %v4369
  %v4371 = vpop.f32.mrb[0].mxu0
  %4372 = vdwg.mxu0
  %4373 = vrot.lane.b32.xlu0 %v361, 80
  %v4374 = vpop.permute.xlu0 %4373
  %4375 = vrot.lane.b32.xlu0 %v366, 80
  %v4376 = vpop.permute.xlu0 %4375
  %v4380 = vsel %vm1116, %v4204, 0
  %4382 = vmatprep.subr.mxu0 0.0
  %4383 = vmatpush1.msra.mxu0 %v4374
  %4384 = vmatprep.subr.mxu0 0.0
  %4385 = vmatpush1.msra.mxu0 %v4376
  %4386 = vmatprep.subr.mxu0 0.0
  %4387 = vmatpush1.msra.mxu0 0.0
  %4388 = vmatprep.subr.mxu0 0.0
  %4389 = vmatpush1.msra.mxu0 0.0
  %4390 = vmatprep.subr.mxu0 0.0
  %4391 = vmatpush1.msra.mxu0 0.0
  %4392 = vmatprep.subr.mxu0 0.0
  %4393 = vmatpush1.msra.mxu0 0.0
  %4394 = vmatprep.subr.mxu0 0.0
  %4395 = vmatpush1.msra.mxu0 0.0
  %4396 = vmatprep.subr.mxu0 0.0
  %4397 = vmatpush1.msra.mxu0 0.0
  %4398 = vmatprep.subr.mxu0 0.0
  %4399 = vmatpush1.msra.mxu0 0.0
  %4400 = vmatprep.subr.mxu0 0.0
  %4401 = vmatpush1.msra.mxu0 0.0
  %4402 = vmatprep.subr.mxu0 0.0
  %4403 = vmatpush1.msra.mxu0 0.0
  %4404 = vmatprep.subr.mxu0 0.0
  %4405 = vmatpush1.msra.mxu0 0.0
  %4406 = vmatprep.subr.mxu0 0.0
  %4407 = vmatpush1.msra.mxu0 0.0
  %4408 = vmatprep.subr.mxu0 0.0
  %4409 = vmatpush1.msra.mxu0 0.0
  %4410 = vmatprep.subr.mxu0 0.0
  %4411 = vmatpush1.msra.mxu0 0.0
  %4412 = vmatprep.subr.mxu0 0.0
  %4413 = vmatpush1.msra.mxu0 0.0
  %4414 = vmatprep.subr.mxu0 0.0
  %4415 = vmatpush1.msra.mxu0 0.0
  %4416 = vmatprep.subr.mxu0 0.0
  %4417 = vmatpush1.msra.mxu0 0.0
  %4418 = vmatprep.subr.mxu0 0.0
  %4419 = vmatpush1.msra.mxu0 0.0
  %4420 = vmatprep.subr.mxu0 0.0
  %4421 = vmatpush1.msra.mxu0 0.0
  %4422 = vmatprep.subr.mxu0 0.0
  %4423 = vmatpush1.msra.mxu0 0.0
  %4424 = vmatprep.subr.mxu0 0.0
  %4425 = vmatpush1.msra.mxu0 0.0
  %4426 = vmatprep.subr.mxu0 0.0
  %4427 = vmatpush1.msra.mxu0 0.0
  %4428 = vmatprep.subr.mxu0 0.0
  %4429 = vmatpush1.msra.mxu0 0.0
  %4430 = vmatprep.subr.mxu0 0.0
  %4431 = vmatpush1.msra.mxu0 0.0
  %4432 = vmatprep.subr.mxu0 0.0
  %4433 = vmatpush1.msra.mxu0 0.0
  %4434 = vmatprep.subr.mxu0 0.0
  %4435 = vmatpush1.msra.mxu0 0.0
  %4436 = vmatprep.subr.mxu0 0.0
  %4437 = vmatpush1.msra.mxu0 0.0
  %4438 = vmatprep.subr.mxu0 0.0
  %4439 = vmatpush1.msra.mxu0 0.0
  %4440 = vmatprep.subr.mxu0 0.0
  %4441 = vmatpush1.msra.mxu0 0.0
  %4442 = vmatprep.subr.mxu0 0.0
  %4443 = vmatpush1.msra.mxu0 0.0
  %4444 = vmatprep.subr.mxu0 0.0
  %4445 = vmatpush1.msra.mxu0 0.0
  %4446 = vmatprep.mubr.f32.mxu0 0.0
  %4447 = vmatmul.mubr.f32.gmra.mrb[0].mxu0 %v4380
  %v4448 = vpop.f32.mrb[0].mxu0
  %v4449 = vadd.f32 0.0, %v4448
  %v4450 = vpop.f32.mrb[0].mxu0
  %4451 = vdwg.mxu0
  %4452 = vrot.lane.b32.xlu0 %v371, 80
  %v4453 = vpop.permute.xlu0 %4452
  %4454 = vrot.lane.b32.xlu0 %v376, 80
  %v4455 = vpop.permute.xlu0 %4454
  %v4459 = vsel %vm1116, %v4206, 0
  %4461 = vmatprep.subr.mxu0 0.0
  %4462 = vmatpush1.msra.mxu0 %v4453
  %4463 = vmatprep.subr.mxu0 0.0
  %4464 = vmatpush1.msra.mxu0 %v4455
  %4465 = vmatprep.subr.mxu0 0.0
  %4466 = vmatpush1.msra.mxu0 0.0
  %4467 = vmatprep.subr.mxu0 0.0
  %4468 = vmatpush1.msra.mxu0 0.0
  %4469 = vmatprep.subr.mxu0 0.0
  %4470 = vmatpush1.msra.mxu0 0.0
  %4471 = vmatprep.subr.mxu0 0.0
  %4472 = vmatpush1.msra.mxu0 0.0
  %4473 = vmatprep.subr.mxu0 0.0
  %4474 = vmatpush1.msra.mxu0 0.0
  %4475 = vmatprep.subr.mxu0 0.0
  %4476 = vmatpush1.msra.mxu0 0.0
  %4477 = vmatprep.subr.mxu0 0.0
  %4478 = vmatpush1.msra.mxu0 0.0
  %4479 = vmatprep.subr.mxu0 0.0
  %4480 = vmatpush1.msra.mxu0 0.0
  %4481 = vmatprep.subr.mxu0 0.0
  %4482 = vmatpush1.msra.mxu0 0.0
  %4483 = vmatprep.subr.mxu0 0.0
  %4484 = vmatpush1.msra.mxu0 0.0
  %4485 = vmatprep.subr.mxu0 0.0
  %4486 = vmatpush1.msra.mxu0 0.0
  %4487 = vmatprep.subr.mxu0 0.0
  %4488 = vmatpush1.msra.mxu0 0.0
  %4489 = vmatprep.subr.mxu0 0.0
  %4490 = vmatpush1.msra.mxu0 0.0
  %4491 = vmatprep.subr.mxu0 0.0
  %4492 = vmatpush1.msra.mxu0 0.0
  %4493 = vmatprep.subr.mxu0 0.0
  %4494 = vmatpush1.msra.mxu0 0.0
  %4495 = vmatprep.subr.mxu0 0.0
  %4496 = vmatpush1.msra.mxu0 0.0
  %4497 = vmatprep.subr.mxu0 0.0
  %4498 = vmatpush1.msra.mxu0 0.0
  %4499 = vmatprep.subr.mxu0 0.0
  %4500 = vmatpush1.msra.mxu0 0.0
  %4501 = vmatprep.subr.mxu0 0.0
  %4502 = vmatpush1.msra.mxu0 0.0
  %4503 = vmatprep.subr.mxu0 0.0
  %4504 = vmatpush1.msra.mxu0 0.0
  %4505 = vmatprep.subr.mxu0 0.0
  %4506 = vmatpush1.msra.mxu0 0.0
  %4507 = vmatprep.subr.mxu0 0.0
  %4508 = vmatpush1.msra.mxu0 0.0
  %4509 = vmatprep.subr.mxu0 0.0
  %4510 = vmatpush1.msra.mxu0 0.0
  %4511 = vmatprep.subr.mxu0 0.0
  %4512 = vmatpush1.msra.mxu0 0.0
  %4513 = vmatprep.subr.mxu0 0.0
  %4514 = vmatpush1.msra.mxu0 0.0
  %4515 = vmatprep.subr.mxu0 0.0
  %4516 = vmatpush1.msra.mxu0 0.0
  %4517 = vmatprep.subr.mxu0 0.0
  %4518 = vmatpush1.msra.mxu0 0.0
  %4519 = vmatprep.subr.mxu0 0.0
  %4520 = vmatpush1.msra.mxu0 0.0
  %4521 = vmatprep.subr.mxu0 0.0
  %4522 = vmatpush1.msra.mxu0 0.0
  %4523 = vmatprep.subr.mxu0 0.0
  %4524 = vmatpush1.msra.mxu0 0.0
  %4525 = vmatprep.mubr.f32.mxu0 0.0
  %4526 = vmatmul.mubr.f32.gmra.mrb[0].mxu0 %v4459
  %v4527 = vpop.f32.mrb[0].mxu0
  %v4528 = vadd.f32 0.0, %v4527
  %v4529 = vpop.f32.mrb[0].mxu0
  %4530 = vdwg.mxu0
  %4531 = vrot.lane.b32.xlu0 %v381, 80
  %v4532 = vpop.permute.xlu0 %4531
  %4533 = vrot.lane.b32.xlu0 %v386, 80
  %v4534 = vpop.permute.xlu0 %4533
  %v4538 = vsel %vm1116, %v4208, 0
  %4540 = vmatprep.subr.mxu0 0.0
  %4541 = vmatpush1.msra.mxu0 %v4532
  %4542 = vmatprep.subr.mxu0 0.0
  %4543 = vmatpush1.msra.mxu0 %v4534
  %4544 = vmatprep.subr.mxu0 0.0
  %4545 = vmatpush1.msra.mxu0 0.0
  %4546 = vmatprep.subr.mxu0 0.0
  %4547 = vmatpush1.msra.mxu0 0.0
  %4548 = vmatprep.subr.mxu0 0.0
  %4549 = vmatpush1.msra.mxu0 0.0
  %4550 = vmatprep.subr.mxu0 0.0
  %4551 = vmatpush1.msra.mxu0 0.0
  %4552 = vmatprep.subr.mxu0 0.0
  %4553 = vmatpush1.msra.mxu0 0.0
  %4554 = vmatprep.subr.mxu0 0.0
  %4555 = vmatpush1.msra.mxu0 0.0
  %4556 = vmatprep.subr.mxu0 0.0
  %4557 = vmatpush1.msra.mxu0 0.0
  %4558 = vmatprep.subr.mxu0 0.0
  %4559 = vmatpush1.msra.mxu0 0.0
  %4560 = vmatprep.subr.mxu0 0.0
  %4561 = vmatpush1.msra.mxu0 0.0
  %4562 = vmatprep.subr.mxu0 0.0
  %4563 = vmatpush1.msra.mxu0 0.0
  %4564 = vmatprep.subr.mxu0 0.0
  %4565 = vmatpush1.msra.mxu0 0.0
  %4566 = vmatprep.subr.mxu0 0.0
  %4567 = vmatpush1.msra.mxu0 0.0
  %4568 = vmatprep.subr.mxu0 0.0
  %4569 = vmatpush1.msra.mxu0 0.0
  %4570 = vmatprep.subr.mxu0 0.0
  %4571 = vmatpush1.msra.mxu0 0.0
  %4572 = vmatprep.subr.mxu0 0.0
  %4573 = vmatpush1.msra.mxu0 0.0
  %4574 = vmatprep.subr.mxu0 0.0
  %4575 = vmatpush1.msra.mxu0 0.0
  %4576 = vmatprep.subr.mxu0 0.0
  %4577 = vmatpush1.msra.mxu0 0.0
  %4578 = vmatprep.subr.mxu0 0.0
  %4579 = vmatpush1.msra.mxu0 0.0
  %4580 = vmatprep.subr.mxu0 0.0
  %4581 = vmatpush1.msra.mxu0 0.0
  %4582 = vmatprep.subr.mxu0 0.0
  %4583 = vmatpush1.msra.mxu0 0.0
  %4584 = vmatprep.subr.mxu0 0.0
  %4585 = vmatpush1.msra.mxu0 0.0
  %4586 = vmatprep.subr.mxu0 0.0
  %4587 = vmatpush1.msra.mxu0 0.0
  %4588 = vmatprep.subr.mxu0 0.0
  %4589 = vmatpush1.msra.mxu0 0.0
  %4590 = vmatprep.subr.mxu0 0.0
  %4591 = vmatpush1.msra.mxu0 0.0
  %4592 = vmatprep.subr.mxu0 0.0
  %4593 = vmatpush1.msra.mxu0 0.0
  %4594 = vmatprep.subr.mxu0 0.0
  %4595 = vmatpush1.msra.mxu0 0.0
  %4596 = vmatprep.subr.mxu0 0.0
  %4597 = vmatpush1.msra.mxu0 0.0
  %4598 = vmatprep.subr.mxu0 0.0
  %4599 = vmatpush1.msra.mxu0 0.0
  %4600 = vmatprep.subr.mxu0 0.0
  %4601 = vmatpush1.msra.mxu0 0.0
  %4602 = vmatprep.subr.mxu0 0.0
  %4603 = vmatpush1.msra.mxu0 0.0
  %4604 = vmatprep.mubr.f32.mxu0 0.0
  %4605 = vmatmul.mubr.f32.gmra.mrb[0].mxu0 %v4538
  %v4606 = vpop.f32.mrb[0].mxu0
  %v4607 = vadd.f32 0.0, %v4606
  %v4608 = vpop.f32.mrb[0].mxu0
  %4609 = vdwg.mxu0
  %4610 = vrot.lane.b32.xlu0 %v391, 80
  %v4611 = vpop.permute.xlu0 %4610
  %4612 = vrot.lane.b32.xlu0 %v396, 80
  %v4613 = vpop.permute.xlu0 %4612
  %v4617 = vsel %vm1116, %v4210, 0
  %4619 = vmatprep.subr.mxu0 0.0
  %4620 = vmatpush1.msra.mxu0 %v4611
  %4621 = vmatprep.subr.mxu0 0.0
  %4622 = vmatpush1.msra.mxu0 %v4613
  %4623 = vmatprep.subr.mxu0 0.0
  %4624 = vmatpush1.msra.mxu0 0.0
  %4625 = vmatprep.subr.mxu0 0.0
  %4626 = vmatpush1.msra.mxu0 0.0
  %4627 = vmatprep.subr.mxu0 0.0
  %4628 = vmatpush1.msra.mxu0 0.0
  %4629 = vmatprep.subr.mxu0 0.0
  %4630 = vmatpush1.msra.mxu0 0.0
  %4631 = vmatprep.subr.mxu0 0.0
  %4632 = vmatpush1.msra.mxu0 0.0
  %4633 = vmatprep.subr.mxu0 0.0
  %4634 = vmatpush1.msra.mxu0 0.0
  %4635 = vmatprep.subr.mxu0 0.0
  %4636 = vmatpush1.msra.mxu0 0.0
  %4637 = vmatprep.subr.mxu0 0.0
  %4638 = vmatpush1.msra.mxu0 0.0
  %4639 = vmatprep.subr.mxu0 0.0
  %4640 = vmatpush1.msra.mxu0 0.0
  %4641 = vmatprep.subr.mxu0 0.0
  %4642 = vmatpush1.msra.mxu0 0.0
  %4643 = vmatprep.subr.mxu0 0.0
  %4644 = vmatpush1.msra.mxu0 0.0
  %4645 = vmatprep.subr.mxu0 0.0
  %4646 = vmatpush1.msra.mxu0 0.0
  %4647 = vmatprep.subr.mxu0 0.0
  %4648 = vmatpush1.msra.mxu0 0.0
  %4649 = vmatprep.subr.mxu0 0.0
  %4650 = vmatpush1.msra.mxu0 0.0
  %4651 = vmatprep.subr.mxu0 0.0
  %4652 = vmatpush1.msra.mxu0 0.0
  %4653 = vmatprep.subr.mxu0 0.0
  %4654 = vmatpush1.msra.mxu0 0.0
  %4655 = vmatprep.subr.mxu0 0.0
  %4656 = vmatpush1.msra.mxu0 0.0
  %4657 = vmatprep.subr.mxu0 0.0
  %4658 = vmatpush1.msra.mxu0 0.0
  %4659 = vmatprep.subr.mxu0 0.0
  %4660 = vmatpush1.msra.mxu0 0.0
  %4661 = vmatprep.subr.mxu0 0.0
  %4662 = vmatpush1.msra.mxu0 0.0
  %4663 = vmatprep.subr.mxu0 0.0
  %4664 = vmatpush1.msra.mxu0 0.0
  %4665 = vmatprep.subr.mxu0 0.0
  %4666 = vmatpush1.msra.mxu0 0.0
  %4667 = vmatprep.subr.mxu0 0.0
  %4668 = vmatpush1.msra.mxu0 0.0
  %4669 = vmatprep.subr.mxu0 0.0
  %4670 = vmatpush1.msra.mxu0 0.0
  %4671 = vmatprep.subr.mxu0 0.0
  %4672 = vmatpush1.msra.mxu0 0.0
  %4673 = vmatprep.subr.mxu0 0.0
  %4674 = vmatpush1.msra.mxu0 0.0
  %4675 = vmatprep.subr.mxu0 0.0
  %4676 = vmatpush1.msra.mxu0 0.0
  %4677 = vmatprep.subr.mxu0 0.0
  %4678 = vmatpush1.msra.mxu0 0.0
  %4679 = vmatprep.subr.mxu0 0.0
  %4680 = vmatpush1.msra.mxu0 0.0
  %4681 = vmatprep.subr.mxu0 0.0
  %4682 = vmatpush1.msra.mxu0 0.0
  %4683 = vmatprep.mubr.f32.mxu0 0.0
  %4684 = vmatmul.mubr.f32.gmra.mrb[0].mxu0 %v4617
  %v4685 = vpop.f32.mrb[0].mxu0
  %v4686 = vadd.f32 0.0, %v4685
  %v4687 = vpop.f32.mrb[0].mxu0
  %4688 = vdwg.mxu0
  %4689 = vrot.lane.b32.xlu0 %v401, 80
  %v4690 = vpop.permute.xlu0 %4689
  %4691 = vrot.lane.b32.xlu0 %v406, 80
  %v4692 = vpop.permute.xlu0 %4691
  %v4696 = vsel %vm1116, %v4212, 0
  %4698 = vmatprep.subr.mxu0 0.0
  %4699 = vmatpush1.msra.mxu0 %v4690
  %4700 = vmatprep.subr.mxu0 0.0
  %4701 = vmatpush1.msra.mxu0 %v4692
  %4702 = vmatprep.subr.mxu0 0.0
  %4703 = vmatpush1.msra.mxu0 0.0
  %4704 = vmatprep.subr.mxu0 0.0
  %4705 = vmatpush1.msra.mxu0 0.0
  %4706 = vmatprep.subr.mxu0 0.0
  %4707 = vmatpush1.msra.mxu0 0.0
  %4708 = vmatprep.subr.mxu0 0.0
  %4709 = vmatpush1.msra.mxu0 0.0
  %4710 = vmatprep.subr.mxu0 0.0
  %4711 = vmatpush1.msra.mxu0 0.0
  %4712 = vmatprep.subr.mxu0 0.0
  %4713 = vmatpush1.msra.mxu0 0.0
  %4714 = vmatprep.subr.mxu0 0.0
  %4715 = vmatpush1.msra.mxu0 0.0
  %4716 = vmatprep.subr.mxu0 0.0
  %4717 = vmatpush1.msra.mxu0 0.0
  %4718 = vmatprep.subr.mxu0 0.0
  %4719 = vmatpush1.msra.mxu0 0.0
  %4720 = vmatprep.subr.mxu0 0.0
  %4721 = vmatpush1.msra.mxu0 0.0
  %4722 = vmatprep.subr.mxu0 0.0
  %4723 = vmatpush1.msra.mxu0 0.0
  %4724 = vmatprep.subr.mxu0 0.0
  %4725 = vmatpush1.msra.mxu0 0.0
  %4726 = vmatprep.subr.mxu0 0.0
  %4727 = vmatpush1.msra.mxu0 0.0
  %4728 = vmatprep.subr.mxu0 0.0
  %4729 = vmatpush1.msra.mxu0 0.0
  %4730 = vmatprep.subr.mxu0 0.0
  %4731 = vmatpush1.msra.mxu0 0.0
  %4732 = vmatprep.subr.mxu0 0.0
  %4733 = vmatpush1.msra.mxu0 0.0
  %4734 = vmatprep.subr.mxu0 0.0
  %4735 = vmatpush1.msra.mxu0 0.0
  %4736 = vmatprep.subr.mxu0 0.0
  %4737 = vmatpush1.msra.mxu0 0.0
  %4738 = vmatprep.subr.mxu0 0.0
  %4739 = vmatpush1.msra.mxu0 0.0
  %4740 = vmatprep.subr.mxu0 0.0
  %4741 = vmatpush1.msra.mxu0 0.0
  %4742 = vmatprep.subr.mxu0 0.0
  %4743 = vmatpush1.msra.mxu0 0.0
  %4744 = vmatprep.subr.mxu0 0.0
  %4745 = vmatpush1.msra.mxu0 0.0
  %4746 = vmatprep.subr.mxu0 0.0
  %4747 = vmatpush1.msra.mxu0 0.0
  %4748 = vmatprep.subr.mxu0 0.0
  %4749 = vmatpush1.msra.mxu0 0.0
  %4750 = vmatprep.subr.mxu0 0.0
  %4751 = vmatpush1.msra.mxu0 0.0
  %4752 = vmatprep.subr.mxu0 0.0
  %4753 = vmatpush1.msra.mxu0 0.0
  %4754 = vmatprep.subr.mxu0 0.0
  %4755 = vmatpush1.msra.mxu0 0.0
  %4756 = vmatprep.subr.mxu0 0.0
  %4757 = vmatpush1.msra.mxu0 0.0
  %4758 = vmatprep.subr.mxu0 0.0
  %4759 = vmatpush1.msra.mxu0 0.0
  %4760 = vmatprep.subr.mxu0 0.0
  %4761 = vmatpush1.msra.mxu0 0.0
  %4762 = vmatprep.mubr.f32.mxu0 0.0
  %4763 = vmatmul.mubr.f32.gmra.mrb[0].mxu0 %v4696
  %v4764 = vpop.f32.mrb[0].mxu0
  %v4765 = vadd.f32 0.0, %v4764
  %v4766 = vpop.f32.mrb[0].mxu0
  %4767 = vdwg.mxu0
  %4768 = vrot.lane.b32.xlu0 %v411, 80
  %v4769 = vpop.permute.xlu0 %4768
  %4770 = vrot.lane.b32.xlu0 %v416, 80
  %v4771 = vpop.permute.xlu0 %4770
  %v4775 = vsel %vm1116, %v4214, 0
  %4777 = vmatprep.subr.mxu0 0.0
  %4778 = vmatpush1.msra.mxu0 %v4769
  %4779 = vmatprep.subr.mxu0 0.0
  %4780 = vmatpush1.msra.mxu0 %v4771
  %4781 = vmatprep.subr.mxu0 0.0
  %4782 = vmatpush1.msra.mxu0 0.0
  %4783 = vmatprep.subr.mxu0 0.0
  %4784 = vmatpush1.msra.mxu0 0.0
  %4785 = vmatprep.subr.mxu0 0.0
  %4786 = vmatpush1.msra.mxu0 0.0
  %4787 = vmatprep.subr.mxu0 0.0
  %4788 = vmatpush1.msra.mxu0 0.0
  %4789 = vmatprep.subr.mxu0 0.0
  %4790 = vmatpush1.msra.mxu0 0.0
  %4791 = vmatprep.subr.mxu0 0.0
  %4792 = vmatpush1.msra.mxu0 0.0
  %4793 = vmatprep.subr.mxu0 0.0
  %4794 = vmatpush1.msra.mxu0 0.0
  %4795 = vmatprep.subr.mxu0 0.0
  %4796 = vmatpush1.msra.mxu0 0.0
  %4797 = vmatprep.subr.mxu0 0.0
  %4798 = vmatpush1.msra.mxu0 0.0
  %4799 = vmatprep.subr.mxu0 0.0
  %4800 = vmatpush1.msra.mxu0 0.0
  %4801 = vmatprep.subr.mxu0 0.0
  %4802 = vmatpush1.msra.mxu0 0.0
  %4803 = vmatprep.subr.mxu0 0.0
  %4804 = vmatpush1.msra.mxu0 0.0
  %4805 = vmatprep.subr.mxu0 0.0
  %4806 = vmatpush1.msra.mxu0 0.0
  %4807 = vmatprep.subr.mxu0 0.0
  %4808 = vmatpush1.msra.mxu0 0.0
  %4809 = vmatprep.subr.mxu0 0.0
  %4810 = vmatpush1.msra.mxu0 0.0
  %4811 = vmatprep.subr.mxu0 0.0
  %4812 = vmatpush1.msra.mxu0 0.0
  %4813 = vmatprep.subr.mxu0 0.0
  %4814 = vmatpush1.msra.mxu0 0.0
  %4815 = vmatprep.subr.mxu0 0.0
  %4816 = vmatpush1.msra.mxu0 0.0
  %4817 = vmatprep.subr.mxu0 0.0
  %4818 = vmatpush1.msra.mxu0 0.0
  %4819 = vmatprep.subr.mxu0 0.0
  %4820 = vmatpush1.msra.mxu0 0.0
  %4821 = vmatprep.subr.mxu0 0.0
  %4822 = vmatpush1.msra.mxu0 0.0
  %4823 = vmatprep.subr.mxu0 0.0
  %4824 = vmatpush1.msra.mxu0 0.0
  %4825 = vmatprep.subr.mxu0 0.0
  %4826 = vmatpush1.msra.mxu0 0.0
  %4827 = vmatprep.subr.mxu0 0.0
  %4828 = vmatpush1.msra.mxu0 0.0
  %4829 = vmatprep.subr.mxu0 0.0
  %4830 = vmatpush1.msra.mxu0 0.0
  %4831 = vmatprep.subr.mxu0 0.0
  %4832 = vmatpush1.msra.mxu0 0.0
  %4833 = vmatprep.subr.mxu0 0.0
  %4834 = vmatpush1.msra.mxu0 0.0
  %4835 = vmatprep.subr.mxu0 0.0
  %4836 = vmatpush1.msra.mxu0 0.0
  %4837 = vmatprep.subr.mxu0 0.0
  %4838 = vmatpush1.msra.mxu0 0.0
  %4839 = vmatprep.subr.mxu0 0.0
  %4840 = vmatpush1.msra.mxu0 0.0
  %4841 = vmatprep.mubr.f32.mxu0 0.0
  %4842 = vmatmul.mubr.f32.gmra.mrb[0].mxu0 %v4775
  %v4843 = vpop.f32.mrb[0].mxu0
  %v4844 = vadd.f32 0.0, %v4843
  %v4845 = vpop.f32.mrb[0].mxu0
  %4846 = vdwg.mxu0
  %v4848 = vsel %vm483, %v4291, 0
  %v4851 = vsel %vm483, %v4370, 0
  %v4854 = vsel %vm483, %v4449, 0
  %v4857 = vsel %vm483, %v4528, 0
  %v4860 = vsel %vm483, %v4607, 0
  %v4863 = vsel %vm483, %v4686, 0
  %v4866 = vsel %vm483, %v4765, 0
  %v4869 = vsel %vm483, %v4844, 0
  %4871 = vmatprep.subr.mxu0 0.0
  %4872 = vmatpush1.msra.mxu0 %v79
  %4873 = vmatprep.subr.mxu0 0.0
  %4874 = vmatpush1.msra.mxu0 0.0
  %4875 = vmatprep.subr.mxu0 0.0
  %4876 = vmatpush1.msra.mxu0 0.0
  %4877 = vmatprep.subr.mxu0 0.0
  %4878 = vmatpush1.msra.mxu0 0.0
  %4879 = vmatprep.subr.mxu0 0.0
  %4880 = vmatpush1.msra.mxu0 0.0
  %4881 = vmatprep.subr.mxu0 0.0
  %4882 = vmatpush1.msra.mxu0 0.0
  %4883 = vmatprep.subr.mxu0 0.0
  %4884 = vmatpush1.msra.mxu0 0.0
  %4885 = vmatprep.subr.mxu0 0.0
  %4886 = vmatpush1.msra.mxu0 0.0
  %4887 = vmatprep.subr.mxu0 0.0
  %4888 = vmatpush1.msra.mxu0 0.0
  %4889 = vmatprep.subr.mxu0 0.0
  %4890 = vmatpush1.msra.mxu0 0.0
  %4891 = vmatprep.subr.mxu0 0.0
  %4892 = vmatpush1.msra.mxu0 0.0
  %4893 = vmatprep.subr.mxu0 0.0
  %4894 = vmatpush1.msra.mxu0 0.0
  %4895 = vmatprep.subr.mxu0 0.0
  %4896 = vmatpush1.msra.mxu0 0.0
  %4897 = vmatprep.subr.mxu0 0.0
  %4898 = vmatpush1.msra.mxu0 0.0
  %4899 = vmatprep.subr.mxu0 0.0
  %4900 = vmatpush1.msra.mxu0 0.0
  %4901 = vmatprep.subr.mxu0 0.0
  %4902 = vmatpush1.msra.mxu0 0.0
  %4903 = vmatprep.subr.mxu0 0.0
  %4904 = vmatpush1.msra.mxu0 0.0
  %4905 = vmatprep.subr.mxu0 0.0
  %4906 = vmatpush1.msra.mxu0 0.0
  %4907 = vmatprep.subr.mxu0 0.0
  %4908 = vmatpush1.msra.mxu0 0.0
  %4909 = vmatprep.subr.mxu0 0.0
  %4910 = vmatpush1.msra.mxu0 0.0
  %4911 = vmatprep.subr.mxu0 0.0
  %4912 = vmatpush1.msra.mxu0 0.0
  %4913 = vmatprep.subr.mxu0 0.0
  %4914 = vmatpush1.msra.mxu0 0.0
  %4915 = vmatprep.subr.mxu0 0.0
  %4916 = vmatpush1.msra.mxu0 0.0
  %4917 = vmatprep.subr.mxu0 0.0
  %4918 = vmatpush1.msra.mxu0 0.0
  %4919 = vmatprep.subr.mxu0 0.0
  %4920 = vmatpush1.msra.mxu0 0.0
  %4921 = vmatprep.subr.mxu0 0.0
  %4922 = vmatpush1.msra.mxu0 0.0
  %4923 = vmatprep.subr.mxu0 0.0
  %4924 = vmatpush1.msra.mxu0 0.0
  %4925 = vmatprep.subr.mxu0 0.0
  %4926 = vmatpush1.msra.mxu0 0.0
  %4927 = vmatprep.subr.mxu0 0.0
  %4928 = vmatpush1.msra.mxu0 0.0
  %4929 = vmatprep.subr.mxu0 0.0
  %4930 = vmatpush1.msra.mxu0 0.0
  %4931 = vmatprep.subr.mxu0 0.0
  %4932 = vmatpush1.msra.mxu0 0.0
  %4933 = vmatprep.subr.mxu0 0.0
  %4934 = vmatpush1.msra.mxu0 0.0
  %4935 = vmatprep.mubr.f32.mxu0 0.0
  %4936 = vmatmul.mubr.f32.gmra.mrb[0].mxu0 %v4848
  %v4937 = vpop.f32.mrb[0].mxu0
  %v4938 = vadd.f32 0.0, %v4937
  %v4939 = vpop.f32.mrb[0].mxu0
  %4940 = vmatprep.mubr.f32.mxu0 0.0
  %4941 = vmatmul.mubr.f32.gmra.mrb[0].mxu0 %v4851
  %v4942 = vpop.f32.mrb[0].mxu0
  %v4943 = vadd.f32 0.0, %v4942
  %v4944 = vpop.f32.mrb[0].mxu0
  %4945 = vmatprep.mubr.f32.mxu0 0.0
  %4946 = vmatmul.mubr.f32.gmra.mrb[0].mxu0 %v4854
  %v4947 = vpop.f32.mrb[0].mxu0
  %v4948 = vadd.f32 0.0, %v4947
  %v4949 = vpop.f32.mrb[0].mxu0
  %4950 = vmatprep.mubr.f32.mxu0 0.0
  %4951 = vmatmul.mubr.f32.gmra.mrb[0].mxu0 %v4857
  %v4952 = vpop.f32.mrb[0].mxu0
  %v4953 = vadd.f32 0.0, %v4952
  %v4954 = vpop.f32.mrb[0].mxu0
  %4955 = vmatprep.mubr.f32.mxu0 0.0
  %4956 = vmatmul.mubr.f32.gmra.mrb[0].mxu0 %v4860
  %v4957 = vpop.f32.mrb[0].mxu0
  %v4958 = vadd.f32 0.0, %v4957
  %v4959 = vpop.f32.mrb[0].mxu0
  %4960 = vmatprep.mubr.f32.mxu0 0.0
  %4961 = vmatmul.mubr.f32.gmra.mrb[0].mxu0 %v4863
  %v4962 = vpop.f32.mrb[0].mxu0
  %v4963 = vadd.f32 0.0, %v4962
  %v4964 = vpop.f32.mrb[0].mxu0
  %4965 = vmatprep.mubr.f32.mxu0 0.0
  %4966 = vmatmul.mubr.f32.gmra.mrb[0].mxu0 %v4866
  %v4967 = vpop.f32.mrb[0].mxu0
  %v4968 = vadd.f32 0.0, %v4967
  %v4969 = vpop.f32.mrb[0].mxu0
  %4970 = vmatprep.mubr.f32.mxu0 0.0
  %4971 = vmatmul.mubr.f32.gmra.mrb[0].mxu0 %v4869
  %v4972 = vpop.f32.mrb[0].mxu0
  %v4973 = vadd.f32 0.0, %v4972
  %v4974 = vpop.f32.mrb[0].mxu0
  %4975 = vdwg.mxu0
  %v4976 = vadd.f32 %v3433, %v4938
  %v4977 = vadd.f32 %v3438, %v4943
  %v4978 = vadd.f32 %v3443, %v4948
  %v4979 = vadd.f32 %v3448, %v4953
  %v4980 = vadd.f32 %v3453, %v4958
  %v4981 = vadd.f32 %v3458, %v4963
  %v4982 = vadd.f32 %v3463, %v4968
  %v4983 = vadd.f32 %v3468, %v4973
  %4984 = vrot.lane.b32.xlu0 %v182, 104
  %v4985 = vpop.permute.xlu0 %4984
  %4986 = vrot.lane.b32.xlu0 %v341, 104
  %v4987 = vpop.permute.xlu0 %4986
  %4988 = vrot.lane.b32.xlu0 %v346, 104
  %v4989 = vpop.permute.xlu0 %4988
  %v4990 = vsel %vm483, %v4985, 0
  %v4992 = vsel %vm483, %v4987, 0
  %v4994 = vsel %vm483, %v4989, 0
  %4996 = vmatprep.subr.mxu0 0.0
  %4997 = vmatpush1.xpose.msra.mxu0 %v4992
  %4998 = vmatprep.subr.mxu0 0.0
  %4999 = vmatpush1.xpose.msra.mxu0 %v4994
  %5000 = vmatprep.subr.mxu0 0.0
  %5001 = vmatpush1.xpose.msra.mxu0 0.0
  %5002 = vmatprep.subr.mxu0 0.0
  %5003 = vmatpush1.xpose.msra.mxu0 0.0
  %5004 = vmatprep.subr.mxu0 0.0
  %5005 = vmatpush1.xpose.msra.mxu0 0.0
  %5006 = vmatprep.subr.mxu0 0.0
  %5007 = vmatpush1.xpose.msra.mxu0 0.0
  %5008 = vmatprep.subr.mxu0 0.0
  %5009 = vmatpush1.xpose.msra.mxu0 0.0
  %5010 = vmatprep.subr.mxu0 0.0
  %5011 = vmatpush1.xpose.msra.mxu0 0.0
  %5012 = vmatprep.subr.mxu0 0.0
  %5013 = vmatpush1.xpose.msra.mxu0 0.0
  %5014 = vmatprep.subr.mxu0 0.0
  %5015 = vmatpush1.xpose.msra.mxu0 0.0
  %5016 = vmatprep.subr.mxu0 0.0
  %5017 = vmatpush1.xpose.msra.mxu0 0.0
  %5018 = vmatprep.subr.mxu0 0.0
  %5019 = vmatpush1.xpose.msra.mxu0 0.0
  %5020 = vmatprep.subr.mxu0 0.0
  %5021 = vmatpush1.xpose.msra.mxu0 0.0
  %5022 = vmatprep.subr.mxu0 0.0
  %5023 = vmatpush1.xpose.msra.mxu0 0.0
  %5024 = vmatprep.subr.mxu0 0.0
  %5025 = vmatpush1.xpose.msra.mxu0 0.0
  %5026 = vmatprep.subr.mxu0 0.0
  %5027 = vmatpush1.xpose.msra.mxu0 0.0
  %5028 = vmatprep.subr.mxu0 0.0
  %5029 = vmatpush1.xpose.msra.mxu0 0.0
  %5030 = vmatprep.subr.mxu0 0.0
  %5031 = vmatpush1.xpose.msra.mxu0 0.0
  %5032 = vmatprep.subr.mxu0 0.0
  %5033 = vmatpush1.xpose.msra.mxu0 0.0
  %5034 = vmatprep.subr.mxu0 0.0
  %5035 = vmatpush1.xpose.msra.mxu0 0.0
  %5036 = vmatprep.subr.mxu0 0.0
  %5037 = vmatpush1.xpose.msra.mxu0 0.0
  %5038 = vmatprep.subr.mxu0 0.0
  %5039 = vmatpush1.xpose.msra.mxu0 0.0
  %5040 = vmatprep.subr.mxu0 0.0
  %5041 = vmatpush1.xpose.msra.mxu0 0.0
  %5042 = vmatprep.subr.mxu0 0.0
  %5043 = vmatpush1.xpose.msra.mxu0 0.0
  %5044 = vmatprep.subr.mxu0 0.0
  %5045 = vmatpush1.xpose.msra.mxu0 0.0
  %5046 = vmatprep.subr.mxu0 0.0
  %5047 = vmatpush1.xpose.msra.mxu0 0.0
  %5048 = vmatprep.subr.mxu0 0.0
  %5049 = vmatpush1.xpose.msra.mxu0 0.0
  %5050 = vmatprep.subr.mxu0 0.0
  %5051 = vmatpush1.xpose.msra.mxu0 0.0
  %5052 = vmatprep.subr.mxu0 0.0
  %5053 = vmatpush1.xpose.msra.mxu0 0.0
  %5054 = vmatprep.subr.mxu0 0.0
  %5055 = vmatpush1.xpose.msra.mxu0 0.0
  %5056 = vmatprep.subr.mxu0 0.0
  %5057 = vmatpush1.xpose.msra.mxu0 0.0
  %5058 = vmatprep.subr.mxu0 0.0
  %5059 = vmatpush1.xpose.msra.mxu0 0.0
  %5060 = vmatprep.mubr.f32.mxu0 0.0
  %5061 = vmatmul.mubr.f32.gmra.mrb[0].mxu0 %v4990
  %v5062 = vpop.f32.mrb[0].mxu0
  %v5063 = vadd.f32 %v446, %v5062
  %v5064 = vpop.f32.mrb[0].mxu0
  %5065 = vdwg.mxu0
  %5066 = vrot.lane.b32.xlu0 %v187, 104
  %v5067 = vpop.permute.xlu0 %5066
  %5068 = vrot.lane.b32.xlu0 %v351, 104
  %v5069 = vpop.permute.xlu0 %5068
  %5070 = vrot.lane.b32.xlu0 %v356, 104
  %v5071 = vpop.permute.xlu0 %5070
  %v5072 = vsel %vm483, %v5067, 0
  %v5074 = vsel %vm483, %v5069, 0
  %v5076 = vsel %vm483, %v5071, 0
  %5078 = vmatprep.subr.mxu0 0.0
  %5079 = vmatpush1.xpose.msra.mxu0 %v5074
  %5080 = vmatprep.subr.mxu0 0.0
  %5081 = vmatpush1.xpose.msra.mxu0 %v5076
  %5082 = vmatprep.subr.mxu0 0.0
  %5083 = vmatpush1.xpose.msra.mxu0 0.0
  %5084 = vmatprep.subr.mxu0 0.0
  %5085 = vmatpush1.xpose.msra.mxu0 0.0
  %5086 = vmatprep.subr.mxu0 0.0
  %5087 = vmatpush1.xpose.msra.mxu0 0.0
  %5088 = vmatprep.subr.mxu0 0.0
  %5089 = vmatpush1.xpose.msra.mxu0 0.0
  %5090 = vmatprep.subr.mxu0 0.0
  %5091 = vmatpush1.xpose.msra.mxu0 0.0
  %5092 = vmatprep.subr.mxu0 0.0
  %5093 = vmatpush1.xpose.msra.mxu0 0.0
  %5094 = vmatprep.subr.mxu0 0.0
  %5095 = vmatpush1.xpose.msra.mxu0 0.0
  %5096 = vmatprep.subr.mxu0 0.0
  %5097 = vmatpush1.xpose.msra.mxu0 0.0
  %5098 = vmatprep.subr.mxu0 0.0
  %5099 = vmatpush1.xpose.msra.mxu0 0.0
  %5100 = vmatprep.subr.mxu0 0.0
  %5101 = vmatpush1.xpose.msra.mxu0 0.0
  %5102 = vmatprep.subr.mxu0 0.0
  %5103 = vmatpush1.xpose.msra.mxu0 0.0
  %5104 = vmatprep.subr.mxu0 0.0
  %5105 = vmatpush1.xpose.msra.mxu0 0.0
  %5106 = vmatprep.subr.mxu0 0.0
  %5107 = vmatpush1.xpose.msra.mxu0 0.0
  %5108 = vmatprep.subr.mxu0 0.0
  %5109 = vmatpush1.xpose.msra.mxu0 0.0
  %5110 = vmatprep.subr.mxu0 0.0
  %5111 = vmatpush1.xpose.msra.mxu0 0.0
  %5112 = vmatprep.subr.mxu0 0.0
  %5113 = vmatpush1.xpose.msra.mxu0 0.0
  %5114 = vmatprep.subr.mxu0 0.0
  %5115 = vmatpush1.xpose.msra.mxu0 0.0
  %5116 = vmatprep.subr.mxu0 0.0
  %5117 = vmatpush1.xpose.msra.mxu0 0.0
  %5118 = vmatprep.subr.mxu0 0.0
  %5119 = vmatpush1.xpose.msra.mxu0 0.0
  %5120 = vmatprep.subr.mxu0 0.0
  %5121 = vmatpush1.xpose.msra.mxu0 0.0
  %5122 = vmatprep.subr.mxu0 0.0
  %5123 = vmatpush1.xpose.msra.mxu0 0.0
  %5124 = vmatprep.subr.mxu0 0.0
  %5125 = vmatpush1.xpose.msra.mxu0 0.0
  %5126 = vmatprep.subr.mxu0 0.0
  %5127 = vmatpush1.xpose.msra.mxu0 0.0
  %5128 = vmatprep.subr.mxu0 0.0
  %5129 = vmatpush1.xpose.msra.mxu0 0.0
  %5130 = vmatprep.subr.mxu0 0.0
  %5131 = vmatpush1.xpose.msra.mxu0 0.0
  %5132 = vmatprep.subr.mxu0 0.0
  %5133 = vmatpush1.xpose.msra.mxu0 0.0
  %5134 = vmatprep.subr.mxu0 0.0
  %5135 = vmatpush1.xpose.msra.mxu0 0.0
  %5136 = vmatprep.subr.mxu0 0.0
  %5137 = vmatpush1.xpose.msra.mxu0 0.0
  %5138 = vmatprep.subr.mxu0 0.0
  %5139 = vmatpush1.xpose.msra.mxu0 0.0
  %5140 = vmatprep.subr.mxu0 0.0
  %5141 = vmatpush1.xpose.msra.mxu0 0.0
  %5142 = vmatprep.mubr.f32.mxu0 0.0
  %5143 = vmatmul.mubr.f32.gmra.mrb[0].mxu0 %v5072
  %v5144 = vpop.f32.mrb[0].mxu0
  %v5145 = vadd.f32 %v450, %v5144
  %v5146 = vpop.f32.mrb[0].mxu0
  %5147 = vdwg.mxu0
  %5148 = vrot.lane.b32.xlu0 %v192, 104
  %v5149 = vpop.permute.xlu0 %5148
  %5150 = vrot.lane.b32.xlu0 %v361, 104
  %v5151 = vpop.permute.xlu0 %5150
  %5152 = vrot.lane.b32.xlu0 %v366, 104
  %v5153 = vpop.permute.xlu0 %5152
  %v5154 = vsel %vm483, %v5149, 0
  %v5156 = vsel %vm483, %v5151, 0
  %v5158 = vsel %vm483, %v5153, 0
  %5160 = vmatprep.subr.mxu0 0.0
  %5161 = vmatpush1.xpose.msra.mxu0 %v5156
  %5162 = vmatprep.subr.mxu0 0.0
  %5163 = vmatpush1.xpose.msra.mxu0 %v5158
  %5164 = vmatprep.subr.mxu0 0.0
  %5165 = vmatpush1.xpose.msra.mxu0 0.0
  %5166 = vmatprep.subr.mxu0 0.0
  %5167 = vmatpush1.xpose.msra.mxu0 0.0
  %5168 = vmatprep.subr.mxu0 0.0
  %5169 = vmatpush1.xpose.msra.mxu0 0.0
  %5170 = vmatprep.subr.mxu0 0.0
  %5171 = vmatpush1.xpose.msra.mxu0 0.0
  %5172 = vmatprep.subr.mxu0 0.0
  %5173 = vmatpush1.xpose.msra.mxu0 0.0
  %5174 = vmatprep.subr.mxu0 0.0
  %5175 = vmatpush1.xpose.msra.mxu0 0.0
  %5176 = vmatprep.subr.mxu0 0.0
  %5177 = vmatpush1.xpose.msra.mxu0 0.0
  %5178 = vmatprep.subr.mxu0 0.0
  %5179 = vmatpush1.xpose.msra.mxu0 0.0
  %5180 = vmatprep.subr.mxu0 0.0
  %5181 = vmatpush1.xpose.msra.mxu0 0.0
  %5182 = vmatprep.subr.mxu0 0.0
  %5183 = vmatpush1.xpose.msra.mxu0 0.0
  %5184 = vmatprep.subr.mxu0 0.0
  %5185 = vmatpush1.xpose.msra.mxu0 0.0
  %5186 = vmatprep.subr.mxu0 0.0
  %5187 = vmatpush1.xpose.msra.mxu0 0.0
  %5188 = vmatprep.subr.mxu0 0.0
  %5189 = vmatpush1.xpose.msra.mxu0 0.0
  %5190 = vmatprep.subr.mxu0 0.0
  %5191 = vmatpush1.xpose.msra.mxu0 0.0
  %5192 = vmatprep.subr.mxu0 0.0
  %5193 = vmatpush1.xpose.msra.mxu0 0.0
  %5194 = vmatprep.subr.mxu0 0.0
  %5195 = vmatpush1.xpose.msra.mxu0 0.0
  %5196 = vmatprep.subr.mxu0 0.0
  %5197 = vmatpush1.xpose.msra.mxu0 0.0
  %5198 = vmatprep.subr.mxu0 0.0
  %5199 = vmatpush1.xpose.msra.mxu0 0.0
  %5200 = vmatprep.subr.mxu0 0.0
  %5201 = vmatpush1.xpose.msra.mxu0 0.0
  %5202 = vmatprep.subr.mxu0 0.0
  %5203 = vmatpush1.xpose.msra.mxu0 0.0
  %5204 = vmatprep.subr.mxu0 0.0
  %5205 = vmatpush1.xpose.msra.mxu0 0.0
  %5206 = vmatprep.subr.mxu0 0.0
  %5207 = vmatpush1.xpose.msra.mxu0 0.0
  %5208 = vmatprep.subr.mxu0 0.0
  %5209 = vmatpush1.xpose.msra.mxu0 0.0
  %5210 = vmatprep.subr.mxu0 0.0
  %5211 = vmatpush1.xpose.msra.mxu0 0.0
  %5212 = vmatprep.subr.mxu0 0.0
  %5213 = vmatpush1.xpose.msra.mxu0 0.0
  %5214 = vmatprep.subr.mxu0 0.0
  %5215 = vmatpush1.xpose.msra.mxu0 0.0
  %5216 = vmatprep.subr.mxu0 0.0
  %5217 = vmatpush1.xpose.msra.mxu0 0.0
  %5218 = vmatprep.subr.mxu0 0.0
  %5219 = vmatpush1.xpose.msra.mxu0 0.0
  %5220 = vmatprep.subr.mxu0 0.0
  %5221 = vmatpush1.xpose.msra.mxu0 0.0
  %5222 = vmatprep.subr.mxu0 0.0
  %5223 = vmatpush1.xpose.msra.mxu0 0.0
  %5224 = vmatprep.mubr.f32.mxu0 0.0
  %5225 = vmatmul.mubr.f32.gmra.mrb[0].mxu0 %v5154
  %v5226 = vpop.f32.mrb[0].mxu0
  %v5227 = vadd.f32 %v454, %v5226
  %v5228 = vpop.f32.mrb[0].mxu0
  %5229 = vdwg.mxu0
  %5230 = vrot.lane.b32.xlu0 %v197, 104
  %v5231 = vpop.permute.xlu0 %5230
  %5232 = vrot.lane.b32.xlu0 %v371, 104
  %v5233 = vpop.permute.xlu0 %5232
  %5234 = vrot.lane.b32.xlu0 %v376, 104
  %v5235 = vpop.permute.xlu0 %5234
  %v5236 = vsel %vm483, %v5231, 0
  %v5238 = vsel %vm483, %v5233, 0
  %v5240 = vsel %vm483, %v5235, 0
  %5242 = vmatprep.subr.mxu0 0.0
  %5243 = vmatpush1.xpose.msra.mxu0 %v5238
  %5244 = vmatprep.subr.mxu0 0.0
  %5245 = vmatpush1.xpose.msra.mxu0 %v5240
  %5246 = vmatprep.subr.mxu0 0.0
  %5247 = vmatpush1.xpose.msra.mxu0 0.0
  %5248 = vmatprep.subr.mxu0 0.0
  %5249 = vmatpush1.xpose.msra.mxu0 0.0
  %5250 = vmatprep.subr.mxu0 0.0
  %5251 = vmatpush1.xpose.msra.mxu0 0.0
  %5252 = vmatprep.subr.mxu0 0.0
  %5253 = vmatpush1.xpose.msra.mxu0 0.0
  %5254 = vmatprep.subr.mxu0 0.0
  %5255 = vmatpush1.xpose.msra.mxu0 0.0
  %5256 = vmatprep.subr.mxu0 0.0
  %5257 = vmatpush1.xpose.msra.mxu0 0.0
  %5258 = vmatprep.subr.mxu0 0.0
  %5259 = vmatpush1.xpose.msra.mxu0 0.0
  %5260 = vmatprep.subr.mxu0 0.0
  %5261 = vmatpush1.xpose.msra.mxu0 0.0
  %5262 = vmatprep.subr.mxu0 0.0
  %5263 = vmatpush1.xpose.msra.mxu0 0.0
  %5264 = vmatprep.subr.mxu0 0.0
  %5265 = vmatpush1.xpose.msra.mxu0 0.0
  %5266 = vmatprep.subr.mxu0 0.0
  %5267 = vmatpush1.xpose.msra.mxu0 0.0
  %5268 = vmatprep.subr.mxu0 0.0
  %5269 = vmatpush1.xpose.msra.mxu0 0.0
  %5270 = vmatprep.subr.mxu0 0.0
  %5271 = vmatpush1.xpose.msra.mxu0 0.0
  %5272 = vmatprep.subr.mxu0 0.0
  %5273 = vmatpush1.xpose.msra.mxu0 0.0
  %5274 = vmatprep.subr.mxu0 0.0
  %5275 = vmatpush1.xpose.msra.mxu0 0.0
  %5276 = vmatprep.subr.mxu0 0.0
  %5277 = vmatpush1.xpose.msra.mxu0 0.0
  %5278 = vmatprep.subr.mxu0 0.0
  %5279 = vmatpush1.xpose.msra.mxu0 0.0
  %5280 = vmatprep.subr.mxu0 0.0
  %5281 = vmatpush1.xpose.msra.mxu0 0.0
  %5282 = vmatprep.subr.mxu0 0.0
  %5283 = vmatpush1.xpose.msra.mxu0 0.0
  %5284 = vmatprep.subr.mxu0 0.0
  %5285 = vmatpush1.xpose.msra.mxu0 0.0
  %5286 = vmatprep.subr.mxu0 0.0
  %5287 = vmatpush1.xpose.msra.mxu0 0.0
  %5288 = vmatprep.subr.mxu0 0.0
  %5289 = vmatpush1.xpose.msra.mxu0 0.0
  %5290 = vmatprep.subr.mxu0 0.0
  %5291 = vmatpush1.xpose.msra.mxu0 0.0
  %5292 = vmatprep.subr.mxu0 0.0
  %5293 = vmatpush1.xpose.msra.mxu0 0.0
  %5294 = vmatprep.subr.mxu0 0.0
  %5295 = vmatpush1.xpose.msra.mxu0 0.0
  %5296 = vmatprep.subr.mxu0 0.0
  %5297 = vmatpush1.xpose.msra.mxu0 0.0
  %5298 = vmatprep.subr.mxu0 0.0
  %5299 = vmatpush1.xpose.msra.mxu0 0.0
  %5300 = vmatprep.subr.mxu0 0.0
  %5301 = vmatpush1.xpose.msra.mxu0 0.0
  %5302 = vmatprep.subr.mxu0 0.0
  %5303 = vmatpush1.xpose.msra.mxu0 0.0
  %5304 = vmatprep.subr.mxu0 0.0
  %5305 = vmatpush1.xpose.msra.mxu0 0.0
  %5306 = vmatprep.mubr.f32.mxu0 0.0
  %5307 = vmatmul.mubr.f32.gmra.mrb[0].mxu0 %v5236
  %v5308 = vpop.f32.mrb[0].mxu0
  %v5309 = vadd.f32 %v458, %v5308
  %v5310 = vpop.f32.mrb[0].mxu0
  %5311 = vdwg.mxu0
  %5312 = vrot.lane.b32.xlu0 %v202, 104
  %v5313 = vpop.permute.xlu0 %5312
  %5314 = vrot.lane.b32.xlu0 %v381, 104
  %v5315 = vpop.permute.xlu0 %5314
  %5316 = vrot.lane.b32.xlu0 %v386, 104
  %v5317 = vpop.permute.xlu0 %5316
  %v5318 = vsel %vm483, %v5313, 0
  %v5320 = vsel %vm483, %v5315, 0
  %v5322 = vsel %vm483, %v5317, 0
  %5324 = vmatprep.subr.mxu0 0.0
  %5325 = vmatpush1.xpose.msra.mxu0 %v5320
  %5326 = vmatprep.subr.mxu0 0.0
  %5327 = vmatpush1.xpose.msra.mxu0 %v5322
  %5328 = vmatprep.subr.mxu0 0.0
  %5329 = vmatpush1.xpose.msra.mxu0 0.0
  %5330 = vmatprep.subr.mxu0 0.0
  %5331 = vmatpush1.xpose.msra.mxu0 0.0
  %5332 = vmatprep.subr.mxu0 0.0
  %5333 = vmatpush1.xpose.msra.mxu0 0.0
  %5334 = vmatprep.subr.mxu0 0.0
  %5335 = vmatpush1.xpose.msra.mxu0 0.0
  %5336 = vmatprep.subr.mxu0 0.0
  %5337 = vmatpush1.xpose.msra.mxu0 0.0
  %5338 = vmatprep.subr.mxu0 0.0
  %5339 = vmatpush1.xpose.msra.mxu0 0.0
  %5340 = vmatprep.subr.mxu0 0.0
  %5341 = vmatpush1.xpose.msra.mxu0 0.0
  %5342 = vmatprep.subr.mxu0 0.0
  %5343 = vmatpush1.xpose.msra.mxu0 0.0
  %5344 = vmatprep.subr.mxu0 0.0
  %5345 = vmatpush1.xpose.msra.mxu0 0.0
  %5346 = vmatprep.subr.mxu0 0.0
  %5347 = vmatpush1.xpose.msra.mxu0 0.0
  %5348 = vmatprep.subr.mxu0 0.0
  %5349 = vmatpush1.xpose.msra.mxu0 0.0
  %5350 = vmatprep.subr.mxu0 0.0
  %5351 = vmatpush1.xpose.msra.mxu0 0.0
  %5352 = vmatprep.subr.mxu0 0.0
  %5353 = vmatpush1.xpose.msra.mxu0 0.0
  %5354 = vmatprep.subr.mxu0 0.0
  %5355 = vmatpush1.xpose.msra.mxu0 0.0
  %5356 = vmatprep.subr.mxu0 0.0
  %5357 = vmatpush1.xpose.msra.mxu0 0.0
  %5358 = vmatprep.subr.mxu0 0.0
  %5359 = vmatpush1.xpose.msra.mxu0 0.0
  %5360 = vmatprep.subr.mxu0 0.0
  %5361 = vmatpush1.xpose.msra.mxu0 0.0
  %5362 = vmatprep.subr.mxu0 0.0
  %5363 = vmatpush1.xpose.msra.mxu0 0.0
  %5364 = vmatprep.subr.mxu0 0.0
  %5365 = vmatpush1.xpose.msra.mxu0 0.0
  %5366 = vmatprep.subr.mxu0 0.0
  %5367 = vmatpush1.xpose.msra.mxu0 0.0
  %5368 = vmatprep.subr.mxu0 0.0
  %5369 = vmatpush1.xpose.msra.mxu0 0.0
  %5370 = vmatprep.subr.mxu0 0.0
  %5371 = vmatpush1.xpose.msra.mxu0 0.0
  %5372 = vmatprep.subr.mxu0 0.0
  %5373 = vmatpush1.xpose.msra.mxu0 0.0
  %5374 = vmatprep.subr.mxu0 0.0
  %5375 = vmatpush1.xpose.msra.mxu0 0.0
  %5376 = vmatprep.subr.mxu0 0.0
  %5377 = vmatpush1.xpose.msra.mxu0 0.0
  %5378 = vmatprep.subr.mxu0 0.0
  %5379 = vmatpush1.xpose.msra.mxu0 0.0
  %5380 = vmatprep.subr.mxu0 0.0
  %5381 = vmatpush1.xpose.msra.mxu0 0.0
  %5382 = vmatprep.subr.mxu0 0.0
  %5383 = vmatpush1.xpose.msra.mxu0 0.0
  %5384 = vmatprep.subr.mxu0 0.0
  %5385 = vmatpush1.xpose.msra.mxu0 0.0
  %5386 = vmatprep.subr.mxu0 0.0
  %5387 = vmatpush1.xpose.msra.mxu0 0.0
  %5388 = vmatprep.mubr.f32.mxu0 0.0
  %5389 = vmatmul.mubr.f32.gmra.mrb[0].mxu0 %v5318
  %v5390 = vpop.f32.mrb[0].mxu0
  %v5391 = vadd.f32 %v462, %v5390
  %v5392 = vpop.f32.mrb[0].mxu0
  %5393 = vdwg.mxu0
  %5394 = vrot.lane.b32.xlu0 %v207, 104
  %v5395 = vpop.permute.xlu0 %5394
  %5396 = vrot.lane.b32.xlu0 %v391, 104
  %v5397 = vpop.permute.xlu0 %5396
  %5398 = vrot.lane.b32.xlu0 %v396, 104
  %v5399 = vpop.permute.xlu0 %5398
  %v5400 = vsel %vm483, %v5395, 0
  %v5402 = vsel %vm483, %v5397, 0
  %v5404 = vsel %vm483, %v5399, 0
  %5406 = vmatprep.subr.mxu0 0.0
  %5407 = vmatpush1.xpose.msra.mxu0 %v5402
  %5408 = vmatprep.subr.mxu0 0.0
  %5409 = vmatpush1.xpose.msra.mxu0 %v5404
  %5410 = vmatprep.subr.mxu0 0.0
  %5411 = vmatpush1.xpose.msra.mxu0 0.0
  %5412 = vmatprep.subr.mxu0 0.0
  %5413 = vmatpush1.xpose.msra.mxu0 0.0
  %5414 = vmatprep.subr.mxu0 0.0
  %5415 = vmatpush1.xpose.msra.mxu0 0.0
  %5416 = vmatprep.subr.mxu0 0.0
  %5417 = vmatpush1.xpose.msra.mxu0 0.0
  %5418 = vmatprep.subr.mxu0 0.0
  %5419 = vmatpush1.xpose.msra.mxu0 0.0
  %5420 = vmatprep.subr.mxu0 0.0
  %5421 = vmatpush1.xpose.msra.mxu0 0.0
  %5422 = vmatprep.subr.mxu0 0.0
  %5423 = vmatpush1.xpose.msra.mxu0 0.0
  %5424 = vmatprep.subr.mxu0 0.0
  %5425 = vmatpush1.xpose.msra.mxu0 0.0
  %5426 = vmatprep.subr.mxu0 0.0
  %5427 = vmatpush1.xpose.msra.mxu0 0.0
  %5428 = vmatprep.subr.mxu0 0.0
  %5429 = vmatpush1.xpose.msra.mxu0 0.0
  %5430 = vmatprep.subr.mxu0 0.0
  %5431 = vmatpush1.xpose.msra.mxu0 0.0
  %5432 = vmatprep.subr.mxu0 0.0
  %5433 = vmatpush1.xpose.msra.mxu0 0.0
  %5434 = vmatprep.subr.mxu0 0.0
  %5435 = vmatpush1.xpose.msra.mxu0 0.0
  %5436 = vmatprep.subr.mxu0 0.0
  %5437 = vmatpush1.xpose.msra.mxu0 0.0
  %5438 = vmatprep.subr.mxu0 0.0
  %5439 = vmatpush1.xpose.msra.mxu0 0.0
  %5440 = vmatprep.subr.mxu0 0.0
  %5441 = vmatpush1.xpose.msra.mxu0 0.0
  %5442 = vmatprep.subr.mxu0 0.0
  %5443 = vmatpush1.xpose.msra.mxu0 0.0
  %5444 = vmatprep.subr.mxu0 0.0
  %5445 = vmatpush1.xpose.msra.mxu0 0.0
  %5446 = vmatprep.subr.mxu0 0.0
  %5447 = vmatpush1.xpose.msra.mxu0 0.0
  %5448 = vmatprep.subr.mxu0 0.0
  %5449 = vmatpush1.xpose.msra.mxu0 0.0
  %5450 = vmatprep.subr.mxu0 0.0
  %5451 = vmatpush1.xpose.msra.mxu0 0.0
  %5452 = vmatprep.subr.mxu0 0.0
  %5453 = vmatpush1.xpose.msra.mxu0 0.0
  %5454 = vmatprep.subr.mxu0 0.0
  %5455 = vmatpush1.xpose.msra.mxu0 0.0
  %5456 = vmatprep.subr.mxu0 0.0
  %5457 = vmatpush1.xpose.msra.mxu0 0.0
  %5458 = vmatprep.subr.mxu0 0.0
  %5459 = vmatpush1.xpose.msra.mxu0 0.0
  %5460 = vmatprep.subr.mxu0 0.0
  %5461 = vmatpush1.xpose.msra.mxu0 0.0
  %5462 = vmatprep.subr.mxu0 0.0
  %5463 = vmatpush1.xpose.msra.mxu0 0.0
  %5464 = vmatprep.subr.mxu0 0.0
  %5465 = vmatpush1.xpose.msra.mxu0 0.0
  %5466 = vmatprep.subr.mxu0 0.0
  %5467 = vmatpush1.xpose.msra.mxu0 0.0
  %5468 = vmatprep.subr.mxu0 0.0
  %5469 = vmatpush1.xpose.msra.mxu0 0.0
  %5470 = vmatprep.mubr.f32.mxu0 0.0
  %5471 = vmatmul.mubr.f32.gmra.mrb[0].mxu0 %v5400
  %v5472 = vpop.f32.mrb[0].mxu0
  %v5473 = vadd.f32 %v466, %v5472
  %v5474 = vpop.f32.mrb[0].mxu0
  %5475 = vdwg.mxu0
  %5476 = vrot.lane.b32.xlu0 %v212, 104
  %v5477 = vpop.permute.xlu0 %5476
  %5478 = vrot.lane.b32.xlu0 %v401, 104
  %v5479 = vpop.permute.xlu0 %5478
  %5480 = vrot.lane.b32.xlu0 %v406, 104
  %v5481 = vpop.permute.xlu0 %5480
  %v5482 = vsel %vm483, %v5477, 0
  %v5484 = vsel %vm483, %v5479, 0
  %v5486 = vsel %vm483, %v5481, 0
  %5488 = vmatprep.subr.mxu0 0.0
  %5489 = vmatpush1.xpose.msra.mxu0 %v5484
  %5490 = vmatprep.subr.mxu0 0.0
  %5491 = vmatpush1.xpose.msra.mxu0 %v5486
  %5492 = vmatprep.subr.mxu0 0.0
  %5493 = vmatpush1.xpose.msra.mxu0 0.0
  %5494 = vmatprep.subr.mxu0 0.0
  %5495 = vmatpush1.xpose.msra.mxu0 0.0
  %5496 = vmatprep.subr.mxu0 0.0
  %5497 = vmatpush1.xpose.msra.mxu0 0.0
  %5498 = vmatprep.subr.mxu0 0.0
  %5499 = vmatpush1.xpose.msra.mxu0 0.0
  %5500 = vmatprep.subr.mxu0 0.0
  %5501 = vmatpush1.xpose.msra.mxu0 0.0
  %5502 = vmatprep.subr.mxu0 0.0
  %5503 = vmatpush1.xpose.msra.mxu0 0.0
  %5504 = vmatprep.subr.mxu0 0.0
  %5505 = vmatpush1.xpose.msra.mxu0 0.0
  %5506 = vmatprep.subr.mxu0 0.0
  %5507 = vmatpush1.xpose.msra.mxu0 0.0
  %5508 = vmatprep.subr.mxu0 0.0
  %5509 = vmatpush1.xpose.msra.mxu0 0.0
  %5510 = vmatprep.subr.mxu0 0.0
  %5511 = vmatpush1.xpose.msra.mxu0 0.0
  %5512 = vmatprep.subr.mxu0 0.0
  %5513 = vmatpush1.xpose.msra.mxu0 0.0
  %5514 = vmatprep.subr.mxu0 0.0
  %5515 = vmatpush1.xpose.msra.mxu0 0.0
  %5516 = vmatprep.subr.mxu0 0.0
  %5517 = vmatpush1.xpose.msra.mxu0 0.0
  %5518 = vmatprep.subr.mxu0 0.0
  %5519 = vmatpush1.xpose.msra.mxu0 0.0
  %5520 = vmatprep.subr.mxu0 0.0
  %5521 = vmatpush1.xpose.msra.mxu0 0.0
  %5522 = vmatprep.subr.mxu0 0.0
  %5523 = vmatpush1.xpose.msra.mxu0 0.0
  %5524 = vmatprep.subr.mxu0 0.0
  %5525 = vmatpush1.xpose.msra.mxu0 0.0
  %5526 = vmatprep.subr.mxu0 0.0
  %5527 = vmatpush1.xpose.msra.mxu0 0.0
  %5528 = vmatprep.subr.mxu0 0.0
  %5529 = vmatpush1.xpose.msra.mxu0 0.0
  %5530 = vmatprep.subr.mxu0 0.0
  %5531 = vmatpush1.xpose.msra.mxu0 0.0
  %5532 = vmatprep.subr.mxu0 0.0
  %5533 = vmatpush1.xpose.msra.mxu0 0.0
  %5534 = vmatprep.subr.mxu0 0.0
  %5535 = vmatpush1.xpose.msra.mxu0 0.0
  %5536 = vmatprep.subr.mxu0 0.0
  %5537 = vmatpush1.xpose.msra.mxu0 0.0
  %5538 = vmatprep.subr.mxu0 0.0
  %5539 = vmatpush1.xpose.msra.mxu0 0.0
  %5540 = vmatprep.subr.mxu0 0.0
  %5541 = vmatpush1.xpose.msra.mxu0 0.0
  %5542 = vmatprep.subr.mxu0 0.0
  %5543 = vmatpush1.xpose.msra.mxu0 0.0
  %5544 = vmatprep.subr.mxu0 0.0
  %5545 = vmatpush1.xpose.msra.mxu0 0.0
  %5546 = vmatprep.subr.mxu0 0.0
  %5547 = vmatpush1.xpose.msra.mxu0 0.0
  %5548 = vmatprep.subr.mxu0 0.0
  %5549 = vmatpush1.xpose.msra.mxu0 0.0
  %5550 = vmatprep.subr.mxu0 0.0
  %5551 = vmatpush1.xpose.msra.mxu0 0.0
  %5552 = vmatprep.mubr.f32.mxu0 0.0
  %5553 = vmatmul.mubr.f32.gmra.mrb[0].mxu0 %v5482
  %v5554 = vpop.f32.mrb[0].mxu0
  %v5555 = vadd.f32 %v470, %v5554
  %v5556 = vpop.f32.mrb[0].mxu0
  %5557 = vdwg.mxu0
  %5558 = vrot.lane.b32.xlu0 %v217, 104
  %v5559 = vpop.permute.xlu0 %5558
  %5560 = vrot.lane.b32.xlu0 %v411, 104
  %v5561 = vpop.permute.xlu0 %5560
  %5562 = vrot.lane.b32.xlu0 %v416, 104
  %v5563 = vpop.permute.xlu0 %5562
  %v5564 = vsel %vm483, %v5559, 0
  %v5566 = vsel %vm483, %v5561, 0
  %v5568 = vsel %vm483, %v5563, 0
  %5570 = vmatprep.subr.mxu0 0.0
  %5571 = vmatpush1.xpose.msra.mxu0 %v5566
  %5572 = vmatprep.subr.mxu0 0.0
  %5573 = vmatpush1.xpose.msra.mxu0 %v5568
  %5574 = vmatprep.subr.mxu0 0.0
  %5575 = vmatpush1.xpose.msra.mxu0 0.0
  %5576 = vmatprep.subr.mxu0 0.0
  %5577 = vmatpush1.xpose.msra.mxu0 0.0
  %5578 = vmatprep.subr.mxu0 0.0
  %5579 = vmatpush1.xpose.msra.mxu0 0.0
  %5580 = vmatprep.subr.mxu0 0.0
  %5581 = vmatpush1.xpose.msra.mxu0 0.0
  %5582 = vmatprep.subr.mxu0 0.0
  %5583 = vmatpush1.xpose.msra.mxu0 0.0
  %5584 = vmatprep.subr.mxu0 0.0
  %5585 = vmatpush1.xpose.msra.mxu0 0.0
  %5586 = vmatprep.subr.mxu0 0.0
  %5587 = vmatpush1.xpose.msra.mxu0 0.0
  %5588 = vmatprep.subr.mxu0 0.0
  %5589 = vmatpush1.xpose.msra.mxu0 0.0
  %5590 = vmatprep.subr.mxu0 0.0
  %5591 = vmatpush1.xpose.msra.mxu0 0.0
  %5592 = vmatprep.subr.mxu0 0.0
  %5593 = vmatpush1.xpose.msra.mxu0 0.0
  %5594 = vmatprep.subr.mxu0 0.0
  %5595 = vmatpush1.xpose.msra.mxu0 0.0
  %5596 = vmatprep.subr.mxu0 0.0
  %5597 = vmatpush1.xpose.msra.mxu0 0.0
  %5598 = vmatprep.subr.mxu0 0.0
  %5599 = vmatpush1.xpose.msra.mxu0 0.0
  %5600 = vmatprep.subr.mxu0 0.0
  %5601 = vmatpush1.xpose.msra.mxu0 0.0
  %5602 = vmatprep.subr.mxu0 0.0
  %5603 = vmatpush1.xpose.msra.mxu0 0.0
  %5604 = vmatprep.subr.mxu0 0.0
  %5605 = vmatpush1.xpose.msra.mxu0 0.0
  %5606 = vmatprep.subr.mxu0 0.0
  %5607 = vmatpush1.xpose.msra.mxu0 0.0
  %5608 = vmatprep.subr.mxu0 0.0
  %5609 = vmatpush1.xpose.msra.mxu0 0.0
  %5610 = vmatprep.subr.mxu0 0.0
  %5611 = vmatpush1.xpose.msra.mxu0 0.0
  %5612 = vmatprep.subr.mxu0 0.0
  %5613 = vmatpush1.xpose.msra.mxu0 0.0
  %5614 = vmatprep.subr.mxu0 0.0
  %5615 = vmatpush1.xpose.msra.mxu0 0.0
  %5616 = vmatprep.subr.mxu0 0.0
  %5617 = vmatpush1.xpose.msra.mxu0 0.0
  %5618 = vmatprep.subr.mxu0 0.0
  %5619 = vmatpush1.xpose.msra.mxu0 0.0
  %5620 = vmatprep.subr.mxu0 0.0
  %5621 = vmatpush1.xpose.msra.mxu0 0.0
  %5622 = vmatprep.subr.mxu0 0.0
  %5623 = vmatpush1.xpose.msra.mxu0 0.0
  %5624 = vmatprep.subr.mxu0 0.0
  %5625 = vmatpush1.xpose.msra.mxu0 0.0
  %5626 = vmatprep.subr.mxu0 0.0
  %5627 = vmatpush1.xpose.msra.mxu0 0.0
  %5628 = vmatprep.subr.mxu0 0.0
  %5629 = vmatpush1.xpose.msra.mxu0 0.0
  %5630 = vmatprep.subr.mxu0 0.0
  %5631 = vmatpush1.xpose.msra.mxu0 0.0
  %5632 = vmatprep.subr.mxu0 0.0
  %5633 = vmatpush1.xpose.msra.mxu0 0.0
  %5634 = vmatprep.mubr.f32.mxu0 0.0
  %5635 = vmatmul.mubr.f32.gmra.mrb[0].mxu0 %v5564
  %v5636 = vpop.f32.mrb[0].mxu0
  %v5637 = vadd.f32 %v474, %v5636
  %v5638 = vpop.f32.mrb[0].mxu0
  %5639 = vdwg.mxu0
  %v5640 = vsel %vm1116, %v5063, -inf
  %5641 = vmax.xlane.f32.xlu0 %v5640
  %v5642 = vpop.xlane.xlu0 %5641
  %v5643 = vsel %vm1116, %v5145, -inf
  %5644 = vmax.xlane.f32.xlu0 %v5643
  %v5645 = vpop.xlane.xlu0 %5644
  %v5646 = vsel %vm1116, %v5227, -inf
  %5647 = vmax.xlane.f32.xlu0 %v5646
  %v5648 = vpop.xlane.xlu0 %5647
  %v5649 = vsel %vm1116, %v5309, -inf
  %5650 = vmax.xlane.f32.xlu0 %v5649
  %v5651 = vpop.xlane.xlu0 %5650
  %v5652 = vsel %vm1116, %v5391, -inf
  %5653 = vmax.xlane.f32.xlu0 %v5652
  %v5654 = vpop.xlane.xlu0 %5653
  %v5655 = vsel %vm1116, %v5473, -inf
  %5656 = vmax.xlane.f32.xlu0 %v5655
  %v5657 = vpop.xlane.xlu0 %5656
  %v5658 = vsel %vm1116, %v5555, -inf
  %5659 = vmax.xlane.f32.xlu0 %v5658
  %v5660 = vpop.xlane.xlu0 %5659
  %v5661 = vsel %vm1116, %v5637, -inf
  %5662 = vmax.xlane.f32.xlu0 %v5661
  %v5663 = vpop.xlane.xlu0 %5662
  %v5664 = vsub.f32 %v5063, %v5642
  %v5665 = vsub.f32 %v5145, %v5645
  %v5666 = vsub.f32 %v5227, %v5648
  %v5667 = vsub.f32 %v5309, %v5651
  %v5668 = vsub.f32 %v5391, %v5654
  %v5669 = vsub.f32 %v5473, %v5657
  %v5670 = vsub.f32 %v5555, %v5660
  %v5671 = vsub.f32 %v5637, %v5663
  %v5672 = vmul.f32 %v5664, 1.442695
  %v5673 = vpow.pop %v5672
  %v5674 = vmul.f32 %v5665, 1.442695
  %v5675 = vpow.pop %v5674
  %v5676 = vmul.f32 %v5666, 1.442695
  %v5677 = vpow.pop %v5676
  %v5678 = vmul.f32 %v5667, 1.442695
  %v5679 = vpow.pop %v5678
  %v5680 = vmul.f32 %v5668, 1.442695
  %v5681 = vpow.pop %v5680
  %v5682 = vmul.f32 %v5669, 1.442695
  %v5683 = vpow.pop %v5682
  %v5684 = vmul.f32 %v5670, 1.442695
  %v5685 = vpow.pop %v5684
  %v5686 = vmul.f32 %v5671, 1.442695
  %v5687 = vpow.pop %v5686
  %v5688 = vsel %vm1116, %v5673, 0.0
  %5689 = vadd.xlane.f32.xlu0 %v5688
  %v5690 = vpop.xlane.xlu0 %5689
  %v5691 = vsel %vm1116, %v5675, 0.0
  %5692 = vadd.xlane.f32.xlu0 %v5691
  %v5693 = vpop.xlane.xlu0 %5692
  %v5694 = vsel %vm1116, %v5677, 0.0
  %5695 = vadd.xlane.f32.xlu0 %v5694
  %v5696 = vpop.xlane.xlu0 %5695
  %v5697 = vsel %vm1116, %v5679, 0.0
  %5698 = vadd.xlane.f32.xlu0 %v5697
  %v5699 = vpop.xlane.xlu0 %5698
  %v5700 = vsel %vm1116, %v5681, 0.0
  %5701 = vadd.xlane.f32.xlu0 %v5700
  %v5702 = vpop.xlane.xlu0 %5701
  %v5703 = vsel %vm1116, %v5683, 0.0
  %5704 = vadd.xlane.f32.xlu0 %v5703
  %v5705 = vpop.xlane.xlu0 %5704
  %v5706 = vsel %vm1116, %v5685, 0.0
  %5707 = vadd.xlane.f32.xlu0 %v5706
  %v5708 = vpop.xlane.xlu0 %5707
  %v5709 = vsel %vm1116, %v5687, 0.0
  %5710 = vadd.xlane.f32.xlu0 %v5709
  %v5711 = vpop.xlane.xlu0 %5710
  %v5712 = vrcp.pop %v5690
  %v5713 = vmul.f32 %v5673, %v5712
  %v5714 = vrcp.pop %v5693
  %v5715 = vmul.f32 %v5675, %v5714
  %v5716 = vrcp.pop %v5696
  %v5717 = vmul.f32 %v5677, %v5716
  %v5718 = vrcp.pop %v5699
  %v5719 = vmul.f32 %v5679, %v5718
  %v5720 = vrcp.pop %v5702
  %v5721 = vmul.f32 %v5681, %v5720
  %v5722 = vrcp.pop %v5705
  %v5723 = vmul.f32 %v5683, %v5722
  %v5724 = vrcp.pop %v5708
  %v5725 = vmul.f32 %v5685, %v5724
  %v5726 = vrcp.pop %v5711
  %v5727 = vmul.f32 %v5687, %v5726
  %5728 = vrot.lane.b32.xlu0 %v341, 72
  %v5729 = vpop.permute.xlu0 %5728
  %5730 = vrot.lane.b32.xlu0 %v346, 72
  %v5731 = vpop.permute.xlu0 %5730
  %v5735 = vsel %vm1116, %v5713, 0
  %5737 = vmatprep.subr.mxu0 0.0
  %5738 = vmatpush1.msra.mxu0 %v5729
  %5739 = vmatprep.subr.mxu0 0.0
  %5740 = vmatpush1.msra.mxu0 %v5731
  %5741 = vmatprep.subr.mxu0 0.0
  %5742 = vmatpush1.msra.mxu0 0.0
  %5743 = vmatprep.subr.mxu0 0.0
  %5744 = vmatpush1.msra.mxu0 0.0
  %5745 = vmatprep.subr.mxu0 0.0
  %5746 = vmatpush1.msra.mxu0 0.0
  %5747 = vmatprep.subr.mxu0 0.0
  %5748 = vmatpush1.msra.mxu0 0.0
  %5749 = vmatprep.subr.mxu0 0.0
  %5750 = vmatpush1.msra.mxu0 0.0
  %5751 = vmatprep.subr.mxu0 0.0
  %5752 = vmatpush1.msra.mxu0 0.0
  %5753 = vmatprep.subr.mxu0 0.0
  %5754 = vmatpush1.msra.mxu0 0.0
  %5755 = vmatprep.subr.mxu0 0.0
  %5756 = vmatpush1.msra.mxu0 0.0
  %5757 = vmatprep.subr.mxu0 0.0
  %5758 = vmatpush1.msra.mxu0 0.0
  %5759 = vmatprep.subr.mxu0 0.0
  %5760 = vmatpush1.msra.mxu0 0.0
  %5761 = vmatprep.subr.mxu0 0.0
  %5762 = vmatpush1.msra.mxu0 0.0
  %5763 = vmatprep.subr.mxu0 0.0
  %5764 = vmatpush1.msra.mxu0 0.0
  %5765 = vmatprep.subr.mxu0 0.0
  %5766 = vmatpush1.msra.mxu0 0.0
  %5767 = vmatprep.subr.mxu0 0.0
  %5768 = vmatpush1.msra.mxu0 0.0
  %5769 = vmatprep.subr.mxu0 0.0
  %5770 = vmatpush1.msra.mxu0 0.0
  %5771 = vmatprep.subr.mxu0 0.0
  %5772 = vmatpush1.msra.mxu0 0.0
  %5773 = vmatprep.subr.mxu0 0.0
  %5774 = vmatpush1.msra.mxu0 0.0
  %5775 = vmatprep.subr.mxu0 0.0
  %5776 = vmatpush1.msra.mxu0 0.0
  %5777 = vmatprep.subr.mxu0 0.0
  %5778 = vmatpush1.msra.mxu0 0.0
  %5779 = vmatprep.subr.mxu0 0.0
  %5780 = vmatpush1.msra.mxu0 0.0
  %5781 = vmatprep.subr.mxu0 0.0
  %5782 = vmatpush1.msra.mxu0 0.0
  %5783 = vmatprep.subr.mxu0 0.0
  %5784 = vmatpush1.msra.mxu0 0.0
  %5785 = vmatprep.subr.mxu0 0.0
  %5786 = vmatpush1.msra.mxu0 0.0
  %5787 = vmatprep.subr.mxu0 0.0
  %5788 = vmatpush1.msra.mxu0 0.0
  %5789 = vmatprep.subr.mxu0 0.0
  %5790 = vmatpush1.msra.mxu0 0.0
  %5791 = vmatprep.subr.mxu0 0.0
  %5792 = vmatpush1.msra.mxu0 0.0
  %5793 = vmatprep.subr.mxu0 0.0
  %5794 = vmatpush1.msra.mxu0 0.0
  %5795 = vmatprep.subr.mxu0 0.0
  %5796 = vmatpush1.msra.mxu0 0.0
  %5797 = vmatprep.subr.mxu0 0.0
  %5798 = vmatpush1.msra.mxu0 0.0
  %5799 = vmatprep.subr.mxu0 0.0
  %5800 = vmatpush1.msra.mxu0 0.0
  %5801 = vmatprep.mubr.f32.mxu0 0.0
  %5802 = vmatmul.mubr.f32.gmra.mrb[0].mxu0 %v5735
  %v5803 = vpop.f32.mrb[0].mxu0
  %v5804 = vadd.f32 0.0, %v5803
  %v5805 = vpop.f32.mrb[0].mxu0
  %5806 = vdwg.mxu0
  %5807 = vrot.lane.b32.xlu0 %v351, 72
  %v5808 = vpop.permute.xlu0 %5807
  %5809 = vrot.lane.b32.xlu0 %v356, 72
  %v5810 = vpop.permute.xlu0 %5809
  %v5814 = vsel %vm1116, %v5715, 0
  %5816 = vmatprep.subr.mxu0 0.0
  %5817 = vmatpush1.msra.mxu0 %v5808
  %5818 = vmatprep.subr.mxu0 0.0
  %5819 = vmatpush1.msra.mxu0 %v5810
  %5820 = vmatprep.subr.mxu0 0.0
  %5821 = vmatpush1.msra.mxu0 0.0
  %5822 = vmatprep.subr.mxu0 0.0
  %5823 = vmatpush1.msra.mxu0 0.0
  %5824 = vmatprep.subr.mxu0 0.0
  %5825 = vmatpush1.msra.mxu0 0.0
  %5826 = vmatprep.subr.mxu0 0.0
  %5827 = vmatpush1.msra.mxu0 0.0
  %5828 = vmatprep.subr.mxu0 0.0
  %5829 = vmatpush1.msra.mxu0 0.0
  %5830 = vmatprep.subr.mxu0 0.0
  %5831 = vmatpush1.msra.mxu0 0.0
  %5832 = vmatprep.subr.mxu0 0.0
  %5833 = vmatpush1.msra.mxu0 0.0
  %5834 = vmatprep.subr.mxu0 0.0
  %5835 = vmatpush1.msra.mxu0 0.0
  %5836 = vmatprep.subr.mxu0 0.0
  %5837 = vmatpush1.msra.mxu0 0.0
  %5838 = vmatprep.subr.mxu0 0.0
  %5839 = vmatpush1.msra.mxu0 0.0
  %5840 = vmatprep.subr.mxu0 0.0
  %5841 = vmatpush1.msra.mxu0 0.0
  %5842 = vmatprep.subr.mxu0 0.0
  %5843 = vmatpush1.msra.mxu0 0.0
  %5844 = vmatprep.subr.mxu0 0.0
  %5845 = vmatpush1.msra.mxu0 0.0
  %5846 = vmatprep.subr.mxu0 0.0
  %5847 = vmatpush1.msra.mxu0 0.0
  %5848 = vmatprep.subr.mxu0 0.0
  %5849 = vmatpush1.msra.mxu0 0.0
  %5850 = vmatprep.subr.mxu0 0.0
  %5851 = vmatpush1.msra.mxu0 0.0
  %5852 = vmatprep.subr.mxu0 0.0
  %5853 = vmatpush1.msra.mxu0 0.0
  %5854 = vmatprep.subr.mxu0 0.0
  %5855 = vmatpush1.msra.mxu0 0.0
  %5856 = vmatprep.subr.mxu0 0.0
  %5857 = vmatpush1.msra.mxu0 0.0
  %5858 = vmatprep.subr.mxu0 0.0
  %5859 = vmatpush1.msra.mxu0 0.0
  %5860 = vmatprep.subr.mxu0 0.0
  %5861 = vmatpush1.msra.mxu0 0.0
  %5862 = vmatprep.subr.mxu0 0.0
  %5863 = vmatpush1.msra.mxu0 0.0
  %5864 = vmatprep.subr.mxu0 0.0
  %5865 = vmatpush1.msra.mxu0 0.0
  %5866 = vmatprep.subr.mxu0 0.0
  %5867 = vmatpush1.msra.mxu0 0.0
  %5868 = vmatprep.subr.mxu0 0.0
  %5869 = vmatpush1.msra.mxu0 0.0
  %5870 = vmatprep.subr.mxu0 0.0
  %5871 = vmatpush1.msra.mxu0 0.0
  %5872 = vmatprep.subr.mxu0 0.0
  %5873 = vmatpush1.msra.mxu0 0.0
  %5874 = vmatprep.subr.mxu0 0.0
  %5875 = vmatpush1.msra.mxu0 0.0
  %5876 = vmatprep.subr.mxu0 0.0
  %5877 = vmatpush1.msra.mxu0 0.0
  %5878 = vmatprep.subr.mxu0 0.0
  %5879 = vmatpush1.msra.mxu0 0.0
  %5880 = vmatprep.mubr.f32.mxu0 0.0
  %5881 = vmatmul.mubr.f32.gmra.mrb[0].mxu0 %v5814
  %v5882 = vpop.f32.mrb[0].mxu0
  %v5883 = vadd.f32 0.0, %v5882
  %v5884 = vpop.f32.mrb[0].mxu0
  %5885 = vdwg.mxu0
  %5886 = vrot.lane.b32.xlu0 %v361, 72
  %v5887 = vpop.permute.xlu0 %5886
  %5888 = vrot.lane.b32.xlu0 %v366, 72
  %v5889 = vpop.permute.xlu0 %5888
  %v5893 = vsel %vm1116, %v5717, 0
  %5895 = vmatprep.subr.mxu0 0.0
  %5896 = vmatpush1.msra.mxu0 %v5887
  %5897 = vmatprep.subr.mxu0 0.0
  %5898 = vmatpush1.msra.mxu0 %v5889
  %5899 = vmatprep.subr.mxu0 0.0
  %5900 = vmatpush1.msra.mxu0 0.0
  %5901 = vmatprep.subr.mxu0 0.0
  %5902 = vmatpush1.msra.mxu0 0.0
  %5903 = vmatprep.subr.mxu0 0.0
  %5904 = vmatpush1.msra.mxu0 0.0
  %5905 = vmatprep.subr.mxu0 0.0
  %5906 = vmatpush1.msra.mxu0 0.0
  %5907 = vmatprep.subr.mxu0 0.0
  %5908 = vmatpush1.msra.mxu0 0.0
  %5909 = vmatprep.subr.mxu0 0.0
  %5910 = vmatpush1.msra.mxu0 0.0
  %5911 = vmatprep.subr.mxu0 0.0
  %5912 = vmatpush1.msra.mxu0 0.0
  %5913 = vmatprep.subr.mxu0 0.0
  %5914 = vmatpush1.msra.mxu0 0.0
  %5915 = vmatprep.subr.mxu0 0.0
  %5916 = vmatpush1.msra.mxu0 0.0
  %5917 = vmatprep.subr.mxu0 0.0
  %5918 = vmatpush1.msra.mxu0 0.0
  %5919 = vmatprep.subr.mxu0 0.0
  %5920 = vmatpush1.msra.mxu0 0.0
  %5921 = vmatprep.subr.mxu0 0.0
  %5922 = vmatpush1.msra.mxu0 0.0
  %5923 = vmatprep.subr.mxu0 0.0
  %5924 = vmatpush1.msra.mxu0 0.0
  %5925 = vmatprep.subr.mxu0 0.0
  %5926 = vmatpush1.msra.mxu0 0.0
  %5927 = vmatprep.subr.mxu0 0.0
  %5928 = vmatpush1.msra.mxu0 0.0
  %5929 = vmatprep.subr.mxu0 0.0
  %5930 = vmatpush1.msra.mxu0 0.0
  %5931 = vmatprep.subr.mxu0 0.0
  %5932 = vmatpush1.msra.mxu0 0.0
  %5933 = vmatprep.subr.mxu0 0.0
  %5934 = vmatpush1.msra.mxu0 0.0
  %5935 = vmatprep.subr.mxu0 0.0
  %5936 = vmatpush1.msra.mxu0 0.0
  %5937 = vmatprep.subr.mxu0 0.0
  %5938 = vmatpush1.msra.mxu0 0.0
  %5939 = vmatprep.subr.mxu0 0.0
  %5940 = vmatpush1.msra.mxu0 0.0
  %5941 = vmatprep.subr.mxu0 0.0
  %5942 = vmatpush1.msra.mxu0 0.0
  %5943 = vmatprep.subr.mxu0 0.0
  %5944 = vmatpush1.msra.mxu0 0.0
  %5945 = vmatprep.subr.mxu0 0.0
  %5946 = vmatpush1.msra.mxu0 0.0
  %5947 = vmatprep.subr.mxu0 0.0
  %5948 = vmatpush1.msra.mxu0 0.0
  %5949 = vmatprep.subr.mxu0 0.0
  %5950 = vmatpush1.msra.mxu0 0.0
  %5951 = vmatprep.subr.mxu0 0.0
  %5952 = vmatpush1.msra.mxu0 0.0
  %5953 = vmatprep.subr.mxu0 0.0
  %5954 = vmatpush1.msra.mxu0 0.0
  %5955 = vmatprep.subr.mxu0 0.0
  %5956 = vmatpush1.msra.mxu0 0.0
  %5957 = vmatprep.subr.mxu0 0.0
  %5958 = vmatpush1.msra.mxu0 0.0
  %5959 = vmatprep.mubr.f32.mxu0 0.0
  %5960 = vmatmul.mubr.f32.gmra.mrb[0].mxu0 %v5893
  %v5961 = vpop.f32.mrb[0].mxu0
  %v5962 = vadd.f32 0.0, %v5961
  %v5963 = vpop.f32.mrb[0].mxu0
  %5964 = vdwg.mxu0
  %5965 = vrot.lane.b32.xlu0 %v371, 72
  %v5966 = vpop.permute.xlu0 %5965
  %5967 = vrot.lane.b32.xlu0 %v376, 72
  %v5968 = vpop.permute.xlu0 %5967
  %v5972 = vsel %vm1116, %v5719, 0
  %5974 = vmatprep.subr.mxu0 0.0
  %5975 = vmatpush1.msra.mxu0 %v5966
  %5976 = vmatprep.subr.mxu0 0.0
  %5977 = vmatpush1.msra.mxu0 %v5968
  %5978 = vmatprep.subr.mxu0 0.0
  %5979 = vmatpush1.msra.mxu0 0.0
  %5980 = vmatprep.subr.mxu0 0.0
  %5981 = vmatpush1.msra.mxu0 0.0
  %5982 = vmatprep.subr.mxu0 0.0
  %5983 = vmatpush1.msra.mxu0 0.0
  %5984 = vmatprep.subr.mxu0 0.0
  %5985 = vmatpush1.msra.mxu0 0.0
  %5986 = vmatprep.subr.mxu0 0.0
  %5987 = vmatpush1.msra.mxu0 0.0
  %5988 = vmatprep.subr.mxu0 0.0
  %5989 = vmatpush1.msra.mxu0 0.0
  %5990 = vmatprep.subr.mxu0 0.0
  %5991 = vmatpush1.msra.mxu0 0.0
  %5992 = vmatprep.subr.mxu0 0.0
  %5993 = vmatpush1.msra.mxu0 0.0
  %5994 = vmatprep.subr.mxu0 0.0
  %5995 = vmatpush1.msra.mxu0 0.0
  %5996 = vmatprep.subr.mxu0 0.0
  %5997 = vmatpush1.msra.mxu0 0.0
  %5998 = vmatprep.subr.mxu0 0.0
  %5999 = vmatpush1.msra.mxu0 0.0
  %6000 = vmatprep.subr.mxu0 0.0
  %6001 = vmatpush1.msra.mxu0 0.0
  %6002 = vmatprep.subr.mxu0 0.0
  %6003 = vmatpush1.msra.mxu0 0.0
  %6004 = vmatprep.subr.mxu0 0.0
  %6005 = vmatpush1.msra.mxu0 0.0
  %6006 = vmatprep.subr.mxu0 0.0
  %6007 = vmatpush1.msra.mxu0 0.0
  %6008 = vmatprep.subr.mxu0 0.0
  %6009 = vmatpush1.msra.mxu0 0.0
  %6010 = vmatprep.subr.mxu0 0.0
  %6011 = vmatpush1.msra.mxu0 0.0
  %6012 = vmatprep.subr.mxu0 0.0
  %6013 = vmatpush1.msra.mxu0 0.0
  %6014 = vmatprep.subr.mxu0 0.0
  %6015 = vmatpush1.msra.mxu0 0.0
  %6016 = vmatprep.subr.mxu0 0.0
  %6017 = vmatpush1.msra.mxu0 0.0
  %6018 = vmatprep.subr.mxu0 0.0
  %6019 = vmatpush1.msra.mxu0 0.0
  %6020 = vmatprep.subr.mxu0 0.0
  %6021 = vmatpush1.msra.mxu0 0.0
  %6022 = vmatprep.subr.mxu0 0.0
  %6023 = vmatpush1.msra.mxu0 0.0
  %6024 = vmatprep.subr.mxu0 0.0
  %6025 = vmatpush1.msra.mxu0 0.0
  %6026 = vmatprep.subr.mxu0 0.0
  %6027 = vmatpush1.msra.mxu0 0.0
  %6028 = vmatprep.subr.mxu0 0.0
  %6029 = vmatpush1.msra.mxu0 0.0
  %6030 = vmatprep.subr.mxu0 0.0
  %6031 = vmatpush1.msra.mxu0 0.0
  %6032 = vmatprep.subr.mxu0 0.0
  %6033 = vmatpush1.msra.mxu0 0.0
  %6034 = vmatprep.subr.mxu0 0.0
  %6035 = vmatpush1.msra.mxu0 0.0
  %6036 = vmatprep.subr.mxu0 0.0
  %6037 = vmatpush1.msra.mxu0 0.0
  %6038 = vmatprep.mubr.f32.mxu0 0.0
  %6039 = vmatmul.mubr.f32.gmra.mrb[0].mxu0 %v5972
  %v6040 = vpop.f32.mrb[0].mxu0
  %v6041 = vadd.f32 0.0, %v6040
  %v6042 = vpop.f32.mrb[0].mxu0
  %6043 = vdwg.mxu0
  %6044 = vrot.lane.b32.xlu0 %v381, 72
  %v6045 = vpop.permute.xlu0 %6044
  %6046 = vrot.lane.b32.xlu0 %v386, 72
  %v6047 = vpop.permute.xlu0 %6046
  %v6051 = vsel %vm1116, %v5721, 0
  %6053 = vmatprep.subr.mxu0 0.0
  %6054 = vmatpush1.msra.mxu0 %v6045
  %6055 = vmatprep.subr.mxu0 0.0
  %6056 = vmatpush1.msra.mxu0 %v6047
  %6057 = vmatprep.subr.mxu0 0.0
  %6058 = vmatpush1.msra.mxu0 0.0
  %6059 = vmatprep.subr.mxu0 0.0
  %6060 = vmatpush1.msra.mxu0 0.0
  %6061 = vmatprep.subr.mxu0 0.0
  %6062 = vmatpush1.msra.mxu0 0.0
  %6063 = vmatprep.subr.mxu0 0.0
  %6064 = vmatpush1.msra.mxu0 0.0
  %6065 = vmatprep.subr.mxu0 0.0
  %6066 = vmatpush1.msra.mxu0 0.0
  %6067 = vmatprep.subr.mxu0 0.0
  %6068 = vmatpush1.msra.mxu0 0.0
  %6069 = vmatprep.subr.mxu0 0.0
  %6070 = vmatpush1.msra.mxu0 0.0
  %6071 = vmatprep.subr.mxu0 0.0
  %6072 = vmatpush1.msra.mxu0 0.0
  %6073 = vmatprep.subr.mxu0 0.0
  %6074 = vmatpush1.msra.mxu0 0.0
  %6075 = vmatprep.subr.mxu0 0.0
  %6076 = vmatpush1.msra.mxu0 0.0
  %6077 = vmatprep.subr.mxu0 0.0
  %6078 = vmatpush1.msra.mxu0 0.0
  %6079 = vmatprep.subr.mxu0 0.0
  %6080 = vmatpush1.msra.mxu0 0.0
  %6081 = vmatprep.subr.mxu0 0.0
  %6082 = vmatpush1.msra.mxu0 0.0
  %6083 = vmatprep.subr.mxu0 0.0
  %6084 = vmatpush1.msra.mxu0 0.0
  %6085 = vmatprep.subr.mxu0 0.0
  %6086 = vmatpush1.msra.mxu0 0.0
  %6087 = vmatprep.subr.mxu0 0.0
  %6088 = vmatpush1.msra.mxu0 0.0
  %6089 = vmatprep.subr.mxu0 0.0
  %6090 = vmatpush1.msra.mxu0 0.0
  %6091 = vmatprep.subr.mxu0 0.0
  %6092 = vmatpush1.msra.mxu0 0.0
  %6093 = vmatprep.subr.mxu0 0.0
  %6094 = vmatpush1.msra.mxu0 0.0
  %6095 = vmatprep.subr.mxu0 0.0
  %6096 = vmatpush1.msra.mxu0 0.0
  %6097 = vmatprep.subr.mxu0 0.0
  %6098 = vmatpush1.msra.mxu0 0.0
  %6099 = vmatprep.subr.mxu0 0.0
  %6100 = vmatpush1.msra.mxu0 0.0
  %6101 = vmatprep.subr.mxu0 0.0
  %6102 = vmatpush1.msra.mxu0 0.0
  %6103 = vmatprep.subr.mxu0 0.0
  %6104 = vmatpush1.msra.mxu0 0.0
  %6105 = vmatprep.subr.mxu0 0.0
  %6106 = vmatpush1.msra.mxu0 0.0
  %6107 = vmatprep.subr.mxu0 0.0
  %6108 = vmatpush1.msra.mxu0 0.0
  %6109 = vmatprep.subr.mxu0 0.0
  %6110 = vmatpush1.msra.mxu0 0.0
  %6111 = vmatprep.subr.mxu0 0.0
  %6112 = vmatpush1.msra.mxu0 0.0
  %6113 = vmatprep.subr.mxu0 0.0
  %6114 = vmatpush1.msra.mxu0 0.0
  %6115 = vmatprep.subr.mxu0 0.0
  %6116 = vmatpush1.msra.mxu0 0.0
  %6117 = vmatprep.mubr.f32.mxu0 0.0
  %6118 = vmatmul.mubr.f32.gmra.mrb[0].mxu0 %v6051
  %v6119 = vpop.f32.mrb[0].mxu0
  %v6120 = vadd.f32 0.0, %v6119
  %v6121 = vpop.f32.mrb[0].mxu0
  %6122 = vdwg.mxu0
  %6123 = vrot.lane.b32.xlu0 %v391, 72
  %v6124 = vpop.permute.xlu0 %6123
  %6125 = vrot.lane.b32.xlu0 %v396, 72
  %v6126 = vpop.permute.xlu0 %6125
  %v6130 = vsel %vm1116, %v5723, 0
  %6132 = vmatprep.subr.mxu0 0.0
  %6133 = vmatpush1.msra.mxu0 %v6124
  %6134 = vmatprep.subr.mxu0 0.0
  %6135 = vmatpush1.msra.mxu0 %v6126
  %6136 = vmatprep.subr.mxu0 0.0
  %6137 = vmatpush1.msra.mxu0 0.0
  %6138 = vmatprep.subr.mxu0 0.0
  %6139 = vmatpush1.msra.mxu0 0.0
  %6140 = vmatprep.subr.mxu0 0.0
  %6141 = vmatpush1.msra.mxu0 0.0
  %6142 = vmatprep.subr.mxu0 0.0
  %6143 = vmatpush1.msra.mxu0 0.0
  %6144 = vmatprep.subr.mxu0 0.0
  %6145 = vmatpush1.msra.mxu0 0.0
  %6146 = vmatprep.subr.mxu0 0.0
  %6147 = vmatpush1.msra.mxu0 0.0
  %6148 = vmatprep.subr.mxu0 0.0
  %6149 = vmatpush1.msra.mxu0 0.0
  %6150 = vmatprep.subr.mxu0 0.0
  %6151 = vmatpush1.msra.mxu0 0.0
  %6152 = vmatprep.subr.mxu0 0.0
  %6153 = vmatpush1.msra.mxu0 0.0
  %6154 = vmatprep.subr.mxu0 0.0
  %6155 = vmatpush1.msra.mxu0 0.0
  %6156 = vmatprep.subr.mxu0 0.0
  %6157 = vmatpush1.msra.mxu0 0.0
  %6158 = vmatprep.subr.mxu0 0.0
  %6159 = vmatpush1.msra.mxu0 0.0
  %6160 = vmatprep.subr.mxu0 0.0
  %6161 = vmatpush1.msra.mxu0 0.0
  %6162 = vmatprep.subr.mxu0 0.0
  %6163 = vmatpush1.msra.mxu0 0.0
  %6164 = vmatprep.subr.mxu0 0.0
  %6165 = vmatpush1.msra.mxu0 0.0
  %6166 = vmatprep.subr.mxu0 0.0
  %6167 = vmatpush1.msra.mxu0 0.0
  %6168 = vmatprep.subr.mxu0 0.0
  %6169 = vmatpush1.msra.mxu0 0.0
  %6170 = vmatprep.subr.mxu0 0.0
  %6171 = vmatpush1.msra.mxu0 0.0
  %6172 = vmatprep.subr.mxu0 0.0
  %6173 = vmatpush1.msra.mxu0 0.0
  %6174 = vmatprep.subr.mxu0 0.0
  %6175 = vmatpush1.msra.mxu0 0.0
  %6176 = vmatprep.subr.mxu0 0.0
  %6177 = vmatpush1.msra.mxu0 0.0
  %6178 = vmatprep.subr.mxu0 0.0
  %6179 = vmatpush1.msra.mxu0 0.0
  %6180 = vmatprep.subr.mxu0 0.0
  %6181 = vmatpush1.msra.mxu0 0.0
  %6182 = vmatprep.subr.mxu0 0.0
  %6183 = vmatpush1.msra.mxu0 0.0
  %6184 = vmatprep.subr.mxu0 0.0
  %6185 = vmatpush1.msra.mxu0 0.0
  %6186 = vmatprep.subr.mxu0 0.0
  %6187 = vmatpush1.msra.mxu0 0.0
  %6188 = vmatprep.subr.mxu0 0.0
  %6189 = vmatpush1.msra.mxu0 0.0
  %6190 = vmatprep.subr.mxu0 0.0
  %6191 = vmatpush1.msra.mxu0 0.0
  %6192 = vmatprep.subr.mxu0 0.0
  %6193 = vmatpush1.msra.mxu0 0.0
  %6194 = vmatprep.subr.mxu0 0.0
  %6195 = vmatpush1.msra.mxu0 0.0
  %6196 = vmatprep.mubr.f32.mxu0 0.0
  %6197 = vmatmul.mubr.f32.gmra.mrb[0].mxu0 %v6130
  %v6198 = vpop.f32.mrb[0].mxu0
  %v6199 = vadd.f32 0.0, %v6198
  %v6200 = vpop.f32.mrb[0].mxu0
  %6201 = vdwg.mxu0
  %6202 = vrot.lane.b32.xlu0 %v401, 72
  %v6203 = vpop.permute.xlu0 %6202
  %6204 = vrot.lane.b32.xlu0 %v406, 72
  %v6205 = vpop.permute.xlu0 %6204
  %v6209 = vsel %vm1116, %v5725, 0
  %6211 = vmatprep.subr.mxu0 0.0
  %6212 = vmatpush1.msra.mxu0 %v6203
  %6213 = vmatprep.subr.mxu0 0.0
  %6214 = vmatpush1.msra.mxu0 %v6205
  %6215 = vmatprep.subr.mxu0 0.0
  %6216 = vmatpush1.msra.mxu0 0.0
  %6217 = vmatprep.subr.mxu0 0.0
  %6218 = vmatpush1.msra.mxu0 0.0
  %6219 = vmatprep.subr.mxu0 0.0
  %6220 = vmatpush1.msra.mxu0 0.0
  %6221 = vmatprep.subr.mxu0 0.0
  %6222 = vmatpush1.msra.mxu0 0.0
  %6223 = vmatprep.subr.mxu0 0.0
  %6224 = vmatpush1.msra.mxu0 0.0
  %6225 = vmatprep.subr.mxu0 0.0
  %6226 = vmatpush1.msra.mxu0 0.0
  %6227 = vmatprep.subr.mxu0 0.0
  %6228 = vmatpush1.msra.mxu0 0.0
  %6229 = vmatprep.subr.mxu0 0.0
  %6230 = vmatpush1.msra.mxu0 0.0
  %6231 = vmatprep.subr.mxu0 0.0
  %6232 = vmatpush1.msra.mxu0 0.0
  %6233 = vmatprep.subr.mxu0 0.0
  %6234 = vmatpush1.msra.mxu0 0.0
  %6235 = vmatprep.subr.mxu0 0.0
  %6236 = vmatpush1.msra.mxu0 0.0
  %6237 = vmatprep.subr.mxu0 0.0
  %6238 = vmatpush1.msra.mxu0 0.0
  %6239 = vmatprep.subr.mxu0 0.0
  %6240 = vmatpush1.msra.mxu0 0.0
  %6241 = vmatprep.subr.mxu0 0.0
  %6242 = vmatpush1.msra.mxu0 0.0
  %6243 = vmatprep.subr.mxu0 0.0
  %6244 = vmatpush1.msra.mxu0 0.0
  %6245 = vmatprep.subr.mxu0 0.0
  %6246 = vmatpush1.msra.mxu0 0.0
  %6247 = vmatprep.subr.mxu0 0.0
  %6248 = vmatpush1.msra.mxu0 0.0
  %6249 = vmatprep.subr.mxu0 0.0
  %6250 = vmatpush1.msra.mxu0 0.0
  %6251 = vmatprep.subr.mxu0 0.0
  %6252 = vmatpush1.msra.mxu0 0.0
  %6253 = vmatprep.subr.mxu0 0.0
  %6254 = vmatpush1.msra.mxu0 0.0
  %6255 = vmatprep.subr.mxu0 0.0
  %6256 = vmatpush1.msra.mxu0 0.0
  %6257 = vmatprep.subr.mxu0 0.0
  %6258 = vmatpush1.msra.mxu0 0.0
  %6259 = vmatprep.subr.mxu0 0.0
  %6260 = vmatpush1.msra.mxu0 0.0
  %6261 = vmatprep.subr.mxu0 0.0
  %6262 = vmatpush1.msra.mxu0 0.0
  %6263 = vmatprep.subr.mxu0 0.0
  %6264 = vmatpush1.msra.mxu0 0.0
  %6265 = vmatprep.subr.mxu0 0.0
  %6266 = vmatpush1.msra.mxu0 0.0
  %6267 = vmatprep.subr.mxu0 0.0
  %6268 = vmatpush1.msra.mxu0 0.0
  %6269 = vmatprep.subr.mxu0 0.0
  %6270 = vmatpush1.msra.mxu0 0.0
  %6271 = vmatprep.subr.mxu0 0.0
  %6272 = vmatpush1.msra.mxu0 0.0
  %6273 = vmatprep.subr.mxu0 0.0
  %6274 = vmatpush1.msra.mxu0 0.0
  %6275 = vmatprep.mubr.f32.mxu0 0.0
  %6276 = vmatmul.mubr.f32.gmra.mrb[0].mxu0 %v6209
  %v6277 = vpop.f32.mrb[0].mxu0
  %v6278 = vadd.f32 0.0, %v6277
  %v6279 = vpop.f32.mrb[0].mxu0
  %6280 = vdwg.mxu0
  %6281 = vrot.lane.b32.xlu0 %v411, 72
  %v6282 = vpop.permute.xlu0 %6281
  %6283 = vrot.lane.b32.xlu0 %v416, 72
  %v6284 = vpop.permute.xlu0 %6283
  %v6288 = vsel %vm1116, %v5727, 0
  %6290 = vmatprep.subr.mxu0 0.0
  %6291 = vmatpush1.msra.mxu0 %v6282
  %6292 = vmatprep.subr.mxu0 0.0
  %6293 = vmatpush1.msra.mxu0 %v6284
  %6294 = vmatprep.subr.mxu0 0.0
  %6295 = vmatpush1.msra.mxu0 0.0
  %6296 = vmatprep.subr.mxu0 0.0
  %6297 = vmatpush1.msra.mxu0 0.0
  %6298 = vmatprep.subr.mxu0 0.0
  %6299 = vmatpush1.msra.mxu0 0.0
  %6300 = vmatprep.subr.mxu0 0.0
  %6301 = vmatpush1.msra.mxu0 0.0
  %6302 = vmatprep.subr.mxu0 0.0
  %6303 = vmatpush1.msra.mxu0 0.0
  %6304 = vmatprep.subr.mxu0 0.0
  %6305 = vmatpush1.msra.mxu0 0.0
  %6306 = vmatprep.subr.mxu0 0.0
  %6307 = vmatpush1.msra.mxu0 0.0
  %6308 = vmatprep.subr.mxu0 0.0
  %6309 = vmatpush1.msra.mxu0 0.0
  %6310 = vmatprep.subr.mxu0 0.0
  %6311 = vmatpush1.msra.mxu0 0.0
  %6312 = vmatprep.subr.mxu0 0.0
  %6313 = vmatpush1.msra.mxu0 0.0
  %6314 = vmatprep.subr.mxu0 0.0
  %6315 = vmatpush1.msra.mxu0 0.0
  %6316 = vmatprep.subr.mxu0 0.0
  %6317 = vmatpush1.msra.mxu0 0.0
  %6318 = vmatprep.subr.mxu0 0.0
  %6319 = vmatpush1.msra.mxu0 0.0
  %6320 = vmatprep.subr.mxu0 0.0
  %6321 = vmatpush1.msra.mxu0 0.0
  %6322 = vmatprep.subr.mxu0 0.0
  %6323 = vmatpush1.msra.mxu0 0.0
  %6324 = vmatprep.subr.mxu0 0.0
  %6325 = vmatpush1.msra.mxu0 0.0
  %6326 = vmatprep.subr.mxu0 0.0
  %6327 = vmatpush1.msra.mxu0 0.0
  %6328 = vmatprep.subr.mxu0 0.0
  %6329 = vmatpush1.msra.mxu0 0.0
  %6330 = vmatprep.subr.mxu0 0.0
  %6331 = vmatpush1.msra.mxu0 0.0
  %6332 = vmatprep.subr.mxu0 0.0
  %6333 = vmatpush1.msra.mxu0 0.0
  %6334 = vmatprep.subr.mxu0 0.0
  %6335 = vmatpush1.msra.mxu0 0.0
  %6336 = vmatprep.subr.mxu0 0.0
  %6337 = vmatpush1.msra.mxu0 0.0
  %6338 = vmatprep.subr.mxu0 0.0
  %6339 = vmatpush1.msra.mxu0 0.0
  %6340 = vmatprep.subr.mxu0 0.0
  %6341 = vmatpush1.msra.mxu0 0.0
  %6342 = vmatprep.subr.mxu0 0.0
  %6343 = vmatpush1.msra.mxu0 0.0
  %6344 = vmatprep.subr.mxu0 0.0
  %6345 = vmatpush1.msra.mxu0 0.0
  %6346 = vmatprep.subr.mxu0 0.0
  %6347 = vmatpush1.msra.mxu0 0.0
  %6348 = vmatprep.subr.mxu0 0.0
  %6349 = vmatpush1.msra.mxu0 0.0
  %6350 = vmatprep.subr.mxu0 0.0
  %6351 = vmatpush1.msra.mxu0 0.0
  %6352 = vmatprep.subr.mxu0 0.0
  %6353 = vmatpush1.msra.mxu0 0.0
  %6354 = vmatprep.mubr.f32.mxu0 0.0
  %6355 = vmatmul.mubr.f32.gmra.mrb[0].mxu0 %v6288
  %v6356 = vpop.f32.mrb[0].mxu0
  %v6357 = vadd.f32 0.0, %v6356
  %v6358 = vpop.f32.mrb[0].mxu0
  %6359 = vdwg.mxu0
  %v6361 = vsel %vm483, %v5804, 0
  %v6364 = vsel %vm483, %v5883, 0
  %v6367 = vsel %vm483, %v5962, 0
  %v6370 = vsel %vm483, %v6041, 0
  %v6373 = vsel %vm483, %v6120, 0
  %v6376 = vsel %vm483, %v6199, 0
  %v6379 = vsel %vm483, %v6278, 0
  %v6382 = vsel %vm483, %v6357, 0
  %6384 = vmatprep.subr.mxu0 0.0
  %6385 = vmatpush1.msra.mxu0 %v80
  %6386 = vmatprep.subr.mxu0 0.0
  %6387 = vmatpush1.msra.mxu0 0.0
  %6388 = vmatprep.subr.mxu0 0.0
  %6389 = vmatpush1.msra.mxu0 0.0
  %6390 = vmatprep.subr.mxu0 0.0
  %6391 = vmatpush1.msra.mxu0 0.0
  %6392 = vmatprep.subr.mxu0 0.0
  %6393 = vmatpush1.msra.mxu0 0.0
  %6394 = vmatprep.subr.mxu0 0.0
  %6395 = vmatpush1.msra.mxu0 0.0
  %6396 = vmatprep.subr.mxu0 0.0
  %6397 = vmatpush1.msra.mxu0 0.0
  %6398 = vmatprep.subr.mxu0 0.0
  %6399 = vmatpush1.msra.mxu0 0.0
  %6400 = vmatprep.subr.mxu0 0.0
  %6401 = vmatpush1.msra.mxu0 0.0
  %6402 = vmatprep.subr.mxu0 0.0
  %6403 = vmatpush1.msra.mxu0 0.0
  %6404 = vmatprep.subr.mxu0 0.0
  %6405 = vmatpush1.msra.mxu0 0.0
  %6406 = vmatprep.subr.mxu0 0.0
  %6407 = vmatpush1.msra.mxu0 0.0
  %6408 = vmatprep.subr.mxu0 0.0
  %6409 = vmatpush1.msra.mxu0 0.0
  %6410 = vmatprep.subr.mxu0 0.0
  %6411 = vmatpush1.msra.mxu0 0.0
  %6412 = vmatprep.subr.mxu0 0.0
  %6413 = vmatpush1.msra.mxu0 0.0
  %6414 = vmatprep.subr.mxu0 0.0
  %6415 = vmatpush1.msra.mxu0 0.0
  %6416 = vmatprep.subr.mxu0 0.0
  %6417 = vmatpush1.msra.mxu0 0.0
  %6418 = vmatprep.subr.mxu0 0.0
  %6419 = vmatpush1.msra.mxu0 0.0
  %6420 = vmatprep.subr.mxu0 0.0
  %6421 = vmatpush1.msra.mxu0 0.0
  %6422 = vmatprep.subr.mxu0 0.0
  %6423 = vmatpush1.msra.mxu0 0.0
  %6424 = vmatprep.subr.mxu0 0.0
  %6425 = vmatpush1.msra.mxu0 0.0
  %6426 = vmatprep.subr.mxu0 0.0
  %6427 = vmatpush1.msra.mxu0 0.0
  %6428 = vmatprep.subr.mxu0 0.0
  %6429 = vmatpush1.msra.mxu0 0.0
  %6430 = vmatprep.subr.mxu0 0.0
  %6431 = vmatpush1.msra.mxu0 0.0
  %6432 = vmatprep.subr.mxu0 0.0
  %6433 = vmatpush1.msra.mxu0 0.0
  %6434 = vmatprep.subr.mxu0 0.0
  %6435 = vmatpush1.msra.mxu0 0.0
  %6436 = vmatprep.subr.mxu0 0.0
  %6437 = vmatpush1.msra.mxu0 0.0
  %6438 = vmatprep.subr.mxu0 0.0
  %6439 = vmatpush1.msra.mxu0 0.0
  %6440 = vmatprep.subr.mxu0 0.0
  %6441 = vmatpush1.msra.mxu0 0.0
  %6442 = vmatprep.subr.mxu0 0.0
  %6443 = vmatpush1.msra.mxu0 0.0
  %6444 = vmatprep.subr.mxu0 0.0
  %6445 = vmatpush1.msra.mxu0 0.0
  %6446 = vmatprep.subr.mxu0 0.0
  %6447 = vmatpush1.msra.mxu0 0.0
  %6448 = vmatprep.mubr.f32.mxu0 0.0
  %6449 = vmatmul.mubr.f32.gmra.mrb[0].mxu0 %v6361
  %v6450 = vpop.f32.mrb[0].mxu0
  %v6451 = vadd.f32 0.0, %v6450
  %v6452 = vpop.f32.mrb[0].mxu0
  %6453 = vmatprep.mubr.f32.mxu0 0.0
  %6454 = vmatmul.mubr.f32.gmra.mrb[0].mxu0 %v6364
  %v6455 = vpop.f32.mrb[0].mxu0
  %v6456 = vadd.f32 0.0, %v6455
  %v6457 = vpop.f32.mrb[0].mxu0
  %6458 = vmatprep.mubr.f32.mxu0 0.0
  %6459 = vmatmul.mubr.f32.gmra.mrb[0].mxu0 %v6367
  %v6460 = vpop.f32.mrb[0].mxu0
  %v6461 = vadd.f32 0.0, %v6460
  %v6462 = vpop.f32.mrb[0].mxu0
  %6463 = vmatprep.mubr.f32.mxu0 0.0
  %6464 = vmatmul.mubr.f32.gmra.mrb[0].mxu0 %v6370
  %v6465 = vpop.f32.mrb[0].mxu0
  %v6466 = vadd.f32 0.0, %v6465
  %v6467 = vpop.f32.mrb[0].mxu0
  %6468 = vmatprep.mubr.f32.mxu0 0.0
  %6469 = vmatmul.mubr.f32.gmra.mrb[0].mxu0 %v6373
  %v6470 = vpop.f32.mrb[0].mxu0
  %v6471 = vadd.f32 0.0, %v6470
  %v6472 = vpop.f32.mrb[0].mxu0
  %6473 = vmatprep.mubr.f32.mxu0 0.0
  %6474 = vmatmul.mubr.f32.gmra.mrb[0].mxu0 %v6376
  %v6475 = vpop.f32.mrb[0].mxu0
  %v6476 = vadd.f32 0.0, %v6475
  %v6477 = vpop.f32.mrb[0].mxu0
  %6478 = vmatprep.mubr.f32.mxu0 0.0
  %6479 = vmatmul.mubr.f32.gmra.mrb[0].mxu0 %v6379
  %v6480 = vpop.f32.mrb[0].mxu0
  %v6481 = vadd.f32 0.0, %v6480
  %v6482 = vpop.f32.mrb[0].mxu0
  %6483 = vmatprep.mubr.f32.mxu0 0.0
  %6484 = vmatmul.mubr.f32.gmra.mrb[0].mxu0 %v6382
  %v6485 = vpop.f32.mrb[0].mxu0
  %v6486 = vadd.f32 0.0, %v6485
  %v6487 = vpop.f32.mrb[0].mxu0
  %6488 = vdwg.mxu0
  %v6489 = vadd.f32 %v4976, %v6451
  %v6490 = vadd.f32 %v4977, %v6456
  %v6491 = vadd.f32 %v4978, %v6461
  %v6492 = vadd.f32 %v4979, %v6466
  %v6493 = vadd.f32 %v4980, %v6471
  %v6494 = vadd.f32 %v4981, %v6476
  %v6495 = vadd.f32 %v4982, %v6481
  %v6496 = vadd.f32 %v4983, %v6486
  %v6498 = vlaneseq
  %v6499 = vshrl.u32 %v6498, 7
  %v6500 = vsub.s32 0, %v6499
  %v6501 = vrot.slane %v81, %v6500
  %v6503 = vadd.f32 %v6489, %v6501
  %v6504 = vadd.f32 %v6490, %v6501
  %v6505 = vadd.f32 %v6491, %v6501
  %v6506 = vadd.f32 %v6492, %v6501
  %v6507 = vadd.f32 %v6493, %v6501
  %v6508 = vadd.f32 %v6494, %v6501
  %v6509 = vadd.f32 %v6495, %v6501
  %v6510 = vadd.f32 %v6496, %v6501
  %v6511 = vadd.f32 %v6503, %v35
  %v6512 = vadd.f32 %v6504, %v36
  %v6513 = vadd.f32 %v6505, %v37
  %v6514 = vadd.f32 %v6506, %v38
  %v6515 = vadd.f32 %v6507, %v39
  %v6516 = vadd.f32 %v6508, %v40
  %v6517 = vadd.f32 %v6509, %v41
  %v6518 = vadd.f32 %v6510, %v42
  %v6519 = vsel %vm90, %v6511, 0.0
  %6520 = vadd.xlane.f32.xlu0 %v6519
  %v6521 = vpop.xlane.xlu0 %6520
  %v6522 = vsel %vm90, %v6512, 0.0
  %6523 = vadd.xlane.f32.xlu0 %v6522
  %v6524 = vpop.xlane.xlu0 %6523
  %v6525 = vsel %vm90, %v6513, 0.0
  %6526 = vadd.xlane.f32.xlu0 %v6525
  %v6527 = vpop.xlane.xlu0 %6526
  %v6528 = vsel %vm90, %v6514, 0.0
  %6529 = vadd.xlane.f32.xlu0 %v6528
  %v6530 = vpop.xlane.xlu0 %6529
  %v6531 = vsel %vm90, %v6515, 0.0
  %6532 = vadd.xlane.f32.xlu0 %v6531
  %v6533 = vpop.xlane.xlu0 %6532
  %v6534 = vsel %vm90, %v6516, 0.0
  %6535 = vadd.xlane.f32.xlu0 %v6534
  %v6536 = vpop.xlane.xlu0 %6535
  %v6537 = vsel %vm90, %v6517, 0.0
  %6538 = vadd.xlane.f32.xlu0 %v6537
  %v6539 = vpop.xlane.xlu0 %6538
  %v6540 = vsel %vm90, %v6518, 0.0
  %6541 = vadd.xlane.f32.xlu0 %v6540
  %v6542 = vpop.xlane.xlu0 %6541
  %v6543 = vrcp.pop 32.0
  %v6544 = vmul.f32 %v6521, %v6543
  %v6545 = vmul.f32 %v6524, %v6543
  %v6546 = vmul.f32 %v6527, %v6543
  %v6547 = vmul.f32 %v6530, %v6543
  %v6548 = vmul.f32 %v6533, %v6543
  %v6549 = vmul.f32 %v6536, %v6543
  %v6550 = vmul.f32 %v6539, %v6543
  %v6551 = vmul.f32 %v6542, %v6543
  %v6552 = vsub.f32 %v6511, %v6544
  %v6553 = vsub.f32 %v6512, %v6545
  %v6554 = vsub.f32 %v6513, %v6546
  %v6555 = vsub.f32 %v6514, %v6547
  %v6556 = vsub.f32 %v6515, %v6548
  %v6557 = vsub.f32 %v6516, %v6549
  %v6558 = vsub.f32 %v6517, %v6550
  %v6559 = vsub.f32 %v6518, %v6551
  %v6560 = vmul.f32 %v6552, %v6552
  %v6561 = vmul.f32 %v6553, %v6553
  %v6562 = vmul.f32 %v6554, %v6554
  %v6563 = vmul.f32 %v6555, %v6555
  %v6564 = vmul.f32 %v6556, %v6556
  %v6565 = vmul.f32 %v6557, %v6557
  %v6566 = vmul.f32 %v6558, %v6558
  %v6567 = vmul.f32 %v6559, %v6559
  %v6568 = vsel %vm90, %v6560, 0.0
  %6569 = vadd.xlane.f32.xlu0 %v6568
  %v6570 = vpop.xlane.xlu0 %6569
  %v6571 = vsel %vm90, %v6561, 0.0
  %6572 = vadd.xlane.f32.xlu0 %v6571
  %v6573 = vpop.xlane.xlu0 %6572
  %v6574 = vsel %vm90, %v6562, 0.0
  %6575 = vadd.xlane.f32.xlu0 %v6574
  %v6576 = vpop.xlane.xlu0 %6575
  %v6577 = vsel %vm90, %v6563, 0.0
  %6578 = vadd.xlane.f32.xlu0 %v6577
  %v6579 = vpop.xlane.xlu0 %6578
  %v6580 = vsel %vm90, %v6564, 0.0
  %6581 = vadd.xlane.f32.xlu0 %v6580
  %v6582 = vpop.xlane.xlu0 %6581
  %v6583 = vsel %vm90, %v6565, 0.0
  %6584 = vadd.xlane.f32.xlu0 %v6583
  %v6585 = vpop.xlane.xlu0 %6584
  %v6586 = vsel %vm90, %v6566, 0.0
  %6587 = vadd.xlane.f32.xlu0 %v6586
  %v6588 = vpop.xlane.xlu0 %6587
  %v6589 = vsel %vm90, %v6567, 0.0
  %6590 = vadd.xlane.f32.xlu0 %v6589
  %v6591 = vpop.xlane.xlu0 %6590
  %v6592 = vmul.f32 %v6570, %v6543
  %v6593 = vmul.f32 %v6573, %v6543
  %v6594 = vmul.f32 %v6576, %v6543
  %v6595 = vmul.f32 %v6579, %v6543
  %v6596 = vmul.f32 %v6582, %v6543
  %v6597 = vmul.f32 %v6585, %v6543
  %v6598 = vmul.f32 %v6588, %v6543
  %v6599 = vmul.f32 %v6591, %v6543
  %v6600 = vadd.f32 %v6592, 1e-12
  %v6601 = vadd.f32 %v6593, 1e-12
  %v6602 = vadd.f32 %v6594, 1e-12
  %v6603 = vadd.f32 %v6595, 1e-12
  %v6604 = vadd.f32 %v6596, 1e-12
  %v6605 = vadd.f32 %v6597, 1e-12
  %v6606 = vadd.f32 %v6598, 1e-12
  %v6607 = vadd.f32 %v6599, 1e-12
  %v6608 = vrsqrt.pop %v6600
  %v6609 = vrsqrt.pop %v6601
  %v6610 = vrsqrt.pop %v6602
  %v6611 = vrsqrt.pop %v6603
  %v6612 = vrsqrt.pop %v6604
  %v6613 = vrsqrt.pop %v6605
  %v6614 = vrsqrt.pop %v6606
  %v6615 = vrsqrt.pop %v6607
  %v6616 = vmul.f32 %v6552, %v6608
  %v6617 = vmul.f32 %v6553, %v6609
  %v6618 = vmul.f32 %v6554, %v6610
  %v6619 = vmul.f32 %v6555, %v6611
  %v6620 = vmul.f32 %v6556, %v6612
  %v6621 = vmul.f32 %v6557, %v6613
  %v6622 = vmul.f32 %v6558, %v6614
  %v6623 = vmul.f32 %v6559, %v6615
  %v6624 = vlaneseq
  %v6625 = vshrl.u32 %v6624, 7
  %v6626 = vsub.s32 0, %v6625
  %v6627 = vrot.slane %v82, %v6626
  %v6628 = vmul.f32 %v6616, %v6627
  %v6629 = vmul.f32 %v6617, %v6627
  %v6630 = vmul.f32 %v6618, %v6627
  %v6631 = vmul.f32 %v6619, %v6627
  %v6632 = vmul.f32 %v6620, %v6627
  %v6633 = vmul.f32 %v6621, %v6627
  %v6634 = vmul.f32 %v6622, %v6627
  %v6635 = vmul.f32 %v6623, %v6627
  %v6636 = vlaneseq
  %v6637 = vshrl.u32 %v6636, 7
  %v6638 = vsub.s32 0, %v6637
  %v6639 = vrot.slane %v83, %v6638
  %v6640 = vadd.f32 %v6628, %v6639
  %v6641 = vadd.f32 %v6629, %v6639
  %v6642 = vadd.f32 %v6630, %v6639
  %v6643 = vadd.f32 %v6631, %v6639
  %v6644 = vadd.f32 %v6632, %v6639
  %v6645 = vadd.f32 %v6633, %v6639
  %v6646 = vadd.f32 %v6634, %v6639
  %v6647 = vadd.f32 %v6635, %v6639
  %6648 = vst.msk [vmem:[%s10] sm:$0xff] %vm90, %v6640
  %6649 = vst.msk [vmem:[%s10 + $0x8] sm:$0xff] %vm90, %v6641
  %6650 = vst.msk [vmem:[%s10 + $0x10] sm:$0xff] %vm90, %v6642
  %6651 = vst.msk [vmem:[%s10 + $0x18] sm:$0xff] %vm90, %v6643
  %6652 = vst.msk [vmem:[%s10 + $0x20] sm:$0xff] %vm90, %v6644
  %6653 = vst.msk [vmem:[%s10 + $0x28] sm:$0xff] %vm90, %v6645
  %6654 = vst.msk [vmem:[%s10 + $0x30] sm:$0xff] %vm90, %v6646
  %6655 = vst.msk [vmem:[%s10 + $0x38] sm:$0xff] %vm90, %v6647
  // Predicated region
  $region42: #{tpu_custom_call.1} parent=0 // pred_check
    _
  $region43: #{tpu_custom_call.1} parent=0 // pred_check_branch
    %6657 = sbr.rel (0) target = $region45
  $region44: #{tpu_custom_call.1} parent=0 // pred_region
    _
  $region45: #{tpu_custom_call.1} parent=0 // pred_fallthru
    _
  // Predicated region
  $region46: #{tpu_custom_call.1} parent=0 // pred_check
    _
  $region47: #{tpu_custom_call.1} parent=0 // pred_check_branch
    %6659 = sbr.rel (0) target = $region49
  $region48: #{tpu_custom_call.1} parent=0 // pred_region
    _
  $region49: #{tpu_custom_call.1} parent=0 // pred_fallthru
    _

</llo_original>
